<compile_context>
chip_gen: v5e
topology: v5e:2x2
jax: 0.10.0
libtpu: 0.0.40
codegen_flags: <defaults>
</compile_context>

<pallas_src>
import functools
import math

import jax
import jax.numpy as jnp
import numpy as np
from jax.experimental import pallas as pl
from jax.experimental.pallas import tpu as pltpu


def _round_up(n, m):
    return ((n + m - 1) // m) * m


def _next_pow2(n):
    p = 1
    while p < n:
        p *= 2
    return p


# ---------------------------------------------------------------------------
# Kernel: one grid step == one full AlbertAttention block (QKV projection +
# attention + output projection + residual + LayerNorm).  grid=(num_blocks,)
# is marked "parallel" so on v7x the two blocks split across the TensorCores.
# ---------------------------------------------------------------------------
def albert_fused_kernel(dvals_ref,                      # (n,) int32 scalar prefetch (real D per block)
                        x_ref,                          # (1, B*S, D_pad)
                        wqkv_ref,                       # (1, D_pad, 3*Hp)
                        bqkv_ref,                       # (1, 1, 3*Hp)
                        wo_ref,                         # (1, Hp, D_pad)
                        bo_ref, gamma_ref, beta_ref,    # (1, 1, D_pad)
                        dmask_ref,                      # (1, 1, D_pad)
                        bias_ref,                       # (R, R) additive block-diag mask
                        out_ref,                        # (1, B*S, D_pad)
                        *, B, S, H, hd, eps):
    x = x_ref[0]                                        # (B*S, D_pad) f32
    Hp = H * hd
    R = B * H * S

    inv_d = 1.0 / dvals_ref[pl.program_id(0)].astype(jnp.float32)

    # Fused, lane-dense QKV projection (1/sqrt(hd) already folded into Wq, bq).
    qkv = jnp.dot(x, wqkv_ref[0], preferred_element_type=jnp.float32) + bqkv_ref[0]

    def to_rows(t):                                     # (B*S, Hp) -> (B*H*S, hd)
        return jnp.transpose(t.reshape(B, S, H, hd), (0, 2, 1, 3)).reshape(R, hd)

    q = to_rows(qkv[:, 0 * Hp:1 * Hp])                  # 128-aligned slices
    k = to_rows(qkv[:, 1 * Hp:2 * Hp])
    v = to_rows(qkv[:, 2 * Hp:3 * Hp])

    # Flattened attention: one (R, hd) x (R, hd)^T score matmul; the additive
    # block-diagonal mask keeps each (batch, head) group of S rows independent.
    s = jax.lax.dot_general(q, k, (((1,), (1,)), ((), ())),
                            preferred_element_type=jnp.float32)     # (R, R)
    s = s + bias_ref[...]
    s = s - jnp.max(s, axis=-1, keepdims=True)
    p = jnp.exp(s)
    p = p * pl.reciprocal(jnp.sum(p, axis=-1, keepdims=True), approx=True)
    ctx = jnp.dot(p, v, preferred_element_type=jnp.float32)         # (R, hd)

    # (B*H*S, hd) -> (B*S, Hp): heads back onto the lane dimension.
    ctx = jnp.transpose(ctx.reshape(B, H, S, hd), (0, 2, 1, 3)).reshape(B * S, Hp)

    # Lane-dense output projection (padded head rows of Wo are zero).
    proj = jnp.dot(ctx, wo_ref[0], preferred_element_type=jnp.float32) + bo_ref[0]

    # Residual + LayerNorm over the real D lanes.  Padded lanes of h are exactly
    # zero, so the mean needs no mask; only the centered value is masked.
    h = x + proj
    mean = jnp.sum(h, axis=-1, keepdims=True) * inv_d
    diff = (h - mean) * dmask_ref[0]
    var = jnp.sum(diff * diff, axis=-1, keepdims=True) * inv_d
    normed = diff * jax.lax.rsqrt(var + eps)
    out_ref[0] = (normed * gamma_ref[0] + beta_ref[0]).astype(out_ref.dtype)


# ---------------------------------------------------------------------------
# Host-side preparation: pad every block to one shared lane-aligned layout and
# stack the parameters so all blocks run from a single pallas_call.
# ---------------------------------------------------------------------------
def fuse_albert_blocks(blocks, *, B, S):
    """blocks: list of (params2d, num_heads)."""
    Ds = [int(p[0].shape[0]) for p, _ in blocks]
    Hs = [int(h) for _, h in blocks]
    hds = [d // h for d, h in zip(Ds, Hs)]

    D_pad = _round_up(max(Ds), 128)
    hd_pad = max(16, _next_pow2(max(hds)))
    # H_pad chosen so B*H_pad*S (score-matrix side) and H_pad*hd_pad (lane width
    # of the head-concat layout) are both multiples of 128.
    step_rows = 128 // math.gcd(128, B * S)
    step_lane = 128 // math.gcd(128, hd_pad)
    step = (step_rows * step_lane) // math.gcd(step_rows, step_lane)
    H_pad = _round_up(max(Hs), step)
    Hp = H_pad * hd_pad
    R = B * H_pad * S

    per_block = []
    for (params2d, _), H in zip(blocks, Hs):
        Wq, bq, Wk, bk, Wv, bv, Wo, bo, gamma, beta = params2d
        D = Wq.shape[0]
        hd = D // H
        scale = 1.0 / math.sqrt(hd)

        def pad_cols(W, b, s=1.0):
            Wr = jnp.pad((W * s).reshape(D, H, hd),
                         ((0, D_pad - D), (0, H_pad - H), (0, hd_pad - hd)))
            br = jnp.pad((b * s).reshape(H, hd),
                         ((0, H_pad - H), (0, hd_pad - hd)))
            return Wr.reshape(D_pad, Hp), br.reshape(Hp)

        Wq_p, bq_p = pad_cols(Wq, bq, scale)            # scale folded into Q proj
        Wk_p, bk_p = pad_cols(Wk, bk)
        Wv_p, bv_p = pad_cols(Wv, bv)
        wqkv = jnp.concatenate([Wq_p, Wk_p, Wv_p], axis=1)              # (D_pad, 3*Hp)
        bqkv = jnp.concatenate([bq_p, bk_p, bv_p]).reshape(1, 3 * Hp)

        wo = jnp.pad(Wo.reshape(H, hd, D),
                     ((0, H_pad - H), (0, hd_pad - hd), (0, D_pad - D))
                     ).reshape(Hp, D_pad)

        pad1 = lambda vec: jnp.pad(vec, (0, D_pad - D)).reshape(1, D_pad)
        dmask = (jnp.arange(D_pad) < D).astype(jnp.float32).reshape(1, D_pad)
        per_block.append(dict(wqkv=wqkv, bqkv=bqkv, wo=wo, bo=pad1(bo),
                              gamma=pad1(gamma), beta=pad1(beta), dmask=dmask))

    fused = {key: jnp.stack([blk[key] for blk in per_block], axis=0)
             for key in per_block[0]}
    fused["dvals"] = jnp.asarray(Ds, dtype=jnp.int32)

    grp = np.arange(R) // S
    fused["attn_bias"] = jnp.asarray(
        np.where(grp[:, None] == grp[None, :], 0.0, -1e30), dtype=jnp.float32)

    meta = dict(B=B, S=S, H_pad=H_pad, hd_pad=hd_pad, D_pad=D_pad, Ds=Ds)
    return fused, meta


def fused_albert_attention(xs, fused, meta, *, eps=1e-12):
    B, S = meta["B"], meta["S"]
    H, hd, D_pad = meta["H_pad"], meta["hd_pad"], meta["D_pad"]
    Ds = meta["Ds"]
    n = len(xs)
    BS = B * S
    Hp = H * hd
    R = B * H * S

    x_all = jnp.stack(
        [jnp.pad(x.reshape(BS, x.shape[-1]),
                 ((0, 0), (0, D_pad - x.shape[-1]))) for x in xs], axis=0)

    kernel = functools.partial(albert_fused_kernel, B=B, S=S, H=H, hd=hd, eps=eps)

    out = pl.pallas_call(
        kernel,
        out_shape=jax.ShapeDtypeStruct((n, BS, D_pad), jnp.float32),
        grid_spec=pltpu.PrefetchScalarGridSpec(
            num_scalar_prefetch=1,
            grid=(n,),
            in_specs=[
                pl.BlockSpec((1, BS, D_pad), lambda i, d: (i, 0, 0)),      # x
                pl.BlockSpec((1, D_pad, 3 * Hp), lambda i, d: (i, 0, 0)),  # Wqkv
                pl.BlockSpec((1, 1, 3 * Hp), lambda i, d: (i, 0, 0)),      # bqkv
                pl.BlockSpec((1, Hp, D_pad), lambda i, d: (i, 0, 0)),      # Wo
                pl.BlockSpec((1, 1, D_pad), lambda i, d: (i, 0, 0)),       # bo
                pl.BlockSpec((1, 1, D_pad), lambda i, d: (i, 0, 0)),       # gamma
                pl.BlockSpec((1, 1, D_pad), lambda i, d: (i, 0, 0)),       # beta
                pl.BlockSpec((1, 1, D_pad), lambda i, d: (i, 0, 0)),       # dmask
                pl.BlockSpec((R, R), lambda i, d: (0, 0)),                 # attn bias
            ],
            out_specs=pl.BlockSpec((1, BS, D_pad), lambda i, d: (i, 0, 0)),
        ),
        compiler_params=pltpu.CompilerParams(dimension_semantics=("parallel",)),
    )(fused["dvals"], x_all, fused["wqkv"], fused["bqkv"], fused["wo"],
      fused["bo"], fused["gamma"], fused["beta"], fused["dmask"], fused["attn_bias"])

    return tuple(out[i, :, :Ds[i]].reshape(B, S, Ds[i]) for i in range(n))


# ---------------------------------------------------------------------------
# Synthetic parameters + pure-JAX reference (HF AlbertAttention, eval, no mask).
# ---------------------------------------------------------------------------
def make_params(key, hidden, num_heads):
    head_dim = hidden // num_heads
    keys = jax.random.split(key, 10)
    std = 0.02
    Wq = std * jax.random.normal(keys[0], (hidden, hidden), jnp.float32)
    bq = std * jax.random.normal(keys[1], (hidden,), jnp.float32)
    Wk = std * jax.random.normal(keys[2], (hidden, hidden), jnp.float32)
    bk = std * jax.random.normal(keys[3], (hidden,), jnp.float32)
    Wv = std * jax.random.normal(keys[4], (hidden, hidden), jnp.float32)
    bv = std * jax.random.normal(keys[5], (hidden,), jnp.float32)
    Wo = std * jax.random.normal(keys[6], (hidden, hidden), jnp.float32)
    bo = std * jax.random.normal(keys[7], (hidden,), jnp.float32)
    gamma = 1.0 + 0.1 * jax.random.normal(keys[8], (hidden,), jnp.float32)
    beta = 0.1 * jax.random.normal(keys[9], (hidden,), jnp.float32)
    return (Wq, bq, Wk, bk, Wv, bv, Wo, bo, gamma, beta), head_dim


def albert_attention_ref(x, params2d, *, num_heads, head_dim, eps=1e-12):
    Wq, bq, Wk, bk, Wv, bv, Wo, bo, gamma, beta = params2d
    B, S, D = x.shape

    def heads(t):
        return jnp.transpose(t.reshape(B, S, num_heads, head_dim), (0, 2, 1, 3))

    q = heads(x @ Wq + bq)
    k = heads(x @ Wk + bk)
    v = heads(x @ Wv + bv)
    scores = jnp.einsum("bhqd,bhkd->bhqk", q, k) / math.sqrt(head_dim)
    probs = jax.nn.softmax(scores, axis=-1)
    ctx = jnp.einsum("bhqk,bhkd->bhqd", probs, v)
    ctx = jnp.transpose(ctx, (0, 2, 1, 3)).reshape(B, S, D)
    proj = ctx @ Wo + bo
    h = x + proj
    mean = jnp.mean(h, axis=-1, keepdims=True)
    var = jnp.mean((h - mean) ** 2, axis=-1, keepdims=True)
    return (h - mean) * jax.lax.rsqrt(var + eps) * gamma + beta


if __name__ == "__main__":
    key = jax.random.PRNGKey(0)
    k_x, k_y, k_p0, k_p1 = jax.random.split(key, 4)

    B, S = 2, 8
    H0, NH0 = 192, 12   # attn0: AlbertAttention(hidden_size=192, heads=12)
    H1, NH1 = 66, 3     # attn1: AlbertSdpaAttention(hidden_size=66, heads=3)
                        # (output_attentions=True -> eager attention math)

    x = jax.random.normal(k_x, (B, S, H0), jnp.float32)
    y = jax.random.normal(k_y, (B, S, H1), jnp.float32)

    params0_2d, d0 = make_params(k_p0, H0, NH0)
    params1_2d, d1 = make_params(k_p1, H1, NH1)

    fused, meta = fuse_albert_blocks([(params0_2d, NH0), (params1_2d, NH1)], B=B, S=S)

    @jax.jit
    def model_forward(x_in, y_in):
        return fused_albert_attention([x_in, y_in], fused, meta)

    out0, out1 = jax.block_until_ready(model_forward(x, y))

    ref0 = albert_attention_ref(x, params0_2d, num_heads=NH0, head_dim=d0)
    ref1 = albert_attention_ref(y, params1_2d, num_heads=NH1, head_dim=d1)

    assert out0.shape == (B, S, H0) and out1.shape == (B, S, H1)
    # Tolerance accounts for the approximate (EUP) reciprocal in the softmax
    # denominator; all matmul/LayerNorm math stays in f32.
    np.testing.assert_allclose(np.asarray(out0), np.asarray(ref0), rtol=1e-3, atol=1e-3)
    np.testing.assert_allclose(np.asarray(out1), np.asarray(ref1), rtol=1e-3, atol=1e-3)

    print("KERNEL_OK")
</pallas_src>

<mosaic_0001>
module attributes {stable_mosaic.version = 11 : i64} {
  func.func @albert_fused_kernel(%arg0: i32, %arg1: memref<2xi32, #tpu.memory_space<smem>>, %arg2: memref<1x16x256xf32, #tpu.memory_space<vmem>>, %arg3: memref<1x256x1536xf32, #tpu.memory_space<vmem>>, %arg4: memref<1x1x1536xf32, #tpu.memory_space<vmem>>, %arg5: memref<1x512x256xf32, #tpu.memory_space<vmem>>, %arg6: memref<1x1x256xf32, #tpu.memory_space<vmem>>, %arg7: memref<1x1x256xf32, #tpu.memory_space<vmem>>, %arg8: memref<1x1x256xf32, #tpu.memory_space<vmem>>, %arg9: memref<1x1x256xf32, #tpu.memory_space<vmem>>, %arg10: memref<256x256xf32, #tpu.memory_space<vmem>>, %arg11: memref<1x16x256xf32, #tpu.memory_space<vmem>>) attributes {dimension_semantics = [#tpu.dimension_semantics<parallel>], iteration_bounds = array<i64: 2>, scalar_prefetch = 1 : i64, scratch_operands = 0 : i64, tpu.core_type = #tpu.core_type<tc>, window_params = [{transform_indices = @transform_0, window_bounds = array<i64: 1, 16, 256>}, {transform_indices = @transform_1, window_bounds = array<i64: 1, 256, 1536>}, {transform_indices = @transform_2, window_bounds = array<i64: 1, 1, 1536>}, {transform_indices = @transform_3, window_bounds = array<i64: 1, 512, 256>}, {transform_indices = @transform_4, window_bounds = array<i64: 1, 1, 256>}, {transform_indices = @transform_5, window_bounds = array<i64: 1, 1, 256>}, {transform_indices = @transform_6, window_bounds = array<i64: 1, 1, 256>}, {transform_indices = @transform_7, window_bounds = array<i64: 1, 1, 256>}, {pipeline_mode = #tpu.pipeline_mode<synchronous>, transform_indices = @transform_8, window_bounds = array<i64: 256, 256>}, {transform_indices = @transform_9, window_bounds = array<i64: 1, 16, 256>}]} {
    %c0 = arith.constant 0 : index
    %c0_0 = arith.constant 0 : index
    %c0_1 = arith.constant 0 : index
    %0 = vector.load %arg2[%c0, %c0_0, %c0_1] : memref<1x16x256xf32, #tpu.memory_space<vmem>>, vector<1x16x256xf32>
    %1 = vector.shape_cast %0 : vector<1x16x256xf32> to vector<16x256xf32>
    %2 = arith.index_cast %arg0 : i32 to index
    %3 = memref.load %arg1[%2] : memref<2xi32, #tpu.memory_space<smem>>
    %4 = arith.sitofp %3 : i32 to f32
    %cst = arith.constant 1.000000e+00 : f32
    %5 = arith.divf %cst, %4 : f32
    %c0_2 = arith.constant 0 : index
    %c0_3 = arith.constant 0 : index
    %c0_4 = arith.constant 0 : index
    %6 = vector.load %arg3[%c0_2, %c0_3, %c0_4] : memref<1x256x1536xf32, #tpu.memory_space<vmem>>, vector<1x256x1536xf32>
    %7 = vector.shape_cast %6 : vector<1x256x1536xf32> to vector<256x1536xf32>
    %cst_5 = arith.constant dense<0.000000e+00> : vector<16x1536xf32>
    %8 = tpu.matmul %1, %7, %cst_5 {dimension_numbers = #tpu.dot_dimension_numbers<[1], [0], [0], [1], [0, 0, 1, 1], [], []>} : vector<16x256xf32>, vector<256x1536xf32>, vector<16x1536xf32> -> vector<16x1536xf32>
    %c0_6 = arith.constant 0 : index
    %c0_7 = arith.constant 0 : index
    %c0_8 = arith.constant 0 : index
    %9 = vector.load %arg4[%c0_6, %c0_7, %c0_8] : memref<1x1x1536xf32, #tpu.memory_space<vmem>>, vector<1x1x1536xf32>
    %10 = vector.shape_cast %9 : vector<1x1x1536xf32> to vector<1x1536xf32>
    %11 = vector.broadcast %10 : vector<1x1536xf32> to vector<16x1536xf32>
    %12 = arith.addf %8, %11 : vector<16x1536xf32>
    %13 = vector.extract_strided_slice %12 {offsets = [0, 0], sizes = [16, 512], strides = [1, 1]} : vector<16x1536xf32> to vector<16x512xf32>
    %14 = vector.shape_cast %13 : vector<16x512xf32> to vector<2x8x16x32xf32>
    %15 = tpu.transpose %14, [0, 2, 1, 3] : vector<2x8x16x32xf32> -> vector<2x16x8x32xf32>
    %16 = vector.shape_cast %15 : vector<2x16x8x32xf32> to vector<256x32xf32>
    %17 = vector.extract_strided_slice %12 {offsets = [0, 512], sizes = [16, 512], strides = [1, 1]} : vector<16x1536xf32> to vector<16x512xf32>
    %18 = vector.shape_cast %17 : vector<16x512xf32> to vector<2x8x16x32xf32>
    %19 = tpu.transpose %18, [0, 2, 1, 3] : vector<2x8x16x32xf32> -> vector<2x16x8x32xf32>
    %20 = vector.shape_cast %19 : vector<2x16x8x32xf32> to vector<256x32xf32>
    %21 = vector.extract_strided_slice %12 {offsets = [0, 1024], sizes = [16, 512], strides = [1, 1]} : vector<16x1536xf32> to vector<16x512xf32>
    %22 = vector.shape_cast %21 : vector<16x512xf32> to vector<2x8x16x32xf32>
    %23 = tpu.transpose %22, [0, 2, 1, 3] : vector<2x8x16x32xf32> -> vector<2x16x8x32xf32>
    %24 = vector.shape_cast %23 : vector<2x16x8x32xf32> to vector<256x32xf32>
    %cst_9 = arith.constant dense<0.000000e+00> : vector<256x256xf32>
    %25 = tpu.matmul %16, %20, %cst_9 {dimension_numbers = #tpu.dot_dimension_numbers<[1], [1], [0], [0], [0, 0, 1, 0], [], []>} : vector<256x32xf32>, vector<256x32xf32>, vector<256x256xf32> -> vector<256x256xf32>
    %c0_10 = arith.constant 0 : index
    %c0_11 = arith.constant 0 : index
    %26 = vector.load %arg10[%c0_10, %c0_11] : memref<256x256xf32, #tpu.memory_space<vmem>>, vector<256x256xf32>
    %27 = arith.addf %25, %26 : vector<256x256xf32>
    %cst_12 = arith.constant dense<0xFF800000> : vector<256xf32>
    %28 = vector.multi_reduction <maximumf>, %27, %cst_12 [1] : vector<256x256xf32> to vector<256xf32>
    %29 = vector.shape_cast %28 : vector<256xf32> to vector<256x1xf32>
    %30 = vector.broadcast %29 : vector<256x1xf32> to vector<256x256xf32>
    %31 = arith.subf %27, %30 : vector<256x256xf32>
    %32 = math.exp %31 : vector<256x256xf32>
    %cst_13 = arith.constant dense<0.000000e+00> : vector<256xf32>
    %33 = vector.multi_reduction <add>, %32, %cst_13 [1] : vector<256x256xf32> to vector<256xf32>
    %34 = vector.shape_cast %33 : vector<256xf32> to vector<256x1xf32>
    %35 = tpu.reciprocal %34 {approx = true} : vector<256x1xf32> -> vector<256x1xf32>
    %36 = vector.broadcast %35 : vector<256x1xf32> to vector<256x256xf32>
    %37 = arith.mulf %32, %36 : vector<256x256xf32>
    %cst_14 = arith.constant dense<0.000000e+00> : vector<256x32xf32>
    %38 = tpu.matmul %37, %24, %cst_14 {dimension_numbers = #tpu.dot_dimension_numbers<[1], [0], [0], [1], [0, 0, 1, 1], [], []>} : vector<256x256xf32>, vector<256x32xf32>, vector<256x32xf32> -> vector<256x32xf32>
    %39 = vector.shape_cast %38 : vector<256x32xf32> to vector<2x16x8x32xf32>
    %40 = tpu.transpose %39, [0, 2, 1, 3] : vector<2x16x8x32xf32> -> vector<2x8x16x32xf32>
    %41 = vector.shape_cast %40 : vector<2x8x16x32xf32> to vector<16x512xf32>
    %c0_15 = arith.constant 0 : index
    %c0_16 = arith.constant 0 : index
    %c0_17 = arith.constant 0 : index
    %42 = vector.load %arg5[%c0_15, %c0_16, %c0_17] : memref<1x512x256xf32, #tpu.memory_space<vmem>>, vector<1x512x256xf32>
    %43 = vector.shape_cast %42 : vector<1x512x256xf32> to vector<512x256xf32>
    %cst_18 = arith.constant dense<0.000000e+00> : vector<16x256xf32>
    %44 = tpu.matmul %41, %43, %cst_18 {dimension_numbers = #tpu.dot_dimension_numbers<[1], [0], [0], [1], [0, 0, 1, 1], [], []>} : vector<16x512xf32>, vector<512x256xf32>, vector<16x256xf32> -> vector<16x256xf32>
    %c0_19 = arith.constant 0 : index
    %c0_20 = arith.constant 0 : index
    %c0_21 = arith.constant 0 : index
    %45 = vector.load %arg6[%c0_19, %c0_20, %c0_21] : memref<1x1x256xf32, #tpu.memory_space<vmem>>, vector<1x1x256xf32>
    %46 = vector.shape_cast %45 : vector<1x1x256xf32> to vector<1x256xf32>
    %47 = vector.broadcast %46 : vector<1x256xf32> to vector<16x256xf32>
    %48 = arith.addf %44, %47 : vector<16x256xf32>
    %49 = arith.addf %1, %48 : vector<16x256xf32>
    %cst_22 = arith.constant dense<0.000000e+00> : vector<16xf32>
    %50 = vector.multi_reduction <add>, %49, %cst_22 [1] : vector<16x256xf32> to vector<16xf32>
    %51 = vector.shape_cast %50 : vector<16xf32> to vector<16x1xf32>
    %52 = vector.broadcast %5 : f32 to vector<16x1xf32>
    %53 = arith.mulf %51, %52 : vector<16x1xf32>
    %54 = vector.broadcast %53 : vector<16x1xf32> to vector<16x256xf32>
    %55 = arith.subf %49, %54 : vector<16x256xf32>
    %c0_23 = arith.constant 0 : index
    %c0_24 = arith.constant 0 : index
    %c0_25 = arith.constant 0 : index
    %56 = vector.load %arg9[%c0_23, %c0_24, %c0_25] : memref<1x1x256xf32, #tpu.memory_space<vmem>>, vector<1x1x256xf32>
    %57 = vector.shape_cast %56 : vector<1x1x256xf32> to vector<1x256xf32>
    %58 = vector.broadcast %57 : vector<1x256xf32> to vector<16x256xf32>
    %59 = arith.mulf %55, %58 : vector<16x256xf32>
    %60 = arith.mulf %59, %59 : vector<16x256xf32>
    %cst_26 = arith.constant dense<0.000000e+00> : vector<16xf32>
    %61 = vector.multi_reduction <add>, %60, %cst_26 [1] : vector<16x256xf32> to vector<16xf32>
    %62 = vector.shape_cast %61 : vector<16xf32> to vector<16x1xf32>
    %63 = vector.broadcast %5 : f32 to vector<16x1xf32>
    %64 = arith.mulf %62, %63 : vector<16x1xf32>
    %cst_27 = arith.constant 9.99999996E-13 : f32
    %65 = vector.broadcast %cst_27 : f32 to vector<16x1xf32>
    %66 = arith.addf %64, %65 : vector<16x1xf32>
    %67 = math.rsqrt %66 : vector<16x1xf32>
    %68 = vector.broadcast %67 : vector<16x1xf32> to vector<16x256xf32>
    %69 = arith.mulf %59, %68 : vector<16x256xf32>
    %c0_28 = arith.constant 0 : index
    %c0_29 = arith.constant 0 : index
    %c0_30 = arith.constant 0 : index
    %70 = vector.load %arg7[%c0_28, %c0_29, %c0_30] : memref<1x1x256xf32, #tpu.memory_space<vmem>>, vector<1x1x256xf32>
    %71 = vector.shape_cast %70 : vector<1x1x256xf32> to vector<1x256xf32>
    %72 = vector.broadcast %71 : vector<1x256xf32> to vector<16x256xf32>
    %73 = arith.mulf %69, %72 : vector<16x256xf32>
    %c0_31 = arith.constant 0 : index
    %c0_32 = arith.constant 0 : index
    %c0_33 = arith.constant 0 : index
    %74 = vector.load %arg8[%c0_31, %c0_32, %c0_33] : memref<1x1x256xf32, #tpu.memory_space<vmem>>, vector<1x1x256xf32>
    %75 = vector.shape_cast %74 : vector<1x1x256xf32> to vector<1x256xf32>
    %76 = vector.broadcast %75 : vector<1x256xf32> to vector<16x256xf32>
    %77 = arith.addf %73, %76 : vector<16x256xf32>
    %c0_34 = arith.constant 0 : index
    %c0_35 = arith.constant 0 : index
    %c0_36 = arith.constant 0 : index
    %78 = vector.load %arg11[%c0_34, %c0_35, %c0_36] : memref<1x16x256xf32, #tpu.memory_space<vmem>>, vector<1x16x256xf32>
    %79 = vector.shape_cast %78 : vector<1x16x256xf32> to vector<16x256xf32>
    %80 = vector.shape_cast %77 : vector<16x256xf32> to vector<1x16x256xf32>
    tpu.vector_store %arg11[%c0_34, %c0_35, %c0_36], %80 {strides = array<i32>} : memref<1x16x256xf32, #tpu.memory_space<vmem>>, vector<1x16x256xf32>,
    return
  }
  func.func @transform_0(%arg0: i32, %arg1: memref<2xi32, #tpu.memory_space<smem>>) -> (i32, i32, i32) {
    %c0_i32 = arith.constant 0 : i32
    %c0_i32_0 = arith.constant 0 : i32
    %c0_i32_1 = arith.constant 0 : i32
    return %arg0, %c0_i32, %c0_i32_0 : i32, i32, i32
  }
  func.func @transform_1(%arg0: i32, %arg1: memref<2xi32, #tpu.memory_space<smem>>) -> (i32, i32, i32) {
    %c0_i32 = arith.constant 0 : i32
    %c0_i32_0 = arith.constant 0 : i32
    %c0_i32_1 = arith.constant 0 : i32
    return %arg0, %c0_i32, %c0_i32_0 : i32, i32, i32
  }
  func.func @transform_2(%arg0: i32, %arg1: memref<2xi32, #tpu.memory_space<smem>>) -> (i32, i32, i32) {
    %c0_i32 = arith.constant 0 : i32
    %c0_i32_0 = arith.constant 0 : i32
    %c0_i32_1 = arith.constant 0 : i32
    return %arg0, %c0_i32, %c0_i32_0 : i32, i32, i32
  }
  func.func @transform_3(%arg0: i32, %arg1: memref<2xi32, #tpu.memory_space<smem>>) -> (i32, i32, i32) {
    %c0_i32 = arith.constant 0 : i32
    %c0_i32_0 = arith.constant 0 : i32
    %c0_i32_1 = arith.constant 0 : i32
    return %arg0, %c0_i32, %c0_i32_0 : i32, i32, i32
  }
  func.func @transform_4(%arg0: i32, %arg1: memref<2xi32, #tpu.memory_space<smem>>) -> (i32, i32, i32) {
    %c0_i32 = arith.constant 0 : i32
    %c0_i32_0 = arith.constant 0 : i32
    %c0_i32_1 = arith.constant 0 : i32
    return %arg0, %c0_i32, %c0_i32_0 : i32, i32, i32
  }
  func.func @transform_5(%arg0: i32, %arg1: memref<2xi32, #tpu.memory_space<smem>>) -> (i32, i32, i32) {
    %c0_i32 = arith.constant 0 : i32
    %c0_i32_0 = arith.constant 0 : i32
    %c0_i32_1 = arith.constant 0 : i32
    return %arg0, %c0_i32, %c0_i32_0 : i32, i32, i32
  }
  func.func @transform_6(%arg0: i32, %arg1: memref<2xi32, #tpu.memory_space<smem>>) -> (i32, i32, i32) {
    %c0_i32 = arith.constant 0 : i32
    %c0_i32_0 = arith.constant 0 : i32
    %c0_i32_1 = arith.constant 0 : i32
    return %arg0, %c0_i32, %c0_i32_0 : i32, i32, i32
  }
  func.func @transform_7(%arg0: i32, %arg1: memref<2xi32, #tpu.memory_space<smem>>) -> (i32, i32, i32) {
    %c0_i32 = arith.constant 0 : i32
    %c0_i32_0 = arith.constant 0 : i32
    %c0_i32_1 = arith.constant 0 : i32
    return %arg0, %c0_i32, %c0_i32_0 : i32, i32, i32
  }
  func.func @transform_8(%arg0: i32, %arg1: memref<2xi32, #tpu.memory_space<smem>>) -> (i32, i32) {
    %c0_i32 = arith.constant 0 : i32
    %c0_i32_0 = arith.constant 0 : i32
    %c0_i32_1 = arith.constant 0 : i32
    return %c0_i32, %c0_i32_0 : i32, i32
  }
  func.func @transform_9(%arg0: i32, %arg1: memref<2xi32, #tpu.memory_space<smem>>) -> (i32, i32, i32) {
    %c0_i32 = arith.constant 0 : i32
    %c0_i32_0 = arith.constant 0 : i32
    %c0_i32_1 = arith.constant 0 : i32
    return %arg0, %c0_i32, %c0_i32_0 : i32, i32, i32
  }
}

</mosaic_0001>

<llo_original>
// kernel: model_forward.1
$region0: #{model_forward.1}
  #allocation0 [shape = 'u32[]', space=smem, size = 0x4, offset = 0x4, fixed_abs, tag = 'smem constant byte address 0x4 - core index']
  #allocation1 [shape = 'u32[72,128]{1,0:T(1,128)}', space=vmem, size = 0x9000, scoped, tag = 'internal scratch']
  #allocation2 [shape = 's32[1]{0}', space=sflag, size = 0x4, scoped, tag = 'scoped memory for model_forward.1']
  #allocation3 [shape = 'u8[512]{0}', space=smem, size = 0x200, scoped, tag = 'prefetched SMEM operand 0']
  %s0 = inlined_call_operand.hbm [shape: s32[2], index: 0, kind: input, shape index: {}]
  %s1 = inlined_call_operand.vmem [shape: f32[2,16,256], index: 1, kind: input, shape index: {}]
  %s2 = inlined_call_operand.hbm [shape: f32[2,256,1536], index: 2, kind: input, shape index: {}]
  %s3 = inlined_call_operand.hbm [shape: f32[2,1,1536], index: 3, kind: input, shape index: {}]
  %s4 = inlined_call_operand.hbm [shape: f32[2,512,256], index: 4, kind: input, shape index: {}]
  %s5 = inlined_call_operand.hbm [shape: f32[2,1,256], index: 5, kind: input, shape index: {}]
  %s6 = inlined_call_operand.hbm [shape: f32[2,1,256], index: 6, kind: input, shape index: {}]
  %s7 = inlined_call_operand.hbm [shape: f32[2,1,256], index: 7, kind: input, shape index: {}]
  %s8 = inlined_call_operand.hbm [shape: f32[2,1,256], index: 8, kind: input, shape index: {}]
  %s9 = inlined_call_operand.hbm [shape: f32[256,256], index: 9, kind: input, shape index: {}]
  %s10 = inlined_call_operand.vmem [shape: f32[2,16,256], index: 10, kind: output, shape index: {}]
  %s11 = sld [smem:[#allocation0]]
  $region101: #{model_forward.1} parent=0
    _
  %s13 = ssub.s32 1, %s11
  %s14 = scalar_select 0, %s13, %s11
  %s16 = sshll.u32 %s0, 4
  %s17 = int_to_ptr.hbm [resolvable:$true] %s16
  %19 = dma.hbm_to_smem %s17, 16, [#allocation3], [#allocation2]
  %21 = dma.done [#allocation2], 16
  %22 = sfence
  $region1: #{model_forward.1} parent=0
    #allocation4 [shape = 'u8[3145728]{0}', space=vmem, size = 0x300000, scoped, tag = 'input window, operand 2']
    #allocation5 [shape = 's32[2]{0}', space=sflag, size = 0x8, scoped, tag = 'scoped memory for model_forward.1']
    #allocation6 [shape = 'u8[12288]{0}', space=vmem, size = 0x3000, scoped, tag = 'input window, operand 3']
    #allocation7 [shape = 's32[2]{0}', space=sflag, size = 0x8, scoped, tag = 'scoped memory for model_forward.1']
    #allocation8 [shape = 'u8[1048576]{0}', space=vmem, size = 0x100000, scoped, tag = 'input window, operand 4']
    #allocation9 [shape = 'u8[2048]{0}', space=vmem, size = 0x800, scoped, tag = 'input window, operand 5']
    #allocation10 [shape = 's32[2]{0}', space=sflag, size = 0x8, scoped, tag = 'scoped memory for model_forward.1']
    #allocation11 [shape = 'u8[2048]{0}', space=vmem, size = 0x800, scoped, tag = 'input window, operand 6']
    #allocation12 [shape = 'u8[2048]{0}', space=vmem, size = 0x800, scoped, tag = 'input window, operand 7']
    #allocation13 [shape = 's32[2]{0}', space=sflag, size = 0x8, scoped, tag = 'scoped memory for model_forward.1']
    #allocation14 [shape = 'u8[2048]{0}', space=vmem, size = 0x800, scoped, tag = 'input window, operand 8']
    #allocation15 [shape = 'u8[262144]{0}', space=vmem, size = 0x40000, scoped, tag = 'input window, operand 9, single buffered']
    #allocation16 [shape = 's32[1]{0}', space=sflag, size = 0x4, scoped, tag = 'scoped memory for model_forward.1']
    %23 = vsyncpa [#allocation5], 0
    %s24 = scalar_lea.sflag [#allocation5], 1
    %25 = vsyncpa %s24, 0
    %26 = vsyncpa [#allocation7], 0
    %s27 = scalar_lea.sflag [#allocation7], 1
    %28 = vsyncpa %s27, 0
    %29 = vsyncpa [#allocation10], 0
    %s30 = scalar_lea.sflag [#allocation10], 1
    %31 = vsyncpa %s30, 0
    %32 = vsyncpa [#allocation13], 0
    %s33 = scalar_lea.sflag [#allocation13], 1
    %34 = vsyncpa %s33, 0
    %35 = vsyncpa [#allocation16], 0
    loop: start=0, step=1, limit=4
    $region2: #{model_forward.1} parent=1 // loop_pre_header
      _
    $region3: #{model_forward.1} parent=1 // loop_header
      %s37 = sphi 0, %s41
      %p38 = scmp.ge.s32.totalorder %s37, 4
      %s47 = sphi 0, %s49
      %s50 = sphi 0, %s47
      %s51 = sphi 0, %s50
      %s67 = sphi 0, %s51
      %s73 = sphi 0, %s75
      %s76 = sphi 0, %s73
      %s77 = sphi 0, %s76
      %s93 = sphi 0, %s77
      %s99 = sphi 0, %s101
      %s102 = sphi 0, %s99
      %s103 = sphi 0, %s102
      %s119 = sphi 0, %s103
      %s125 = sphi 0, %s127
      %s128 = sphi 0, %s125
      %s129 = sphi 0, %s128
      %s145 = sphi 0, %s129
      %s151 = sphi 0, %s153
      %s154 = sphi 0, %s151
      %s155 = sphi 0, %s154
      %s171 = sphi 0, %s155
      %s177 = sphi 0, %s179
      %s180 = sphi 0, %s177
      %s181 = sphi 0, %s180
      %s197 = sphi 0, %s181
      %s203 = sphi 0, %s205
      %s206 = sphi 0, %s203
      %s207 = sphi 0, %s206
      %s223 = sphi 0, %s207
      %s229 = sphi 0, %s231
      %s232 = sphi 0, %s229
      %s233 = sphi 0, %s232
      %s249 = sphi 0, %s233
      %s253 = sphi 0, %s253
      %s255 = sphi 0, %s253
      %s256 = sphi 0, %s255
      %s270 = sphi 0, %s256
      %s276 = sphi 0, %s278
      %s279 = sphi 0, %s276
      %s280 = sphi 0, %s279
      %s296 = sphi 0, %s280
    $region4: #{model_forward.1} parent=1 // loop_header_branch
      %40 = sbr.rel (%p38) target = $region8
    $region5: #{model_forward.1} parent=1 // loop_body
      %s42 = ssub.s32 %s37, 1
      %s43 = ssub.s32 %s37, 2
      %s44 = sadd.s32 %s37, 1
      %s45 = ssub.s32 %s37, %s44
      %p46 = scmp.eq.s32.totalorder %s45, 0
      %s48 = sadd.s32 %s47, 1
      %s49 = scalar_select %p46, %s47, %s48
      %p52 = pneg %p46
      %p53 = scmp.eq.s32.totalorder %s37, 1
      %p54 = por %p52, %p53
      %p55 = scmp.ne.s32.totalorder %s47, %s50
      %p56 = scmp.eq.s32.totalorder %s37, 0
      %p57 = por %p55, %p56
      %p58 = scmp.ne.s32.totalorder %s47, %s50
      %p59 = scmp.eq.s32.totalorder %s42, 1
      %p60 = por %p58, %p59
      %p61 = scmp.ne.s32.totalorder %s50, %s51
      %p62 = scmp.eq.s32.totalorder %s42, 0
      %p63 = por %p61, %p62
      %p64 = scmp.ne.s32.totalorder %s50, %s51
      %p65 = scmp.eq.s32.totalorder %s43, 1
      %p66 = por %p64, %p65
      %p68 = scmp.ne.s32.totalorder %s51, %s67
      %p69 = scmp.eq.s32.totalorder %s43, 0
      %p70 = por %p68, %p69
      %s71 = ssub.s32 %s37, %s44
      %p72 = scmp.eq.s32.totalorder %s71, 0
      %s74 = sadd.s32 %s73, 1
      %s75 = scalar_select %p72, %s73, %s74
      %p78 = pneg %p72
      %p79 = scmp.eq.s32.totalorder %s37, 1
      %p80 = por %p78, %p79
      %p81 = scmp.ne.s32.totalorder %s73, %s76
      %p82 = scmp.eq.s32.totalorder %s37, 0
      %p83 = por %p81, %p82
      %p84 = scmp.ne.s32.totalorder %s73, %s76
      %p85 = scmp.eq.s32.totalorder %s42, 1
      %p86 = por %p84, %p85
      %p87 = scmp.ne.s32.totalorder %s76, %s77
      %p88 = scmp.eq.s32.totalorder %s42, 0
      %p89 = por %p87, %p88
      %p90 = scmp.ne.s32.totalorder %s76, %s77
      %p91 = scmp.eq.s32.totalorder %s43, 1
      %p92 = por %p90, %p91
      %p94 = scmp.ne.s32.totalorder %s77, %s93
      %p95 = scmp.eq.s32.totalorder %s43, 0
      %p96 = por %p94, %p95
      %s97 = ssub.s32 %s37, %s44
      %p98 = scmp.eq.s32.totalorder %s97, 0
      %s100 = sadd.s32 %s99, 1
      %s101 = scalar_select %p98, %s99, %s100
      %p104 = pneg %p98
      %p105 = scmp.eq.s32.totalorder %s37, 1
      %p106 = por %p104, %p105
      %p107 = scmp.ne.s32.totalorder %s99, %s102
      %p108 = scmp.eq.s32.totalorder %s37, 0
      %p109 = por %p107, %p108
      %p110 = scmp.ne.s32.totalorder %s99, %s102
      %p111 = scmp.eq.s32.totalorder %s42, 1
      %p112 = por %p110, %p111
      %p113 = scmp.ne.s32.totalorder %s102, %s103
      %p114 = scmp.eq.s32.totalorder %s42, 0
      %p115 = por %p113, %p114
      %p116 = scmp.ne.s32.totalorder %s102, %s103
      %p117 = scmp.eq.s32.totalorder %s43, 1
      %p118 = por %p116, %p117
      %p120 = scmp.ne.s32.totalorder %s103, %s119
      %p121 = scmp.eq.s32.totalorder %s43, 0
      %p122 = por %p120, %p121
      %s123 = ssub.s32 %s37, %s44
      %p124 = scmp.eq.s32.totalorder %s123, 0
      %s126 = sadd.s32 %s125, 1
      %s127 = scalar_select %p124, %s125, %s126
      %p130 = pneg %p124
      %p131 = scmp.eq.s32.totalorder %s37, 1
      %p132 = por %p130, %p131
      %p133 = scmp.ne.s32.totalorder %s125, %s128
      %p134 = scmp.eq.s32.totalorder %s37, 0
      %p135 = por %p133, %p134
      %p136 = scmp.ne.s32.totalorder %s125, %s128
      %p137 = scmp.eq.s32.totalorder %s42, 1
      %p138 = por %p136, %p137
      %p139 = scmp.ne.s32.totalorder %s128, %s129
      %p140 = scmp.eq.s32.totalorder %s42, 0
      %p141 = por %p139, %p140
      %p142 = scmp.ne.s32.totalorder %s128, %s129
      %p143 = scmp.eq.s32.totalorder %s43, 1
      %p144 = por %p142, %p143
      %p146 = scmp.ne.s32.totalorder %s129, %s145
      %p147 = scmp.eq.s32.totalorder %s43, 0
      %p148 = por %p146, %p147
      %s149 = ssub.s32 %s37, %s44
      %p150 = scmp.eq.s32.totalorder %s149, 0
      %s152 = sadd.s32 %s151, 1
      %s153 = scalar_select %p150, %s151, %s152
      %p156 = pneg %p150
      %p157 = scmp.eq.s32.totalorder %s37, 1
      %p158 = por %p156, %p157
      %p159 = scmp.ne.s32.totalorder %s151, %s154
      %p160 = scmp.eq.s32.totalorder %s37, 0
      %p161 = por %p159, %p160
      %p162 = scmp.ne.s32.totalorder %s151, %s154
      %p163 = scmp.eq.s32.totalorder %s42, 1
      %p164 = por %p162, %p163
      %p165 = scmp.ne.s32.totalorder %s154, %s155
      %p166 = scmp.eq.s32.totalorder %s42, 0
      %p167 = por %p165, %p166
      %p168 = scmp.ne.s32.totalorder %s154, %s155
      %p169 = scmp.eq.s32.totalorder %s43, 1
      %p170 = por %p168, %p169
      %p172 = scmp.ne.s32.totalorder %s155, %s171
      %p173 = scmp.eq.s32.totalorder %s43, 0
      %p174 = por %p172, %p173
      %s175 = ssub.s32 %s37, %s44
      %p176 = scmp.eq.s32.totalorder %s175, 0
      %s178 = sadd.s32 %s177, 1
      %s179 = scalar_select %p176, %s177, %s178
      %p182 = pneg %p176
      %p183 = scmp.eq.s32.totalorder %s37, 1
      %p184 = por %p182, %p183
      %p185 = scmp.ne.s32.totalorder %s177, %s180
      %p186 = scmp.eq.s32.totalorder %s37, 0
      %p187 = por %p185, %p186
      %p188 = scmp.ne.s32.totalorder %s177, %s180
      %p189 = scmp.eq.s32.totalorder %s42, 1
      %p190 = por %p188, %p189
      %p191 = scmp.ne.s32.totalorder %s180, %s181
      %p192 = scmp.eq.s32.totalorder %s42, 0
      %p193 = por %p191, %p192
      %p194 = scmp.ne.s32.totalorder %s180, %s181
      %p195 = scmp.eq.s32.totalorder %s43, 1
      %p196 = por %p194, %p195
      %p198 = scmp.ne.s32.totalorder %s181, %s197
      %p199 = scmp.eq.s32.totalorder %s43, 0
      %p200 = por %p198, %p199
      %s201 = ssub.s32 %s37, %s44
      %p202 = scmp.eq.s32.totalorder %s201, 0
      %s204 = sadd.s32 %s203, 1
      %s205 = scalar_select %p202, %s203, %s204
      %p208 = pneg %p202
      %p209 = scmp.eq.s32.totalorder %s37, 1
      %p210 = por %p208, %p209
      %p211 = scmp.ne.s32.totalorder %s203, %s206
      %p212 = scmp.eq.s32.totalorder %s37, 0
      %p213 = por %p211, %p212
      %p214 = scmp.ne.s32.totalorder %s203, %s206
      %p215 = scmp.eq.s32.totalorder %s42, 1
      %p216 = por %p214, %p215
      %p217 = scmp.ne.s32.totalorder %s206, %s207
      %p218 = scmp.eq.s32.totalorder %s42, 0
      %p219 = por %p217, %p218
      %p220 = scmp.ne.s32.totalorder %s206, %s207
      %p221 = scmp.eq.s32.totalorder %s43, 1
      %p222 = por %p220, %p221
      %p224 = scmp.ne.s32.totalorder %s207, %s223
      %p225 = scmp.eq.s32.totalorder %s43, 0
      %p226 = por %p224, %p225
      %s227 = ssub.s32 %s37, %s44
      %p228 = scmp.eq.s32.totalorder %s227, 0
      %s230 = sadd.s32 %s229, 1
      %s231 = scalar_select %p228, %s229, %s230
      %p234 = pneg %p228
      %p235 = scmp.eq.s32.totalorder %s37, 1
      %p236 = por %p234, %p235
      %p237 = scmp.ne.s32.totalorder %s229, %s232
      %p238 = scmp.eq.s32.totalorder %s37, 0
      %p239 = por %p237, %p238
      %p240 = scmp.ne.s32.totalorder %s229, %s232
      %p241 = scmp.eq.s32.totalorder %s42, 1
      %p242 = por %p240, %p241
      %p243 = scmp.ne.s32.totalorder %s232, %s233
      %p244 = scmp.eq.s32.totalorder %s42, 0
      %p245 = por %p243, %p244
      %p246 = scmp.ne.s32.totalorder %s232, %s233
      %p247 = scmp.eq.s32.totalorder %s43, 1
      %p248 = por %p246, %p247
      %p250 = scmp.ne.s32.totalorder %s233, %s249
      %p251 = scmp.eq.s32.totalorder %s43, 0
      %p252 = por %p250, %p251
      %s254 = sadd.s32 %s253, 1
      %p257 = scmp.eq.s32.totalorder %s37, 1
      %p258 = scmp.ne.s32.totalorder %s253, %s255
      %p259 = scmp.eq.s32.totalorder %s37, 0
      %p260 = por %p258, %p259
      %p261 = scmp.ne.s32.totalorder %s253, %s255
      %p262 = scmp.eq.s32.totalorder %s42, 1
      %p263 = por %p261, %p262
      %p264 = scmp.ne.s32.totalorder %s255, %s256
      %p265 = scmp.eq.s32.totalorder %s42, 0
      %p266 = por %p264, %p265
      %p267 = scmp.ne.s32.totalorder %s255, %s256
      %p268 = scmp.eq.s32.totalorder %s43, 1
      %p269 = por %p267, %p268
      %p271 = scmp.ne.s32.totalorder %s256, %s270
      %p272 = scmp.eq.s32.totalorder %s43, 0
      %p273 = por %p271, %p272
      %s274 = ssub.s32 %s37, %s44
      %p275 = scmp.eq.s32.totalorder %s274, 0
      %s277 = sadd.s32 %s276, 1
      %s278 = scalar_select %p275, %s276, %s277
      %p281 = pneg %p275
      %p282 = scmp.eq.s32.totalorder %s37, 1
      %p283 = por %p281, %p282
      %p284 = scmp.ne.s32.totalorder %s276, %s279
      %p285 = scmp.eq.s32.totalorder %s37, 0
      %p286 = por %p284, %p285
      %p287 = scmp.ne.s32.totalorder %s276, %s279
      %p288 = scmp.eq.s32.totalorder %s42, 1
      %p289 = por %p287, %p288
      %p290 = scmp.ne.s32.totalorder %s279, %s280
      %p291 = scmp.eq.s32.totalorder %s42, 0
      %p292 = por %p290, %p291
      %p293 = scmp.ne.s32.totalorder %s279, %s280
      %p294 = scmp.eq.s32.totalorder %s43, 1
      %p295 = por %p293, %p294
      %p297 = scmp.ne.s32.totalorder %s280, %s296
      %p298 = scmp.eq.s32.totalorder %s43, 0
      %p299 = por %p297, %p298
      %p300 = scmp.le.s32.totalorder 1, %s37
      %p301 = scmp.lt.s32.totalorder %s37, 3
      %p302 = pnand %p300, %p301
      %p303 = pneg %p302
      // Predicated region
      $region9: #{model_forward.1} parent=5 // pred_check
        _
      $region10: #{model_forward.1} parent=5 // pred_check_branch
        %305 = sbr.rel (%p302) target = $region12
      $region11: #{model_forward.1} parent=5 // pred_region
        %s306 = ssub.s32 %s37, 1
        // Predicated region
        $region13: #{model_forward.1} parent=11 // pred_check
          %p307 = pneg %p266
        $region14: #{model_forward.1} parent=11 // pred_check_branch
          %309 = sbr.rel (%p307) target = $region16
        $region15: #{model_forward.1} parent=11 // pred_region
          %311 = vsyncadd [#allocation16], 0
          %s312 = sshll.u32 %s9, 4
          %s313 = int_to_ptr.hbm [resolvable:$true] %s312
          %s314 = sshll.u32 [#allocation15], 4
          %s315 = int_to_ptr.vmem [resolvable:$true] %s314
          %320 = dma.hbm_to_vmem [thread:$0]  %s313, 8192, %s315, [#allocation16], 256, 256, 16
        $region16: #{model_forward.1} parent=11 // pred_fallthru
          _
      $region12: #{model_forward.1} parent=5 // pred_fallthru
        _
      %p321 = scmp.lt.s32.totalorder %s37, 2
      // Predicated region
      $region17: #{model_forward.1} parent=5 // pred_check
        %p322 = pneg %p321
      $region18: #{model_forward.1} parent=5 // pred_check_branch
        %324 = sbr.rel (%p322) target = $region20
      $region19: #{model_forward.1} parent=5 // pred_region
        // Predicated region
        $region21: #{model_forward.1} parent=19 // pred_check
          %p325 = pneg %p57
        $region22: #{model_forward.1} parent=19 // pred_check_branch
          %327 = sbr.rel (%p325) target = $region24
        $region23: #{model_forward.1} parent=19 // pred_region
          %p328 = scmp.lt.s32.totalorder %s37, 1
          %s329 = scalar_select %p328, %s37, 1
          %s330 = smul.addr %s329, 4
          %s331 = smul.addr %s330, 8
          %s332 = scalar_lea.vmem %s1, %s331
        $region24: #{model_forward.1} parent=19 // pred_fallthru
          _
        // Predicated region
        $region25: #{model_forward.1} parent=19 // pred_check
          %p333 = pneg %p83
        $region26: #{model_forward.1} parent=19 // pred_check_branch
          %335 = sbr.rel (%p333) target = $region28
        $region27: #{model_forward.1} parent=19 // pred_region
          %s336 = sand.u32 %s73, 1
          %s337 = scalar_lea.sflag [#allocation5], %s336
          %s338 = sand.u32 %s73, 1
          %s339 = smul.addr %s338, 3072
          %s340 = scalar_lea.vmem [#allocation4], %s339
          %342 = vsyncadd %s337, 0
          %s343 = smul.addr %s37, 384
          %s344 = smul.addr %s343, 8
          %s345 = scalar_lea.hbm %s2, %s344
          %s346 = sshll.u32 %s345, 4
          %s347 = int_to_ptr.hbm [resolvable:$true] %s346
          %s348 = sshll.u32 %s340, 4
          %s349 = int_to_ptr.vmem [resolvable:$true] %s348
          %354 = dma.hbm_to_vmem [thread:$0]  %s347, 49152, %s349, %s337, 1536, 1536, 96
        $region28: #{model_forward.1} parent=19 // pred_fallthru
          _
        // Predicated region
        $region29: #{model_forward.1} parent=19 // pred_check
          %p355 = pneg %p109
        $region30: #{model_forward.1} parent=19 // pred_check_branch
          %357 = sbr.rel (%p355) target = $region32
        $region31: #{model_forward.1} parent=19 // pred_region
          %s358 = sand.u32 %s37, 1
          %s359 = scalar_lea.sflag [#allocation7], %s358
          %s360 = sand.u32 %s99, 1
          %s361 = smul.addr %s360, 12
          %s362 = scalar_lea.vmem [#allocation6], %s361
          %364 = vsyncadd %s359, 0
          %s365 = smul.addr %s37, 12
          %s366 = scalar_lea.hbm %s3, %s365
          %s368 = sshll.u32 %s366, 4
          %s369 = int_to_ptr.hbm [resolvable:$true] %s368
          %s370 = sshll.u32 %s362, 4
          %s371 = int_to_ptr.vmem [resolvable:$true] %s370
          %373 = dma.hbm_to_vmem [thread:$0]  %s369, 192, %s371, %s359
        $region32: #{model_forward.1} parent=19 // pred_fallthru
          _
        // Predicated region
        $region33: #{model_forward.1} parent=19 // pred_check
          %p374 = pneg %p135
        $region34: #{model_forward.1} parent=19 // pred_check_branch
          %376 = sbr.rel (%p374) target = $region36
        $region35: #{model_forward.1} parent=19 // pred_region
          %s377 = sand.u32 %s37, 1
          %s378 = scalar_lea.sflag [#allocation7], %s377
          %s379 = sand.u32 %s125, 1
          %s380 = smul.addr %s379, 1024
          %s381 = scalar_lea.vmem [#allocation8], %s380
          %383 = vsyncadd %s378, 0
          %s384 = smul.addr %s37, 128
          %s385 = smul.addr %s384, 8
          %s386 = scalar_lea.hbm %s4, %s385
          %s387 = sshll.u32 %s386, 4
          %s388 = int_to_ptr.hbm [resolvable:$true] %s387
          %s389 = sshll.u32 %s381, 4
          %s390 = int_to_ptr.vmem [resolvable:$true] %s389
          %395 = dma.hbm_to_vmem [thread:$0]  %s388, 16384, %s390, %s378, 256, 256, 16
        $region36: #{model_forward.1} parent=19 // pred_fallthru
          _
        // Predicated region
        $region37: #{model_forward.1} parent=19 // pred_check
          %p396 = pneg %p161
        $region38: #{model_forward.1} parent=19 // pred_check_branch
          %398 = sbr.rel (%p396) target = $region40
        $region39: #{model_forward.1} parent=19 // pred_region
          %s399 = sand.u32 %s37, 1
          %s400 = scalar_lea.sflag [#allocation10], %s399
          %s401 = sand.u32 %s151, 1
          %s402 = smul.addr %s401, 2
          %s403 = scalar_lea.vmem [#allocation9], %s402
          %405 = vsyncadd %s400, 0
          %s406 = smul.addr %s37, 2
          %s407 = scalar_lea.hbm %s5, %s406
          %s409 = sshll.u32 %s407, 4
          %s410 = int_to_ptr.hbm [resolvable:$true] %s409
          %s411 = sshll.u32 %s403, 4
          %s412 = int_to_ptr.vmem [resolvable:$true] %s411
          %414 = dma.hbm_to_vmem [thread:$0]  %s410, 32, %s412, %s400
        $region40: #{model_forward.1} parent=19 // pred_fallthru
          _
        // Predicated region
        $region41: #{model_forward.1} parent=19 // pred_check
          %p415 = pneg %p187
        $region42: #{model_forward.1} parent=19 // pred_check_branch
          %417 = sbr.rel (%p415) target = $region44
        $region43: #{model_forward.1} parent=19 // pred_region
          %s418 = sand.u32 %s37, 1
          %s419 = scalar_lea.sflag [#allocation10], %s418
          %s420 = sand.u32 %s177, 1
          %s421 = smul.addr %s420, 2
          %s422 = scalar_lea.vmem [#allocation11], %s421
          %424 = vsyncadd %s419, 0
          %s425 = smul.addr %s37, 2
          %s426 = scalar_lea.hbm %s6, %s425
          %s428 = sshll.u32 %s426, 4
          %s429 = int_to_ptr.hbm [resolvable:$true] %s428
          %s430 = sshll.u32 %s422, 4
          %s431 = int_to_ptr.vmem [resolvable:$true] %s430
          %433 = dma.hbm_to_vmem [thread:$0]  %s429, 32, %s431, %s419
        $region44: #{model_forward.1} parent=19 // pred_fallthru
          _
        // Predicated region
        $region45: #{model_forward.1} parent=19 // pred_check
          %p434 = pneg %p213
        $region46: #{model_forward.1} parent=19 // pred_check_branch
          %436 = sbr.rel (%p434) target = $region48
        $region47: #{model_forward.1} parent=19 // pred_region
          %s437 = sand.u32 %s37, 1
          %s438 = scalar_lea.sflag [#allocation13], %s437
          %s439 = sand.u32 %s203, 1
          %s440 = smul.addr %s439, 2
          %s441 = scalar_lea.vmem [#allocation12], %s440
          %443 = vsyncadd %s438, 0
          %s444 = smul.addr %s37, 2
          %s445 = scalar_lea.hbm %s7, %s444
          %s447 = sshll.u32 %s445, 4
          %s448 = int_to_ptr.hbm [resolvable:$true] %s447
          %s449 = sshll.u32 %s441, 4
          %s450 = int_to_ptr.vmem [resolvable:$true] %s449
          %452 = dma.hbm_to_vmem [thread:$0]  %s448, 32, %s450, %s438
        $region48: #{model_forward.1} parent=19 // pred_fallthru
          _
        // Predicated region
        $region49: #{model_forward.1} parent=19 // pred_check
          %p453 = pneg %p239
        $region50: #{model_forward.1} parent=19 // pred_check_branch
          %455 = sbr.rel (%p453) target = $region52
        $region51: #{model_forward.1} parent=19 // pred_region
          %s456 = sand.u32 %s37, 1
          %s457 = scalar_lea.sflag [#allocation13], %s456
          %s458 = sand.u32 %s229, 1
          %s459 = smul.addr %s458, 2
          %s460 = scalar_lea.vmem [#allocation14], %s459
          %462 = vsyncadd %s457, 0
          %s463 = smul.addr %s37, 2
          %s464 = scalar_lea.hbm %s8, %s463
          %s466 = sshll.u32 %s464, 4
          %s467 = int_to_ptr.hbm [resolvable:$true] %s466
          %s468 = sshll.u32 %s460, 4
          %s469 = int_to_ptr.vmem [resolvable:$true] %s468
          %471 = dma.hbm_to_vmem [thread:$0]  %s467, 32, %s469, %s457
        $region52: #{model_forward.1} parent=19 // pred_fallthru
          _
      $region20: #{model_forward.1} parent=5 // pred_fallthru
        _
      %p472 = scmp.le.s32.totalorder 1, %s37
      %p473 = scmp.lt.s32.totalorder %s37, 3
      %p474 = pnand %p472, %p473
      %p475 = pneg %p474
      // Predicated region
      $region53: #{model_forward.1} parent=5 // pred_check
        _
      $region54: #{model_forward.1} parent=5 // pred_check_branch
        %477 = sbr.rel (%p474) target = $region56
      $region55: #{model_forward.1} parent=5 // pred_region
        %s478 = ssub.s32 %s37, 1
        %s479 = sand.u32 %s76, 1
        %s480 = scalar_lea.sflag [#allocation5], %s479
        %s481 = sand.u32 %s76, 1
        %s482 = smul.addr %s481, 3072
        %s483 = scalar_lea.vmem [#allocation4], %s482
        // Predicated region
        $region57: #{model_forward.1} parent=55 // pred_check
          %p484 = pneg %p89
        $region58: #{model_forward.1} parent=55 // pred_check_branch
          %486 = sbr.rel (%p484) target = $region60
        $region59: #{model_forward.1} parent=55 // pred_region
          %488 = dma.done %s480, 49152
        $region60: #{model_forward.1} parent=55 // pred_fallthru
          _
        %s489 = sand.u32 %s42, 1
        %s490 = scalar_lea.sflag [#allocation7], %s489
        %s491 = sand.u32 %s102, 1
        %s492 = smul.addr %s491, 12
        %s493 = scalar_lea.vmem [#allocation6], %s492
        // Predicated region
        $region61: #{model_forward.1} parent=55 // pred_check
          %p494 = pneg %p115
        $region62: #{model_forward.1} parent=55 // pred_check_branch
          %496 = sbr.rel (%p494) target = $region64
        $region63: #{model_forward.1} parent=55 // pred_region
          %498 = dma.done %s490, 192
        $region64: #{model_forward.1} parent=55 // pred_fallthru
          _
        %s499 = sand.u32 %s42, 1
        %s500 = scalar_lea.sflag [#allocation7], %s499
        %s501 = sand.u32 %s128, 1
        %s502 = smul.addr %s501, 1024
        %s503 = scalar_lea.vmem [#allocation8], %s502
        // Predicated region
        $region65: #{model_forward.1} parent=55 // pred_check
          %p504 = pneg %p141
        $region66: #{model_forward.1} parent=55 // pred_check_branch
          %506 = sbr.rel (%p504) target = $region68
        $region67: #{model_forward.1} parent=55 // pred_region
          %508 = dma.done %s500, 16384
        $region68: #{model_forward.1} parent=55 // pred_fallthru
          _
        %s509 = sand.u32 %s42, 1
        %s510 = scalar_lea.sflag [#allocation10], %s509
        %s511 = sand.u32 %s154, 1
        %s512 = smul.addr %s511, 2
        %s513 = scalar_lea.vmem [#allocation9], %s512
        // Predicated region
        $region69: #{model_forward.1} parent=55 // pred_check
          %p514 = pneg %p167
        $region70: #{model_forward.1} parent=55 // pred_check_branch
          %516 = sbr.rel (%p514) target = $region72
        $region71: #{model_forward.1} parent=55 // pred_region
          %518 = dma.done %s510, 32
        $region72: #{model_forward.1} parent=55 // pred_fallthru
          _
        %s519 = sand.u32 %s42, 1
        %s520 = scalar_lea.sflag [#allocation10], %s519
        %s521 = sand.u32 %s180, 1
        %s522 = smul.addr %s521, 2
        %s523 = scalar_lea.vmem [#allocation11], %s522
        // Predicated region
        $region73: #{model_forward.1} parent=55 // pred_check
          %p524 = pneg %p193
        $region74: #{model_forward.1} parent=55 // pred_check_branch
          %526 = sbr.rel (%p524) target = $region76
        $region75: #{model_forward.1} parent=55 // pred_region
          %528 = dma.done %s520, 32
        $region76: #{model_forward.1} parent=55 // pred_fallthru
          _
        %s529 = sand.u32 %s42, 1
        %s530 = scalar_lea.sflag [#allocation13], %s529
        %s531 = sand.u32 %s206, 1
        %s532 = smul.addr %s531, 2
        %s533 = scalar_lea.vmem [#allocation12], %s532
        // Predicated region
        $region77: #{model_forward.1} parent=55 // pred_check
          %p534 = pneg %p219
        $region78: #{model_forward.1} parent=55 // pred_check_branch
          %536 = sbr.rel (%p534) target = $region80
        $region79: #{model_forward.1} parent=55 // pred_region
          %538 = dma.done %s530, 32
        $region80: #{model_forward.1} parent=55 // pred_fallthru
          _
        %s539 = sand.u32 %s42, 1
        %s540 = scalar_lea.sflag [#allocation13], %s539
        %s541 = sand.u32 %s232, 1
        %s542 = smul.addr %s541, 2
        %s543 = scalar_lea.vmem [#allocation14], %s542
        // Predicated region
        $region81: #{model_forward.1} parent=55 // pred_check
          %p544 = pneg %p245
        $region82: #{model_forward.1} parent=55 // pred_check_branch
          %546 = sbr.rel (%p544) target = $region84
        $region83: #{model_forward.1} parent=55 // pred_region
          %548 = dma.done %s540, 32
        $region84: #{model_forward.1} parent=55 // pred_fallthru
          _
        // Predicated region
        $region85: #{model_forward.1} parent=55 // pred_check
          %p549 = pneg %p266
        $region86: #{model_forward.1} parent=55 // pred_check_branch
          %551 = sbr.rel (%p549) target = $region88
        $region87: #{model_forward.1} parent=55 // pred_region
          %553 = dma.done [#allocation16], 8192
        $region88: #{model_forward.1} parent=55 // pred_fallthru
          _
        %p554 = scmp.lt.s32.totalorder %s42, 1
        %s555 = scalar_select %p554, %s42, 1
        %s556 = smul.addr %s555, 4
        %s557 = smul.addr %s556, 8
        %s558 = scalar_lea.vmem %s1, %s557
        %p559 = pneg %p63
        %p560 = pneg %p60
        %s561 = sand.u32 %s76, 1
        %s562 = scalar_lea.sflag [#allocation5], %s561
        %s563 = sand.u32 %s76, 1
        %s564 = smul.addr %s563, 3072
        %s565 = scalar_lea.vmem [#allocation4], %s564
        %p566 = pneg %p89
        %p567 = pneg %p86
        %s568 = sand.u32 %s42, 1
        %s569 = scalar_lea.sflag [#allocation7], %s568
        %s570 = sand.u32 %s102, 1
        %s571 = smul.addr %s570, 12
        %s572 = scalar_lea.vmem [#allocation6], %s571
        %p573 = pneg %p115
        %p574 = pneg %p112
        %s575 = sand.u32 %s42, 1
        %s576 = scalar_lea.sflag [#allocation7], %s575
        %s577 = sand.u32 %s128, 1
        %s578 = smul.addr %s577, 1024
        %s579 = scalar_lea.vmem [#allocation8], %s578
        %p580 = pneg %p141
        %p581 = pneg %p138
        %s582 = sand.u32 %s42, 1
        %s583 = scalar_lea.sflag [#allocation10], %s582
        %s584 = sand.u32 %s154, 1
        %s585 = smul.addr %s584, 2
        %s586 = scalar_lea.vmem [#allocation9], %s585
        %p587 = pneg %p167
        %p588 = pneg %p164
        %s589 = sand.u32 %s42, 1
        %s590 = scalar_lea.sflag [#allocation10], %s589
        %s591 = sand.u32 %s180, 1
        %s592 = smul.addr %s591, 2
        %s593 = scalar_lea.vmem [#allocation11], %s592
        %p594 = pneg %p193
        %p595 = pneg %p190
        %s596 = sand.u32 %s42, 1
        %s597 = scalar_lea.sflag [#allocation13], %s596
        %s598 = sand.u32 %s206, 1
        %s599 = smul.addr %s598, 2
        %s600 = scalar_lea.vmem [#allocation12], %s599
        %p601 = pneg %p219
        %p602 = pneg %p216
        %s603 = sand.u32 %s42, 1
        %s604 = scalar_lea.sflag [#allocation13], %s603
        %s605 = sand.u32 %s232, 1
        %s606 = smul.addr %s605, 2
        %s607 = scalar_lea.vmem [#allocation14], %s606
        %p608 = pneg %p245
        %p609 = pneg %p242
        %p610 = pneg %p266
        %p611 = pneg %p263
        %p612 = pneg %p292
        %p613 = pneg %p289
        %p614 = scmp.lt.s32.totalorder %s42, 1
        %s615 = scalar_select %p614, %s42, 1
        %s616 = smul.addr %s615, 4
        %s617 = smul.addr %s616, 8
        %s618 = scalar_lea.vmem %s10, %s617
        %p619 = scmp.lt.s32.totalorder %s42, 1
        %s620 = scalar_select %p619, %s42, 1
        %s621 = smul.addr %s620, 4
        %s622 = smul.addr %s621, 8
        %s623 = scalar_lea.vmem %s1, %s622
        %p624 = scmp.lt.s32.totalorder %s42, 1
        %s625 = scalar_select %p624, %s42, 1
        %s626 = smul.addr %s625, 4
        %s627 = smul.addr %s626, 8
        %s628 = scalar_lea.vmem %s10, %s627
        %v629 = vld [vmem:[%s623] sm:$0xff]
        %v630 = vld [vmem:[%s623 + $0x8] sm:$0xff]
        %v631 = vld [vmem:[%s623 + $0x10] sm:$0xff]
        %v632 = vld [vmem:[%s623 + $0x18] sm:$0xff]
        %s633 = sld [smem:[#allocation3 + %s42]]
        %s634 = scvt.s32.f32 %s633
        %v635 = vstv %s634
        %v636 = vrcp.pop %v635
        %v637 = vmul.f32 %v635, %v636
        %v638 = vsub.f32 1.0, %v637
        %v639 = vmul.f32 %v636, %v638
        %v640 = vadd.f32 %v636, %v639
        %vm641 = vweird.f32 %v635
        %vm642 = vweird.f32 %v636
        %vm643 = vmor %vm641, %vm642
        %v644 = vsel %vm643, %v636, %v640
        %v645 = vand.u32 2147483647, %v635
        %vm646 = vcmp.eq.f32.partialorder %v645, 8.507059e+37
        %v647 = vand.u32 %v635, 2147483648
        %v648 = vor.u32 1.1754944e-38, %v647
        %v649 = vsel %vm646, %v648, %v644
        %s650 = vtos %v649
        %v651 = vld [vmem:[%s483] sm:$0xff]
        %v652 = vld [vmem:[%s483 + $0x8] sm:$0xff]
        %v653 = vld [vmem:[%s483 + $0x10] sm:$0xff]
        %v654 = vld [vmem:[%s483 + $0x18] sm:$0xff]
        %v655 = vld [vmem:[%s483 + $0x20] sm:$0xff]
        %v656 = vld [vmem:[%s483 + $0x28] sm:$0xff]
        %v657 = vld [vmem:[%s483 + $0x30] sm:$0xff]
        %v658 = vld [vmem:[%s483 + $0x38] sm:$0xff]
        %v659 = vld [vmem:[%s483 + $0x40] sm:$0xff]
        %v660 = vld [vmem:[%s483 + $0x48] sm:$0xff]
        %v661 = vld [vmem:[%s483 + $0x50] sm:$0xff]
        %v662 = vld [vmem:[%s483 + $0x58] sm:$0xff]
        %v663 = vld [vmem:[%s483 + $0x60] sm:$0xff]
        %v664 = vld [vmem:[%s483 + $0x68] sm:$0xff]
        %v665 = vld [vmem:[%s483 + $0x70] sm:$0xff]
        %v666 = vld [vmem:[%s483 + $0x78] sm:$0xff]
        %v667 = vld [vmem:[%s483 + $0x80] sm:$0xff]
        %v668 = vld [vmem:[%s483 + $0x88] sm:$0xff]
        %v669 = vld [vmem:[%s483 + $0x90] sm:$0xff]
        %v670 = vld [vmem:[%s483 + $0x98] sm:$0xff]
        %v671 = vld [vmem:[%s483 + $0xa0] sm:$0xff]
        %v672 = vld [vmem:[%s483 + $0xa8] sm:$0xff]
        %v673 = vld [vmem:[%s483 + $0xb0] sm:$0xff]
        %v674 = vld [vmem:[%s483 + $0xb8] sm:$0xff]
        %v675 = vld [vmem:[%s483 + $0xc0] sm:$0xff]
        %v676 = vld [vmem:[%s483 + $0xc8] sm:$0xff]
        %v677 = vld [vmem:[%s483 + $0xd0] sm:$0xff]
        %v678 = vld [vmem:[%s483 + $0xd8] sm:$0xff]
        %v679 = vld [vmem:[%s483 + $0xe0] sm:$0xff]
        %v680 = vld [vmem:[%s483 + $0xe8] sm:$0xff]
        %v681 = vld [vmem:[%s483 + $0xf0] sm:$0xff]
        %v682 = vld [vmem:[%s483 + $0xf8] sm:$0xff]
        %v683 = vld [vmem:[%s483 + $0x100] sm:$0xff]
        %v684 = vld [vmem:[%s483 + $0x108] sm:$0xff]
        %v685 = vld [vmem:[%s483 + $0x110] sm:$0xff]
        %v686 = vld [vmem:[%s483 + $0x118] sm:$0xff]
        %v687 = vld [vmem:[%s483 + $0x120] sm:$0xff]
        %v688 = vld [vmem:[%s483 + $0x128] sm:$0xff]
        %v689 = vld [vmem:[%s483 + $0x130] sm:$0xff]
        %v690 = vld [vmem:[%s483 + $0x138] sm:$0xff]
        %v691 = vld [vmem:[%s483 + $0x140] sm:$0xff]
        %v692 = vld [vmem:[%s483 + $0x148] sm:$0xff]
        %v693 = vld [vmem:[%s483 + $0x150] sm:$0xff]
        %v694 = vld [vmem:[%s483 + $0x158] sm:$0xff]
        %v695 = vld [vmem:[%s483 + $0x160] sm:$0xff]
        %v696 = vld [vmem:[%s483 + $0x168] sm:$0xff]
        %v697 = vld [vmem:[%s483 + $0x170] sm:$0xff]
        %v698 = vld [vmem:[%s483 + $0x178] sm:$0xff]
        %v699 = vld [vmem:[%s483 + $0x180] sm:$0xff]
        %v700 = vld [vmem:[%s483 + $0x188] sm:$0xff]
        %v701 = vld [vmem:[%s483 + $0x190] sm:$0xff]
        %v702 = vld [vmem:[%s483 + $0x198] sm:$0xff]
        %v703 = vld [vmem:[%s483 + $0x1a0] sm:$0xff]
        %v704 = vld [vmem:[%s483 + $0x1a8] sm:$0xff]
        %v705 = vld [vmem:[%s483 + $0x1b0] sm:$0xff]
        %v706 = vld [vmem:[%s483 + $0x1b8] sm:$0xff]
        %v707 = vld [vmem:[%s483 + $0x1c0] sm:$0xff]
        %v708 = vld [vmem:[%s483 + $0x1c8] sm:$0xff]
        %v709 = vld [vmem:[%s483 + $0x1d0] sm:$0xff]
        %v710 = vld [vmem:[%s483 + $0x1d8] sm:$0xff]
        %v711 = vld [vmem:[%s483 + $0x1e0] sm:$0xff]
        %v712 = vld [vmem:[%s483 + $0x1e8] sm:$0xff]
        %v713 = vld [vmem:[%s483 + $0x1f0] sm:$0xff]
        %v714 = vld [vmem:[%s483 + $0x1f8] sm:$0xff]
        %v715 = vld [vmem:[%s483 + $0x200] sm:$0xff]
        %v716 = vld [vmem:[%s483 + $0x208] sm:$0xff]
        %v717 = vld [vmem:[%s483 + $0x210] sm:$0xff]
        %v718 = vld [vmem:[%s483 + $0x218] sm:$0xff]
        %v719 = vld [vmem:[%s483 + $0x220] sm:$0xff]
        %v720 = vld [vmem:[%s483 + $0x228] sm:$0xff]
        %v721 = vld [vmem:[%s483 + $0x230] sm:$0xff]
        %v722 = vld [vmem:[%s483 + $0x238] sm:$0xff]
        %v723 = vld [vmem:[%s483 + $0x240] sm:$0xff]
        %v724 = vld [vmem:[%s483 + $0x248] sm:$0xff]
        %v725 = vld [vmem:[%s483 + $0x250] sm:$0xff]
        %v726 = vld [vmem:[%s483 + $0x258] sm:$0xff]
        %v727 = vld [vmem:[%s483 + $0x260] sm:$0xff]
        %v728 = vld [vmem:[%s483 + $0x268] sm:$0xff]
        %v729 = vld [vmem:[%s483 + $0x270] sm:$0xff]
        %v730 = vld [vmem:[%s483 + $0x278] sm:$0xff]
        %v731 = vld [vmem:[%s483 + $0x280] sm:$0xff]
        %v732 = vld [vmem:[%s483 + $0x288] sm:$0xff]
        %v733 = vld [vmem:[%s483 + $0x290] sm:$0xff]
        %v734 = vld [vmem:[%s483 + $0x298] sm:$0xff]
        %v735 = vld [vmem:[%s483 + $0x2a0] sm:$0xff]
        %v736 = vld [vmem:[%s483 + $0x2a8] sm:$0xff]
        %v737 = vld [vmem:[%s483 + $0x2b0] sm:$0xff]
        %v738 = vld [vmem:[%s483 + $0x2b8] sm:$0xff]
        %v739 = vld [vmem:[%s483 + $0x2c0] sm:$0xff]
        %v740 = vld [vmem:[%s483 + $0x2c8] sm:$0xff]
        %v741 = vld [vmem:[%s483 + $0x2d0] sm:$0xff]
        %v742 = vld [vmem:[%s483 + $0x2d8] sm:$0xff]
        %v743 = vld [vmem:[%s483 + $0x2e0] sm:$0xff]
        %v744 = vld [vmem:[%s483 + $0x2e8] sm:$0xff]
        %v745 = vld [vmem:[%s483 + $0x2f0] sm:$0xff]
        %v746 = vld [vmem:[%s483 + $0x2f8] sm:$0xff]
        %v747 = vld [vmem:[%s483 + $0x300] sm:$0xff]
        %v748 = vld [vmem:[%s483 + $0x308] sm:$0xff]
        %v749 = vld [vmem:[%s483 + $0x310] sm:$0xff]
        %v750 = vld [vmem:[%s483 + $0x318] sm:$0xff]
        %v751 = vld [vmem:[%s483 + $0x320] sm:$0xff]
        %v752 = vld [vmem:[%s483 + $0x328] sm:$0xff]
        %v753 = vld [vmem:[%s483 + $0x330] sm:$0xff]
        %v754 = vld [vmem:[%s483 + $0x338] sm:$0xff]
        %v755 = vld [vmem:[%s483 + $0x340] sm:$0xff]
        %v756 = vld [vmem:[%s483 + $0x348] sm:$0xff]
        %v757 = vld [vmem:[%s483 + $0x350] sm:$0xff]
        %v758 = vld [vmem:[%s483 + $0x358] sm:$0xff]
        %v759 = vld [vmem:[%s483 + $0x360] sm:$0xff]
        %v760 = vld [vmem:[%s483 + $0x368] sm:$0xff]
        %v761 = vld [vmem:[%s483 + $0x370] sm:$0xff]
        %v762 = vld [vmem:[%s483 + $0x378] sm:$0xff]
        %v763 = vld [vmem:[%s483 + $0x380] sm:$0xff]
        %v764 = vld [vmem:[%s483 + $0x388] sm:$0xff]
        %v765 = vld [vmem:[%s483 + $0x390] sm:$0xff]
        %v766 = vld [vmem:[%s483 + $0x398] sm:$0xff]
        %v767 = vld [vmem:[%s483 + $0x3a0] sm:$0xff]
        %v768 = vld [vmem:[%s483 + $0x3a8] sm:$0xff]
        %v769 = vld [vmem:[%s483 + $0x3b0] sm:$0xff]
        %v770 = vld [vmem:[%s483 + $0x3b8] sm:$0xff]
        %v771 = vld [vmem:[%s483 + $0x3c0] sm:$0xff]
        %v772 = vld [vmem:[%s483 + $0x3c8] sm:$0xff]
        %v773 = vld [vmem:[%s483 + $0x3d0] sm:$0xff]
        %v774 = vld [vmem:[%s483 + $0x3d8] sm:$0xff]
        %v775 = vld [vmem:[%s483 + $0x3e0] sm:$0xff]
        %v776 = vld [vmem:[%s483 + $0x3e8] sm:$0xff]
        %v777 = vld [vmem:[%s483 + $0x3f0] sm:$0xff]
        %v778 = vld [vmem:[%s483 + $0x3f8] sm:$0xff]
        %v779 = vld [vmem:[%s483 + $0x400] sm:$0xff]
        %v780 = vld [vmem:[%s483 + $0x408] sm:$0xff]
        %v781 = vld [vmem:[%s483 + $0x410] sm:$0xff]
        %v782 = vld [vmem:[%s483 + $0x418] sm:$0xff]
        %v783 = vld [vmem:[%s483 + $0x420] sm:$0xff]
        %v784 = vld [vmem:[%s483 + $0x428] sm:$0xff]
        %v785 = vld [vmem:[%s483 + $0x430] sm:$0xff]
        %v786 = vld [vmem:[%s483 + $0x438] sm:$0xff]
        %v787 = vld [vmem:[%s483 + $0x440] sm:$0xff]
        %v788 = vld [vmem:[%s483 + $0x448] sm:$0xff]
        %v789 = vld [vmem:[%s483 + $0x450] sm:$0xff]
        %v790 = vld [vmem:[%s483 + $0x458] sm:$0xff]
        %v791 = vld [vmem:[%s483 + $0x460] sm:$0xff]
        %v792 = vld [vmem:[%s483 + $0x468] sm:$0xff]
        %v793 = vld [vmem:[%s483 + $0x470] sm:$0xff]
        %v794 = vld [vmem:[%s483 + $0x478] sm:$0xff]
        %v795 = vld [vmem:[%s483 + $0x480] sm:$0xff]
        %v796 = vld [vmem:[%s483 + $0x488] sm:$0xff]
        %v797 = vld [vmem:[%s483 + $0x490] sm:$0xff]
        %v798 = vld [vmem:[%s483 + $0x498] sm:$0xff]
        %v799 = vld [vmem:[%s483 + $0x4a0] sm:$0xff]
        %v800 = vld [vmem:[%s483 + $0x4a8] sm:$0xff]
        %v801 = vld [vmem:[%s483 + $0x4b0] sm:$0xff]
        %v802 = vld [vmem:[%s483 + $0x4b8] sm:$0xff]
        %v803 = vld [vmem:[%s483 + $0x4c0] sm:$0xff]
        %v804 = vld [vmem:[%s483 + $0x4c8] sm:$0xff]
        %v805 = vld [vmem:[%s483 + $0x4d0] sm:$0xff]
        %v806 = vld [vmem:[%s483 + $0x4d8] sm:$0xff]
        %v807 = vld [vmem:[%s483 + $0x4e0] sm:$0xff]
        %v808 = vld [vmem:[%s483 + $0x4e8] sm:$0xff]
        %v809 = vld [vmem:[%s483 + $0x4f0] sm:$0xff]
        %v810 = vld [vmem:[%s483 + $0x4f8] sm:$0xff]
        %v811 = vld [vmem:[%s483 + $0x500] sm:$0xff]
        %v812 = vld [vmem:[%s483 + $0x508] sm:$0xff]
        %v813 = vld [vmem:[%s483 + $0x510] sm:$0xff]
        %v814 = vld [vmem:[%s483 + $0x518] sm:$0xff]
        %v815 = vld [vmem:[%s483 + $0x520] sm:$0xff]
        %v816 = vld [vmem:[%s483 + $0x528] sm:$0xff]
        %v817 = vld [vmem:[%s483 + $0x530] sm:$0xff]
        %v818 = vld [vmem:[%s483 + $0x538] sm:$0xff]
        %v819 = vld [vmem:[%s483 + $0x540] sm:$0xff]
        %v820 = vld [vmem:[%s483 + $0x548] sm:$0xff]
        %v821 = vld [vmem:[%s483 + $0x550] sm:$0xff]
        %v822 = vld [vmem:[%s483 + $0x558] sm:$0xff]
        %v823 = vld [vmem:[%s483 + $0x560] sm:$0xff]
        %v824 = vld [vmem:[%s483 + $0x568] sm:$0xff]
        %v825 = vld [vmem:[%s483 + $0x570] sm:$0xff]
        %v826 = vld [vmem:[%s483 + $0x578] sm:$0xff]
        %v827 = vld [vmem:[%s483 + $0x580] sm:$0xff]
        %v828 = vld [vmem:[%s483 + $0x588] sm:$0xff]
        %v829 = vld [vmem:[%s483 + $0x590] sm:$0xff]
        %v830 = vld [vmem:[%s483 + $0x598] sm:$0xff]
        %v831 = vld [vmem:[%s483 + $0x5a0] sm:$0xff]
        %v832 = vld [vmem:[%s483 + $0x5a8] sm:$0xff]
        %v833 = vld [vmem:[%s483 + $0x5b0] sm:$0xff]
        %v834 = vld [vmem:[%s483 + $0x5b8] sm:$0xff]
        %v835 = vld [vmem:[%s483 + $0x5c0] sm:$0xff]
        %v836 = vld [vmem:[%s483 + $0x5c8] sm:$0xff]
        %v837 = vld [vmem:[%s483 + $0x5d0] sm:$0xff]
        %v838 = vld [vmem:[%s483 + $0x5d8] sm:$0xff]
        %v839 = vld [vmem:[%s483 + $0x5e0] sm:$0xff]
        %v840 = vld [vmem:[%s483 + $0x5e8] sm:$0xff]
        %v841 = vld [vmem:[%s483 + $0x5f0] sm:$0xff]
        %v842 = vld [vmem:[%s483 + $0x5f8] sm:$0xff]
        %v843 = vld [vmem:[%s483 + $0x600] sm:$0xff]
        %v844 = vld [vmem:[%s483 + $0x608] sm:$0xff]
        %v845 = vld [vmem:[%s483 + $0x610] sm:$0xff]
        %v846 = vld [vmem:[%s483 + $0x618] sm:$0xff]
        %v847 = vld [vmem:[%s483 + $0x620] sm:$0xff]
        %v848 = vld [vmem:[%s483 + $0x628] sm:$0xff]
        %v849 = vld [vmem:[%s483 + $0x630] sm:$0xff]
        %v850 = vld [vmem:[%s483 + $0x638] sm:$0xff]
        %v851 = vld [vmem:[%s483 + $0x640] sm:$0xff]
        %v852 = vld [vmem:[%s483 + $0x648] sm:$0xff]
        %v853 = vld [vmem:[%s483 + $0x650] sm:$0xff]
        %v854 = vld [vmem:[%s483 + $0x658] sm:$0xff]
        %v855 = vld [vmem:[%s483 + $0x660] sm:$0xff]
        %v856 = vld [vmem:[%s483 + $0x668] sm:$0xff]
        %v857 = vld [vmem:[%s483 + $0x670] sm:$0xff]
        %v858 = vld [vmem:[%s483 + $0x678] sm:$0xff]
        %v859 = vld [vmem:[%s483 + $0x680] sm:$0xff]
        %v860 = vld [vmem:[%s483 + $0x688] sm:$0xff]
        %v861 = vld [vmem:[%s483 + $0x690] sm:$0xff]
        %v862 = vld [vmem:[%s483 + $0x698] sm:$0xff]
        %v863 = vld [vmem:[%s483 + $0x6a0] sm:$0xff]
        %v864 = vld [vmem:[%s483 + $0x6a8] sm:$0xff]
        %v865 = vld [vmem:[%s483 + $0x6b0] sm:$0xff]
        %v866 = vld [vmem:[%s483 + $0x6b8] sm:$0xff]
        %v867 = vld [vmem:[%s483 + $0x6c0] sm:$0xff]
        %v868 = vld [vmem:[%s483 + $0x6c8] sm:$0xff]
        %v869 = vld [vmem:[%s483 + $0x6d0] sm:$0xff]
        %v870 = vld [vmem:[%s483 + $0x6d8] sm:$0xff]
        %v871 = vld [vmem:[%s483 + $0x6e0] sm:$0xff]
        %v872 = vld [vmem:[%s483 + $0x6e8] sm:$0xff]
        %v873 = vld [vmem:[%s483 + $0x6f0] sm:$0xff]
        %v874 = vld [vmem:[%s483 + $0x6f8] sm:$0xff]
        %v875 = vld [vmem:[%s483 + $0x700] sm:$0xff]
        %v876 = vld [vmem:[%s483 + $0x708] sm:$0xff]
        %v877 = vld [vmem:[%s483 + $0x710] sm:$0xff]
        %v878 = vld [vmem:[%s483 + $0x718] sm:$0xff]
        %v879 = vld [vmem:[%s483 + $0x720] sm:$0xff]
        %v880 = vld [vmem:[%s483 + $0x728] sm:$0xff]
        %v881 = vld [vmem:[%s483 + $0x730] sm:$0xff]
        %v882 = vld [vmem:[%s483 + $0x738] sm:$0xff]
        %v883 = vld [vmem:[%s483 + $0x740] sm:$0xff]
        %v884 = vld [vmem:[%s483 + $0x748] sm:$0xff]
        %v885 = vld [vmem:[%s483 + $0x750] sm:$0xff]
        %v886 = vld [vmem:[%s483 + $0x758] sm:$0xff]
        %v887 = vld [vmem:[%s483 + $0x760] sm:$0xff]
        %v888 = vld [vmem:[%s483 + $0x768] sm:$0xff]
        %v889 = vld [vmem:[%s483 + $0x770] sm:$0xff]
        %v890 = vld [vmem:[%s483 + $0x778] sm:$0xff]
        %v891 = vld [vmem:[%s483 + $0x780] sm:$0xff]
        %v892 = vld [vmem:[%s483 + $0x788] sm:$0xff]
        %v893 = vld [vmem:[%s483 + $0x790] sm:$0xff]
        %v894 = vld [vmem:[%s483 + $0x798] sm:$0xff]
        %v895 = vld [vmem:[%s483 + $0x7a0] sm:$0xff]
        %v896 = vld [vmem:[%s483 + $0x7a8] sm:$0xff]
        %v897 = vld [vmem:[%s483 + $0x7b0] sm:$0xff]
        %v898 = vld [vmem:[%s483 + $0x7b8] sm:$0xff]
        %v899 = vld [vmem:[%s483 + $0x7c0] sm:$0xff]
        %v900 = vld [vmem:[%s483 + $0x7c8] sm:$0xff]
        %v901 = vld [vmem:[%s483 + $0x7d0] sm:$0xff]
        %v902 = vld [vmem:[%s483 + $0x7d8] sm:$0xff]
        %v903 = vld [vmem:[%s483 + $0x7e0] sm:$0xff]
        %v904 = vld [vmem:[%s483 + $0x7e8] sm:$0xff]
        %v905 = vld [vmem:[%s483 + $0x7f0] sm:$0xff]
        %v906 = vld [vmem:[%s483 + $0x7f8] sm:$0xff]
        %v907 = vld [vmem:[%s483 + $0x800] sm:$0xff]
        %v908 = vld [vmem:[%s483 + $0x808] sm:$0xff]
        %v909 = vld [vmem:[%s483 + $0x810] sm:$0xff]
        %v910 = vld [vmem:[%s483 + $0x818] sm:$0xff]
        %v911 = vld [vmem:[%s483 + $0x820] sm:$0xff]
        %v912 = vld [vmem:[%s483 + $0x828] sm:$0xff]
        %v913 = vld [vmem:[%s483 + $0x830] sm:$0xff]
        %v914 = vld [vmem:[%s483 + $0x838] sm:$0xff]
        %v915 = vld [vmem:[%s483 + $0x840] sm:$0xff]
        %v916 = vld [vmem:[%s483 + $0x848] sm:$0xff]
        %v917 = vld [vmem:[%s483 + $0x850] sm:$0xff]
        %v918 = vld [vmem:[%s483 + $0x858] sm:$0xff]
        %v919 = vld [vmem:[%s483 + $0x860] sm:$0xff]
        %v920 = vld [vmem:[%s483 + $0x868] sm:$0xff]
        %v921 = vld [vmem:[%s483 + $0x870] sm:$0xff]
        %v922 = vld [vmem:[%s483 + $0x878] sm:$0xff]
        %v923 = vld [vmem:[%s483 + $0x880] sm:$0xff]
        %v924 = vld [vmem:[%s483 + $0x888] sm:$0xff]
        %v925 = vld [vmem:[%s483 + $0x890] sm:$0xff]
        %v926 = vld [vmem:[%s483 + $0x898] sm:$0xff]
        %v927 = vld [vmem:[%s483 + $0x8a0] sm:$0xff]
        %v928 = vld [vmem:[%s483 + $0x8a8] sm:$0xff]
        %v929 = vld [vmem:[%s483 + $0x8b0] sm:$0xff]
        %v930 = vld [vmem:[%s483 + $0x8b8] sm:$0xff]
        %v931 = vld [vmem:[%s483 + $0x8c0] sm:$0xff]
        %v932 = vld [vmem:[%s483 + $0x8c8] sm:$0xff]
        %v933 = vld [vmem:[%s483 + $0x8d0] sm:$0xff]
        %v934 = vld [vmem:[%s483 + $0x8d8] sm:$0xff]
        %v935 = vld [vmem:[%s483 + $0x8e0] sm:$0xff]
        %v936 = vld [vmem:[%s483 + $0x8e8] sm:$0xff]
        %v937 = vld [vmem:[%s483 + $0x8f0] sm:$0xff]
        %v938 = vld [vmem:[%s483 + $0x8f8] sm:$0xff]
        %v939 = vld [vmem:[%s483 + $0x900] sm:$0xff]
        %v940 = vld [vmem:[%s483 + $0x908] sm:$0xff]
        %v941 = vld [vmem:[%s483 + $0x910] sm:$0xff]
        %v942 = vld [vmem:[%s483 + $0x918] sm:$0xff]
        %v943 = vld [vmem:[%s483 + $0x920] sm:$0xff]
        %v944 = vld [vmem:[%s483 + $0x928] sm:$0xff]
        %v945 = vld [vmem:[%s483 + $0x930] sm:$0xff]
        %v946 = vld [vmem:[%s483 + $0x938] sm:$0xff]
        %v947 = vld [vmem:[%s483 + $0x940] sm:$0xff]
        %v948 = vld [vmem:[%s483 + $0x948] sm:$0xff]
        %v949 = vld [vmem:[%s483 + $0x950] sm:$0xff]
        %v950 = vld [vmem:[%s483 + $0x958] sm:$0xff]
        %v951 = vld [vmem:[%s483 + $0x960] sm:$0xff]
        %v952 = vld [vmem:[%s483 + $0x968] sm:$0xff]
        %v953 = vld [vmem:[%s483 + $0x970] sm:$0xff]
        %v954 = vld [vmem:[%s483 + $0x978] sm:$0xff]
        %v955 = vld [vmem:[%s483 + $0x980] sm:$0xff]
        %v956 = vld [vmem:[%s483 + $0x988] sm:$0xff]
        %v957 = vld [vmem:[%s483 + $0x990] sm:$0xff]
        %v958 = vld [vmem:[%s483 + $0x998] sm:$0xff]
        %v959 = vld [vmem:[%s483 + $0x9a0] sm:$0xff]
        %v960 = vld [vmem:[%s483 + $0x9a8] sm:$0xff]
        %v961 = vld [vmem:[%s483 + $0x9b0] sm:$0xff]
        %v962 = vld [vmem:[%s483 + $0x9b8] sm:$0xff]
        %v963 = vld [vmem:[%s483 + $0x9c0] sm:$0xff]
        %v964 = vld [vmem:[%s483 + $0x9c8] sm:$0xff]
        %v965 = vld [vmem:[%s483 + $0x9d0] sm:$0xff]
        %v966 = vld [vmem:[%s483 + $0x9d8] sm:$0xff]
        %v967 = vld [vmem:[%s483 + $0x9e0] sm:$0xff]
        %v968 = vld [vmem:[%s483 + $0x9e8] sm:$0xff]
        %v969 = vld [vmem:[%s483 + $0x9f0] sm:$0xff]
        %v970 = vld [vmem:[%s483 + $0x9f8] sm:$0xff]
        %v971 = vld [vmem:[%s483 + $0xa00] sm:$0xff]
        %v972 = vld [vmem:[%s483 + $0xa08] sm:$0xff]
        %v973 = vld [vmem:[%s483 + $0xa10] sm:$0xff]
        %v974 = vld [vmem:[%s483 + $0xa18] sm:$0xff]
        %v975 = vld [vmem:[%s483 + $0xa20] sm:$0xff]
        %v976 = vld [vmem:[%s483 + $0xa28] sm:$0xff]
        %v977 = vld [vmem:[%s483 + $0xa30] sm:$0xff]
        %v978 = vld [vmem:[%s483 + $0xa38] sm:$0xff]
        %v979 = vld [vmem:[%s483 + $0xa40] sm:$0xff]
        %v980 = vld [vmem:[%s483 + $0xa48] sm:$0xff]
        %v981 = vld [vmem:[%s483 + $0xa50] sm:$0xff]
        %v982 = vld [vmem:[%s483 + $0xa58] sm:$0xff]
        %v983 = vld [vmem:[%s483 + $0xa60] sm:$0xff]
        %v984 = vld [vmem:[%s483 + $0xa68] sm:$0xff]
        %v985 = vld [vmem:[%s483 + $0xa70] sm:$0xff]
        %v986 = vld [vmem:[%s483 + $0xa78] sm:$0xff]
        %v987 = vld [vmem:[%s483 + $0xa80] sm:$0xff]
        %v988 = vld [vmem:[%s483 + $0xa88] sm:$0xff]
        %v989 = vld [vmem:[%s483 + $0xa90] sm:$0xff]
        %v990 = vld [vmem:[%s483 + $0xa98] sm:$0xff]
        %v991 = vld [vmem:[%s483 + $0xaa0] sm:$0xff]
        %v992 = vld [vmem:[%s483 + $0xaa8] sm:$0xff]
        %v993 = vld [vmem:[%s483 + $0xab0] sm:$0xff]
        %v994 = vld [vmem:[%s483 + $0xab8] sm:$0xff]
        %v995 = vld [vmem:[%s483 + $0xac0] sm:$0xff]
        %v996 = vld [vmem:[%s483 + $0xac8] sm:$0xff]
        %v997 = vld [vmem:[%s483 + $0xad0] sm:$0xff]
        %v998 = vld [vmem:[%s483 + $0xad8] sm:$0xff]
        %v999 = vld [vmem:[%s483 + $0xae0] sm:$0xff]
        %v1000 = vld [vmem:[%s483 + $0xae8] sm:$0xff]
        %v1001 = vld [vmem:[%s483 + $0xaf0] sm:$0xff]
        %v1002 = vld [vmem:[%s483 + $0xaf8] sm:$0xff]
        %v1003 = vld [vmem:[%s483 + $0xb00] sm:$0xff]
        %v1004 = vld [vmem:[%s483 + $0xb08] sm:$0xff]
        %v1005 = vld [vmem:[%s483 + $0xb10] sm:$0xff]
        %v1006 = vld [vmem:[%s483 + $0xb18] sm:$0xff]
        %v1007 = vld [vmem:[%s483 + $0xb20] sm:$0xff]
        %v1008 = vld [vmem:[%s483 + $0xb28] sm:$0xff]
        %v1009 = vld [vmem:[%s483 + $0xb30] sm:$0xff]
        %v1010 = vld [vmem:[%s483 + $0xb38] sm:$0xff]
        %v1011 = vld [vmem:[%s483 + $0xb40] sm:$0xff]
        %v1012 = vld [vmem:[%s483 + $0xb48] sm:$0xff]
        %v1013 = vld [vmem:[%s483 + $0xb50] sm:$0xff]
        %v1014 = vld [vmem:[%s483 + $0xb58] sm:$0xff]
        %v1015 = vld [vmem:[%s483 + $0xb60] sm:$0xff]
        %v1016 = vld [vmem:[%s483 + $0xb68] sm:$0xff]
        %v1017 = vld [vmem:[%s483 + $0xb70] sm:$0xff]
        %v1018 = vld [vmem:[%s483 + $0xb78] sm:$0xff]
        %v1019 = vld [vmem:[%s483 + $0xb80] sm:$0xff]
        %v1020 = vld [vmem:[%s483 + $0xb88] sm:$0xff]
        %v1021 = vld [vmem:[%s483 + $0xb90] sm:$0xff]
        %v1022 = vld [vmem:[%s483 + $0xb98] sm:$0xff]
        %v1023 = vld [vmem:[%s483 + $0xba0] sm:$0xff]
        %v1024 = vld [vmem:[%s483 + $0xba8] sm:$0xff]
        %v1025 = vld [vmem:[%s483 + $0xbb0] sm:$0xff]
        %v1026 = vld [vmem:[%s483 + $0xbb8] sm:$0xff]
        %v1027 = vld [vmem:[%s483 + $0xbc0] sm:$0xff]
        %v1028 = vld [vmem:[%s483 + $0xbc8] sm:$0xff]
        %v1029 = vld [vmem:[%s483 + $0xbd0] sm:$0xff]
        %v1030 = vld [vmem:[%s483 + $0xbd8] sm:$0xff]
        %v1031 = vld [vmem:[%s483 + $0xbe0] sm:$0xff]
        %v1032 = vld [vmem:[%s483 + $0xbe8] sm:$0xff]
        %v1033 = vld [vmem:[%s483 + $0xbf0] sm:$0xff]
        %v1034 = vld [vmem:[%s483 + $0xbf8] sm:$0xff]
        %v1035 = vld [vmem:[%s493] sm:$0xff]
        %v1036 = vld [vmem:[%s493 + $0x8] sm:$0xf]
        %v1039 = vperm.slane %v1035, 0
        %v1040 = vperm.slane %v1035, 1
        %v1041 = vperm.slane %v1035, 2
        %v1042 = vperm.slane %v1035, 3
        %v1043 = vperm.slane %v1035, 4
        %v1044 = vperm.slane %v1035, 5
        %v1045 = vperm.slane %v1035, 6
        %v1046 = vperm.slane %v1035, 7
        %v1047 = vperm.slane %v1036, 0
        %v1048 = vperm.slane %v1036, 1
        %v1049 = vperm.slane %v1036, 2
        %v1050 = vperm.slane %v1036, 3
        %1063 = vmatpush.msra.mxu0 %v831
        %1064 = vmatpush.msra.mxu0 %v819
        %1065 = vmatpush.msra.mxu0 %v807
        %1066 = vmatpush.msra.mxu0 %v795
        %1067 = vmatpush.msra.mxu0 %v783
        %1068 = vmatpush.msra.mxu0 %v771
        %1069 = vmatpush.msra.mxu0 %v759
        %1070 = vmatpush.msra.mxu0 %v747
        %1071 = vmatpush.msra.mxu0 %v735
        %1072 = vmatpush.msra.mxu0 %v723
        %1073 = vmatpush.msra.mxu0 %v711
        %1074 = vmatpush.msra.mxu0 %v699
        %1075 = vmatpush.msra.mxu0 %v687
        %1076 = vmatpush.msra.mxu0 %v675
        %1077 = vmatpush.msra.mxu0 %v663
        %1078 = vmatpush.msra.mxu0 %v651
        %1079 = vmatmul.f32.gmra.mxu0 %v629
        %v1080 = vpop.f32.mrf.mxu0
        %v1081 = vadd.f32 %v1039, %v1080
        %1082 = vmatmul.f32.gmra.mxu0 %v631
        %v1083 = vpop.f32.mrf.mxu0
        %v1084 = vadd.f32 %v1039, %v1083
        %1085 = vdwg.mxu0
        %1086 = vmatpush.msra.mxu0 %v1023
        %1087 = vmatpush.msra.mxu0 %v1011
        %1088 = vmatpush.msra.mxu0 %v999
        %1089 = vmatpush.msra.mxu0 %v987
        %1090 = vmatpush.msra.mxu0 %v975
        %1091 = vmatpush.msra.mxu0 %v963
        %1092 = vmatpush.msra.mxu0 %v951
        %1093 = vmatpush.msra.mxu0 %v939
        %1094 = vmatpush.msra.mxu0 %v927
        %1095 = vmatpush.msra.mxu0 %v915
        %1096 = vmatpush.msra.mxu0 %v903
        %1097 = vmatpush.msra.mxu0 %v891
        %1098 = vmatpush.msra.mxu0 %v879
        %1099 = vmatpush.msra.mxu0 %v867
        %1100 = vmatpush.msra.mxu0 %v855
        %1101 = vmatpush.msra.mxu0 %v843
        %1102 = vmatmul.f32.gmra.mxu0 %v630
        %v1103 = vpop.f32.mrf.mxu0
        %v1104 = vadd.f32 %v1081, %v1103
        %1105 = vmatmul.f32.gmra.mxu0 %v632
        %v1106 = vpop.f32.mrf.mxu0
        %v1107 = vadd.f32 %v1084, %v1106
        %1108 = vdwg.mxu0
        %1109 = vmatpush.msra.mxu0 %v832
        %1110 = vmatpush.msra.mxu0 %v820
        %1111 = vmatpush.msra.mxu0 %v808
        %1112 = vmatpush.msra.mxu0 %v796
        %1113 = vmatpush.msra.mxu0 %v784
        %1114 = vmatpush.msra.mxu0 %v772
        %1115 = vmatpush.msra.mxu0 %v760
        %1116 = vmatpush.msra.mxu0 %v748
        %1117 = vmatpush.msra.mxu0 %v736
        %1118 = vmatpush.msra.mxu0 %v724
        %1119 = vmatpush.msra.mxu0 %v712
        %1120 = vmatpush.msra.mxu0 %v700
        %1121 = vmatpush.msra.mxu0 %v688
        %1122 = vmatpush.msra.mxu0 %v676
        %1123 = vmatpush.msra.mxu0 %v664
        %1124 = vmatpush.msra.mxu0 %v652
        %1125 = vmatmul.f32.gmra.mxu0 %v629
        %v1126 = vpop.f32.mrf.mxu0
        %v1127 = vadd.f32 %v1040, %v1126
        %1128 = vmatmul.f32.gmra.mxu0 %v631
        %v1129 = vpop.f32.mrf.mxu0
        %v1130 = vadd.f32 %v1040, %v1129
        %1131 = vdwg.mxu0
        %1132 = vmatpush.msra.mxu0 %v1024
        %1133 = vmatpush.msra.mxu0 %v1012
        %1134 = vmatpush.msra.mxu0 %v1000
        %1135 = vmatpush.msra.mxu0 %v988
        %1136 = vmatpush.msra.mxu0 %v976
        %1137 = vmatpush.msra.mxu0 %v964
        %1138 = vmatpush.msra.mxu0 %v952
        %1139 = vmatpush.msra.mxu0 %v940
        %1140 = vmatpush.msra.mxu0 %v928
        %1141 = vmatpush.msra.mxu0 %v916
        %1142 = vmatpush.msra.mxu0 %v904
        %1143 = vmatpush.msra.mxu0 %v892
        %1144 = vmatpush.msra.mxu0 %v880
        %1145 = vmatpush.msra.mxu0 %v868
        %1146 = vmatpush.msra.mxu0 %v856
        %1147 = vmatpush.msra.mxu0 %v844
        %1148 = vmatmul.f32.gmra.mxu0 %v630
        %v1149 = vpop.f32.mrf.mxu0
        %v1150 = vadd.f32 %v1127, %v1149
        %1151 = vmatmul.f32.gmra.mxu0 %v632
        %v1152 = vpop.f32.mrf.mxu0
        %v1153 = vadd.f32 %v1130, %v1152
        %1154 = vdwg.mxu0
        %1155 = vmatpush.msra.mxu0 %v833
        %1156 = vmatpush.msra.mxu0 %v821
        %1157 = vmatpush.msra.mxu0 %v809
        %1158 = vmatpush.msra.mxu0 %v797
        %1159 = vmatpush.msra.mxu0 %v785
        %1160 = vmatpush.msra.mxu0 %v773
        %1161 = vmatpush.msra.mxu0 %v761
        %1162 = vmatpush.msra.mxu0 %v749
        %1163 = vmatpush.msra.mxu0 %v737
        %1164 = vmatpush.msra.mxu0 %v725
        %1165 = vmatpush.msra.mxu0 %v713
        %1166 = vmatpush.msra.mxu0 %v701
        %1167 = vmatpush.msra.mxu0 %v689
        %1168 = vmatpush.msra.mxu0 %v677
        %1169 = vmatpush.msra.mxu0 %v665
        %1170 = vmatpush.msra.mxu0 %v653
        %1171 = vmatmul.f32.gmra.mxu0 %v629
        %v1172 = vpop.f32.mrf.mxu0
        %v1173 = vadd.f32 %v1041, %v1172
        %1174 = vmatmul.f32.gmra.mxu0 %v631
        %v1175 = vpop.f32.mrf.mxu0
        %v1176 = vadd.f32 %v1041, %v1175
        %1177 = vdwg.mxu0
        %1178 = vmatpush.msra.mxu0 %v1025
        %1179 = vmatpush.msra.mxu0 %v1013
        %1180 = vmatpush.msra.mxu0 %v1001
        %1181 = vmatpush.msra.mxu0 %v989
        %1182 = vmatpush.msra.mxu0 %v977
        %1183 = vmatpush.msra.mxu0 %v965
        %1184 = vmatpush.msra.mxu0 %v953
        %1185 = vmatpush.msra.mxu0 %v941
        %1186 = vmatpush.msra.mxu0 %v929
        %1187 = vmatpush.msra.mxu0 %v917
        %1188 = vmatpush.msra.mxu0 %v905
        %1189 = vmatpush.msra.mxu0 %v893
        %1190 = vmatpush.msra.mxu0 %v881
        %1191 = vmatpush.msra.mxu0 %v869
        %1192 = vmatpush.msra.mxu0 %v857
        %1193 = vmatpush.msra.mxu0 %v845
        %1194 = vmatmul.f32.gmra.mxu0 %v630
        %v1195 = vpop.f32.mrf.mxu0
        %v1196 = vadd.f32 %v1173, %v1195
        %1197 = vmatmul.f32.gmra.mxu0 %v632
        %v1198 = vpop.f32.mrf.mxu0
        %v1199 = vadd.f32 %v1176, %v1198
        %1200 = vdwg.mxu0
        %1201 = vmatpush.msra.mxu0 %v834
        %1202 = vmatpush.msra.mxu0 %v822
        %1203 = vmatpush.msra.mxu0 %v810
        %1204 = vmatpush.msra.mxu0 %v798
        %1205 = vmatpush.msra.mxu0 %v786
        %1206 = vmatpush.msra.mxu0 %v774
        %1207 = vmatpush.msra.mxu0 %v762
        %1208 = vmatpush.msra.mxu0 %v750
        %1209 = vmatpush.msra.mxu0 %v738
        %1210 = vmatpush.msra.mxu0 %v726
        %1211 = vmatpush.msra.mxu0 %v714
        %1212 = vmatpush.msra.mxu0 %v702
        %1213 = vmatpush.msra.mxu0 %v690
        %1214 = vmatpush.msra.mxu0 %v678
        %1215 = vmatpush.msra.mxu0 %v666
        %1216 = vmatpush.msra.mxu0 %v654
        %1217 = vmatmul.f32.gmra.mxu0 %v629
        %v1218 = vpop.f32.mrf.mxu0
        %v1219 = vadd.f32 %v1042, %v1218
        %1220 = vmatmul.f32.gmra.mxu0 %v631
        %v1221 = vpop.f32.mrf.mxu0
        %v1222 = vadd.f32 %v1042, %v1221
        %1223 = vdwg.mxu0
        %1224 = vmatpush.msra.mxu0 %v1026
        %1225 = vmatpush.msra.mxu0 %v1014
        %1226 = vmatpush.msra.mxu0 %v1002
        %1227 = vmatpush.msra.mxu0 %v990
        %1228 = vmatpush.msra.mxu0 %v978
        %1229 = vmatpush.msra.mxu0 %v966
        %1230 = vmatpush.msra.mxu0 %v954
        %1231 = vmatpush.msra.mxu0 %v942
        %1232 = vmatpush.msra.mxu0 %v930
        %1233 = vmatpush.msra.mxu0 %v918
        %1234 = vmatpush.msra.mxu0 %v906
        %1235 = vmatpush.msra.mxu0 %v894
        %1236 = vmatpush.msra.mxu0 %v882
        %1237 = vmatpush.msra.mxu0 %v870
        %1238 = vmatpush.msra.mxu0 %v858
        %1239 = vmatpush.msra.mxu0 %v846
        %1240 = vmatmul.f32.gmra.mxu0 %v630
        %v1241 = vpop.f32.mrf.mxu0
        %v1242 = vadd.f32 %v1219, %v1241
        %1243 = vmatmul.f32.gmra.mxu0 %v632
        %v1244 = vpop.f32.mrf.mxu0
        %v1245 = vadd.f32 %v1222, %v1244
        %1246 = vdwg.mxu0
        %1247 = vmatpush.msra.mxu0 %v835
        %1248 = vmatpush.msra.mxu0 %v823
        %1249 = vmatpush.msra.mxu0 %v811
        %1250 = vmatpush.msra.mxu0 %v799
        %1251 = vmatpush.msra.mxu0 %v787
        %1252 = vmatpush.msra.mxu0 %v775
        %1253 = vmatpush.msra.mxu0 %v763
        %1254 = vmatpush.msra.mxu0 %v751
        %1255 = vmatpush.msra.mxu0 %v739
        %1256 = vmatpush.msra.mxu0 %v727
        %1257 = vmatpush.msra.mxu0 %v715
        %1258 = vmatpush.msra.mxu0 %v703
        %1259 = vmatpush.msra.mxu0 %v691
        %1260 = vmatpush.msra.mxu0 %v679
        %1261 = vmatpush.msra.mxu0 %v667
        %1262 = vmatpush.msra.mxu0 %v655
        %1263 = vmatmul.f32.gmra.mxu0 %v629
        %v1264 = vpop.f32.mrf.mxu0
        %v1265 = vadd.f32 %v1043, %v1264
        %1266 = vmatmul.f32.gmra.mxu0 %v631
        %v1267 = vpop.f32.mrf.mxu0
        %v1268 = vadd.f32 %v1043, %v1267
        %1269 = vdwg.mxu0
        %1270 = vmatpush.msra.mxu0 %v1027
        %1271 = vmatpush.msra.mxu0 %v1015
        %1272 = vmatpush.msra.mxu0 %v1003
        %1273 = vmatpush.msra.mxu0 %v991
        %1274 = vmatpush.msra.mxu0 %v979
        %1275 = vmatpush.msra.mxu0 %v967
        %1276 = vmatpush.msra.mxu0 %v955
        %1277 = vmatpush.msra.mxu0 %v943
        %1278 = vmatpush.msra.mxu0 %v931
        %1279 = vmatpush.msra.mxu0 %v919
        %1280 = vmatpush.msra.mxu0 %v907
        %1281 = vmatpush.msra.mxu0 %v895
        %1282 = vmatpush.msra.mxu0 %v883
        %1283 = vmatpush.msra.mxu0 %v871
        %1284 = vmatpush.msra.mxu0 %v859
        %1285 = vmatpush.msra.mxu0 %v847
        %1286 = vmatmul.f32.gmra.mxu0 %v630
        %v1287 = vpop.f32.mrf.mxu0
        %v1288 = vadd.f32 %v1265, %v1287
        %1289 = vmatmul.f32.gmra.mxu0 %v632
        %v1290 = vpop.f32.mrf.mxu0
        %v1291 = vadd.f32 %v1268, %v1290
        %1292 = vdwg.mxu0
        %1293 = vmatpush.msra.mxu0 %v836
        %1294 = vmatpush.msra.mxu0 %v824
        %1295 = vmatpush.msra.mxu0 %v812
        %1296 = vmatpush.msra.mxu0 %v800
        %1297 = vmatpush.msra.mxu0 %v788
        %1298 = vmatpush.msra.mxu0 %v776
        %1299 = vmatpush.msra.mxu0 %v764
        %1300 = vmatpush.msra.mxu0 %v752
        %1301 = vmatpush.msra.mxu0 %v740
        %1302 = vmatpush.msra.mxu0 %v728
        %1303 = vmatpush.msra.mxu0 %v716
        %1304 = vmatpush.msra.mxu0 %v704
        %1305 = vmatpush.msra.mxu0 %v692
        %1306 = vmatpush.msra.mxu0 %v680
        %1307 = vmatpush.msra.mxu0 %v668
        %1308 = vmatpush.msra.mxu0 %v656
        %1309 = vmatmul.f32.gmra.mxu0 %v629
        %v1310 = vpop.f32.mrf.mxu0
        %v1311 = vadd.f32 %v1044, %v1310
        %1312 = vmatmul.f32.gmra.mxu0 %v631
        %v1313 = vpop.f32.mrf.mxu0
        %v1314 = vadd.f32 %v1044, %v1313
        %1315 = vdwg.mxu0
        %1316 = vmatpush.msra.mxu0 %v1028
        %1317 = vmatpush.msra.mxu0 %v1016
        %1318 = vmatpush.msra.mxu0 %v1004
        %1319 = vmatpush.msra.mxu0 %v992
        %1320 = vmatpush.msra.mxu0 %v980
        %1321 = vmatpush.msra.mxu0 %v968
        %1322 = vmatpush.msra.mxu0 %v956
        %1323 = vmatpush.msra.mxu0 %v944
        %1324 = vmatpush.msra.mxu0 %v932
        %1325 = vmatpush.msra.mxu0 %v920
        %1326 = vmatpush.msra.mxu0 %v908
        %1327 = vmatpush.msra.mxu0 %v896
        %1328 = vmatpush.msra.mxu0 %v884
        %1329 = vmatpush.msra.mxu0 %v872
        %1330 = vmatpush.msra.mxu0 %v860
        %1331 = vmatpush.msra.mxu0 %v848
        %1332 = vmatmul.f32.gmra.mxu0 %v630
        %v1333 = vpop.f32.mrf.mxu0
        %v1334 = vadd.f32 %v1311, %v1333
        %1335 = vmatmul.f32.gmra.mxu0 %v632
        %v1336 = vpop.f32.mrf.mxu0
        %v1337 = vadd.f32 %v1314, %v1336
        %1338 = vdwg.mxu0
        %1339 = vmatpush.msra.mxu0 %v837
        %1340 = vmatpush.msra.mxu0 %v825
        %1341 = vmatpush.msra.mxu0 %v813
        %1342 = vmatpush.msra.mxu0 %v801
        %1343 = vmatpush.msra.mxu0 %v789
        %1344 = vmatpush.msra.mxu0 %v777
        %1345 = vmatpush.msra.mxu0 %v765
        %1346 = vmatpush.msra.mxu0 %v753
        %1347 = vmatpush.msra.mxu0 %v741
        %1348 = vmatpush.msra.mxu0 %v729
        %1349 = vmatpush.msra.mxu0 %v717
        %1350 = vmatpush.msra.mxu0 %v705
        %1351 = vmatpush.msra.mxu0 %v693
        %1352 = vmatpush.msra.mxu0 %v681
        %1353 = vmatpush.msra.mxu0 %v669
        %1354 = vmatpush.msra.mxu0 %v657
        %1355 = vmatmul.f32.gmra.mxu0 %v629
        %v1356 = vpop.f32.mrf.mxu0
        %v1357 = vadd.f32 %v1045, %v1356
        %1358 = vmatmul.f32.gmra.mxu0 %v631
        %v1359 = vpop.f32.mrf.mxu0
        %v1360 = vadd.f32 %v1045, %v1359
        %1361 = vdwg.mxu0
        %1362 = vmatpush.msra.mxu0 %v1029
        %1363 = vmatpush.msra.mxu0 %v1017
        %1364 = vmatpush.msra.mxu0 %v1005
        %1365 = vmatpush.msra.mxu0 %v993
        %1366 = vmatpush.msra.mxu0 %v981
        %1367 = vmatpush.msra.mxu0 %v969
        %1368 = vmatpush.msra.mxu0 %v957
        %1369 = vmatpush.msra.mxu0 %v945
        %1370 = vmatpush.msra.mxu0 %v933
        %1371 = vmatpush.msra.mxu0 %v921
        %1372 = vmatpush.msra.mxu0 %v909
        %1373 = vmatpush.msra.mxu0 %v897
        %1374 = vmatpush.msra.mxu0 %v885
        %1375 = vmatpush.msra.mxu0 %v873
        %1376 = vmatpush.msra.mxu0 %v861
        %1377 = vmatpush.msra.mxu0 %v849
        %1378 = vmatmul.f32.gmra.mxu0 %v630
        %v1379 = vpop.f32.mrf.mxu0
        %v1380 = vadd.f32 %v1357, %v1379
        %1381 = vmatmul.f32.gmra.mxu0 %v632
        %v1382 = vpop.f32.mrf.mxu0
        %v1383 = vadd.f32 %v1360, %v1382
        %1384 = vdwg.mxu0
        %1385 = vmatpush.msra.mxu0 %v838
        %1386 = vmatpush.msra.mxu0 %v826
        %1387 = vmatpush.msra.mxu0 %v814
        %1388 = vmatpush.msra.mxu0 %v802
        %1389 = vmatpush.msra.mxu0 %v790
        %1390 = vmatpush.msra.mxu0 %v778
        %1391 = vmatpush.msra.mxu0 %v766
        %1392 = vmatpush.msra.mxu0 %v754
        %1393 = vmatpush.msra.mxu0 %v742
        %1394 = vmatpush.msra.mxu0 %v730
        %1395 = vmatpush.msra.mxu0 %v718
        %1396 = vmatpush.msra.mxu0 %v706
        %1397 = vmatpush.msra.mxu0 %v694
        %1398 = vmatpush.msra.mxu0 %v682
        %1399 = vmatpush.msra.mxu0 %v670
        %1400 = vmatpush.msra.mxu0 %v658
        %1401 = vmatmul.f32.gmra.mxu0 %v629
        %v1402 = vpop.f32.mrf.mxu0
        %v1403 = vadd.f32 %v1046, %v1402
        %1404 = vmatmul.f32.gmra.mxu0 %v631
        %v1405 = vpop.f32.mrf.mxu0
        %v1406 = vadd.f32 %v1046, %v1405
        %1407 = vdwg.mxu0
        %1408 = vmatpush.msra.mxu0 %v1030
        %1409 = vmatpush.msra.mxu0 %v1018
        %1410 = vmatpush.msra.mxu0 %v1006
        %1411 = vmatpush.msra.mxu0 %v994
        %1412 = vmatpush.msra.mxu0 %v982
        %1413 = vmatpush.msra.mxu0 %v970
        %1414 = vmatpush.msra.mxu0 %v958
        %1415 = vmatpush.msra.mxu0 %v946
        %1416 = vmatpush.msra.mxu0 %v934
        %1417 = vmatpush.msra.mxu0 %v922
        %1418 = vmatpush.msra.mxu0 %v910
        %1419 = vmatpush.msra.mxu0 %v898
        %1420 = vmatpush.msra.mxu0 %v886
        %1421 = vmatpush.msra.mxu0 %v874
        %1422 = vmatpush.msra.mxu0 %v862
        %1423 = vmatpush.msra.mxu0 %v850
        %1424 = vmatmul.f32.gmra.mxu0 %v630
        %v1425 = vpop.f32.mrf.mxu0
        %v1426 = vadd.f32 %v1403, %v1425
        %1427 = vmatmul.f32.gmra.mxu0 %v632
        %v1428 = vpop.f32.mrf.mxu0
        %v1429 = vadd.f32 %v1406, %v1428
        %1430 = vdwg.mxu0
        %1431 = vmatpush.msra.mxu0 %v839
        %1432 = vmatpush.msra.mxu0 %v827
        %1433 = vmatpush.msra.mxu0 %v815
        %1434 = vmatpush.msra.mxu0 %v803
        %1435 = vmatpush.msra.mxu0 %v791
        %1436 = vmatpush.msra.mxu0 %v779
        %1437 = vmatpush.msra.mxu0 %v767
        %1438 = vmatpush.msra.mxu0 %v755
        %1439 = vmatpush.msra.mxu0 %v743
        %1440 = vmatpush.msra.mxu0 %v731
        %1441 = vmatpush.msra.mxu0 %v719
        %1442 = vmatpush.msra.mxu0 %v707
        %1443 = vmatpush.msra.mxu0 %v695
        %1444 = vmatpush.msra.mxu0 %v683
        %1445 = vmatpush.msra.mxu0 %v671
        %1446 = vmatpush.msra.mxu0 %v659
        %1447 = vmatmul.f32.gmra.mxu0 %v629
        %v1448 = vpop.f32.mrf.mxu0
        %v1449 = vadd.f32 %v1047, %v1448
        %1450 = vmatmul.f32.gmra.mxu0 %v631
        %v1451 = vpop.f32.mrf.mxu0
        %v1452 = vadd.f32 %v1047, %v1451
        %1453 = vdwg.mxu0
        %1454 = vmatpush.msra.mxu0 %v1031
        %1455 = vmatpush.msra.mxu0 %v1019
        %1456 = vmatpush.msra.mxu0 %v1007
        %1457 = vmatpush.msra.mxu0 %v995
        %1458 = vmatpush.msra.mxu0 %v983
        %1459 = vmatpush.msra.mxu0 %v971
        %1460 = vmatpush.msra.mxu0 %v959
        %1461 = vmatpush.msra.mxu0 %v947
        %1462 = vmatpush.msra.mxu0 %v935
        %1463 = vmatpush.msra.mxu0 %v923
        %1464 = vmatpush.msra.mxu0 %v911
        %1465 = vmatpush.msra.mxu0 %v899
        %1466 = vmatpush.msra.mxu0 %v887
        %1467 = vmatpush.msra.mxu0 %v875
        %1468 = vmatpush.msra.mxu0 %v863
        %1469 = vmatpush.msra.mxu0 %v851
        %1470 = vmatmul.f32.gmra.mxu0 %v630
        %v1471 = vpop.f32.mrf.mxu0
        %v1472 = vadd.f32 %v1449, %v1471
        %1473 = vmatmul.f32.gmra.mxu0 %v632
        %v1474 = vpop.f32.mrf.mxu0
        %v1475 = vadd.f32 %v1452, %v1474
        %1476 = vdwg.mxu0
        %1477 = vmatpush.msra.mxu0 %v840
        %1478 = vmatpush.msra.mxu0 %v828
        %1479 = vmatpush.msra.mxu0 %v816
        %1480 = vmatpush.msra.mxu0 %v804
        %1481 = vmatpush.msra.mxu0 %v792
        %1482 = vmatpush.msra.mxu0 %v780
        %1483 = vmatpush.msra.mxu0 %v768
        %1484 = vmatpush.msra.mxu0 %v756
        %1485 = vmatpush.msra.mxu0 %v744
        %1486 = vmatpush.msra.mxu0 %v732
        %1487 = vmatpush.msra.mxu0 %v720
        %1488 = vmatpush.msra.mxu0 %v708
        %1489 = vmatpush.msra.mxu0 %v696
        %1490 = vmatpush.msra.mxu0 %v684
        %1491 = vmatpush.msra.mxu0 %v672
        %1492 = vmatpush.msra.mxu0 %v660
        %1493 = vmatmul.f32.gmra.mxu0 %v629
        %v1494 = vpop.f32.mrf.mxu0
        %v1495 = vadd.f32 %v1048, %v1494
        %1496 = vmatmul.f32.gmra.mxu0 %v631
        %v1497 = vpop.f32.mrf.mxu0
        %v1498 = vadd.f32 %v1048, %v1497
        %1499 = vdwg.mxu0
        %1500 = vmatpush.msra.mxu0 %v1032
        %1501 = vmatpush.msra.mxu0 %v1020
        %1502 = vmatpush.msra.mxu0 %v1008
        %1503 = vmatpush.msra.mxu0 %v996
        %1504 = vmatpush.msra.mxu0 %v984
        %1505 = vmatpush.msra.mxu0 %v972
        %1506 = vmatpush.msra.mxu0 %v960
        %1507 = vmatpush.msra.mxu0 %v948
        %1508 = vmatpush.msra.mxu0 %v936
        %1509 = vmatpush.msra.mxu0 %v924
        %1510 = vmatpush.msra.mxu0 %v912
        %1511 = vmatpush.msra.mxu0 %v900
        %1512 = vmatpush.msra.mxu0 %v888
        %1513 = vmatpush.msra.mxu0 %v876
        %1514 = vmatpush.msra.mxu0 %v864
        %1515 = vmatpush.msra.mxu0 %v852
        %1516 = vmatmul.f32.gmra.mxu0 %v630
        %v1517 = vpop.f32.mrf.mxu0
        %v1518 = vadd.f32 %v1495, %v1517
        %1519 = vmatmul.f32.gmra.mxu0 %v632
        %v1520 = vpop.f32.mrf.mxu0
        %v1521 = vadd.f32 %v1498, %v1520
        %1522 = vdwg.mxu0
        %1523 = vmatpush.msra.mxu0 %v841
        %1524 = vmatpush.msra.mxu0 %v829
        %1525 = vmatpush.msra.mxu0 %v817
        %1526 = vmatpush.msra.mxu0 %v805
        %1527 = vmatpush.msra.mxu0 %v793
        %1528 = vmatpush.msra.mxu0 %v781
        %1529 = vmatpush.msra.mxu0 %v769
        %1530 = vmatpush.msra.mxu0 %v757
        %1531 = vmatpush.msra.mxu0 %v745
        %1532 = vmatpush.msra.mxu0 %v733
        %1533 = vmatpush.msra.mxu0 %v721
        %1534 = vmatpush.msra.mxu0 %v709
        %1535 = vmatpush.msra.mxu0 %v697
        %1536 = vmatpush.msra.mxu0 %v685
        %1537 = vmatpush.msra.mxu0 %v673
        %1538 = vmatpush.msra.mxu0 %v661
        %1539 = vmatmul.f32.gmra.mxu0 %v629
        %v1540 = vpop.f32.mrf.mxu0
        %v1541 = vadd.f32 %v1049, %v1540
        %1542 = vmatmul.f32.gmra.mxu0 %v631
        %v1543 = vpop.f32.mrf.mxu0
        %v1544 = vadd.f32 %v1049, %v1543
        %1545 = vdwg.mxu0
        %1546 = vmatpush.msra.mxu0 %v1033
        %1547 = vmatpush.msra.mxu0 %v1021
        %1548 = vmatpush.msra.mxu0 %v1009
        %1549 = vmatpush.msra.mxu0 %v997
        %1550 = vmatpush.msra.mxu0 %v985
        %1551 = vmatpush.msra.mxu0 %v973
        %1552 = vmatpush.msra.mxu0 %v961
        %1553 = vmatpush.msra.mxu0 %v949
        %1554 = vmatpush.msra.mxu0 %v937
        %1555 = vmatpush.msra.mxu0 %v925
        %1556 = vmatpush.msra.mxu0 %v913
        %1557 = vmatpush.msra.mxu0 %v901
        %1558 = vmatpush.msra.mxu0 %v889
        %1559 = vmatpush.msra.mxu0 %v877
        %1560 = vmatpush.msra.mxu0 %v865
        %1561 = vmatpush.msra.mxu0 %v853
        %1562 = vmatmul.f32.gmra.mxu0 %v630
        %v1563 = vpop.f32.mrf.mxu0
        %v1564 = vadd.f32 %v1541, %v1563
        %1565 = vmatmul.f32.gmra.mxu0 %v632
        %v1566 = vpop.f32.mrf.mxu0
        %v1567 = vadd.f32 %v1544, %v1566
        %1568 = vdwg.mxu0
        %1569 = vmatpush.msra.mxu0 %v842
        %1570 = vmatpush.msra.mxu0 %v830
        %1571 = vmatpush.msra.mxu0 %v818
        %1572 = vmatpush.msra.mxu0 %v806
        %1573 = vmatpush.msra.mxu0 %v794
        %1574 = vmatpush.msra.mxu0 %v782
        %1575 = vmatpush.msra.mxu0 %v770
        %1576 = vmatpush.msra.mxu0 %v758
        %1577 = vmatpush.msra.mxu0 %v746
        %1578 = vmatpush.msra.mxu0 %v734
        %1579 = vmatpush.msra.mxu0 %v722
        %1580 = vmatpush.msra.mxu0 %v710
        %1581 = vmatpush.msra.mxu0 %v698
        %1582 = vmatpush.msra.mxu0 %v686
        %1583 = vmatpush.msra.mxu0 %v674
        %1584 = vmatpush.msra.mxu0 %v662
        %1585 = vmatmul.f32.gmra.mxu0 %v629
        %v1586 = vpop.f32.mrf.mxu0
        %v1587 = vadd.f32 %v1050, %v1586
        %1588 = vmatmul.f32.gmra.mxu0 %v631
        %v1589 = vpop.f32.mrf.mxu0
        %v1590 = vadd.f32 %v1050, %v1589
        %1591 = vdwg.mxu0
        %1592 = vmatpush.msra.mxu0 %v1034
        %1593 = vmatpush.msra.mxu0 %v1022
        %1594 = vmatpush.msra.mxu0 %v1010
        %1595 = vmatpush.msra.mxu0 %v998
        %1596 = vmatpush.msra.mxu0 %v986
        %1597 = vmatpush.msra.mxu0 %v974
        %1598 = vmatpush.msra.mxu0 %v962
        %1599 = vmatpush.msra.mxu0 %v950
        %1600 = vmatpush.msra.mxu0 %v938
        %1601 = vmatpush.msra.mxu0 %v926
        %1602 = vmatpush.msra.mxu0 %v914
        %1603 = vmatpush.msra.mxu0 %v902
        %1604 = vmatpush.msra.mxu0 %v890
        %1605 = vmatpush.msra.mxu0 %v878
        %1606 = vmatpush.msra.mxu0 %v866
        %1607 = vmatpush.msra.mxu0 %v854
        %1608 = vmatmul.f32.gmra.mxu0 %v630
        %v1609 = vpop.f32.mrf.mxu0
        %v1610 = vadd.f32 %v1587, %v1609
        %1611 = vmatmul.f32.gmra.mxu0 %v632
        %v1612 = vpop.f32.mrf.mxu0
        %v1613 = vadd.f32 %v1590, %v1612
        %1614 = vdwg.mxu0
        %1617 = vrot.lane.b32.xlu0 %v1104, 96
        %v1618 = vpop.permute.xlu0 %1617
        %1619 = vrot.lane.b32.xlu0 %v1107, 96
        %v1620 = vpop.permute.xlu0 %1619
        %1623 = vrot.lane.b32.xlu0 %v1104, 64
        %v1624 = vpop.permute.xlu0 %1623
        %1625 = vrot.lane.b32.xlu0 %v1107, 64
        %v1626 = vpop.permute.xlu0 %1625
        %1629 = vrot.lane.b32.xlu0 %v1104, 32
        %v1630 = vpop.permute.xlu0 %1629
        %1631 = vrot.lane.b32.xlu0 %v1107, 32
        %v1632 = vpop.permute.xlu0 %1631
        %1637 = vrot.lane.b32.xlu0 %v1150, 96
        %v1638 = vpop.permute.xlu0 %1637
        %1639 = vrot.lane.b32.xlu0 %v1153, 96
        %v1640 = vpop.permute.xlu0 %1639
        %1643 = vrot.lane.b32.xlu0 %v1150, 64
        %v1644 = vpop.permute.xlu0 %1643
        %1645 = vrot.lane.b32.xlu0 %v1153, 64
        %v1646 = vpop.permute.xlu0 %1645
        %1649 = vrot.lane.b32.xlu0 %v1150, 32
        %v1650 = vpop.permute.xlu0 %1649
        %1651 = vrot.lane.b32.xlu0 %v1153, 32
        %v1652 = vpop.permute.xlu0 %1651
        %1657 = vrot.lane.b32.xlu0 %v1196, 96
        %v1658 = vpop.permute.xlu0 %1657
        %1659 = vrot.lane.b32.xlu0 %v1199, 96
        %v1660 = vpop.permute.xlu0 %1659
        %1663 = vrot.lane.b32.xlu0 %v1196, 64
        %v1664 = vpop.permute.xlu0 %1663
        %1665 = vrot.lane.b32.xlu0 %v1199, 64
        %v1666 = vpop.permute.xlu0 %1665
        %1669 = vrot.lane.b32.xlu0 %v1196, 32
        %v1670 = vpop.permute.xlu0 %1669
        %1671 = vrot.lane.b32.xlu0 %v1199, 32
        %v1672 = vpop.permute.xlu0 %1671
        %1677 = vrot.lane.b32.xlu0 %v1242, 96
        %v1678 = vpop.permute.xlu0 %1677
        %1679 = vrot.lane.b32.xlu0 %v1245, 96
        %v1680 = vpop.permute.xlu0 %1679
        %1683 = vrot.lane.b32.xlu0 %v1242, 64
        %v1684 = vpop.permute.xlu0 %1683
        %1685 = vrot.lane.b32.xlu0 %v1245, 64
        %v1686 = vpop.permute.xlu0 %1685
        %1689 = vrot.lane.b32.xlu0 %v1242, 32
        %v1690 = vpop.permute.xlu0 %1689
        %1691 = vrot.lane.b32.xlu0 %v1245, 32
        %v1692 = vpop.permute.xlu0 %1691
        %v1695 = vrot.slane %v1624, 4
        %vm1696 = vcmask 1047556
        %v1697 = vsel %vm1696, %v1695, %v1104
        %v1698 = vrot.slane %v1104, 4
        %v1699 = vsel %vm1696, %v1624, %v1698
        %v1701 = vunpack.c.l.s4 1983009808
        %v1702 = vunpack.c.0.s8 %v1701
        %v1703 = vperm.slane %v1697, %v1702
        %v1705 = vunpack.c.l.s4 1983009808
        %v1706 = vunpack.c.0.s8 %v1705
        %v1707 = vperm.slane %v1699, %v1706
        %v1708 = vrot.slane %v1630, 4
        %v1709 = vsel %vm1696, %v1708, %v1618
        %v1710 = vrot.slane %v1618, 4
        %v1711 = vsel %vm1696, %v1630, %v1710
        %v1713 = vunpack.c.l.s4 1983009808
        %v1714 = vunpack.c.0.s8 %v1713
        %v1715 = vperm.slane %v1709, %v1714
        %v1717 = vunpack.c.l.s4 1983009808
        %v1718 = vunpack.c.0.s8 %v1717
        %v1719 = vperm.slane %v1711, %v1718
        %v1720 = vrot.slane %v1644, 4
        %v1721 = vsel %vm1696, %v1720, %v1150
        %v1722 = vrot.slane %v1150, 4
        %v1723 = vsel %vm1696, %v1644, %v1722
        %v1725 = vunpack.c.l.s4 1983009808
        %v1726 = vunpack.c.0.s8 %v1725
        %v1727 = vperm.slane %v1721, %v1726
        %v1729 = vunpack.c.l.s4 1983009808
        %v1730 = vunpack.c.0.s8 %v1729
        %v1731 = vperm.slane %v1723, %v1730
        %v1732 = vrot.slane %v1650, 4
        %v1733 = vsel %vm1696, %v1732, %v1638
        %v1734 = vrot.slane %v1638, 4
        %v1735 = vsel %vm1696, %v1650, %v1734
        %v1737 = vunpack.c.l.s4 1983009808
        %v1738 = vunpack.c.0.s8 %v1737
        %v1739 = vperm.slane %v1733, %v1738
        %v1741 = vunpack.c.l.s4 1983009808
        %v1742 = vunpack.c.0.s8 %v1741
        %v1743 = vperm.slane %v1735, %v1742
        %v1744 = vrot.slane %v1715, 4
        %v1745 = vsel %vm1696, %v1744, %v1703
        %v1746 = vrot.slane %v1703, 4
        %v1747 = vsel %vm1696, %v1715, %v1746
        %v1749 = vunpack.c.l.s4 1934713408
        %v1750 = vunpack.c.0.s8 %v1749
        %v1751 = vperm.slane %v1745, %v1750
        %v1753 = vunpack.c.l.s4 1934713408
        %v1754 = vunpack.c.0.s8 %v1753
        %v1755 = vperm.slane %v1747, %v1754
        %v1756 = vrot.slane %v1719, 4
        %v1757 = vsel %vm1696, %v1756, %v1707
        %v1758 = vrot.slane %v1707, 4
        %v1759 = vsel %vm1696, %v1719, %v1758
        %v1761 = vunpack.c.l.s4 1934713408
        %v1762 = vunpack.c.0.s8 %v1761
        %v1763 = vperm.slane %v1757, %v1762
        %v1765 = vunpack.c.l.s4 1934713408
        %v1766 = vunpack.c.0.s8 %v1765
        %v1767 = vperm.slane %v1759, %v1766
        %v1768 = vrot.slane %v1739, 4
        %v1769 = vsel %vm1696, %v1768, %v1727
        %v1770 = vrot.slane %v1727, 4
        %v1771 = vsel %vm1696, %v1739, %v1770
        %v1773 = vunpack.c.l.s4 1934713408
        %v1774 = vunpack.c.0.s8 %v1773
        %v1775 = vperm.slane %v1769, %v1774
        %v1777 = vunpack.c.l.s4 1934713408
        %v1778 = vunpack.c.0.s8 %v1777
        %v1779 = vperm.slane %v1771, %v1778
        %v1780 = vrot.slane %v1743, 4
        %v1781 = vsel %vm1696, %v1780, %v1731
        %v1782 = vrot.slane %v1731, 4
        %v1783 = vsel %vm1696, %v1743, %v1782
        %v1785 = vunpack.c.l.s4 1934713408
        %v1786 = vunpack.c.0.s8 %v1785
        %v1787 = vperm.slane %v1781, %v1786
        %v1789 = vunpack.c.l.s4 1934713408
        %v1790 = vunpack.c.0.s8 %v1789
        %v1791 = vperm.slane %v1783, %v1790
        %v1792 = vrot.slane %v1775, 4
        %v1793 = vsel %vm1696, %v1792, %v1751
        %v1794 = vrot.slane %v1751, 4
        %v1795 = vsel %vm1696, %v1775, %v1794
        %v1796 = vrot.slane %v1779, 4
        %v1797 = vsel %vm1696, %v1796, %v1755
        %v1798 = vrot.slane %v1755, 4
        %v1799 = vsel %vm1696, %v1779, %v1798
        %v1800 = vrot.slane %v1787, 4
        %v1801 = vsel %vm1696, %v1800, %v1763
        %v1802 = vrot.slane %v1763, 4
        %v1803 = vsel %vm1696, %v1787, %v1802
        %v1804 = vrot.slane %v1791, 4
        %v1805 = vsel %vm1696, %v1804, %v1767
        %v1806 = vrot.slane %v1767, 4
        %v1807 = vsel %vm1696, %v1791, %v1806
        %v1808 = vrot.slane %v1664, 4
        %v1809 = vsel %vm1696, %v1808, %v1196
        %v1810 = vrot.slane %v1196, 4
        %v1811 = vsel %vm1696, %v1664, %v1810
        %v1813 = vunpack.c.l.s4 1983009808
        %v1814 = vunpack.c.0.s8 %v1813
        %v1815 = vperm.slane %v1809, %v1814
        %v1817 = vunpack.c.l.s4 1983009808
        %v1818 = vunpack.c.0.s8 %v1817
        %v1819 = vperm.slane %v1811, %v1818
        %v1820 = vrot.slane %v1670, 4
        %v1821 = vsel %vm1696, %v1820, %v1658
        %v1822 = vrot.slane %v1658, 4
        %v1823 = vsel %vm1696, %v1670, %v1822
        %v1825 = vunpack.c.l.s4 1983009808
        %v1826 = vunpack.c.0.s8 %v1825
        %v1827 = vperm.slane %v1821, %v1826
        %v1829 = vunpack.c.l.s4 1983009808
        %v1830 = vunpack.c.0.s8 %v1829
        %v1831 = vperm.slane %v1823, %v1830
        %v1832 = vrot.slane %v1684, 4
        %v1833 = vsel %vm1696, %v1832, %v1242
        %v1834 = vrot.slane %v1242, 4
        %v1835 = vsel %vm1696, %v1684, %v1834
        %v1837 = vunpack.c.l.s4 1983009808
        %v1838 = vunpack.c.0.s8 %v1837
        %v1839 = vperm.slane %v1833, %v1838
        %v1841 = vunpack.c.l.s4 1983009808
        %v1842 = vunpack.c.0.s8 %v1841
        %v1843 = vperm.slane %v1835, %v1842
        %v1844 = vrot.slane %v1690, 4
        %v1845 = vsel %vm1696, %v1844, %v1678
        %v1846 = vrot.slane %v1678, 4
        %v1847 = vsel %vm1696, %v1690, %v1846
        %v1849 = vunpack.c.l.s4 1983009808
        %v1850 = vunpack.c.0.s8 %v1849
        %v1851 = vperm.slane %v1845, %v1850
        %v1853 = vunpack.c.l.s4 1983009808
        %v1854 = vunpack.c.0.s8 %v1853
        %v1855 = vperm.slane %v1847, %v1854
        %v1856 = vrot.slane %v1827, 4
        %v1857 = vsel %vm1696, %v1856, %v1815
        %v1858 = vrot.slane %v1815, 4
        %v1859 = vsel %vm1696, %v1827, %v1858
        %v1861 = vunpack.c.l.s4 1934713408
        %v1862 = vunpack.c.0.s8 %v1861
        %v1863 = vperm.slane %v1857, %v1862
        %v1865 = vunpack.c.l.s4 1934713408
        %v1866 = vunpack.c.0.s8 %v1865
        %v1867 = vperm.slane %v1859, %v1866
        %v1868 = vrot.slane %v1831, 4
        %v1869 = vsel %vm1696, %v1868, %v1819
        %v1870 = vrot.slane %v1819, 4
        %v1871 = vsel %vm1696, %v1831, %v1870
        %v1873 = vunpack.c.l.s4 1934713408
        %v1874 = vunpack.c.0.s8 %v1873
        %v1875 = vperm.slane %v1869, %v1874
        %v1877 = vunpack.c.l.s4 1934713408
        %v1878 = vunpack.c.0.s8 %v1877
        %v1879 = vperm.slane %v1871, %v1878
        %v1880 = vrot.slane %v1851, 4
        %v1881 = vsel %vm1696, %v1880, %v1839
        %v1882 = vrot.slane %v1839, 4
        %v1883 = vsel %vm1696, %v1851, %v1882
        %v1885 = vunpack.c.l.s4 1934713408
        %v1886 = vunpack.c.0.s8 %v1885
        %v1887 = vperm.slane %v1881, %v1886
        %v1889 = vunpack.c.l.s4 1934713408
        %v1890 = vunpack.c.0.s8 %v1889
        %v1891 = vperm.slane %v1883, %v1890
        %v1892 = vrot.slane %v1855, 4
        %v1893 = vsel %vm1696, %v1892, %v1843
        %v1894 = vrot.slane %v1843, 4
        %v1895 = vsel %vm1696, %v1855, %v1894
        %v1897 = vunpack.c.l.s4 1934713408
        %v1898 = vunpack.c.0.s8 %v1897
        %v1899 = vperm.slane %v1893, %v1898
        %v1901 = vunpack.c.l.s4 1934713408
        %v1902 = vunpack.c.0.s8 %v1901
        %v1903 = vperm.slane %v1895, %v1902
        %v1904 = vrot.slane %v1887, 4
        %v1905 = vsel %vm1696, %v1904, %v1863
        %v1906 = vrot.slane %v1863, 4
        %v1907 = vsel %vm1696, %v1887, %v1906
        %v1908 = vrot.slane %v1891, 4
        %v1909 = vsel %vm1696, %v1908, %v1867
        %v1910 = vrot.slane %v1867, 4
        %v1911 = vsel %vm1696, %v1891, %v1910
        %v1912 = vrot.slane %v1899, 4
        %v1913 = vsel %vm1696, %v1912, %v1875
        %v1914 = vrot.slane %v1875, 4
        %v1915 = vsel %vm1696, %v1899, %v1914
        %v1916 = vrot.slane %v1903, 4
        %v1917 = vsel %vm1696, %v1916, %v1879
        %v1918 = vrot.slane %v1879, 4
        %v1919 = vsel %vm1696, %v1903, %v1918
        %v1920 = vrot.slane %v1626, 4
        %v1921 = vsel %vm1696, %v1920, %v1107
        %v1922 = vrot.slane %v1107, 4
        %v1923 = vsel %vm1696, %v1626, %v1922
        %v1925 = vunpack.c.l.s4 1983009808
        %v1926 = vunpack.c.0.s8 %v1925
        %v1927 = vperm.slane %v1921, %v1926
        %v1929 = vunpack.c.l.s4 1983009808
        %v1930 = vunpack.c.0.s8 %v1929
        %v1931 = vperm.slane %v1923, %v1930
        %v1932 = vrot.slane %v1632, 4
        %v1933 = vsel %vm1696, %v1932, %v1620
        %v1934 = vrot.slane %v1620, 4
        %v1935 = vsel %vm1696, %v1632, %v1934
        %v1937 = vunpack.c.l.s4 1983009808
        %v1938 = vunpack.c.0.s8 %v1937
        %v1939 = vperm.slane %v1933, %v1938
        %v1941 = vunpack.c.l.s4 1983009808
        %v1942 = vunpack.c.0.s8 %v1941
        %v1943 = vperm.slane %v1935, %v1942
        %v1944 = vrot.slane %v1646, 4
        %v1945 = vsel %vm1696, %v1944, %v1153
        %v1946 = vrot.slane %v1153, 4
        %v1947 = vsel %vm1696, %v1646, %v1946
        %v1949 = vunpack.c.l.s4 1983009808
        %v1950 = vunpack.c.0.s8 %v1949
        %v1951 = vperm.slane %v1945, %v1950
        %v1953 = vunpack.c.l.s4 1983009808
        %v1954 = vunpack.c.0.s8 %v1953
        %v1955 = vperm.slane %v1947, %v1954
        %v1956 = vrot.slane %v1652, 4
        %v1957 = vsel %vm1696, %v1956, %v1640
        %v1958 = vrot.slane %v1640, 4
        %v1959 = vsel %vm1696, %v1652, %v1958
        %v1961 = vunpack.c.l.s4 1983009808
        %v1962 = vunpack.c.0.s8 %v1961
        %v1963 = vperm.slane %v1957, %v1962
        %v1965 = vunpack.c.l.s4 1983009808
        %v1966 = vunpack.c.0.s8 %v1965
        %v1967 = vperm.slane %v1959, %v1966
        %v1968 = vrot.slane %v1939, 4
        %v1969 = vsel %vm1696, %v1968, %v1927
        %v1970 = vrot.slane %v1927, 4
        %v1971 = vsel %vm1696, %v1939, %v1970
        %v1973 = vunpack.c.l.s4 1934713408
        %v1974 = vunpack.c.0.s8 %v1973
        %v1975 = vperm.slane %v1969, %v1974
        %v1977 = vunpack.c.l.s4 1934713408
        %v1978 = vunpack.c.0.s8 %v1977
        %v1979 = vperm.slane %v1971, %v1978
        %v1980 = vrot.slane %v1943, 4
        %v1981 = vsel %vm1696, %v1980, %v1931
        %v1982 = vrot.slane %v1931, 4
        %v1983 = vsel %vm1696, %v1943, %v1982
        %v1985 = vunpack.c.l.s4 1934713408
        %v1986 = vunpack.c.0.s8 %v1985
        %v1987 = vperm.slane %v1981, %v1986
        %v1989 = vunpack.c.l.s4 1934713408
        %v1990 = vunpack.c.0.s8 %v1989
        %v1991 = vperm.slane %v1983, %v1990
        %v1992 = vrot.slane %v1963, 4
        %v1993 = vsel %vm1696, %v1992, %v1951
        %v1994 = vrot.slane %v1951, 4
        %v1995 = vsel %vm1696, %v1963, %v1994
        %v1997 = vunpack.c.l.s4 1934713408
        %v1998 = vunpack.c.0.s8 %v1997
        %v1999 = vperm.slane %v1993, %v1998
        %v2001 = vunpack.c.l.s4 1934713408
        %v2002 = vunpack.c.0.s8 %v2001
        %v2003 = vperm.slane %v1995, %v2002
        %v2004 = vrot.slane %v1967, 4
        %v2005 = vsel %vm1696, %v2004, %v1955
        %v2006 = vrot.slane %v1955, 4
        %v2007 = vsel %vm1696, %v1967, %v2006
        %v2009 = vunpack.c.l.s4 1934713408
        %v2010 = vunpack.c.0.s8 %v2009
        %v2011 = vperm.slane %v2005, %v2010
        %v2013 = vunpack.c.l.s4 1934713408
        %v2014 = vunpack.c.0.s8 %v2013
        %v2015 = vperm.slane %v2007, %v2014
        %v2016 = vrot.slane %v1999, 4
        %v2017 = vsel %vm1696, %v2016, %v1975
        %v2018 = vrot.slane %v1975, 4
        %v2019 = vsel %vm1696, %v1999, %v2018
        %v2020 = vrot.slane %v2003, 4
        %v2021 = vsel %vm1696, %v2020, %v1979
        %v2022 = vrot.slane %v1979, 4
        %v2023 = vsel %vm1696, %v2003, %v2022
        %v2024 = vrot.slane %v2011, 4
        %v2025 = vsel %vm1696, %v2024, %v1987
        %v2026 = vrot.slane %v1987, 4
        %v2027 = vsel %vm1696, %v2011, %v2026
        %v2028 = vrot.slane %v2015, 4
        %v2029 = vsel %vm1696, %v2028, %v1991
        %v2030 = vrot.slane %v1991, 4
        %v2031 = vsel %vm1696, %v2015, %v2030
        %v2032 = vrot.slane %v1666, 4
        %v2033 = vsel %vm1696, %v2032, %v1199
        %v2034 = vrot.slane %v1199, 4
        %v2035 = vsel %vm1696, %v1666, %v2034
        %v2037 = vunpack.c.l.s4 1983009808
        %v2038 = vunpack.c.0.s8 %v2037
        %v2039 = vperm.slane %v2033, %v2038
        %v2041 = vunpack.c.l.s4 1983009808
        %v2042 = vunpack.c.0.s8 %v2041
        %v2043 = vperm.slane %v2035, %v2042
        %v2044 = vrot.slane %v1672, 4
        %v2045 = vsel %vm1696, %v2044, %v1660
        %v2046 = vrot.slane %v1660, 4
        %v2047 = vsel %vm1696, %v1672, %v2046
        %v2049 = vunpack.c.l.s4 1983009808
        %v2050 = vunpack.c.0.s8 %v2049
        %v2051 = vperm.slane %v2045, %v2050
        %v2053 = vunpack.c.l.s4 1983009808
        %v2054 = vunpack.c.0.s8 %v2053
        %v2055 = vperm.slane %v2047, %v2054
        %v2056 = vrot.slane %v1686, 4
        %v2057 = vsel %vm1696, %v2056, %v1245
        %v2058 = vrot.slane %v1245, 4
        %v2059 = vsel %vm1696, %v1686, %v2058
        %v2061 = vunpack.c.l.s4 1983009808
        %v2062 = vunpack.c.0.s8 %v2061
        %v2063 = vperm.slane %v2057, %v2062
        %v2065 = vunpack.c.l.s4 1983009808
        %v2066 = vunpack.c.0.s8 %v2065
        %v2067 = vperm.slane %v2059, %v2066
        %v2068 = vrot.slane %v1692, 4
        %v2069 = vsel %vm1696, %v2068, %v1680
        %v2070 = vrot.slane %v1680, 4
        %v2071 = vsel %vm1696, %v1692, %v2070
        %v2073 = vunpack.c.l.s4 1983009808
        %v2074 = vunpack.c.0.s8 %v2073
        %v2075 = vperm.slane %v2069, %v2074
        %v2077 = vunpack.c.l.s4 1983009808
        %v2078 = vunpack.c.0.s8 %v2077
        %v2079 = vperm.slane %v2071, %v2078
        %v2080 = vrot.slane %v2051, 4
        %v2081 = vsel %vm1696, %v2080, %v2039
        %v2082 = vrot.slane %v2039, 4
        %v2083 = vsel %vm1696, %v2051, %v2082
        %v2085 = vunpack.c.l.s4 1934713408
        %v2086 = vunpack.c.0.s8 %v2085
        %v2087 = vperm.slane %v2081, %v2086
        %v2089 = vunpack.c.l.s4 1934713408
        %v2090 = vunpack.c.0.s8 %v2089
        %v2091 = vperm.slane %v2083, %v2090
        %v2092 = vrot.slane %v2055, 4
        %v2093 = vsel %vm1696, %v2092, %v2043
        %v2094 = vrot.slane %v2043, 4
        %v2095 = vsel %vm1696, %v2055, %v2094
        %v2097 = vunpack.c.l.s4 1934713408
        %v2098 = vunpack.c.0.s8 %v2097
        %v2099 = vperm.slane %v2093, %v2098
        %v2101 = vunpack.c.l.s4 1934713408
        %v2102 = vunpack.c.0.s8 %v2101
        %v2103 = vperm.slane %v2095, %v2102
        %v2104 = vrot.slane %v2075, 4
        %v2105 = vsel %vm1696, %v2104, %v2063
        %v2106 = vrot.slane %v2063, 4
        %v2107 = vsel %vm1696, %v2075, %v2106
        %v2109 = vunpack.c.l.s4 1934713408
        %v2110 = vunpack.c.0.s8 %v2109
        %v2111 = vperm.slane %v2105, %v2110
        %v2113 = vunpack.c.l.s4 1934713408
        %v2114 = vunpack.c.0.s8 %v2113
        %v2115 = vperm.slane %v2107, %v2114
        %v2116 = vrot.slane %v2079, 4
        %v2117 = vsel %vm1696, %v2116, %v2067
        %v2118 = vrot.slane %v2067, 4
        %v2119 = vsel %vm1696, %v2079, %v2118
        %v2121 = vunpack.c.l.s4 1934713408
        %v2122 = vunpack.c.0.s8 %v2121
        %v2123 = vperm.slane %v2117, %v2122
        %v2125 = vunpack.c.l.s4 1934713408
        %v2126 = vunpack.c.0.s8 %v2125
        %v2127 = vperm.slane %v2119, %v2126
        %v2128 = vrot.slane %v2111, 4
        %v2129 = vsel %vm1696, %v2128, %v2087
        %v2130 = vrot.slane %v2087, 4
        %v2131 = vsel %vm1696, %v2111, %v2130
        %v2132 = vrot.slane %v2115, 4
        %v2133 = vsel %vm1696, %v2132, %v2091
        %v2134 = vrot.slane %v2091, 4
        %v2135 = vsel %vm1696, %v2115, %v2134
        %v2136 = vrot.slane %v2123, 4
        %v2137 = vsel %vm1696, %v2136, %v2099
        %v2138 = vrot.slane %v2099, 4
        %v2139 = vsel %vm1696, %v2123, %v2138
        %v2140 = vrot.slane %v2127, 4
        %v2141 = vsel %vm1696, %v2140, %v2103
        %v2142 = vrot.slane %v2103, 4
        %v2143 = vsel %vm1696, %v2127, %v2142
        %v2144 = vrot.slane %v1797, 4
        %v2145 = vsel %vm1696, %v2144, %v1793
        %v2146 = vrot.slane %v1793, 4
        %v2147 = vsel %vm1696, %v1797, %v2146
        %v2149 = vunpack.c.l.s4 1983009808
        %v2150 = vunpack.c.0.s8 %v2149
        %v2151 = vperm.slane %v2145, %v2150
        %v2153 = vunpack.c.l.s4 1983009808
        %v2154 = vunpack.c.0.s8 %v2153
        %v2155 = vperm.slane %v2147, %v2154
        %v2156 = vrot.slane %v1799, 4
        %v2157 = vsel %vm1696, %v2156, %v1795
        %v2158 = vrot.slane %v1795, 4
        %v2159 = vsel %vm1696, %v1799, %v2158
        %v2161 = vunpack.c.l.s4 1983009808
        %v2162 = vunpack.c.0.s8 %v2161
        %v2163 = vperm.slane %v2157, %v2162
        %v2165 = vunpack.c.l.s4 1983009808
        %v2166 = vunpack.c.0.s8 %v2165
        %v2167 = vperm.slane %v2159, %v2166
        %v2168 = vrot.slane %v1805, 4
        %v2169 = vsel %vm1696, %v2168, %v1801
        %v2170 = vrot.slane %v1801, 4
        %v2171 = vsel %vm1696, %v1805, %v2170
        %v2173 = vunpack.c.l.s4 1983009808
        %v2174 = vunpack.c.0.s8 %v2173
        %v2175 = vperm.slane %v2169, %v2174
        %v2177 = vunpack.c.l.s4 1983009808
        %v2178 = vunpack.c.0.s8 %v2177
        %v2179 = vperm.slane %v2171, %v2178
        %v2180 = vrot.slane %v1807, 4
        %v2181 = vsel %vm1696, %v2180, %v1803
        %v2182 = vrot.slane %v1803, 4
        %v2183 = vsel %vm1696, %v1807, %v2182
        %v2185 = vunpack.c.l.s4 1983009808
        %v2186 = vunpack.c.0.s8 %v2185
        %v2187 = vperm.slane %v2181, %v2186
        %v2189 = vunpack.c.l.s4 1983009808
        %v2190 = vunpack.c.0.s8 %v2189
        %v2191 = vperm.slane %v2183, %v2190
        %v2192 = vrot.slane %v2163, 4
        %v2193 = vsel %vm1696, %v2192, %v2151
        %v2194 = vrot.slane %v2151, 4
        %v2195 = vsel %vm1696, %v2163, %v2194
        %v2197 = vunpack.c.l.s4 1934713408
        %v2198 = vunpack.c.0.s8 %v2197
        %v2199 = vperm.slane %v2193, %v2198
        %v2201 = vunpack.c.l.s4 1934713408
        %v2202 = vunpack.c.0.s8 %v2201
        %v2203 = vperm.slane %v2195, %v2202
        %v2204 = vrot.slane %v2167, 4
        %v2205 = vsel %vm1696, %v2204, %v2155
        %v2206 = vrot.slane %v2155, 4
        %v2207 = vsel %vm1696, %v2167, %v2206
        %v2209 = vunpack.c.l.s4 1934713408
        %v2210 = vunpack.c.0.s8 %v2209
        %v2211 = vperm.slane %v2205, %v2210
        %v2213 = vunpack.c.l.s4 1934713408
        %v2214 = vunpack.c.0.s8 %v2213
        %v2215 = vperm.slane %v2207, %v2214
        %v2216 = vrot.slane %v2187, 4
        %v2217 = vsel %vm1696, %v2216, %v2175
        %v2218 = vrot.slane %v2175, 4
        %v2219 = vsel %vm1696, %v2187, %v2218
        %v2221 = vunpack.c.l.s4 1934713408
        %v2222 = vunpack.c.0.s8 %v2221
        %v2223 = vperm.slane %v2217, %v2222
        %v2225 = vunpack.c.l.s4 1934713408
        %v2226 = vunpack.c.0.s8 %v2225
        %v2227 = vperm.slane %v2219, %v2226
        %v2228 = vrot.slane %v2191, 4
        %v2229 = vsel %vm1696, %v2228, %v2179
        %v2230 = vrot.slane %v2179, 4
        %v2231 = vsel %vm1696, %v2191, %v2230
        %v2233 = vunpack.c.l.s4 1934713408
        %v2234 = vunpack.c.0.s8 %v2233
        %v2235 = vperm.slane %v2229, %v2234
        %v2237 = vunpack.c.l.s4 1934713408
        %v2238 = vunpack.c.0.s8 %v2237
        %v2239 = vperm.slane %v2231, %v2238
        %v2240 = vrot.slane %v2223, 4
        %v2241 = vsel %vm1696, %v2240, %v2199
        %v2242 = vrot.slane %v2199, 4
        %v2243 = vsel %vm1696, %v2223, %v2242
        %v2244 = vrot.slane %v2227, 4
        %v2245 = vsel %vm1696, %v2244, %v2203
        %v2246 = vrot.slane %v2203, 4
        %v2247 = vsel %vm1696, %v2227, %v2246
        %v2248 = vrot.slane %v2235, 4
        %v2249 = vsel %vm1696, %v2248, %v2211
        %v2250 = vrot.slane %v2211, 4
        %v2251 = vsel %vm1696, %v2235, %v2250
        %v2252 = vrot.slane %v2239, 4
        %v2253 = vsel %vm1696, %v2252, %v2215
        %v2254 = vrot.slane %v2215, 4
        %v2255 = vsel %vm1696, %v2239, %v2254
        %v2256 = vrot.slane %v1909, 4
        %v2257 = vsel %vm1696, %v2256, %v1905
        %v2258 = vrot.slane %v1905, 4
        %v2259 = vsel %vm1696, %v1909, %v2258
        %v2261 = vunpack.c.l.s4 1983009808
        %v2262 = vunpack.c.0.s8 %v2261
        %v2263 = vperm.slane %v2257, %v2262
        %v2265 = vunpack.c.l.s4 1983009808
        %v2266 = vunpack.c.0.s8 %v2265
        %v2267 = vperm.slane %v2259, %v2266
        %v2268 = vrot.slane %v1911, 4
        %v2269 = vsel %vm1696, %v2268, %v1907
        %v2270 = vrot.slane %v1907, 4
        %v2271 = vsel %vm1696, %v1911, %v2270
        %v2273 = vunpack.c.l.s4 1983009808
        %v2274 = vunpack.c.0.s8 %v2273
        %v2275 = vperm.slane %v2269, %v2274
        %v2277 = vunpack.c.l.s4 1983009808
        %v2278 = vunpack.c.0.s8 %v2277
        %v2279 = vperm.slane %v2271, %v2278
        %v2280 = vrot.slane %v1917, 4
        %v2281 = vsel %vm1696, %v2280, %v1913
        %v2282 = vrot.slane %v1913, 4
        %v2283 = vsel %vm1696, %v1917, %v2282
        %v2285 = vunpack.c.l.s4 1983009808
        %v2286 = vunpack.c.0.s8 %v2285
        %v2287 = vperm.slane %v2281, %v2286
        %v2289 = vunpack.c.l.s4 1983009808
        %v2290 = vunpack.c.0.s8 %v2289
        %v2291 = vperm.slane %v2283, %v2290
        %v2292 = vrot.slane %v1919, 4
        %v2293 = vsel %vm1696, %v2292, %v1915
        %v2294 = vrot.slane %v1915, 4
        %v2295 = vsel %vm1696, %v1919, %v2294
        %v2297 = vunpack.c.l.s4 1983009808
        %v2298 = vunpack.c.0.s8 %v2297
        %v2299 = vperm.slane %v2293, %v2298
        %v2301 = vunpack.c.l.s4 1983009808
        %v2302 = vunpack.c.0.s8 %v2301
        %v2303 = vperm.slane %v2295, %v2302
        %v2304 = vrot.slane %v2275, 4
        %v2305 = vsel %vm1696, %v2304, %v2263
        %v2306 = vrot.slane %v2263, 4
        %v2307 = vsel %vm1696, %v2275, %v2306
        %v2309 = vunpack.c.l.s4 1934713408
        %v2310 = vunpack.c.0.s8 %v2309
        %v2311 = vperm.slane %v2305, %v2310
        %v2313 = vunpack.c.l.s4 1934713408
        %v2314 = vunpack.c.0.s8 %v2313
        %v2315 = vperm.slane %v2307, %v2314
        %v2316 = vrot.slane %v2279, 4
        %v2317 = vsel %vm1696, %v2316, %v2267
        %v2318 = vrot.slane %v2267, 4
        %v2319 = vsel %vm1696, %v2279, %v2318
        %v2321 = vunpack.c.l.s4 1934713408
        %v2322 = vunpack.c.0.s8 %v2321
        %v2323 = vperm.slane %v2317, %v2322
        %v2325 = vunpack.c.l.s4 1934713408
        %v2326 = vunpack.c.0.s8 %v2325
        %v2327 = vperm.slane %v2319, %v2326
        %v2328 = vrot.slane %v2299, 4
        %v2329 = vsel %vm1696, %v2328, %v2287
        %v2330 = vrot.slane %v2287, 4
        %v2331 = vsel %vm1696, %v2299, %v2330
        %v2333 = vunpack.c.l.s4 1934713408
        %v2334 = vunpack.c.0.s8 %v2333
        %v2335 = vperm.slane %v2329, %v2334
        %v2337 = vunpack.c.l.s4 1934713408
        %v2338 = vunpack.c.0.s8 %v2337
        %v2339 = vperm.slane %v2331, %v2338
        %v2340 = vrot.slane %v2303, 4
        %v2341 = vsel %vm1696, %v2340, %v2291
        %v2342 = vrot.slane %v2291, 4
        %v2343 = vsel %vm1696, %v2303, %v2342
        %v2345 = vunpack.c.l.s4 1934713408
        %v2346 = vunpack.c.0.s8 %v2345
        %v2347 = vperm.slane %v2341, %v2346
        %v2349 = vunpack.c.l.s4 1934713408
        %v2350 = vunpack.c.0.s8 %v2349
        %v2351 = vperm.slane %v2343, %v2350
        %v2352 = vrot.slane %v2335, 4
        %v2353 = vsel %vm1696, %v2352, %v2311
        %v2354 = vrot.slane %v2311, 4
        %v2355 = vsel %vm1696, %v2335, %v2354
        %v2356 = vrot.slane %v2339, 4
        %v2357 = vsel %vm1696, %v2356, %v2315
        %v2358 = vrot.slane %v2315, 4
        %v2359 = vsel %vm1696, %v2339, %v2358
        %v2360 = vrot.slane %v2347, 4
        %v2361 = vsel %vm1696, %v2360, %v2323
        %v2362 = vrot.slane %v2323, 4
        %v2363 = vsel %vm1696, %v2347, %v2362
        %v2364 = vrot.slane %v2351, 4
        %v2365 = vsel %vm1696, %v2364, %v2327
        %v2366 = vrot.slane %v2327, 4
        %v2367 = vsel %vm1696, %v2351, %v2366
        %v2368 = vrot.slane %v2021, 4
        %v2369 = vsel %vm1696, %v2368, %v2017
        %v2370 = vrot.slane %v2017, 4
        %v2371 = vsel %vm1696, %v2021, %v2370
        %v2373 = vunpack.c.l.s4 1983009808
        %v2374 = vunpack.c.0.s8 %v2373
        %v2375 = vperm.slane %v2369, %v2374
        %v2377 = vunpack.c.l.s4 1983009808
        %v2378 = vunpack.c.0.s8 %v2377
        %v2379 = vperm.slane %v2371, %v2378
        %v2380 = vrot.slane %v2023, 4
        %v2381 = vsel %vm1696, %v2380, %v2019
        %v2382 = vrot.slane %v2019, 4
        %v2383 = vsel %vm1696, %v2023, %v2382
        %v2385 = vunpack.c.l.s4 1983009808
        %v2386 = vunpack.c.0.s8 %v2385
        %v2387 = vperm.slane %v2381, %v2386
        %v2389 = vunpack.c.l.s4 1983009808
        %v2390 = vunpack.c.0.s8 %v2389
        %v2391 = vperm.slane %v2383, %v2390
        %v2392 = vrot.slane %v2029, 4
        %v2393 = vsel %vm1696, %v2392, %v2025
        %v2394 = vrot.slane %v2025, 4
        %v2395 = vsel %vm1696, %v2029, %v2394
        %v2397 = vunpack.c.l.s4 1983009808
        %v2398 = vunpack.c.0.s8 %v2397
        %v2399 = vperm.slane %v2393, %v2398
        %v2401 = vunpack.c.l.s4 1983009808
        %v2402 = vunpack.c.0.s8 %v2401
        %v2403 = vperm.slane %v2395, %v2402
        %v2404 = vrot.slane %v2031, 4
        %v2405 = vsel %vm1696, %v2404, %v2027
        %v2406 = vrot.slane %v2027, 4
        %v2407 = vsel %vm1696, %v2031, %v2406
        %v2409 = vunpack.c.l.s4 1983009808
        %v2410 = vunpack.c.0.s8 %v2409
        %v2411 = vperm.slane %v2405, %v2410
        %v2413 = vunpack.c.l.s4 1983009808
        %v2414 = vunpack.c.0.s8 %v2413
        %v2415 = vperm.slane %v2407, %v2414
        %v2416 = vrot.slane %v2387, 4
        %v2417 = vsel %vm1696, %v2416, %v2375
        %v2418 = vrot.slane %v2375, 4
        %v2419 = vsel %vm1696, %v2387, %v2418
        %v2421 = vunpack.c.l.s4 1934713408
        %v2422 = vunpack.c.0.s8 %v2421
        %v2423 = vperm.slane %v2417, %v2422
        %v2425 = vunpack.c.l.s4 1934713408
        %v2426 = vunpack.c.0.s8 %v2425
        %v2427 = vperm.slane %v2419, %v2426
        %v2428 = vrot.slane %v2391, 4
        %v2429 = vsel %vm1696, %v2428, %v2379
        %v2430 = vrot.slane %v2379, 4
        %v2431 = vsel %vm1696, %v2391, %v2430
        %v2433 = vunpack.c.l.s4 1934713408
        %v2434 = vunpack.c.0.s8 %v2433
        %v2435 = vperm.slane %v2429, %v2434
        %v2437 = vunpack.c.l.s4 1934713408
        %v2438 = vunpack.c.0.s8 %v2437
        %v2439 = vperm.slane %v2431, %v2438
        %v2440 = vrot.slane %v2411, 4
        %v2441 = vsel %vm1696, %v2440, %v2399
        %v2442 = vrot.slane %v2399, 4
        %v2443 = vsel %vm1696, %v2411, %v2442
        %v2445 = vunpack.c.l.s4 1934713408
        %v2446 = vunpack.c.0.s8 %v2445
        %v2447 = vperm.slane %v2441, %v2446
        %v2449 = vunpack.c.l.s4 1934713408
        %v2450 = vunpack.c.0.s8 %v2449
        %v2451 = vperm.slane %v2443, %v2450
        %v2452 = vrot.slane %v2415, 4
        %v2453 = vsel %vm1696, %v2452, %v2403
        %v2454 = vrot.slane %v2403, 4
        %v2455 = vsel %vm1696, %v2415, %v2454
        %v2457 = vunpack.c.l.s4 1934713408
        %v2458 = vunpack.c.0.s8 %v2457
        %v2459 = vperm.slane %v2453, %v2458
        %v2461 = vunpack.c.l.s4 1934713408
        %v2462 = vunpack.c.0.s8 %v2461
        %v2463 = vperm.slane %v2455, %v2462
        %v2464 = vrot.slane %v2447, 4
        %v2465 = vsel %vm1696, %v2464, %v2423
        %v2466 = vrot.slane %v2423, 4
        %v2467 = vsel %vm1696, %v2447, %v2466
        %v2468 = vrot.slane %v2451, 4
        %v2469 = vsel %vm1696, %v2468, %v2427
        %v2470 = vrot.slane %v2427, 4
        %v2471 = vsel %vm1696, %v2451, %v2470
        %v2472 = vrot.slane %v2459, 4
        %v2473 = vsel %vm1696, %v2472, %v2435
        %v2474 = vrot.slane %v2435, 4
        %v2475 = vsel %vm1696, %v2459, %v2474
        %v2476 = vrot.slane %v2463, 4
        %v2477 = vsel %vm1696, %v2476, %v2439
        %v2478 = vrot.slane %v2439, 4
        %v2479 = vsel %vm1696, %v2463, %v2478
        %v2480 = vrot.slane %v2133, 4
        %v2481 = vsel %vm1696, %v2480, %v2129
        %v2482 = vrot.slane %v2129, 4
        %v2483 = vsel %vm1696, %v2133, %v2482
        %v2485 = vunpack.c.l.s4 1983009808
        %v2486 = vunpack.c.0.s8 %v2485
        %v2487 = vperm.slane %v2481, %v2486
        %v2489 = vunpack.c.l.s4 1983009808
        %v2490 = vunpack.c.0.s8 %v2489
        %v2491 = vperm.slane %v2483, %v2490
        %v2492 = vrot.slane %v2135, 4
        %v2493 = vsel %vm1696, %v2492, %v2131
        %v2494 = vrot.slane %v2131, 4
        %v2495 = vsel %vm1696, %v2135, %v2494
        %v2497 = vunpack.c.l.s4 1983009808
        %v2498 = vunpack.c.0.s8 %v2497
        %v2499 = vperm.slane %v2493, %v2498
        %v2501 = vunpack.c.l.s4 1983009808
        %v2502 = vunpack.c.0.s8 %v2501
        %v2503 = vperm.slane %v2495, %v2502
        %v2504 = vrot.slane %v2141, 4
        %v2505 = vsel %vm1696, %v2504, %v2137
        %v2506 = vrot.slane %v2137, 4
        %v2507 = vsel %vm1696, %v2141, %v2506
        %v2509 = vunpack.c.l.s4 1983009808
        %v2510 = vunpack.c.0.s8 %v2509
        %v2511 = vperm.slane %v2505, %v2510
        %v2513 = vunpack.c.l.s4 1983009808
        %v2514 = vunpack.c.0.s8 %v2513
        %v2515 = vperm.slane %v2507, %v2514
        %v2516 = vrot.slane %v2143, 4
        %v2517 = vsel %vm1696, %v2516, %v2139
        %v2518 = vrot.slane %v2139, 4
        %v2519 = vsel %vm1696, %v2143, %v2518
        %v2521 = vunpack.c.l.s4 1983009808
        %v2522 = vunpack.c.0.s8 %v2521
        %v2523 = vperm.slane %v2517, %v2522
        %v2525 = vunpack.c.l.s4 1983009808
        %v2526 = vunpack.c.0.s8 %v2525
        %v2527 = vperm.slane %v2519, %v2526
        %v2528 = vrot.slane %v2499, 4
        %v2529 = vsel %vm1696, %v2528, %v2487
        %v2530 = vrot.slane %v2487, 4
        %v2531 = vsel %vm1696, %v2499, %v2530
        %v2533 = vunpack.c.l.s4 1934713408
        %v2534 = vunpack.c.0.s8 %v2533
        %v2535 = vperm.slane %v2529, %v2534
        %v2537 = vunpack.c.l.s4 1934713408
        %v2538 = vunpack.c.0.s8 %v2537
        %v2539 = vperm.slane %v2531, %v2538
        %v2540 = vrot.slane %v2503, 4
        %v2541 = vsel %vm1696, %v2540, %v2491
        %v2542 = vrot.slane %v2491, 4
        %v2543 = vsel %vm1696, %v2503, %v2542
        %v2545 = vunpack.c.l.s4 1934713408
        %v2546 = vunpack.c.0.s8 %v2545
        %v2547 = vperm.slane %v2541, %v2546
        %v2549 = vunpack.c.l.s4 1934713408
        %v2550 = vunpack.c.0.s8 %v2549
        %v2551 = vperm.slane %v2543, %v2550
        %v2552 = vrot.slane %v2523, 4
        %v2553 = vsel %vm1696, %v2552, %v2511
        %v2554 = vrot.slane %v2511, 4
        %v2555 = vsel %vm1696, %v2523, %v2554
        %v2557 = vunpack.c.l.s4 1934713408
        %v2558 = vunpack.c.0.s8 %v2557
        %v2559 = vperm.slane %v2553, %v2558
        %v2561 = vunpack.c.l.s4 1934713408
        %v2562 = vunpack.c.0.s8 %v2561
        %v2563 = vperm.slane %v2555, %v2562
        %v2564 = vrot.slane %v2527, 4
        %v2565 = vsel %vm1696, %v2564, %v2515
        %v2566 = vrot.slane %v2515, 4
        %v2567 = vsel %vm1696, %v2527, %v2566
        %v2569 = vunpack.c.l.s4 1934713408
        %v2570 = vunpack.c.0.s8 %v2569
        %v2571 = vperm.slane %v2565, %v2570
        %v2573 = vunpack.c.l.s4 1934713408
        %v2574 = vunpack.c.0.s8 %v2573
        %v2575 = vperm.slane %v2567, %v2574
        %v2576 = vrot.slane %v2559, 4
        %v2577 = vsel %vm1696, %v2576, %v2535
        %v2578 = vrot.slane %v2535, 4
        %v2579 = vsel %vm1696, %v2559, %v2578
        %v2580 = vrot.slane %v2563, 4
        %v2581 = vsel %vm1696, %v2580, %v2539
        %v2582 = vrot.slane %v2539, 4
        %v2583 = vsel %vm1696, %v2563, %v2582
        %v2584 = vrot.slane %v2571, 4
        %v2585 = vsel %vm1696, %v2584, %v2547
        %v2586 = vrot.slane %v2547, 4
        %v2587 = vsel %vm1696, %v2571, %v2586
        %v2588 = vrot.slane %v2575, 4
        %v2589 = vsel %vm1696, %v2588, %v2551
        %v2590 = vrot.slane %v2551, 4
        %v2591 = vsel %vm1696, %v2575, %v2590
        %2594 = vrot.lane.b32.xlu0 %v1288, 96
        %v2595 = vpop.permute.xlu0 %2594
        %2596 = vrot.lane.b32.xlu0 %v1291, 96
        %v2597 = vpop.permute.xlu0 %2596
        %2600 = vrot.lane.b32.xlu0 %v1288, 64
        %v2601 = vpop.permute.xlu0 %2600
        %2602 = vrot.lane.b32.xlu0 %v1291, 64
        %v2603 = vpop.permute.xlu0 %2602
        %2606 = vrot.lane.b32.xlu0 %v1288, 32
        %v2607 = vpop.permute.xlu0 %2606
        %2608 = vrot.lane.b32.xlu0 %v1291, 32
        %v2609 = vpop.permute.xlu0 %2608
        %2614 = vrot.lane.b32.xlu0 %v1334, 96
        %v2615 = vpop.permute.xlu0 %2614
        %2616 = vrot.lane.b32.xlu0 %v1337, 96
        %v2617 = vpop.permute.xlu0 %2616
        %2620 = vrot.lane.b32.xlu0 %v1334, 64
        %v2621 = vpop.permute.xlu0 %2620
        %2622 = vrot.lane.b32.xlu0 %v1337, 64
        %v2623 = vpop.permute.xlu0 %2622
        %2626 = vrot.lane.b32.xlu0 %v1334, 32
        %v2627 = vpop.permute.xlu0 %2626
        %2628 = vrot.lane.b32.xlu0 %v1337, 32
        %v2629 = vpop.permute.xlu0 %2628
        %2634 = vrot.lane.b32.xlu0 %v1380, 96
        %v2635 = vpop.permute.xlu0 %2634
        %2636 = vrot.lane.b32.xlu0 %v1383, 96
        %v2637 = vpop.permute.xlu0 %2636
        %2640 = vrot.lane.b32.xlu0 %v1380, 64
        %v2641 = vpop.permute.xlu0 %2640
        %2642 = vrot.lane.b32.xlu0 %v1383, 64
        %v2643 = vpop.permute.xlu0 %2642
        %2646 = vrot.lane.b32.xlu0 %v1380, 32
        %v2647 = vpop.permute.xlu0 %2646
        %2648 = vrot.lane.b32.xlu0 %v1383, 32
        %v2649 = vpop.permute.xlu0 %2648
        %2654 = vrot.lane.b32.xlu0 %v1426, 96
        %v2655 = vpop.permute.xlu0 %2654
        %2656 = vrot.lane.b32.xlu0 %v1429, 96
        %v2657 = vpop.permute.xlu0 %2656
        %2660 = vrot.lane.b32.xlu0 %v1426, 64
        %v2661 = vpop.permute.xlu0 %2660
        %2662 = vrot.lane.b32.xlu0 %v1429, 64
        %v2663 = vpop.permute.xlu0 %2662
        %2666 = vrot.lane.b32.xlu0 %v1426, 32
        %v2667 = vpop.permute.xlu0 %2666
        %2668 = vrot.lane.b32.xlu0 %v1429, 32
        %v2669 = vpop.permute.xlu0 %2668
        %v2672 = vrot.slane %v2601, 4
        %v2673 = vsel %vm1696, %v2672, %v1288
        %v2674 = vrot.slane %v1288, 4
        %v2675 = vsel %vm1696, %v2601, %v2674
        %v2677 = vunpack.c.l.s4 1983009808
        %v2678 = vunpack.c.0.s8 %v2677
        %v2679 = vperm.slane %v2673, %v2678
        %v2681 = vunpack.c.l.s4 1983009808
        %v2682 = vunpack.c.0.s8 %v2681
        %v2683 = vperm.slane %v2675, %v2682
        %v2684 = vrot.slane %v2607, 4
        %v2685 = vsel %vm1696, %v2684, %v2595
        %v2686 = vrot.slane %v2595, 4
        %v2687 = vsel %vm1696, %v2607, %v2686
        %v2689 = vunpack.c.l.s4 1983009808
        %v2690 = vunpack.c.0.s8 %v2689
        %v2691 = vperm.slane %v2685, %v2690
        %v2693 = vunpack.c.l.s4 1983009808
        %v2694 = vunpack.c.0.s8 %v2693
        %v2695 = vperm.slane %v2687, %v2694
        %v2696 = vrot.slane %v2621, 4
        %v2697 = vsel %vm1696, %v2696, %v1334
        %v2698 = vrot.slane %v1334, 4
        %v2699 = vsel %vm1696, %v2621, %v2698
        %v2701 = vunpack.c.l.s4 1983009808
        %v2702 = vunpack.c.0.s8 %v2701
        %v2703 = vperm.slane %v2697, %v2702
        %v2705 = vunpack.c.l.s4 1983009808
        %v2706 = vunpack.c.0.s8 %v2705
        %v2707 = vperm.slane %v2699, %v2706
        %v2708 = vrot.slane %v2627, 4
        %v2709 = vsel %vm1696, %v2708, %v2615
        %v2710 = vrot.slane %v2615, 4
        %v2711 = vsel %vm1696, %v2627, %v2710
        %v2713 = vunpack.c.l.s4 1983009808
        %v2714 = vunpack.c.0.s8 %v2713
        %v2715 = vperm.slane %v2709, %v2714
        %v2717 = vunpack.c.l.s4 1983009808
        %v2718 = vunpack.c.0.s8 %v2717
        %v2719 = vperm.slane %v2711, %v2718
        %v2720 = vrot.slane %v2691, 4
        %v2721 = vsel %vm1696, %v2720, %v2679
        %v2722 = vrot.slane %v2679, 4
        %v2723 = vsel %vm1696, %v2691, %v2722
        %v2725 = vunpack.c.l.s4 1934713408
        %v2726 = vunpack.c.0.s8 %v2725
        %v2727 = vperm.slane %v2721, %v2726
        %v2729 = vunpack.c.l.s4 1934713408
        %v2730 = vunpack.c.0.s8 %v2729
        %v2731 = vperm.slane %v2723, %v2730
        %v2732 = vrot.slane %v2695, 4
        %v2733 = vsel %vm1696, %v2732, %v2683
        %v2734 = vrot.slane %v2683, 4
        %v2735 = vsel %vm1696, %v2695, %v2734
        %v2737 = vunpack.c.l.s4 1934713408
        %v2738 = vunpack.c.0.s8 %v2737
        %v2739 = vperm.slane %v2733, %v2738
        %v2741 = vunpack.c.l.s4 1934713408
        %v2742 = vunpack.c.0.s8 %v2741
        %v2743 = vperm.slane %v2735, %v2742
        %v2744 = vrot.slane %v2715, 4
        %v2745 = vsel %vm1696, %v2744, %v2703
        %v2746 = vrot.slane %v2703, 4
        %v2747 = vsel %vm1696, %v2715, %v2746
        %v2749 = vunpack.c.l.s4 1934713408
        %v2750 = vunpack.c.0.s8 %v2749
        %v2751 = vperm.slane %v2745, %v2750
        %v2753 = vunpack.c.l.s4 1934713408
        %v2754 = vunpack.c.0.s8 %v2753
        %v2755 = vperm.slane %v2747, %v2754
        %v2756 = vrot.slane %v2719, 4
        %v2757 = vsel %vm1696, %v2756, %v2707
        %v2758 = vrot.slane %v2707, 4
        %v2759 = vsel %vm1696, %v2719, %v2758
        %v2761 = vunpack.c.l.s4 1934713408
        %v2762 = vunpack.c.0.s8 %v2761
        %v2763 = vperm.slane %v2757, %v2762
        %v2765 = vunpack.c.l.s4 1934713408
        %v2766 = vunpack.c.0.s8 %v2765
        %v2767 = vperm.slane %v2759, %v2766
        %v2768 = vrot.slane %v2751, 4
        %v2769 = vsel %vm1696, %v2768, %v2727
        %v2770 = vrot.slane %v2727, 4
        %v2771 = vsel %vm1696, %v2751, %v2770
        %v2772 = vrot.slane %v2755, 4
        %v2773 = vsel %vm1696, %v2772, %v2731
        %v2774 = vrot.slane %v2731, 4
        %v2775 = vsel %vm1696, %v2755, %v2774
        %v2776 = vrot.slane %v2763, 4
        %v2777 = vsel %vm1696, %v2776, %v2739
        %v2778 = vrot.slane %v2739, 4
        %v2779 = vsel %vm1696, %v2763, %v2778
        %v2780 = vrot.slane %v2767, 4
        %v2781 = vsel %vm1696, %v2780, %v2743
        %v2782 = vrot.slane %v2743, 4
        %v2783 = vsel %vm1696, %v2767, %v2782
        %v2784 = vrot.slane %v2641, 4
        %v2785 = vsel %vm1696, %v2784, %v1380
        %v2786 = vrot.slane %v1380, 4
        %v2787 = vsel %vm1696, %v2641, %v2786
        %v2789 = vunpack.c.l.s4 1983009808
        %v2790 = vunpack.c.0.s8 %v2789
        %v2791 = vperm.slane %v2785, %v2790
        %v2793 = vunpack.c.l.s4 1983009808
        %v2794 = vunpack.c.0.s8 %v2793
        %v2795 = vperm.slane %v2787, %v2794
        %v2796 = vrot.slane %v2647, 4
        %v2797 = vsel %vm1696, %v2796, %v2635
        %v2798 = vrot.slane %v2635, 4
        %v2799 = vsel %vm1696, %v2647, %v2798
        %v2801 = vunpack.c.l.s4 1983009808
        %v2802 = vunpack.c.0.s8 %v2801
        %v2803 = vperm.slane %v2797, %v2802
        %v2805 = vunpack.c.l.s4 1983009808
        %v2806 = vunpack.c.0.s8 %v2805
        %v2807 = vperm.slane %v2799, %v2806
        %v2808 = vrot.slane %v2661, 4
        %v2809 = vsel %vm1696, %v2808, %v1426
        %v2810 = vrot.slane %v1426, 4
        %v2811 = vsel %vm1696, %v2661, %v2810
        %v2813 = vunpack.c.l.s4 1983009808
        %v2814 = vunpack.c.0.s8 %v2813
        %v2815 = vperm.slane %v2809, %v2814
        %v2817 = vunpack.c.l.s4 1983009808
        %v2818 = vunpack.c.0.s8 %v2817
        %v2819 = vperm.slane %v2811, %v2818
        %v2820 = vrot.slane %v2667, 4
        %v2821 = vsel %vm1696, %v2820, %v2655
        %v2822 = vrot.slane %v2655, 4
        %v2823 = vsel %vm1696, %v2667, %v2822
        %v2825 = vunpack.c.l.s4 1983009808
        %v2826 = vunpack.c.0.s8 %v2825
        %v2827 = vperm.slane %v2821, %v2826
        %v2829 = vunpack.c.l.s4 1983009808
        %v2830 = vunpack.c.0.s8 %v2829
        %v2831 = vperm.slane %v2823, %v2830
        %v2832 = vrot.slane %v2803, 4
        %v2833 = vsel %vm1696, %v2832, %v2791
        %v2834 = vrot.slane %v2791, 4
        %v2835 = vsel %vm1696, %v2803, %v2834
        %v2837 = vunpack.c.l.s4 1934713408
        %v2838 = vunpack.c.0.s8 %v2837
        %v2839 = vperm.slane %v2833, %v2838
        %v2841 = vunpack.c.l.s4 1934713408
        %v2842 = vunpack.c.0.s8 %v2841
        %v2843 = vperm.slane %v2835, %v2842
        %v2844 = vrot.slane %v2807, 4
        %v2845 = vsel %vm1696, %v2844, %v2795
        %v2846 = vrot.slane %v2795, 4
        %v2847 = vsel %vm1696, %v2807, %v2846
        %v2849 = vunpack.c.l.s4 1934713408
        %v2850 = vunpack.c.0.s8 %v2849
        %v2851 = vperm.slane %v2845, %v2850
        %v2853 = vunpack.c.l.s4 1934713408
        %v2854 = vunpack.c.0.s8 %v2853
        %v2855 = vperm.slane %v2847, %v2854
        %v2856 = vrot.slane %v2827, 4
        %v2857 = vsel %vm1696, %v2856, %v2815
        %v2858 = vrot.slane %v2815, 4
        %v2859 = vsel %vm1696, %v2827, %v2858
        %v2861 = vunpack.c.l.s4 1934713408
        %v2862 = vunpack.c.0.s8 %v2861
        %v2863 = vperm.slane %v2857, %v2862
        %v2865 = vunpack.c.l.s4 1934713408
        %v2866 = vunpack.c.0.s8 %v2865
        %v2867 = vperm.slane %v2859, %v2866
        %v2868 = vrot.slane %v2831, 4
        %v2869 = vsel %vm1696, %v2868, %v2819
        %v2870 = vrot.slane %v2819, 4
        %v2871 = vsel %vm1696, %v2831, %v2870
        %v2873 = vunpack.c.l.s4 1934713408
        %v2874 = vunpack.c.0.s8 %v2873
        %v2875 = vperm.slane %v2869, %v2874
        %v2877 = vunpack.c.l.s4 1934713408
        %v2878 = vunpack.c.0.s8 %v2877
        %v2879 = vperm.slane %v2871, %v2878
        %v2880 = vrot.slane %v2863, 4
        %v2881 = vsel %vm1696, %v2880, %v2839
        %v2882 = vrot.slane %v2839, 4
        %v2883 = vsel %vm1696, %v2863, %v2882
        %v2884 = vrot.slane %v2867, 4
        %v2885 = vsel %vm1696, %v2884, %v2843
        %v2886 = vrot.slane %v2843, 4
        %v2887 = vsel %vm1696, %v2867, %v2886
        %v2888 = vrot.slane %v2875, 4
        %v2889 = vsel %vm1696, %v2888, %v2851
        %v2890 = vrot.slane %v2851, 4
        %v2891 = vsel %vm1696, %v2875, %v2890
        %v2892 = vrot.slane %v2879, 4
        %v2893 = vsel %vm1696, %v2892, %v2855
        %v2894 = vrot.slane %v2855, 4
        %v2895 = vsel %vm1696, %v2879, %v2894
        %v2896 = vrot.slane %v2603, 4
        %v2897 = vsel %vm1696, %v2896, %v1291
        %v2898 = vrot.slane %v1291, 4
        %v2899 = vsel %vm1696, %v2603, %v2898
        %v2901 = vunpack.c.l.s4 1983009808
        %v2902 = vunpack.c.0.s8 %v2901
        %v2903 = vperm.slane %v2897, %v2902
        %v2905 = vunpack.c.l.s4 1983009808
        %v2906 = vunpack.c.0.s8 %v2905
        %v2907 = vperm.slane %v2899, %v2906
        %v2908 = vrot.slane %v2609, 4
        %v2909 = vsel %vm1696, %v2908, %v2597
        %v2910 = vrot.slane %v2597, 4
        %v2911 = vsel %vm1696, %v2609, %v2910
        %v2913 = vunpack.c.l.s4 1983009808
        %v2914 = vunpack.c.0.s8 %v2913
        %v2915 = vperm.slane %v2909, %v2914
        %v2917 = vunpack.c.l.s4 1983009808
        %v2918 = vunpack.c.0.s8 %v2917
        %v2919 = vperm.slane %v2911, %v2918
        %v2920 = vrot.slane %v2623, 4
        %v2921 = vsel %vm1696, %v2920, %v1337
        %v2922 = vrot.slane %v1337, 4
        %v2923 = vsel %vm1696, %v2623, %v2922
        %v2925 = vunpack.c.l.s4 1983009808
        %v2926 = vunpack.c.0.s8 %v2925
        %v2927 = vperm.slane %v2921, %v2926
        %v2929 = vunpack.c.l.s4 1983009808
        %v2930 = vunpack.c.0.s8 %v2929
        %v2931 = vperm.slane %v2923, %v2930
        %v2932 = vrot.slane %v2629, 4
        %v2933 = vsel %vm1696, %v2932, %v2617
        %v2934 = vrot.slane %v2617, 4
        %v2935 = vsel %vm1696, %v2629, %v2934
        %v2937 = vunpack.c.l.s4 1983009808
        %v2938 = vunpack.c.0.s8 %v2937
        %v2939 = vperm.slane %v2933, %v2938
        %v2941 = vunpack.c.l.s4 1983009808
        %v2942 = vunpack.c.0.s8 %v2941
        %v2943 = vperm.slane %v2935, %v2942
        %v2944 = vrot.slane %v2915, 4
        %v2945 = vsel %vm1696, %v2944, %v2903
        %v2946 = vrot.slane %v2903, 4
        %v2947 = vsel %vm1696, %v2915, %v2946
        %v2949 = vunpack.c.l.s4 1934713408
        %v2950 = vunpack.c.0.s8 %v2949
        %v2951 = vperm.slane %v2945, %v2950
        %v2953 = vunpack.c.l.s4 1934713408
        %v2954 = vunpack.c.0.s8 %v2953
        %v2955 = vperm.slane %v2947, %v2954
        %v2956 = vrot.slane %v2919, 4
        %v2957 = vsel %vm1696, %v2956, %v2907
        %v2958 = vrot.slane %v2907, 4
        %v2959 = vsel %vm1696, %v2919, %v2958
        %v2961 = vunpack.c.l.s4 1934713408
        %v2962 = vunpack.c.0.s8 %v2961
        %v2963 = vperm.slane %v2957, %v2962
        %v2965 = vunpack.c.l.s4 1934713408
        %v2966 = vunpack.c.0.s8 %v2965
        %v2967 = vperm.slane %v2959, %v2966
        %v2968 = vrot.slane %v2939, 4
        %v2969 = vsel %vm1696, %v2968, %v2927
        %v2970 = vrot.slane %v2927, 4
        %v2971 = vsel %vm1696, %v2939, %v2970
        %v2973 = vunpack.c.l.s4 1934713408
        %v2974 = vunpack.c.0.s8 %v2973
        %v2975 = vperm.slane %v2969, %v2974
        %v2977 = vunpack.c.l.s4 1934713408
        %v2978 = vunpack.c.0.s8 %v2977
        %v2979 = vperm.slane %v2971, %v2978
        %v2980 = vrot.slane %v2943, 4
        %v2981 = vsel %vm1696, %v2980, %v2931
        %v2982 = vrot.slane %v2931, 4
        %v2983 = vsel %vm1696, %v2943, %v2982
        %v2985 = vunpack.c.l.s4 1934713408
        %v2986 = vunpack.c.0.s8 %v2985
        %v2987 = vperm.slane %v2981, %v2986
        %v2989 = vunpack.c.l.s4 1934713408
        %v2990 = vunpack.c.0.s8 %v2989
        %v2991 = vperm.slane %v2983, %v2990
        %v2992 = vrot.slane %v2975, 4
        %v2993 = vsel %vm1696, %v2992, %v2951
        %v2994 = vrot.slane %v2951, 4
        %v2995 = vsel %vm1696, %v2975, %v2994
        %v2996 = vrot.slane %v2979, 4
        %v2997 = vsel %vm1696, %v2996, %v2955
        %v2998 = vrot.slane %v2955, 4
        %v2999 = vsel %vm1696, %v2979, %v2998
        %v3000 = vrot.slane %v2987, 4
        %v3001 = vsel %vm1696, %v3000, %v2963
        %v3002 = vrot.slane %v2963, 4
        %v3003 = vsel %vm1696, %v2987, %v3002
        %v3004 = vrot.slane %v2991, 4
        %v3005 = vsel %vm1696, %v3004, %v2967
        %v3006 = vrot.slane %v2967, 4
        %v3007 = vsel %vm1696, %v2991, %v3006
        %v3008 = vrot.slane %v2643, 4
        %v3009 = vsel %vm1696, %v3008, %v1383
        %v3010 = vrot.slane %v1383, 4
        %v3011 = vsel %vm1696, %v2643, %v3010
        %v3013 = vunpack.c.l.s4 1983009808
        %v3014 = vunpack.c.0.s8 %v3013
        %v3015 = vperm.slane %v3009, %v3014
        %v3017 = vunpack.c.l.s4 1983009808
        %v3018 = vunpack.c.0.s8 %v3017
        %v3019 = vperm.slane %v3011, %v3018
        %v3020 = vrot.slane %v2649, 4
        %v3021 = vsel %vm1696, %v3020, %v2637
        %v3022 = vrot.slane %v2637, 4
        %v3023 = vsel %vm1696, %v2649, %v3022
        %v3025 = vunpack.c.l.s4 1983009808
        %v3026 = vunpack.c.0.s8 %v3025
        %v3027 = vperm.slane %v3021, %v3026
        %v3029 = vunpack.c.l.s4 1983009808
        %v3030 = vunpack.c.0.s8 %v3029
        %v3031 = vperm.slane %v3023, %v3030
        %v3032 = vrot.slane %v2663, 4
        %v3033 = vsel %vm1696, %v3032, %v1429
        %v3034 = vrot.slane %v1429, 4
        %v3035 = vsel %vm1696, %v2663, %v3034
        %v3037 = vunpack.c.l.s4 1983009808
        %v3038 = vunpack.c.0.s8 %v3037
        %v3039 = vperm.slane %v3033, %v3038
        %v3041 = vunpack.c.l.s4 1983009808
        %v3042 = vunpack.c.0.s8 %v3041
        %v3043 = vperm.slane %v3035, %v3042
        %v3044 = vrot.slane %v2669, 4
        %v3045 = vsel %vm1696, %v3044, %v2657
        %v3046 = vrot.slane %v2657, 4
        %v3047 = vsel %vm1696, %v2669, %v3046
        %v3049 = vunpack.c.l.s4 1983009808
        %v3050 = vunpack.c.0.s8 %v3049
        %v3051 = vperm.slane %v3045, %v3050
        %v3053 = vunpack.c.l.s4 1983009808
        %v3054 = vunpack.c.0.s8 %v3053
        %v3055 = vperm.slane %v3047, %v3054
        %v3056 = vrot.slane %v3027, 4
        %v3057 = vsel %vm1696, %v3056, %v3015
        %v3058 = vrot.slane %v3015, 4
        %v3059 = vsel %vm1696, %v3027, %v3058
        %v3061 = vunpack.c.l.s4 1934713408
        %v3062 = vunpack.c.0.s8 %v3061
        %v3063 = vperm.slane %v3057, %v3062
        %v3065 = vunpack.c.l.s4 1934713408
        %v3066 = vunpack.c.0.s8 %v3065
        %v3067 = vperm.slane %v3059, %v3066
        %v3068 = vrot.slane %v3031, 4
        %v3069 = vsel %vm1696, %v3068, %v3019
        %v3070 = vrot.slane %v3019, 4
        %v3071 = vsel %vm1696, %v3031, %v3070
        %v3073 = vunpack.c.l.s4 1934713408
        %v3074 = vunpack.c.0.s8 %v3073
        %v3075 = vperm.slane %v3069, %v3074
        %v3077 = vunpack.c.l.s4 1934713408
        %v3078 = vunpack.c.0.s8 %v3077
        %v3079 = vperm.slane %v3071, %v3078
        %v3080 = vrot.slane %v3051, 4
        %v3081 = vsel %vm1696, %v3080, %v3039
        %v3082 = vrot.slane %v3039, 4
        %v3083 = vsel %vm1696, %v3051, %v3082
        %v3085 = vunpack.c.l.s4 1934713408
        %v3086 = vunpack.c.0.s8 %v3085
        %v3087 = vperm.slane %v3081, %v3086
        %v3089 = vunpack.c.l.s4 1934713408
        %v3090 = vunpack.c.0.s8 %v3089
        %v3091 = vperm.slane %v3083, %v3090
        %v3092 = vrot.slane %v3055, 4
        %v3093 = vsel %vm1696, %v3092, %v3043
        %v3094 = vrot.slane %v3043, 4
        %v3095 = vsel %vm1696, %v3055, %v3094
        %v3097 = vunpack.c.l.s4 1934713408
        %v3098 = vunpack.c.0.s8 %v3097
        %v3099 = vperm.slane %v3093, %v3098
        %v3101 = vunpack.c.l.s4 1934713408
        %v3102 = vunpack.c.0.s8 %v3101
        %v3103 = vperm.slane %v3095, %v3102
        %v3104 = vrot.slane %v3087, 4
        %v3105 = vsel %vm1696, %v3104, %v3063
        %v3106 = vrot.slane %v3063, 4
        %v3107 = vsel %vm1696, %v3087, %v3106
        %v3108 = vrot.slane %v3091, 4
        %v3109 = vsel %vm1696, %v3108, %v3067
        %v3110 = vrot.slane %v3067, 4
        %v3111 = vsel %vm1696, %v3091, %v3110
        %v3112 = vrot.slane %v3099, 4
        %v3113 = vsel %vm1696, %v3112, %v3075
        %v3114 = vrot.slane %v3075, 4
        %v3115 = vsel %vm1696, %v3099, %v3114
        %v3116 = vrot.slane %v3103, 4
        %v3117 = vsel %vm1696, %v3116, %v3079
        %v3118 = vrot.slane %v3079, 4
        %v3119 = vsel %vm1696, %v3103, %v3118
        %v3120 = vrot.slane %v2773, 4
        %v3121 = vsel %vm1696, %v3120, %v2769
        %v3122 = vrot.slane %v2769, 4
        %v3123 = vsel %vm1696, %v2773, %v3122
        %v3125 = vunpack.c.l.s4 1983009808
        %v3126 = vunpack.c.0.s8 %v3125
        %v3127 = vperm.slane %v3121, %v3126
        %v3129 = vunpack.c.l.s4 1983009808
        %v3130 = vunpack.c.0.s8 %v3129
        %v3131 = vperm.slane %v3123, %v3130
        %v3132 = vrot.slane %v2775, 4
        %v3133 = vsel %vm1696, %v3132, %v2771
        %v3134 = vrot.slane %v2771, 4
        %v3135 = vsel %vm1696, %v2775, %v3134
        %v3137 = vunpack.c.l.s4 1983009808
        %v3138 = vunpack.c.0.s8 %v3137
        %v3139 = vperm.slane %v3133, %v3138
        %v3141 = vunpack.c.l.s4 1983009808
        %v3142 = vunpack.c.0.s8 %v3141
        %v3143 = vperm.slane %v3135, %v3142
        %v3144 = vrot.slane %v2781, 4
        %v3145 = vsel %vm1696, %v3144, %v2777
        %v3146 = vrot.slane %v2777, 4
        %v3147 = vsel %vm1696, %v2781, %v3146
        %v3149 = vunpack.c.l.s4 1983009808
        %v3150 = vunpack.c.0.s8 %v3149
        %v3151 = vperm.slane %v3145, %v3150
        %v3153 = vunpack.c.l.s4 1983009808
        %v3154 = vunpack.c.0.s8 %v3153
        %v3155 = vperm.slane %v3147, %v3154
        %v3156 = vrot.slane %v2783, 4
        %v3157 = vsel %vm1696, %v3156, %v2779
        %v3158 = vrot.slane %v2779, 4
        %v3159 = vsel %vm1696, %v2783, %v3158
        %v3161 = vunpack.c.l.s4 1983009808
        %v3162 = vunpack.c.0.s8 %v3161
        %v3163 = vperm.slane %v3157, %v3162
        %v3165 = vunpack.c.l.s4 1983009808
        %v3166 = vunpack.c.0.s8 %v3165
        %v3167 = vperm.slane %v3159, %v3166
        %v3168 = vrot.slane %v3139, 4
        %v3169 = vsel %vm1696, %v3168, %v3127
        %v3170 = vrot.slane %v3127, 4
        %v3171 = vsel %vm1696, %v3139, %v3170
        %v3173 = vunpack.c.l.s4 1934713408
        %v3174 = vunpack.c.0.s8 %v3173
        %v3175 = vperm.slane %v3169, %v3174
        %v3177 = vunpack.c.l.s4 1934713408
        %v3178 = vunpack.c.0.s8 %v3177
        %v3179 = vperm.slane %v3171, %v3178
        %v3180 = vrot.slane %v3143, 4
        %v3181 = vsel %vm1696, %v3180, %v3131
        %v3182 = vrot.slane %v3131, 4
        %v3183 = vsel %vm1696, %v3143, %v3182
        %v3185 = vunpack.c.l.s4 1934713408
        %v3186 = vunpack.c.0.s8 %v3185
        %v3187 = vperm.slane %v3181, %v3186
        %v3189 = vunpack.c.l.s4 1934713408
        %v3190 = vunpack.c.0.s8 %v3189
        %v3191 = vperm.slane %v3183, %v3190
        %v3192 = vrot.slane %v3163, 4
        %v3193 = vsel %vm1696, %v3192, %v3151
        %v3194 = vrot.slane %v3151, 4
        %v3195 = vsel %vm1696, %v3163, %v3194
        %v3197 = vunpack.c.l.s4 1934713408
        %v3198 = vunpack.c.0.s8 %v3197
        %v3199 = vperm.slane %v3193, %v3198
        %v3201 = vunpack.c.l.s4 1934713408
        %v3202 = vunpack.c.0.s8 %v3201
        %v3203 = vperm.slane %v3195, %v3202
        %v3204 = vrot.slane %v3167, 4
        %v3205 = vsel %vm1696, %v3204, %v3155
        %v3206 = vrot.slane %v3155, 4
        %v3207 = vsel %vm1696, %v3167, %v3206
        %v3209 = vunpack.c.l.s4 1934713408
        %v3210 = vunpack.c.0.s8 %v3209
        %v3211 = vperm.slane %v3205, %v3210
        %v3213 = vunpack.c.l.s4 1934713408
        %v3214 = vunpack.c.0.s8 %v3213
        %v3215 = vperm.slane %v3207, %v3214
        %v3216 = vrot.slane %v3199, 4
        %v3217 = vsel %vm1696, %v3216, %v3175
        %v3218 = vrot.slane %v3175, 4
        %v3219 = vsel %vm1696, %v3199, %v3218
        %v3220 = vrot.slane %v3203, 4
        %v3221 = vsel %vm1696, %v3220, %v3179
        %v3222 = vrot.slane %v3179, 4
        %v3223 = vsel %vm1696, %v3203, %v3222
        %v3224 = vrot.slane %v3211, 4
        %v3225 = vsel %vm1696, %v3224, %v3187
        %v3226 = vrot.slane %v3187, 4
        %v3227 = vsel %vm1696, %v3211, %v3226
        %v3228 = vrot.slane %v3215, 4
        %v3229 = vsel %vm1696, %v3228, %v3191
        %v3230 = vrot.slane %v3191, 4
        %v3231 = vsel %vm1696, %v3215, %v3230
        %v3232 = vrot.slane %v2885, 4
        %v3233 = vsel %vm1696, %v3232, %v2881
        %v3234 = vrot.slane %v2881, 4
        %v3235 = vsel %vm1696, %v2885, %v3234
        %v3237 = vunpack.c.l.s4 1983009808
        %v3238 = vunpack.c.0.s8 %v3237
        %v3239 = vperm.slane %v3233, %v3238
        %v3241 = vunpack.c.l.s4 1983009808
        %v3242 = vunpack.c.0.s8 %v3241
        %v3243 = vperm.slane %v3235, %v3242
        %v3244 = vrot.slane %v2887, 4
        %v3245 = vsel %vm1696, %v3244, %v2883
        %v3246 = vrot.slane %v2883, 4
        %v3247 = vsel %vm1696, %v2887, %v3246
        %v3249 = vunpack.c.l.s4 1983009808
        %v3250 = vunpack.c.0.s8 %v3249
        %v3251 = vperm.slane %v3245, %v3250
        %v3253 = vunpack.c.l.s4 1983009808
        %v3254 = vunpack.c.0.s8 %v3253
        %v3255 = vperm.slane %v3247, %v3254
        %v3256 = vrot.slane %v2893, 4
        %v3257 = vsel %vm1696, %v3256, %v2889
        %v3258 = vrot.slane %v2889, 4
        %v3259 = vsel %vm1696, %v2893, %v3258
        %v3261 = vunpack.c.l.s4 1983009808
        %v3262 = vunpack.c.0.s8 %v3261
        %v3263 = vperm.slane %v3257, %v3262
        %v3265 = vunpack.c.l.s4 1983009808
        %v3266 = vunpack.c.0.s8 %v3265
        %v3267 = vperm.slane %v3259, %v3266
        %v3268 = vrot.slane %v2895, 4
        %v3269 = vsel %vm1696, %v3268, %v2891
        %v3270 = vrot.slane %v2891, 4
        %v3271 = vsel %vm1696, %v2895, %v3270
        %v3273 = vunpack.c.l.s4 1983009808
        %v3274 = vunpack.c.0.s8 %v3273
        %v3275 = vperm.slane %v3269, %v3274
        %v3277 = vunpack.c.l.s4 1983009808
        %v3278 = vunpack.c.0.s8 %v3277
        %v3279 = vperm.slane %v3271, %v3278
        %v3280 = vrot.slane %v3251, 4
        %v3281 = vsel %vm1696, %v3280, %v3239
        %v3282 = vrot.slane %v3239, 4
        %v3283 = vsel %vm1696, %v3251, %v3282
        %v3285 = vunpack.c.l.s4 1934713408
        %v3286 = vunpack.c.0.s8 %v3285
        %v3287 = vperm.slane %v3281, %v3286
        %v3289 = vunpack.c.l.s4 1934713408
        %v3290 = vunpack.c.0.s8 %v3289
        %v3291 = vperm.slane %v3283, %v3290
        %v3292 = vrot.slane %v3255, 4
        %v3293 = vsel %vm1696, %v3292, %v3243
        %v3294 = vrot.slane %v3243, 4
        %v3295 = vsel %vm1696, %v3255, %v3294
        %v3297 = vunpack.c.l.s4 1934713408
        %v3298 = vunpack.c.0.s8 %v3297
        %v3299 = vperm.slane %v3293, %v3298
        %v3301 = vunpack.c.l.s4 1934713408
        %v3302 = vunpack.c.0.s8 %v3301
        %v3303 = vperm.slane %v3295, %v3302
        %v3304 = vrot.slane %v3275, 4
        %v3305 = vsel %vm1696, %v3304, %v3263
        %v3306 = vrot.slane %v3263, 4
        %v3307 = vsel %vm1696, %v3275, %v3306
        %v3309 = vunpack.c.l.s4 1934713408
        %v3310 = vunpack.c.0.s8 %v3309
        %v3311 = vperm.slane %v3305, %v3310
        %v3313 = vunpack.c.l.s4 1934713408
        %v3314 = vunpack.c.0.s8 %v3313
        %v3315 = vperm.slane %v3307, %v3314
        %v3316 = vrot.slane %v3279, 4
        %v3317 = vsel %vm1696, %v3316, %v3267
        %v3318 = vrot.slane %v3267, 4
        %v3319 = vsel %vm1696, %v3279, %v3318
        %v3321 = vunpack.c.l.s4 1934713408
        %v3322 = vunpack.c.0.s8 %v3321
        %v3323 = vperm.slane %v3317, %v3322
        %v3325 = vunpack.c.l.s4 1934713408
        %v3326 = vunpack.c.0.s8 %v3325
        %v3327 = vperm.slane %v3319, %v3326
        %v3328 = vrot.slane %v3311, 4
        %v3329 = vsel %vm1696, %v3328, %v3287
        %v3330 = vrot.slane %v3287, 4
        %v3331 = vsel %vm1696, %v3311, %v3330
        %v3332 = vrot.slane %v3315, 4
        %v3333 = vsel %vm1696, %v3332, %v3291
        %v3334 = vrot.slane %v3291, 4
        %v3335 = vsel %vm1696, %v3315, %v3334
        %v3336 = vrot.slane %v3323, 4
        %v3337 = vsel %vm1696, %v3336, %v3299
        %v3338 = vrot.slane %v3299, 4
        %v3339 = vsel %vm1696, %v3323, %v3338
        %v3340 = vrot.slane %v3327, 4
        %v3341 = vsel %vm1696, %v3340, %v3303
        %v3342 = vrot.slane %v3303, 4
        %v3343 = vsel %vm1696, %v3327, %v3342
        %v3344 = vrot.slane %v2997, 4
        %v3345 = vsel %vm1696, %v3344, %v2993
        %v3346 = vrot.slane %v2993, 4
        %v3347 = vsel %vm1696, %v2997, %v3346
        %v3349 = vunpack.c.l.s4 1983009808
        %v3350 = vunpack.c.0.s8 %v3349
        %v3351 = vperm.slane %v3345, %v3350
        %v3353 = vunpack.c.l.s4 1983009808
        %v3354 = vunpack.c.0.s8 %v3353
        %v3355 = vperm.slane %v3347, %v3354
        %v3356 = vrot.slane %v2999, 4
        %v3357 = vsel %vm1696, %v3356, %v2995
        %v3358 = vrot.slane %v2995, 4
        %v3359 = vsel %vm1696, %v2999, %v3358
        %v3361 = vunpack.c.l.s4 1983009808
        %v3362 = vunpack.c.0.s8 %v3361
        %v3363 = vperm.slane %v3357, %v3362
        %v3365 = vunpack.c.l.s4 1983009808
        %v3366 = vunpack.c.0.s8 %v3365
        %v3367 = vperm.slane %v3359, %v3366
        %v3368 = vrot.slane %v3005, 4
        %v3369 = vsel %vm1696, %v3368, %v3001
        %v3370 = vrot.slane %v3001, 4
        %v3371 = vsel %vm1696, %v3005, %v3370
        %v3373 = vunpack.c.l.s4 1983009808
        %v3374 = vunpack.c.0.s8 %v3373
        %v3375 = vperm.slane %v3369, %v3374
        %v3377 = vunpack.c.l.s4 1983009808
        %v3378 = vunpack.c.0.s8 %v3377
        %v3379 = vperm.slane %v3371, %v3378
        %v3380 = vrot.slane %v3007, 4
        %v3381 = vsel %vm1696, %v3380, %v3003
        %v3382 = vrot.slane %v3003, 4
        %v3383 = vsel %vm1696, %v3007, %v3382
        %v3385 = vunpack.c.l.s4 1983009808
        %v3386 = vunpack.c.0.s8 %v3385
        %v3387 = vperm.slane %v3381, %v3386
        %v3389 = vunpack.c.l.s4 1983009808
        %v3390 = vunpack.c.0.s8 %v3389
        %v3391 = vperm.slane %v3383, %v3390
        %v3392 = vrot.slane %v3363, 4
        %v3393 = vsel %vm1696, %v3392, %v3351
        %v3394 = vrot.slane %v3351, 4
        %v3395 = vsel %vm1696, %v3363, %v3394
        %v3397 = vunpack.c.l.s4 1934713408
        %v3398 = vunpack.c.0.s8 %v3397
        %v3399 = vperm.slane %v3393, %v3398
        %v3401 = vunpack.c.l.s4 1934713408
        %v3402 = vunpack.c.0.s8 %v3401
        %v3403 = vperm.slane %v3395, %v3402
        %v3404 = vrot.slane %v3367, 4
        %v3405 = vsel %vm1696, %v3404, %v3355
        %v3406 = vrot.slane %v3355, 4
        %v3407 = vsel %vm1696, %v3367, %v3406
        %v3409 = vunpack.c.l.s4 1934713408
        %v3410 = vunpack.c.0.s8 %v3409
        %v3411 = vperm.slane %v3405, %v3410
        %v3413 = vunpack.c.l.s4 1934713408
        %v3414 = vunpack.c.0.s8 %v3413
        %v3415 = vperm.slane %v3407, %v3414
        %v3416 = vrot.slane %v3387, 4
        %v3417 = vsel %vm1696, %v3416, %v3375
        %v3418 = vrot.slane %v3375, 4
        %v3419 = vsel %vm1696, %v3387, %v3418
        %v3421 = vunpack.c.l.s4 1934713408
        %v3422 = vunpack.c.0.s8 %v3421
        %v3423 = vperm.slane %v3417, %v3422
        %v3425 = vunpack.c.l.s4 1934713408
        %v3426 = vunpack.c.0.s8 %v3425
        %v3427 = vperm.slane %v3419, %v3426
        %v3428 = vrot.slane %v3391, 4
        %v3429 = vsel %vm1696, %v3428, %v3379
        %v3430 = vrot.slane %v3379, 4
        %v3431 = vsel %vm1696, %v3391, %v3430
        %v3433 = vunpack.c.l.s4 1934713408
        %v3434 = vunpack.c.0.s8 %v3433
        %v3435 = vperm.slane %v3429, %v3434
        %v3437 = vunpack.c.l.s4 1934713408
        %v3438 = vunpack.c.0.s8 %v3437
        %v3439 = vperm.slane %v3431, %v3438
        %v3440 = vrot.slane %v3423, 4
        %v3441 = vsel %vm1696, %v3440, %v3399
        %v3442 = vrot.slane %v3399, 4
        %v3443 = vsel %vm1696, %v3423, %v3442
        %v3444 = vrot.slane %v3427, 4
        %v3445 = vsel %vm1696, %v3444, %v3403
        %v3446 = vrot.slane %v3403, 4
        %v3447 = vsel %vm1696, %v3427, %v3446
        %v3448 = vrot.slane %v3435, 4
        %v3449 = vsel %vm1696, %v3448, %v3411
        %v3450 = vrot.slane %v3411, 4
        %v3451 = vsel %vm1696, %v3435, %v3450
        %v3452 = vrot.slane %v3439, 4
        %v3453 = vsel %vm1696, %v3452, %v3415
        %v3454 = vrot.slane %v3415, 4
        %v3455 = vsel %vm1696, %v3439, %v3454
        %v3456 = vrot.slane %v3109, 4
        %v3457 = vsel %vm1696, %v3456, %v3105
        %v3458 = vrot.slane %v3105, 4
        %v3459 = vsel %vm1696, %v3109, %v3458
        %v3461 = vunpack.c.l.s4 1983009808
        %v3462 = vunpack.c.0.s8 %v3461
        %v3463 = vperm.slane %v3457, %v3462
        %v3465 = vunpack.c.l.s4 1983009808
        %v3466 = vunpack.c.0.s8 %v3465
        %v3467 = vperm.slane %v3459, %v3466
        %v3468 = vrot.slane %v3111, 4
        %v3469 = vsel %vm1696, %v3468, %v3107
        %v3470 = vrot.slane %v3107, 4
        %v3471 = vsel %vm1696, %v3111, %v3470
        %v3473 = vunpack.c.l.s4 1983009808
        %v3474 = vunpack.c.0.s8 %v3473
        %v3475 = vperm.slane %v3469, %v3474
        %v3477 = vunpack.c.l.s4 1983009808
        %v3478 = vunpack.c.0.s8 %v3477
        %v3479 = vperm.slane %v3471, %v3478
        %v3480 = vrot.slane %v3117, 4
        %v3481 = vsel %vm1696, %v3480, %v3113
        %v3482 = vrot.slane %v3113, 4
        %v3483 = vsel %vm1696, %v3117, %v3482
        %v3485 = vunpack.c.l.s4 1983009808
        %v3486 = vunpack.c.0.s8 %v3485
        %v3487 = vperm.slane %v3481, %v3486
        %v3489 = vunpack.c.l.s4 1983009808
        %v3490 = vunpack.c.0.s8 %v3489
        %v3491 = vperm.slane %v3483, %v3490
        %v3492 = vrot.slane %v3119, 4
        %v3493 = vsel %vm1696, %v3492, %v3115
        %v3494 = vrot.slane %v3115, 4
        %v3495 = vsel %vm1696, %v3119, %v3494
        %v3497 = vunpack.c.l.s4 1983009808
        %v3498 = vunpack.c.0.s8 %v3497
        %v3499 = vperm.slane %v3493, %v3498
        %v3501 = vunpack.c.l.s4 1983009808
        %v3502 = vunpack.c.0.s8 %v3501
        %v3503 = vperm.slane %v3495, %v3502
        %v3504 = vrot.slane %v3475, 4
        %v3505 = vsel %vm1696, %v3504, %v3463
        %v3506 = vrot.slane %v3463, 4
        %v3507 = vsel %vm1696, %v3475, %v3506
        %v3509 = vunpack.c.l.s4 1934713408
        %v3510 = vunpack.c.0.s8 %v3509
        %v3511 = vperm.slane %v3505, %v3510
        %v3513 = vunpack.c.l.s4 1934713408
        %v3514 = vunpack.c.0.s8 %v3513
        %v3515 = vperm.slane %v3507, %v3514
        %v3516 = vrot.slane %v3479, 4
        %v3517 = vsel %vm1696, %v3516, %v3467
        %v3518 = vrot.slane %v3467, 4
        %v3519 = vsel %vm1696, %v3479, %v3518
        %v3521 = vunpack.c.l.s4 1934713408
        %v3522 = vunpack.c.0.s8 %v3521
        %v3523 = vperm.slane %v3517, %v3522
        %v3525 = vunpack.c.l.s4 1934713408
        %v3526 = vunpack.c.0.s8 %v3525
        %v3527 = vperm.slane %v3519, %v3526
        %v3528 = vrot.slane %v3499, 4
        %v3529 = vsel %vm1696, %v3528, %v3487
        %v3530 = vrot.slane %v3487, 4
        %v3531 = vsel %vm1696, %v3499, %v3530
        %v3533 = vunpack.c.l.s4 1934713408
        %v3534 = vunpack.c.0.s8 %v3533
        %v3535 = vperm.slane %v3529, %v3534
        %v3537 = vunpack.c.l.s4 1934713408
        %v3538 = vunpack.c.0.s8 %v3537
        %v3539 = vperm.slane %v3531, %v3538
        %v3540 = vrot.slane %v3503, 4
        %v3541 = vsel %vm1696, %v3540, %v3491
        %v3542 = vrot.slane %v3491, 4
        %v3543 = vsel %vm1696, %v3503, %v3542
        %v3545 = vunpack.c.l.s4 1934713408
        %v3546 = vunpack.c.0.s8 %v3545
        %v3547 = vperm.slane %v3541, %v3546
        %v3549 = vunpack.c.l.s4 1934713408
        %v3550 = vunpack.c.0.s8 %v3549
        %v3551 = vperm.slane %v3543, %v3550
        %v3552 = vrot.slane %v3535, 4
        %v3553 = vsel %vm1696, %v3552, %v3511
        %v3554 = vrot.slane %v3511, 4
        %v3555 = vsel %vm1696, %v3535, %v3554
        %v3556 = vrot.slane %v3539, 4
        %v3557 = vsel %vm1696, %v3556, %v3515
        %v3558 = vrot.slane %v3515, 4
        %v3559 = vsel %vm1696, %v3539, %v3558
        %v3560 = vrot.slane %v3547, 4
        %v3561 = vsel %vm1696, %v3560, %v3523
        %v3562 = vrot.slane %v3523, 4
        %v3563 = vsel %vm1696, %v3547, %v3562
        %v3564 = vrot.slane %v3551, 4
        %v3565 = vsel %vm1696, %v3564, %v3527
        %v3566 = vrot.slane %v3527, 4
        %v3567 = vsel %vm1696, %v3551, %v3566
        %3570 = vrot.lane.b32.xlu0 %v1472, 96
        %v3571 = vpop.permute.xlu0 %3570
        %3572 = vrot.lane.b32.xlu0 %v1475, 96
        %v3573 = vpop.permute.xlu0 %3572
        %3576 = vrot.lane.b32.xlu0 %v1472, 64
        %v3577 = vpop.permute.xlu0 %3576
        %3578 = vrot.lane.b32.xlu0 %v1475, 64
        %v3579 = vpop.permute.xlu0 %3578
        %3582 = vrot.lane.b32.xlu0 %v1472, 32
        %v3583 = vpop.permute.xlu0 %3582
        %3584 = vrot.lane.b32.xlu0 %v1475, 32
        %v3585 = vpop.permute.xlu0 %3584
        %3590 = vrot.lane.b32.xlu0 %v1518, 96
        %v3591 = vpop.permute.xlu0 %3590
        %3592 = vrot.lane.b32.xlu0 %v1521, 96
        %v3593 = vpop.permute.xlu0 %3592
        %3596 = vrot.lane.b32.xlu0 %v1518, 64
        %v3597 = vpop.permute.xlu0 %3596
        %3598 = vrot.lane.b32.xlu0 %v1521, 64
        %v3599 = vpop.permute.xlu0 %3598
        %3602 = vrot.lane.b32.xlu0 %v1518, 32
        %v3603 = vpop.permute.xlu0 %3602
        %3604 = vrot.lane.b32.xlu0 %v1521, 32
        %v3605 = vpop.permute.xlu0 %3604
        %3610 = vrot.lane.b32.xlu0 %v1564, 96
        %v3611 = vpop.permute.xlu0 %3610
        %3612 = vrot.lane.b32.xlu0 %v1567, 96
        %v3613 = vpop.permute.xlu0 %3612
        %3616 = vrot.lane.b32.xlu0 %v1564, 64
        %v3617 = vpop.permute.xlu0 %3616
        %3618 = vrot.lane.b32.xlu0 %v1567, 64
        %v3619 = vpop.permute.xlu0 %3618
        %3622 = vrot.lane.b32.xlu0 %v1564, 32
        %v3623 = vpop.permute.xlu0 %3622
        %3624 = vrot.lane.b32.xlu0 %v1567, 32
        %v3625 = vpop.permute.xlu0 %3624
        %3630 = vrot.lane.b32.xlu0 %v1610, 96
        %v3631 = vpop.permute.xlu0 %3630
        %3632 = vrot.lane.b32.xlu0 %v1613, 96
        %v3633 = vpop.permute.xlu0 %3632
        %3636 = vrot.lane.b32.xlu0 %v1610, 64
        %v3637 = vpop.permute.xlu0 %3636
        %3638 = vrot.lane.b32.xlu0 %v1613, 64
        %v3639 = vpop.permute.xlu0 %3638
        %3642 = vrot.lane.b32.xlu0 %v1610, 32
        %v3643 = vpop.permute.xlu0 %3642
        %3644 = vrot.lane.b32.xlu0 %v1613, 32
        %v3645 = vpop.permute.xlu0 %3644
        %v3648 = vrot.slane %v3577, 4
        %v3649 = vsel %vm1696, %v3648, %v1472
        %v3650 = vrot.slane %v1472, 4
        %v3651 = vsel %vm1696, %v3577, %v3650
        %v3653 = vunpack.c.l.s4 1983009808
        %v3654 = vunpack.c.0.s8 %v3653
        %v3655 = vperm.slane %v3649, %v3654
        %v3657 = vunpack.c.l.s4 1983009808
        %v3658 = vunpack.c.0.s8 %v3657
        %v3659 = vperm.slane %v3651, %v3658
        %v3660 = vrot.slane %v3583, 4
        %v3661 = vsel %vm1696, %v3660, %v3571
        %v3662 = vrot.slane %v3571, 4
        %v3663 = vsel %vm1696, %v3583, %v3662
        %v3665 = vunpack.c.l.s4 1983009808
        %v3666 = vunpack.c.0.s8 %v3665
        %v3667 = vperm.slane %v3661, %v3666
        %v3669 = vunpack.c.l.s4 1983009808
        %v3670 = vunpack.c.0.s8 %v3669
        %v3671 = vperm.slane %v3663, %v3670
        %v3672 = vrot.slane %v3597, 4
        %v3673 = vsel %vm1696, %v3672, %v1518
        %v3674 = vrot.slane %v1518, 4
        %v3675 = vsel %vm1696, %v3597, %v3674
        %v3677 = vunpack.c.l.s4 1983009808
        %v3678 = vunpack.c.0.s8 %v3677
        %v3679 = vperm.slane %v3673, %v3678
        %v3681 = vunpack.c.l.s4 1983009808
        %v3682 = vunpack.c.0.s8 %v3681
        %v3683 = vperm.slane %v3675, %v3682
        %v3684 = vrot.slane %v3603, 4
        %v3685 = vsel %vm1696, %v3684, %v3591
        %v3686 = vrot.slane %v3591, 4
        %v3687 = vsel %vm1696, %v3603, %v3686
        %v3689 = vunpack.c.l.s4 1983009808
        %v3690 = vunpack.c.0.s8 %v3689
        %v3691 = vperm.slane %v3685, %v3690
        %v3693 = vunpack.c.l.s4 1983009808
        %v3694 = vunpack.c.0.s8 %v3693
        %v3695 = vperm.slane %v3687, %v3694
        %v3696 = vrot.slane %v3667, 4
        %v3697 = vsel %vm1696, %v3696, %v3655
        %v3698 = vrot.slane %v3655, 4
        %v3699 = vsel %vm1696, %v3667, %v3698
        %v3701 = vunpack.c.l.s4 1934713408
        %v3702 = vunpack.c.0.s8 %v3701
        %v3703 = vperm.slane %v3697, %v3702
        %v3705 = vunpack.c.l.s4 1934713408
        %v3706 = vunpack.c.0.s8 %v3705
        %v3707 = vperm.slane %v3699, %v3706
        %v3708 = vrot.slane %v3671, 4
        %v3709 = vsel %vm1696, %v3708, %v3659
        %v3710 = vrot.slane %v3659, 4
        %v3711 = vsel %vm1696, %v3671, %v3710
        %v3713 = vunpack.c.l.s4 1934713408
        %v3714 = vunpack.c.0.s8 %v3713
        %v3715 = vperm.slane %v3709, %v3714
        %v3717 = vunpack.c.l.s4 1934713408
        %v3718 = vunpack.c.0.s8 %v3717
        %v3719 = vperm.slane %v3711, %v3718
        %v3720 = vrot.slane %v3691, 4
        %v3721 = vsel %vm1696, %v3720, %v3679
        %v3722 = vrot.slane %v3679, 4
        %v3723 = vsel %vm1696, %v3691, %v3722
        %v3725 = vunpack.c.l.s4 1934713408
        %v3726 = vunpack.c.0.s8 %v3725
        %v3727 = vperm.slane %v3721, %v3726
        %v3729 = vunpack.c.l.s4 1934713408
        %v3730 = vunpack.c.0.s8 %v3729
        %v3731 = vperm.slane %v3723, %v3730
        %v3732 = vrot.slane %v3695, 4
        %v3733 = vsel %vm1696, %v3732, %v3683
        %v3734 = vrot.slane %v3683, 4
        %v3735 = vsel %vm1696, %v3695, %v3734
        %v3737 = vunpack.c.l.s4 1934713408
        %v3738 = vunpack.c.0.s8 %v3737
        %v3739 = vperm.slane %v3733, %v3738
        %v3741 = vunpack.c.l.s4 1934713408
        %v3742 = vunpack.c.0.s8 %v3741
        %v3743 = vperm.slane %v3735, %v3742
        %v3744 = vrot.slane %v3727, 4
        %v3745 = vsel %vm1696, %v3744, %v3703
        %v3746 = vrot.slane %v3703, 4
        %v3747 = vsel %vm1696, %v3727, %v3746
        %v3748 = vrot.slane %v3731, 4
        %v3749 = vsel %vm1696, %v3748, %v3707
        %v3750 = vrot.slane %v3707, 4
        %v3751 = vsel %vm1696, %v3731, %v3750
        %v3752 = vrot.slane %v3739, 4
        %v3753 = vsel %vm1696, %v3752, %v3715
        %v3754 = vrot.slane %v3715, 4
        %v3755 = vsel %vm1696, %v3739, %v3754
        %v3756 = vrot.slane %v3743, 4
        %v3757 = vsel %vm1696, %v3756, %v3719
        %v3758 = vrot.slane %v3719, 4
        %v3759 = vsel %vm1696, %v3743, %v3758
        %v3760 = vrot.slane %v3617, 4
        %v3761 = vsel %vm1696, %v3760, %v1564
        %v3762 = vrot.slane %v1564, 4
        %v3763 = vsel %vm1696, %v3617, %v3762
        %v3765 = vunpack.c.l.s4 1983009808
        %v3766 = vunpack.c.0.s8 %v3765
        %v3767 = vperm.slane %v3761, %v3766
        %v3769 = vunpack.c.l.s4 1983009808
        %v3770 = vunpack.c.0.s8 %v3769
        %v3771 = vperm.slane %v3763, %v3770
        %v3772 = vrot.slane %v3623, 4
        %v3773 = vsel %vm1696, %v3772, %v3611
        %v3774 = vrot.slane %v3611, 4
        %v3775 = vsel %vm1696, %v3623, %v3774
        %v3777 = vunpack.c.l.s4 1983009808
        %v3778 = vunpack.c.0.s8 %v3777
        %v3779 = vperm.slane %v3773, %v3778
        %v3781 = vunpack.c.l.s4 1983009808
        %v3782 = vunpack.c.0.s8 %v3781
        %v3783 = vperm.slane %v3775, %v3782
        %v3784 = vrot.slane %v3637, 4
        %v3785 = vsel %vm1696, %v3784, %v1610
        %v3786 = vrot.slane %v1610, 4
        %v3787 = vsel %vm1696, %v3637, %v3786
        %v3789 = vunpack.c.l.s4 1983009808
        %v3790 = vunpack.c.0.s8 %v3789
        %v3791 = vperm.slane %v3785, %v3790
        %v3793 = vunpack.c.l.s4 1983009808
        %v3794 = vunpack.c.0.s8 %v3793
        %v3795 = vperm.slane %v3787, %v3794
        %v3796 = vrot.slane %v3643, 4
        %v3797 = vsel %vm1696, %v3796, %v3631
        %v3798 = vrot.slane %v3631, 4
        %v3799 = vsel %vm1696, %v3643, %v3798
        %v3801 = vunpack.c.l.s4 1983009808
        %v3802 = vunpack.c.0.s8 %v3801
        %v3803 = vperm.slane %v3797, %v3802
        %v3805 = vunpack.c.l.s4 1983009808
        %v3806 = vunpack.c.0.s8 %v3805
        %v3807 = vperm.slane %v3799, %v3806
        %v3808 = vrot.slane %v3779, 4
        %v3809 = vsel %vm1696, %v3808, %v3767
        %v3810 = vrot.slane %v3767, 4
        %v3811 = vsel %vm1696, %v3779, %v3810
        %v3813 = vunpack.c.l.s4 1934713408
        %v3814 = vunpack.c.0.s8 %v3813
        %v3815 = vperm.slane %v3809, %v3814
        %v3817 = vunpack.c.l.s4 1934713408
        %v3818 = vunpack.c.0.s8 %v3817
        %v3819 = vperm.slane %v3811, %v3818
        %v3820 = vrot.slane %v3783, 4
        %v3821 = vsel %vm1696, %v3820, %v3771
        %v3822 = vrot.slane %v3771, 4
        %v3823 = vsel %vm1696, %v3783, %v3822
        %v3825 = vunpack.c.l.s4 1934713408
        %v3826 = vunpack.c.0.s8 %v3825
        %v3827 = vperm.slane %v3821, %v3826
        %v3829 = vunpack.c.l.s4 1934713408
        %v3830 = vunpack.c.0.s8 %v3829
        %v3831 = vperm.slane %v3823, %v3830
        %v3832 = vrot.slane %v3803, 4
        %v3833 = vsel %vm1696, %v3832, %v3791
        %v3834 = vrot.slane %v3791, 4
        %v3835 = vsel %vm1696, %v3803, %v3834
        %v3837 = vunpack.c.l.s4 1934713408
        %v3838 = vunpack.c.0.s8 %v3837
        %v3839 = vperm.slane %v3833, %v3838
        %v3841 = vunpack.c.l.s4 1934713408
        %v3842 = vunpack.c.0.s8 %v3841
        %v3843 = vperm.slane %v3835, %v3842
        %v3844 = vrot.slane %v3807, 4
        %v3845 = vsel %vm1696, %v3844, %v3795
        %v3846 = vrot.slane %v3795, 4
        %v3847 = vsel %vm1696, %v3807, %v3846
        %v3849 = vunpack.c.l.s4 1934713408
        %v3850 = vunpack.c.0.s8 %v3849
        %v3851 = vperm.slane %v3845, %v3850
        %v3853 = vunpack.c.l.s4 1934713408
        %v3854 = vunpack.c.0.s8 %v3853
        %v3855 = vperm.slane %v3847, %v3854
        %v3856 = vrot.slane %v3839, 4
        %v3857 = vsel %vm1696, %v3856, %v3815
        %v3858 = vrot.slane %v3815, 4
        %v3859 = vsel %vm1696, %v3839, %v3858
        %v3860 = vrot.slane %v3843, 4
        %v3861 = vsel %vm1696, %v3860, %v3819
        %v3862 = vrot.slane %v3819, 4
        %v3863 = vsel %vm1696, %v3843, %v3862
        %v3864 = vrot.slane %v3851, 4
        %v3865 = vsel %vm1696, %v3864, %v3827
        %v3866 = vrot.slane %v3827, 4
        %v3867 = vsel %vm1696, %v3851, %v3866
        %v3868 = vrot.slane %v3855, 4
        %v3869 = vsel %vm1696, %v3868, %v3831
        %v3870 = vrot.slane %v3831, 4
        %v3871 = vsel %vm1696, %v3855, %v3870
        %v3872 = vrot.slane %v3579, 4
        %v3873 = vsel %vm1696, %v3872, %v1475
        %v3874 = vrot.slane %v1475, 4
        %v3875 = vsel %vm1696, %v3579, %v3874
        %v3877 = vunpack.c.l.s4 1983009808
        %v3878 = vunpack.c.0.s8 %v3877
        %v3879 = vperm.slane %v3873, %v3878
        %v3881 = vunpack.c.l.s4 1983009808
        %v3882 = vunpack.c.0.s8 %v3881
        %v3883 = vperm.slane %v3875, %v3882
        %v3884 = vrot.slane %v3585, 4
        %v3885 = vsel %vm1696, %v3884, %v3573
        %v3886 = vrot.slane %v3573, 4
        %v3887 = vsel %vm1696, %v3585, %v3886
        %v3889 = vunpack.c.l.s4 1983009808
        %v3890 = vunpack.c.0.s8 %v3889
        %v3891 = vperm.slane %v3885, %v3890
        %v3893 = vunpack.c.l.s4 1983009808
        %v3894 = vunpack.c.0.s8 %v3893
        %v3895 = vperm.slane %v3887, %v3894
        %v3896 = vrot.slane %v3599, 4
        %v3897 = vsel %vm1696, %v3896, %v1521
        %v3898 = vrot.slane %v1521, 4
        %v3899 = vsel %vm1696, %v3599, %v3898
        %v3901 = vunpack.c.l.s4 1983009808
        %v3902 = vunpack.c.0.s8 %v3901
        %v3903 = vperm.slane %v3897, %v3902
        %v3905 = vunpack.c.l.s4 1983009808
        %v3906 = vunpack.c.0.s8 %v3905
        %v3907 = vperm.slane %v3899, %v3906
        %v3908 = vrot.slane %v3605, 4
        %v3909 = vsel %vm1696, %v3908, %v3593
        %v3910 = vrot.slane %v3593, 4
        %v3911 = vsel %vm1696, %v3605, %v3910
        %v3913 = vunpack.c.l.s4 1983009808
        %v3914 = vunpack.c.0.s8 %v3913
        %v3915 = vperm.slane %v3909, %v3914
        %v3917 = vunpack.c.l.s4 1983009808
        %v3918 = vunpack.c.0.s8 %v3917
        %v3919 = vperm.slane %v3911, %v3918
        %v3920 = vrot.slane %v3891, 4
        %v3921 = vsel %vm1696, %v3920, %v3879
        %v3922 = vrot.slane %v3879, 4
        %v3923 = vsel %vm1696, %v3891, %v3922
        %v3925 = vunpack.c.l.s4 1934713408
        %v3926 = vunpack.c.0.s8 %v3925
        %v3927 = vperm.slane %v3921, %v3926
        %v3929 = vunpack.c.l.s4 1934713408
        %v3930 = vunpack.c.0.s8 %v3929
        %v3931 = vperm.slane %v3923, %v3930
        %v3932 = vrot.slane %v3895, 4
        %v3933 = vsel %vm1696, %v3932, %v3883
        %v3934 = vrot.slane %v3883, 4
        %v3935 = vsel %vm1696, %v3895, %v3934
        %v3937 = vunpack.c.l.s4 1934713408
        %v3938 = vunpack.c.0.s8 %v3937
        %v3939 = vperm.slane %v3933, %v3938
        %v3941 = vunpack.c.l.s4 1934713408
        %v3942 = vunpack.c.0.s8 %v3941
        %v3943 = vperm.slane %v3935, %v3942
        %v3944 = vrot.slane %v3915, 4
        %v3945 = vsel %vm1696, %v3944, %v3903
        %v3946 = vrot.slane %v3903, 4
        %v3947 = vsel %vm1696, %v3915, %v3946
        %v3949 = vunpack.c.l.s4 1934713408
        %v3950 = vunpack.c.0.s8 %v3949
        %v3951 = vperm.slane %v3945, %v3950
        %v3953 = vunpack.c.l.s4 1934713408
        %v3954 = vunpack.c.0.s8 %v3953
        %v3955 = vperm.slane %v3947, %v3954
        %v3956 = vrot.slane %v3919, 4
        %v3957 = vsel %vm1696, %v3956, %v3907
        %v3958 = vrot.slane %v3907, 4
        %v3959 = vsel %vm1696, %v3919, %v3958
        %v3961 = vunpack.c.l.s4 1934713408
        %v3962 = vunpack.c.0.s8 %v3961
        %v3963 = vperm.slane %v3957, %v3962
        %v3965 = vunpack.c.l.s4 1934713408
        %v3966 = vunpack.c.0.s8 %v3965
        %v3967 = vperm.slane %v3959, %v3966
        %v3968 = vrot.slane %v3951, 4
        %v3969 = vsel %vm1696, %v3968, %v3927
        %v3970 = vrot.slane %v3927, 4
        %v3971 = vsel %vm1696, %v3951, %v3970
        %v3972 = vrot.slane %v3955, 4
        %v3973 = vsel %vm1696, %v3972, %v3931
        %v3974 = vrot.slane %v3931, 4
        %v3975 = vsel %vm1696, %v3955, %v3974
        %v3976 = vrot.slane %v3963, 4
        %v3977 = vsel %vm1696, %v3976, %v3939
        %v3978 = vrot.slane %v3939, 4
        %v3979 = vsel %vm1696, %v3963, %v3978
        %v3980 = vrot.slane %v3967, 4
        %v3981 = vsel %vm1696, %v3980, %v3943
        %v3982 = vrot.slane %v3943, 4
        %v3983 = vsel %vm1696, %v3967, %v3982
        %v3984 = vrot.slane %v3619, 4
        %v3985 = vsel %vm1696, %v3984, %v1567
        %v3986 = vrot.slane %v1567, 4
        %v3987 = vsel %vm1696, %v3619, %v3986
        %v3989 = vunpack.c.l.s4 1983009808
        %v3990 = vunpack.c.0.s8 %v3989
        %v3991 = vperm.slane %v3985, %v3990
        %v3993 = vunpack.c.l.s4 1983009808
        %v3994 = vunpack.c.0.s8 %v3993
        %v3995 = vperm.slane %v3987, %v3994
        %v3996 = vrot.slane %v3625, 4
        %v3997 = vsel %vm1696, %v3996, %v3613
        %v3998 = vrot.slane %v3613, 4
        %v3999 = vsel %vm1696, %v3625, %v3998
        %v4001 = vunpack.c.l.s4 1983009808
        %v4002 = vunpack.c.0.s8 %v4001
        %v4003 = vperm.slane %v3997, %v4002
        %v4005 = vunpack.c.l.s4 1983009808
        %v4006 = vunpack.c.0.s8 %v4005
        %v4007 = vperm.slane %v3999, %v4006
        %v4008 = vrot.slane %v3639, 4
        %v4009 = vsel %vm1696, %v4008, %v1613
        %v4010 = vrot.slane %v1613, 4
        %v4011 = vsel %vm1696, %v3639, %v4010
        %v4013 = vunpack.c.l.s4 1983009808
        %v4014 = vunpack.c.0.s8 %v4013
        %v4015 = vperm.slane %v4009, %v4014
        %v4017 = vunpack.c.l.s4 1983009808
        %v4018 = vunpack.c.0.s8 %v4017
        %v4019 = vperm.slane %v4011, %v4018
        %v4020 = vrot.slane %v3645, 4
        %v4021 = vsel %vm1696, %v4020, %v3633
        %v4022 = vrot.slane %v3633, 4
        %v4023 = vsel %vm1696, %v3645, %v4022
        %v4025 = vunpack.c.l.s4 1983009808
        %v4026 = vunpack.c.0.s8 %v4025
        %v4027 = vperm.slane %v4021, %v4026
        %v4029 = vunpack.c.l.s4 1983009808
        %v4030 = vunpack.c.0.s8 %v4029
        %v4031 = vperm.slane %v4023, %v4030
        %v4032 = vrot.slane %v4003, 4
        %v4033 = vsel %vm1696, %v4032, %v3991
        %v4034 = vrot.slane %v3991, 4
        %v4035 = vsel %vm1696, %v4003, %v4034
        %v4037 = vunpack.c.l.s4 1934713408
        %v4038 = vunpack.c.0.s8 %v4037
        %v4039 = vperm.slane %v4033, %v4038
        %v4041 = vunpack.c.l.s4 1934713408
        %v4042 = vunpack.c.0.s8 %v4041
        %v4043 = vperm.slane %v4035, %v4042
        %v4044 = vrot.slane %v4007, 4
        %v4045 = vsel %vm1696, %v4044, %v3995
        %v4046 = vrot.slane %v3995, 4
        %v4047 = vsel %vm1696, %v4007, %v4046
        %v4049 = vunpack.c.l.s4 1934713408
        %v4050 = vunpack.c.0.s8 %v4049
        %v4051 = vperm.slane %v4045, %v4050
        %v4053 = vunpack.c.l.s4 1934713408
        %v4054 = vunpack.c.0.s8 %v4053
        %v4055 = vperm.slane %v4047, %v4054
        %v4056 = vrot.slane %v4027, 4
        %v4057 = vsel %vm1696, %v4056, %v4015
        %v4058 = vrot.slane %v4015, 4
        %v4059 = vsel %vm1696, %v4027, %v4058
        %v4061 = vunpack.c.l.s4 1934713408
        %v4062 = vunpack.c.0.s8 %v4061
        %v4063 = vperm.slane %v4057, %v4062
        %v4065 = vunpack.c.l.s4 1934713408
        %v4066 = vunpack.c.0.s8 %v4065
        %v4067 = vperm.slane %v4059, %v4066
        %v4068 = vrot.slane %v4031, 4
        %v4069 = vsel %vm1696, %v4068, %v4019
        %v4070 = vrot.slane %v4019, 4
        %v4071 = vsel %vm1696, %v4031, %v4070
        %v4073 = vunpack.c.l.s4 1934713408
        %v4074 = vunpack.c.0.s8 %v4073
        %v4075 = vperm.slane %v4069, %v4074
        %v4077 = vunpack.c.l.s4 1934713408
        %v4078 = vunpack.c.0.s8 %v4077
        %v4079 = vperm.slane %v4071, %v4078
        %v4080 = vrot.slane %v4063, 4
        %v4081 = vsel %vm1696, %v4080, %v4039
        %v4082 = vrot.slane %v4039, 4
        %v4083 = vsel %vm1696, %v4063, %v4082
        %v4084 = vrot.slane %v4067, 4
        %v4085 = vsel %vm1696, %v4084, %v4043
        %v4086 = vrot.slane %v4043, 4
        %v4087 = vsel %vm1696, %v4067, %v4086
        %v4088 = vrot.slane %v4075, 4
        %v4089 = vsel %vm1696, %v4088, %v4051
        %v4090 = vrot.slane %v4051, 4
        %v4091 = vsel %vm1696, %v4075, %v4090
        %v4092 = vrot.slane %v4079, 4
        %v4093 = vsel %vm1696, %v4092, %v4055
        %v4094 = vrot.slane %v4055, 4
        %v4095 = vsel %vm1696, %v4079, %v4094
        %v4096 = vrot.slane %v3749, 4
        %v4097 = vsel %vm1696, %v4096, %v3745
        %v4098 = vrot.slane %v3745, 4
        %v4099 = vsel %vm1696, %v3749, %v4098
        %v4101 = vunpack.c.l.s4 1983009808
        %v4102 = vunpack.c.0.s8 %v4101
        %v4103 = vperm.slane %v4097, %v4102
        %v4105 = vunpack.c.l.s4 1983009808
        %v4106 = vunpack.c.0.s8 %v4105
        %v4107 = vperm.slane %v4099, %v4106
        %v4108 = vrot.slane %v3751, 4
        %v4109 = vsel %vm1696, %v4108, %v3747
        %v4110 = vrot.slane %v3747, 4
        %v4111 = vsel %vm1696, %v3751, %v4110
        %v4113 = vunpack.c.l.s4 1983009808
        %v4114 = vunpack.c.0.s8 %v4113
        %v4115 = vperm.slane %v4109, %v4114
        %v4117 = vunpack.c.l.s4 1983009808
        %v4118 = vunpack.c.0.s8 %v4117
        %v4119 = vperm.slane %v4111, %v4118
        %v4120 = vrot.slane %v3757, 4
        %v4121 = vsel %vm1696, %v4120, %v3753
        %v4122 = vrot.slane %v3753, 4
        %v4123 = vsel %vm1696, %v3757, %v4122
        %v4125 = vunpack.c.l.s4 1983009808
        %v4126 = vunpack.c.0.s8 %v4125
        %v4127 = vperm.slane %v4121, %v4126
        %v4129 = vunpack.c.l.s4 1983009808
        %v4130 = vunpack.c.0.s8 %v4129
        %v4131 = vperm.slane %v4123, %v4130
        %v4132 = vrot.slane %v3759, 4
        %v4133 = vsel %vm1696, %v4132, %v3755
        %v4134 = vrot.slane %v3755, 4
        %v4135 = vsel %vm1696, %v3759, %v4134
        %v4137 = vunpack.c.l.s4 1983009808
        %v4138 = vunpack.c.0.s8 %v4137
        %v4139 = vperm.slane %v4133, %v4138
        %v4141 = vunpack.c.l.s4 1983009808
        %v4142 = vunpack.c.0.s8 %v4141
        %v4143 = vperm.slane %v4135, %v4142
        %v4144 = vrot.slane %v4115, 4
        %v4145 = vsel %vm1696, %v4144, %v4103
        %v4146 = vrot.slane %v4103, 4
        %v4147 = vsel %vm1696, %v4115, %v4146
        %v4149 = vunpack.c.l.s4 1934713408
        %v4150 = vunpack.c.0.s8 %v4149
        %v4151 = vperm.slane %v4145, %v4150
        %v4153 = vunpack.c.l.s4 1934713408
        %v4154 = vunpack.c.0.s8 %v4153
        %v4155 = vperm.slane %v4147, %v4154
        %v4156 = vrot.slane %v4119, 4
        %v4157 = vsel %vm1696, %v4156, %v4107
        %v4158 = vrot.slane %v4107, 4
        %v4159 = vsel %vm1696, %v4119, %v4158
        %v4161 = vunpack.c.l.s4 1934713408
        %v4162 = vunpack.c.0.s8 %v4161
        %v4163 = vperm.slane %v4157, %v4162
        %v4165 = vunpack.c.l.s4 1934713408
        %v4166 = vunpack.c.0.s8 %v4165
        %v4167 = vperm.slane %v4159, %v4166
        %v4168 = vrot.slane %v4139, 4
        %v4169 = vsel %vm1696, %v4168, %v4127
        %v4170 = vrot.slane %v4127, 4
        %v4171 = vsel %vm1696, %v4139, %v4170
        %v4173 = vunpack.c.l.s4 1934713408
        %v4174 = vunpack.c.0.s8 %v4173
        %v4175 = vperm.slane %v4169, %v4174
        %v4177 = vunpack.c.l.s4 1934713408
        %v4178 = vunpack.c.0.s8 %v4177
        %v4179 = vperm.slane %v4171, %v4178
        %v4180 = vrot.slane %v4143, 4
        %v4181 = vsel %vm1696, %v4180, %v4131
        %v4182 = vrot.slane %v4131, 4
        %v4183 = vsel %vm1696, %v4143, %v4182
        %v4185 = vunpack.c.l.s4 1934713408
        %v4186 = vunpack.c.0.s8 %v4185
        %v4187 = vperm.slane %v4181, %v4186
        %v4189 = vunpack.c.l.s4 1934713408
        %v4190 = vunpack.c.0.s8 %v4189
        %v4191 = vperm.slane %v4183, %v4190
        %v4192 = vrot.slane %v4175, 4
        %v4193 = vsel %vm1696, %v4192, %v4151
        %v4194 = vrot.slane %v4151, 4
        %v4195 = vsel %vm1696, %v4175, %v4194
        %v4196 = vrot.slane %v4179, 4
        %v4197 = vsel %vm1696, %v4196, %v4155
        %v4198 = vrot.slane %v4155, 4
        %v4199 = vsel %vm1696, %v4179, %v4198
        %v4200 = vrot.slane %v4187, 4
        %v4201 = vsel %vm1696, %v4200, %v4163
        %v4202 = vrot.slane %v4163, 4
        %v4203 = vsel %vm1696, %v4187, %v4202
        %v4204 = vrot.slane %v4191, 4
        %v4205 = vsel %vm1696, %v4204, %v4167
        %v4206 = vrot.slane %v4167, 4
        %v4207 = vsel %vm1696, %v4191, %v4206
        %v4208 = vrot.slane %v3861, 4
        %v4209 = vsel %vm1696, %v4208, %v3857
        %v4210 = vrot.slane %v3857, 4
        %v4211 = vsel %vm1696, %v3861, %v4210
        %v4213 = vunpack.c.l.s4 1983009808
        %v4214 = vunpack.c.0.s8 %v4213
        %v4215 = vperm.slane %v4209, %v4214
        %v4217 = vunpack.c.l.s4 1983009808
        %v4218 = vunpack.c.0.s8 %v4217
        %v4219 = vperm.slane %v4211, %v4218
        %v4220 = vrot.slane %v3863, 4
        %v4221 = vsel %vm1696, %v4220, %v3859
        %v4222 = vrot.slane %v3859, 4
        %v4223 = vsel %vm1696, %v3863, %v4222
        %v4225 = vunpack.c.l.s4 1983009808
        %v4226 = vunpack.c.0.s8 %v4225
        %v4227 = vperm.slane %v4221, %v4226
        %v4229 = vunpack.c.l.s4 1983009808
        %v4230 = vunpack.c.0.s8 %v4229
        %v4231 = vperm.slane %v4223, %v4230
        %v4232 = vrot.slane %v3869, 4
        %v4233 = vsel %vm1696, %v4232, %v3865
        %v4234 = vrot.slane %v3865, 4
        %v4235 = vsel %vm1696, %v3869, %v4234
        %v4237 = vunpack.c.l.s4 1983009808
        %v4238 = vunpack.c.0.s8 %v4237
        %v4239 = vperm.slane %v4233, %v4238
        %v4241 = vunpack.c.l.s4 1983009808
        %v4242 = vunpack.c.0.s8 %v4241
        %v4243 = vperm.slane %v4235, %v4242
        %v4244 = vrot.slane %v3871, 4
        %v4245 = vsel %vm1696, %v4244, %v3867
        %v4246 = vrot.slane %v3867, 4
        %v4247 = vsel %vm1696, %v3871, %v4246
        %v4249 = vunpack.c.l.s4 1983009808
        %v4250 = vunpack.c.0.s8 %v4249
        %v4251 = vperm.slane %v4245, %v4250
        %v4253 = vunpack.c.l.s4 1983009808
        %v4254 = vunpack.c.0.s8 %v4253
        %v4255 = vperm.slane %v4247, %v4254
        %v4256 = vrot.slane %v4227, 4
        %v4257 = vsel %vm1696, %v4256, %v4215
        %v4258 = vrot.slane %v4215, 4
        %v4259 = vsel %vm1696, %v4227, %v4258
        %v4261 = vunpack.c.l.s4 1934713408
        %v4262 = vunpack.c.0.s8 %v4261
        %v4263 = vperm.slane %v4257, %v4262
        %v4265 = vunpack.c.l.s4 1934713408
        %v4266 = vunpack.c.0.s8 %v4265
        %v4267 = vperm.slane %v4259, %v4266
        %v4268 = vrot.slane %v4231, 4
        %v4269 = vsel %vm1696, %v4268, %v4219
        %v4270 = vrot.slane %v4219, 4
        %v4271 = vsel %vm1696, %v4231, %v4270
        %v4273 = vunpack.c.l.s4 1934713408
        %v4274 = vunpack.c.0.s8 %v4273
        %v4275 = vperm.slane %v4269, %v4274
        %v4277 = vunpack.c.l.s4 1934713408
        %v4278 = vunpack.c.0.s8 %v4277
        %v4279 = vperm.slane %v4271, %v4278
        %v4280 = vrot.slane %v4251, 4
        %v4281 = vsel %vm1696, %v4280, %v4239
        %v4282 = vrot.slane %v4239, 4
        %v4283 = vsel %vm1696, %v4251, %v4282
        %v4285 = vunpack.c.l.s4 1934713408
        %v4286 = vunpack.c.0.s8 %v4285
        %v4287 = vperm.slane %v4281, %v4286
        %v4289 = vunpack.c.l.s4 1934713408
        %v4290 = vunpack.c.0.s8 %v4289
        %v4291 = vperm.slane %v4283, %v4290
        %v4292 = vrot.slane %v4255, 4
        %v4293 = vsel %vm1696, %v4292, %v4243
        %v4294 = vrot.slane %v4243, 4
        %v4295 = vsel %vm1696, %v4255, %v4294
        %v4297 = vunpack.c.l.s4 1934713408
        %v4298 = vunpack.c.0.s8 %v4297
        %v4299 = vperm.slane %v4293, %v4298
        %v4301 = vunpack.c.l.s4 1934713408
        %v4302 = vunpack.c.0.s8 %v4301
        %v4303 = vperm.slane %v4295, %v4302
        %v4304 = vrot.slane %v4287, 4
        %v4305 = vsel %vm1696, %v4304, %v4263
        %v4306 = vrot.slane %v4263, 4
        %v4307 = vsel %vm1696, %v4287, %v4306
        %v4308 = vrot.slane %v4291, 4
        %v4309 = vsel %vm1696, %v4308, %v4267
        %v4310 = vrot.slane %v4267, 4
        %v4311 = vsel %vm1696, %v4291, %v4310
        %v4312 = vrot.slane %v4299, 4
        %v4313 = vsel %vm1696, %v4312, %v4275
        %v4314 = vrot.slane %v4275, 4
        %v4315 = vsel %vm1696, %v4299, %v4314
        %v4316 = vrot.slane %v4303, 4
        %v4317 = vsel %vm1696, %v4316, %v4279
        %v4318 = vrot.slane %v4279, 4
        %v4319 = vsel %vm1696, %v4303, %v4318
        %v4320 = vrot.slane %v3973, 4
        %v4321 = vsel %vm1696, %v4320, %v3969
        %v4322 = vrot.slane %v3969, 4
        %v4323 = vsel %vm1696, %v3973, %v4322
        %v4325 = vunpack.c.l.s4 1983009808
        %v4326 = vunpack.c.0.s8 %v4325
        %v4327 = vperm.slane %v4321, %v4326
        %v4329 = vunpack.c.l.s4 1983009808
        %v4330 = vunpack.c.0.s8 %v4329
        %v4331 = vperm.slane %v4323, %v4330
        %v4332 = vrot.slane %v3975, 4
        %v4333 = vsel %vm1696, %v4332, %v3971
        %v4334 = vrot.slane %v3971, 4
        %v4335 = vsel %vm1696, %v3975, %v4334
        %v4337 = vunpack.c.l.s4 1983009808
        %v4338 = vunpack.c.0.s8 %v4337
        %v4339 = vperm.slane %v4333, %v4338
        %v4341 = vunpack.c.l.s4 1983009808
        %v4342 = vunpack.c.0.s8 %v4341
        %v4343 = vperm.slane %v4335, %v4342
        %v4344 = vrot.slane %v3981, 4
        %v4345 = vsel %vm1696, %v4344, %v3977
        %v4346 = vrot.slane %v3977, 4
        %v4347 = vsel %vm1696, %v3981, %v4346
        %v4349 = vunpack.c.l.s4 1983009808
        %v4350 = vunpack.c.0.s8 %v4349
        %v4351 = vperm.slane %v4345, %v4350
        %v4353 = vunpack.c.l.s4 1983009808
        %v4354 = vunpack.c.0.s8 %v4353
        %v4355 = vperm.slane %v4347, %v4354
        %v4356 = vrot.slane %v3983, 4
        %v4357 = vsel %vm1696, %v4356, %v3979
        %v4358 = vrot.slane %v3979, 4
        %v4359 = vsel %vm1696, %v3983, %v4358
        %v4361 = vunpack.c.l.s4 1983009808
        %v4362 = vunpack.c.0.s8 %v4361
        %v4363 = vperm.slane %v4357, %v4362
        %v4365 = vunpack.c.l.s4 1983009808
        %v4366 = vunpack.c.0.s8 %v4365
        %v4367 = vperm.slane %v4359, %v4366
        %v4368 = vrot.slane %v4339, 4
        %v4369 = vsel %vm1696, %v4368, %v4327
        %v4370 = vrot.slane %v4327, 4
        %v4371 = vsel %vm1696, %v4339, %v4370
        %v4373 = vunpack.c.l.s4 1934713408
        %v4374 = vunpack.c.0.s8 %v4373
        %v4375 = vperm.slane %v4369, %v4374
        %v4377 = vunpack.c.l.s4 1934713408
        %v4378 = vunpack.c.0.s8 %v4377
        %v4379 = vperm.slane %v4371, %v4378
        %v4380 = vrot.slane %v4343, 4
        %v4381 = vsel %vm1696, %v4380, %v4331
        %v4382 = vrot.slane %v4331, 4
        %v4383 = vsel %vm1696, %v4343, %v4382
        %v4385 = vunpack.c.l.s4 1934713408
        %v4386 = vunpack.c.0.s8 %v4385
        %v4387 = vperm.slane %v4381, %v4386
        %v4389 = vunpack.c.l.s4 1934713408
        %v4390 = vunpack.c.0.s8 %v4389
        %v4391 = vperm.slane %v4383, %v4390
        %v4392 = vrot.slane %v4363, 4
        %v4393 = vsel %vm1696, %v4392, %v4351
        %v4394 = vrot.slane %v4351, 4
        %v4395 = vsel %vm1696, %v4363, %v4394
        %v4397 = vunpack.c.l.s4 1934713408
        %v4398 = vunpack.c.0.s8 %v4397
        %v4399 = vperm.slane %v4393, %v4398
        %v4401 = vunpack.c.l.s4 1934713408
        %v4402 = vunpack.c.0.s8 %v4401
        %v4403 = vperm.slane %v4395, %v4402
        %v4404 = vrot.slane %v4367, 4
        %v4405 = vsel %vm1696, %v4404, %v4355
        %v4406 = vrot.slane %v4355, 4
        %v4407 = vsel %vm1696, %v4367, %v4406
        %v4409 = vunpack.c.l.s4 1934713408
        %v4410 = vunpack.c.0.s8 %v4409
        %v4411 = vperm.slane %v4405, %v4410
        %v4413 = vunpack.c.l.s4 1934713408
        %v4414 = vunpack.c.0.s8 %v4413
        %v4415 = vperm.slane %v4407, %v4414
        %v4416 = vrot.slane %v4399, 4
        %v4417 = vsel %vm1696, %v4416, %v4375
        %v4418 = vrot.slane %v4375, 4
        %v4419 = vsel %vm1696, %v4399, %v4418
        %v4420 = vrot.slane %v4403, 4
        %v4421 = vsel %vm1696, %v4420, %v4379
        %v4422 = vrot.slane %v4379, 4
        %v4423 = vsel %vm1696, %v4403, %v4422
        %v4424 = vrot.slane %v4411, 4
        %v4425 = vsel %vm1696, %v4424, %v4387
        %v4426 = vrot.slane %v4387, 4
        %v4427 = vsel %vm1696, %v4411, %v4426
        %v4428 = vrot.slane %v4415, 4
        %v4429 = vsel %vm1696, %v4428, %v4391
        %v4430 = vrot.slane %v4391, 4
        %v4431 = vsel %vm1696, %v4415, %v4430
        %v4432 = vrot.slane %v4085, 4
        %v4433 = vsel %vm1696, %v4432, %v4081
        %v4434 = vrot.slane %v4081, 4
        %v4435 = vsel %vm1696, %v4085, %v4434
        %v4437 = vunpack.c.l.s4 1983009808
        %v4438 = vunpack.c.0.s8 %v4437
        %v4439 = vperm.slane %v4433, %v4438
        %v4441 = vunpack.c.l.s4 1983009808
        %v4442 = vunpack.c.0.s8 %v4441
        %v4443 = vperm.slane %v4435, %v4442
        %v4444 = vrot.slane %v4087, 4
        %v4445 = vsel %vm1696, %v4444, %v4083
        %v4446 = vrot.slane %v4083, 4
        %v4447 = vsel %vm1696, %v4087, %v4446
        %v4449 = vunpack.c.l.s4 1983009808
        %v4450 = vunpack.c.0.s8 %v4449
        %v4451 = vperm.slane %v4445, %v4450
        %v4453 = vunpack.c.l.s4 1983009808
        %v4454 = vunpack.c.0.s8 %v4453
        %v4455 = vperm.slane %v4447, %v4454
        %v4456 = vrot.slane %v4093, 4
        %v4457 = vsel %vm1696, %v4456, %v4089
        %v4458 = vrot.slane %v4089, 4
        %v4459 = vsel %vm1696, %v4093, %v4458
        %v4461 = vunpack.c.l.s4 1983009808
        %v4462 = vunpack.c.0.s8 %v4461
        %v4463 = vperm.slane %v4457, %v4462
        %v4465 = vunpack.c.l.s4 1983009808
        %v4466 = vunpack.c.0.s8 %v4465
        %v4467 = vperm.slane %v4459, %v4466
        %v4468 = vrot.slane %v4095, 4
        %v4469 = vsel %vm1696, %v4468, %v4091
        %v4470 = vrot.slane %v4091, 4
        %v4471 = vsel %vm1696, %v4095, %v4470
        %v4473 = vunpack.c.l.s4 1983009808
        %v4474 = vunpack.c.0.s8 %v4473
        %v4475 = vperm.slane %v4469, %v4474
        %v4477 = vunpack.c.l.s4 1983009808
        %v4478 = vunpack.c.0.s8 %v4477
        %v4479 = vperm.slane %v4471, %v4478
        %v4480 = vrot.slane %v4451, 4
        %v4481 = vsel %vm1696, %v4480, %v4439
        %v4482 = vrot.slane %v4439, 4
        %v4483 = vsel %vm1696, %v4451, %v4482
        %v4485 = vunpack.c.l.s4 1934713408
        %v4486 = vunpack.c.0.s8 %v4485
        %v4487 = vperm.slane %v4481, %v4486
        %v4489 = vunpack.c.l.s4 1934713408
        %v4490 = vunpack.c.0.s8 %v4489
        %v4491 = vperm.slane %v4483, %v4490
        %v4492 = vrot.slane %v4455, 4
        %v4493 = vsel %vm1696, %v4492, %v4443
        %v4494 = vrot.slane %v4443, 4
        %v4495 = vsel %vm1696, %v4455, %v4494
        %v4497 = vunpack.c.l.s4 1934713408
        %v4498 = vunpack.c.0.s8 %v4497
        %v4499 = vperm.slane %v4493, %v4498
        %v4501 = vunpack.c.l.s4 1934713408
        %v4502 = vunpack.c.0.s8 %v4501
        %v4503 = vperm.slane %v4495, %v4502
        %v4504 = vrot.slane %v4475, 4
        %v4505 = vsel %vm1696, %v4504, %v4463
        %v4506 = vrot.slane %v4463, 4
        %v4507 = vsel %vm1696, %v4475, %v4506
        %v4509 = vunpack.c.l.s4 1934713408
        %v4510 = vunpack.c.0.s8 %v4509
        %v4511 = vperm.slane %v4505, %v4510
        %v4513 = vunpack.c.l.s4 1934713408
        %v4514 = vunpack.c.0.s8 %v4513
        %v4515 = vperm.slane %v4507, %v4514
        %v4516 = vrot.slane %v4479, 4
        %v4517 = vsel %vm1696, %v4516, %v4467
        %v4518 = vrot.slane %v4467, 4
        %v4519 = vsel %vm1696, %v4479, %v4518
        %v4521 = vunpack.c.l.s4 1934713408
        %v4522 = vunpack.c.0.s8 %v4521
        %v4523 = vperm.slane %v4517, %v4522
        %v4525 = vunpack.c.l.s4 1934713408
        %v4526 = vunpack.c.0.s8 %v4525
        %v4527 = vperm.slane %v4519, %v4526
        %v4528 = vrot.slane %v4511, 4
        %v4529 = vsel %vm1696, %v4528, %v4487
        %v4530 = vrot.slane %v4487, 4
        %v4531 = vsel %vm1696, %v4511, %v4530
        %v4532 = vrot.slane %v4515, 4
        %v4533 = vsel %vm1696, %v4532, %v4491
        %v4534 = vrot.slane %v4491, 4
        %v4535 = vsel %vm1696, %v4515, %v4534
        %v4536 = vrot.slane %v4523, 4
        %v4537 = vsel %vm1696, %v4536, %v4499
        %v4538 = vrot.slane %v4499, 4
        %v4539 = vsel %vm1696, %v4523, %v4538
        %v4540 = vrot.slane %v4527, 4
        %v4541 = vsel %vm1696, %v4540, %v4503
        %v4542 = vrot.slane %v4503, 4
        %v4543 = vsel %vm1696, %v4527, %v4542
        %v4544 = vld [vmem:[#allocation15] sm:$0xff]
        %v4545 = vld [vmem:[#allocation15 + $0x8] sm:$0xff]
        %v4546 = vld [vmem:[#allocation15 + $0x10] sm:$0xff]
        %v4547 = vld [vmem:[#allocation15 + $0x18] sm:$0xff]
        %v4548 = vld [vmem:[#allocation15 + $0x20] sm:$0xff]
        %v4549 = vld [vmem:[#allocation15 + $0x28] sm:$0xff]
        %v4550 = vld [vmem:[#allocation15 + $0x30] sm:$0xff]
        %v4551 = vld [vmem:[#allocation15 + $0x38] sm:$0xff]
        %v4552 = vld [vmem:[#allocation15 + $0x40] sm:$0xff]
        %v4553 = vld [vmem:[#allocation15 + $0x48] sm:$0xff]
        %v4554 = vld [vmem:[#allocation15 + $0x50] sm:$0xff]
        %v4555 = vld [vmem:[#allocation15 + $0x58] sm:$0xff]
        %v4556 = vld [vmem:[#allocation15 + $0x60] sm:$0xff]
        %v4557 = vld [vmem:[#allocation15 + $0x68] sm:$0xff]
        %v4558 = vld [vmem:[#allocation15 + $0x70] sm:$0xff]
        %v4559 = vld [vmem:[#allocation15 + $0x78] sm:$0xff]
        %v4560 = vld [vmem:[#allocation15 + $0x80] sm:$0xff]
        %v4561 = vld [vmem:[#allocation15 + $0x88] sm:$0xff]
        %v4562 = vld [vmem:[#allocation15 + $0x90] sm:$0xff]
        %v4563 = vld [vmem:[#allocation15 + $0x98] sm:$0xff]
        %v4564 = vld [vmem:[#allocation15 + $0xa0] sm:$0xff]
        %v4565 = vld [vmem:[#allocation15 + $0xa8] sm:$0xff]
        %v4566 = vld [vmem:[#allocation15 + $0xb0] sm:$0xff]
        %v4567 = vld [vmem:[#allocation15 + $0xb8] sm:$0xff]
        %v4568 = vld [vmem:[#allocation15 + $0xc0] sm:$0xff]
        %v4569 = vld [vmem:[#allocation15 + $0xc8] sm:$0xff]
        %v4570 = vld [vmem:[#allocation15 + $0xd0] sm:$0xff]
        %v4571 = vld [vmem:[#allocation15 + $0xd8] sm:$0xff]
        %v4572 = vld [vmem:[#allocation15 + $0xe0] sm:$0xff]
        %v4573 = vld [vmem:[#allocation15 + $0xe8] sm:$0xff]
        %v4574 = vld [vmem:[#allocation15 + $0xf0] sm:$0xff]
        %v4575 = vld [vmem:[#allocation15 + $0xf8] sm:$0xff]
        %v4576 = vld [vmem:[#allocation15 + $0x100] sm:$0xff]
        %v4577 = vld [vmem:[#allocation15 + $0x108] sm:$0xff]
        %v4578 = vld [vmem:[#allocation15 + $0x110] sm:$0xff]
        %v4579 = vld [vmem:[#allocation15 + $0x118] sm:$0xff]
        %v4580 = vld [vmem:[#allocation15 + $0x120] sm:$0xff]
        %v4581 = vld [vmem:[#allocation15 + $0x128] sm:$0xff]
        %v4582 = vld [vmem:[#allocation15 + $0x130] sm:$0xff]
        %v4583 = vld [vmem:[#allocation15 + $0x138] sm:$0xff]
        %v4584 = vld [vmem:[#allocation15 + $0x140] sm:$0xff]
        %v4585 = vld [vmem:[#allocation15 + $0x148] sm:$0xff]
        %v4586 = vld [vmem:[#allocation15 + $0x150] sm:$0xff]
        %v4587 = vld [vmem:[#allocation15 + $0x158] sm:$0xff]
        %v4588 = vld [vmem:[#allocation15 + $0x160] sm:$0xff]
        %v4589 = vld [vmem:[#allocation15 + $0x168] sm:$0xff]
        %v4590 = vld [vmem:[#allocation15 + $0x170] sm:$0xff]
        %v4591 = vld [vmem:[#allocation15 + $0x178] sm:$0xff]
        %v4592 = vld [vmem:[#allocation15 + $0x180] sm:$0xff]
        %v4593 = vld [vmem:[#allocation15 + $0x188] sm:$0xff]
        %v4594 = vld [vmem:[#allocation15 + $0x190] sm:$0xff]
        %v4595 = vld [vmem:[#allocation15 + $0x198] sm:$0xff]
        %v4596 = vld [vmem:[#allocation15 + $0x1a0] sm:$0xff]
        %v4597 = vld [vmem:[#allocation15 + $0x1a8] sm:$0xff]
        %v4598 = vld [vmem:[#allocation15 + $0x1b0] sm:$0xff]
        %v4599 = vld [vmem:[#allocation15 + $0x1b8] sm:$0xff]
        %v4600 = vld [vmem:[#allocation15 + $0x1c0] sm:$0xff]
        %v4601 = vld [vmem:[#allocation15 + $0x1c8] sm:$0xff]
        %v4602 = vld [vmem:[#allocation15 + $0x1d0] sm:$0xff]
        %v4603 = vld [vmem:[#allocation15 + $0x1d8] sm:$0xff]
        %v4604 = vld [vmem:[#allocation15 + $0x1e0] sm:$0xff]
        %v4605 = vld [vmem:[#allocation15 + $0x1e8] sm:$0xff]
        %v4606 = vld [vmem:[#allocation15 + $0x1f0] sm:$0xff]
        %v4607 = vld [vmem:[#allocation15 + $0x1f8] sm:$0xff]
        %vm4608 = vcmask 261120
        %v4610 = vsel %vm4608, %v2241, 0
        %v4613 = vsel %vm4608, %v2243, 0
        %v4616 = vsel %vm4608, %v2245, 0
        %v4619 = vsel %vm4608, %v2247, 0
        %v4622 = vsel %vm4608, %v2249, 0
        %v4625 = vsel %vm4608, %v2251, 0
        %v4628 = vsel %vm4608, %v2253, 0
        %v4631 = vsel %vm4608, %v2255, 0
        %v4634 = vsel %vm4608, %v2353, 0
        %v4637 = vsel %vm4608, %v2355, 0
        %v4640 = vsel %vm4608, %v2357, 0
        %v4643 = vsel %vm4608, %v2359, 0
        %v4646 = vsel %vm4608, %v2361, 0
        %v4649 = vsel %vm4608, %v2363, 0
        %v4652 = vsel %vm4608, %v2365, 0
        %v4655 = vsel %vm4608, %v2367, 0
        %v4658 = vsel %vm4608, %v2465, 0
        %v4661 = vsel %vm4608, %v2467, 0
        %v4664 = vsel %vm4608, %v2469, 0
        %v4667 = vsel %vm4608, %v2471, 0
        %v4670 = vsel %vm4608, %v2473, 0
        %v4673 = vsel %vm4608, %v2475, 0
        %v4676 = vsel %vm4608, %v2477, 0
        %v4679 = vsel %vm4608, %v2479, 0
        %v4682 = vsel %vm4608, %v2577, 0
        %v4685 = vsel %vm4608, %v2579, 0
        %v4688 = vsel %vm4608, %v2581, 0
        %v4691 = vsel %vm4608, %v2583, 0
        %v4694 = vsel %vm4608, %v2585, 0
        %v4697 = vsel %vm4608, %v2587, 0
        %v4700 = vsel %vm4608, %v2589, 0
        %v4703 = vsel %vm4608, %v2591, 0
        %v4706 = vsel %vm4608, %v3217, 0
        %v4709 = vsel %vm4608, %v3219, 0
        %v4712 = vsel %vm4608, %v3221, 0
        %v4715 = vsel %vm4608, %v3223, 0
        %v4718 = vsel %vm4608, %v3225, 0
        %v4721 = vsel %vm4608, %v3227, 0
        %v4724 = vsel %vm4608, %v3229, 0
        %v4727 = vsel %vm4608, %v3231, 0
        %v4730 = vsel %vm4608, %v3329, 0
        %v4733 = vsel %vm4608, %v3331, 0
        %v4736 = vsel %vm4608, %v3333, 0
        %v4739 = vsel %vm4608, %v3335, 0
        %v4742 = vsel %vm4608, %v3337, 0
        %v4745 = vsel %vm4608, %v3339, 0
        %v4748 = vsel %vm4608, %v3341, 0
        %v4751 = vsel %vm4608, %v3343, 0
        %v4754 = vsel %vm4608, %v3441, 0
        %v4757 = vsel %vm4608, %v3443, 0
        %v4760 = vsel %vm4608, %v3445, 0
        %v4763 = vsel %vm4608, %v3447, 0
        %v4766 = vsel %vm4608, %v3449, 0
        %v4769 = vsel %vm4608, %v3451, 0
        %v4772 = vsel %vm4608, %v3453, 0
        %v4775 = vsel %vm4608, %v3455, 0
        %v4778 = vsel %vm4608, %v3553, 0
        %v4781 = vsel %vm4608, %v3555, 0
        %v4784 = vsel %vm4608, %v3557, 0
        %v4787 = vsel %vm4608, %v3559, 0
        %v4790 = vsel %vm4608, %v3561, 0
        %v4793 = vsel %vm4608, %v3563, 0
        %v4796 = vsel %vm4608, %v3565, 0
        %v4799 = vsel %vm4608, %v3567, 0
        %4801 = vmatpush.xpose.msra.mxu0 %v4751
        %4802 = vmatpush.xpose.msra.mxu0 %v4748
        %4803 = vmatpush.xpose.msra.mxu0 %v4745
        %4804 = vmatpush.xpose.msra.mxu0 %v4742
        %4805 = vmatpush.xpose.msra.mxu0 %v4739
        %4806 = vmatpush.xpose.msra.mxu0 %v4736
        %4807 = vmatpush.xpose.msra.mxu0 %v4733
        %4808 = vmatpush.xpose.msra.mxu0 %v4730
        %4809 = vmatpush.xpose.msra.mxu0 %v4727
        %4810 = vmatpush.xpose.msra.mxu0 %v4724
        %4811 = vmatpush.xpose.msra.mxu0 %v4721
        %4812 = vmatpush.xpose.msra.mxu0 %v4718
        %4813 = vmatpush.xpose.msra.mxu0 %v4715
        %4814 = vmatpush.xpose.msra.mxu0 %v4712
        %4815 = vmatpush.xpose.msra.mxu0 %v4709
        %4816 = vmatpush.xpose.msra.mxu0 %v4706
        %4817 = vmatmul.f32.gmra.mxu0 %v4610
        %v4818 = vpop.f32.mrf.mxu0
        %v4819 = vadd.f32 %v4544, %v4818
        %4820 = vmatmul.f32.gmra.mxu0 %v4613
        %v4821 = vpop.f32.mrf.mxu0
        %v4822 = vadd.f32 %v4546, %v4821
        %4823 = vmatmul.f32.gmra.mxu0 %v4616
        %v4824 = vpop.f32.mrf.mxu0
        %v4825 = vadd.f32 %v4548, %v4824
        %4826 = vmatmul.f32.gmra.mxu0 %v4619
        %v4827 = vpop.f32.mrf.mxu0
        %v4828 = vadd.f32 %v4550, %v4827
        %4829 = vmatmul.f32.gmra.mxu0 %v4622
        %v4830 = vpop.f32.mrf.mxu0
        %v4831 = vadd.f32 %v4552, %v4830
        %4832 = vmatmul.f32.gmra.mxu0 %v4625
        %v4833 = vpop.f32.mrf.mxu0
        %v4834 = vadd.f32 %v4554, %v4833
        %4835 = vmatmul.f32.gmra.mxu0 %v4628
        %v4836 = vpop.f32.mrf.mxu0
        %v4837 = vadd.f32 %v4556, %v4836
        %4838 = vmatmul.f32.gmra.mxu0 %v4631
        %v4839 = vpop.f32.mrf.mxu0
        %v4840 = vadd.f32 %v4558, %v4839
        %4841 = vmatmul.f32.gmra.mxu0 %v4634
        %v4842 = vpop.f32.mrf.mxu0
        %v4843 = vadd.f32 %v4560, %v4842
        %4844 = vmatmul.f32.gmra.mxu0 %v4637
        %v4845 = vpop.f32.mrf.mxu0
        %v4846 = vadd.f32 %v4562, %v4845
        %4847 = vmatmul.f32.gmra.mxu0 %v4640
        %v4848 = vpop.f32.mrf.mxu0
        %v4849 = vadd.f32 %v4564, %v4848
        %4850 = vmatmul.f32.gmra.mxu0 %v4643
        %v4851 = vpop.f32.mrf.mxu0
        %v4852 = vadd.f32 %v4566, %v4851
        %4853 = vmatmul.f32.gmra.mxu0 %v4646
        %v4854 = vpop.f32.mrf.mxu0
        %v4855 = vadd.f32 %v4568, %v4854
        %4856 = vmatmul.f32.gmra.mxu0 %v4649
        %v4857 = vpop.f32.mrf.mxu0
        %v4858 = vadd.f32 %v4570, %v4857
        %4859 = vmatmul.f32.gmra.mxu0 %v4652
        %v4860 = vpop.f32.mrf.mxu0
        %v4861 = vadd.f32 %v4572, %v4860
        %4862 = vmatmul.f32.gmra.mxu0 %v4655
        %v4863 = vpop.f32.mrf.mxu0
        %v4864 = vadd.f32 %v4574, %v4863
        %4865 = vmatmul.f32.gmra.mxu0 %v4658
        %v4866 = vpop.f32.mrf.mxu0
        %v4867 = vadd.f32 %v4576, %v4866
        %4868 = vmatmul.f32.gmra.mxu0 %v4661
        %v4869 = vpop.f32.mrf.mxu0
        %v4870 = vadd.f32 %v4578, %v4869
        %4871 = vmatmul.f32.gmra.mxu0 %v4664
        %v4872 = vpop.f32.mrf.mxu0
        %v4873 = vadd.f32 %v4580, %v4872
        %4874 = vmatmul.f32.gmra.mxu0 %v4667
        %v4875 = vpop.f32.mrf.mxu0
        %v4876 = vadd.f32 %v4582, %v4875
        %4877 = vmatmul.f32.gmra.mxu0 %v4670
        %v4878 = vpop.f32.mrf.mxu0
        %v4879 = vadd.f32 %v4584, %v4878
        %4880 = vmatmul.f32.gmra.mxu0 %v4673
        %v4881 = vpop.f32.mrf.mxu0
        %v4882 = vadd.f32 %v4586, %v4881
        %4883 = vmatmul.f32.gmra.mxu0 %v4676
        %v4884 = vpop.f32.mrf.mxu0
        %v4885 = vadd.f32 %v4588, %v4884
        %4886 = vmatmul.f32.gmra.mxu0 %v4679
        %v4887 = vpop.f32.mrf.mxu0
        %v4888 = vadd.f32 %v4590, %v4887
        %4889 = vmatmul.f32.gmra.mxu0 %v4682
        %v4890 = vpop.f32.mrf.mxu0
        %v4891 = vadd.f32 %v4592, %v4890
        %4892 = vmatmul.f32.gmra.mxu0 %v4685
        %v4893 = vpop.f32.mrf.mxu0
        %v4894 = vadd.f32 %v4594, %v4893
        %4895 = vmatmul.f32.gmra.mxu0 %v4688
        %v4896 = vpop.f32.mrf.mxu0
        %v4897 = vadd.f32 %v4596, %v4896
        %4898 = vmatmul.f32.gmra.mxu0 %v4691
        %v4899 = vpop.f32.mrf.mxu0
        %v4900 = vadd.f32 %v4598, %v4899
        %4901 = vmatmul.f32.gmra.mxu0 %v4694
        %v4902 = vpop.f32.mrf.mxu0
        %v4903 = vadd.f32 %v4600, %v4902
        %4904 = vmatmul.f32.gmra.mxu0 %v4697
        %v4905 = vpop.f32.mrf.mxu0
        %v4906 = vadd.f32 %v4602, %v4905
        %4907 = vmatmul.f32.gmra.mxu0 %v4700
        %v4908 = vpop.f32.mrf.mxu0
        %v4909 = vadd.f32 %v4604, %v4908
        %4910 = vmatmul.f32.gmra.mxu0 %v4703
        %v4911 = vpop.f32.mrf.mxu0
        %v4912 = vadd.f32 %v4606, %v4911
        %4913 = vdwg.mxu0
        %4914 = vmatpush.xpose.msra.mxu0 %v4799
        %4915 = vmatpush.xpose.msra.mxu0 %v4796
        %4916 = vmatpush.xpose.msra.mxu0 %v4793
        %4917 = vmatpush.xpose.msra.mxu0 %v4790
        %4918 = vmatpush.xpose.msra.mxu0 %v4787
        %4919 = vmatpush.xpose.msra.mxu0 %v4784
        %4920 = vmatpush.xpose.msra.mxu0 %v4781
        %4921 = vmatpush.xpose.msra.mxu0 %v4778
        %4922 = vmatpush.xpose.msra.mxu0 %v4775
        %4923 = vmatpush.xpose.msra.mxu0 %v4772
        %4924 = vmatpush.xpose.msra.mxu0 %v4769
        %4925 = vmatpush.xpose.msra.mxu0 %v4766
        %4926 = vmatpush.xpose.msra.mxu0 %v4763
        %4927 = vmatpush.xpose.msra.mxu0 %v4760
        %4928 = vmatpush.xpose.msra.mxu0 %v4757
        %4929 = vmatpush.xpose.msra.mxu0 %v4754
        %4930 = vmatmul.f32.gmra.mxu0 %v4610
        %v4931 = vpop.f32.mrf.mxu0
        %v4932 = vadd.f32 %v4545, %v4931
        %4933 = vmatmul.f32.gmra.mxu0 %v4613
        %v4934 = vpop.f32.mrf.mxu0
        %v4935 = vadd.f32 %v4547, %v4934
        %4936 = vmatmul.f32.gmra.mxu0 %v4616
        %v4937 = vpop.f32.mrf.mxu0
        %v4938 = vadd.f32 %v4549, %v4937
        %4939 = vmatmul.f32.gmra.mxu0 %v4619
        %v4940 = vpop.f32.mrf.mxu0
        %v4941 = vadd.f32 %v4551, %v4940
        %4942 = vmatmul.f32.gmra.mxu0 %v4622
        %v4943 = vpop.f32.mrf.mxu0
        %v4944 = vadd.f32 %v4553, %v4943
        %4945 = vmatmul.f32.gmra.mxu0 %v4625
        %v4946 = vpop.f32.mrf.mxu0
        %v4947 = vadd.f32 %v4555, %v4946
        %4948 = vmatmul.f32.gmra.mxu0 %v4628
        %v4949 = vpop.f32.mrf.mxu0
        %v4950 = vadd.f32 %v4557, %v4949
        %4951 = vmatmul.f32.gmra.mxu0 %v4631
        %v4952 = vpop.f32.mrf.mxu0
        %v4953 = vadd.f32 %v4559, %v4952
        %4954 = vmatmul.f32.gmra.mxu0 %v4634
        %v4955 = vpop.f32.mrf.mxu0
        %v4956 = vadd.f32 %v4561, %v4955
        %4957 = vmatmul.f32.gmra.mxu0 %v4637
        %v4958 = vpop.f32.mrf.mxu0
        %v4959 = vadd.f32 %v4563, %v4958
        %4960 = vmatmul.f32.gmra.mxu0 %v4640
        %v4961 = vpop.f32.mrf.mxu0
        %v4962 = vadd.f32 %v4565, %v4961
        %4963 = vmatmul.f32.gmra.mxu0 %v4643
        %v4964 = vpop.f32.mrf.mxu0
        %v4965 = vadd.f32 %v4567, %v4964
        %4966 = vmatmul.f32.gmra.mxu0 %v4646
        %v4967 = vpop.f32.mrf.mxu0
        %v4968 = vadd.f32 %v4569, %v4967
        %4969 = vmatmul.f32.gmra.mxu0 %v4649
        %v4970 = vpop.f32.mrf.mxu0
        %v4971 = vadd.f32 %v4571, %v4970
        %4972 = vmatmul.f32.gmra.mxu0 %v4652
        %v4973 = vpop.f32.mrf.mxu0
        %v4974 = vadd.f32 %v4573, %v4973
        %4975 = vmatmul.f32.gmra.mxu0 %v4655
        %v4976 = vpop.f32.mrf.mxu0
        %v4977 = vadd.f32 %v4575, %v4976
        %4978 = vmatmul.f32.gmra.mxu0 %v4658
        %v4979 = vpop.f32.mrf.mxu0
        %v4980 = vadd.f32 %v4577, %v4979
        %4981 = vmatmul.f32.gmra.mxu0 %v4661
        %v4982 = vpop.f32.mrf.mxu0
        %v4983 = vadd.f32 %v4579, %v4982
        %4984 = vmatmul.f32.gmra.mxu0 %v4664
        %v4985 = vpop.f32.mrf.mxu0
        %v4986 = vadd.f32 %v4581, %v4985
        %4987 = vmatmul.f32.gmra.mxu0 %v4667
        %v4988 = vpop.f32.mrf.mxu0
        %v4989 = vadd.f32 %v4583, %v4988
        %4990 = vmatmul.f32.gmra.mxu0 %v4670
        %v4991 = vpop.f32.mrf.mxu0
        %v4992 = vadd.f32 %v4585, %v4991
        %4993 = vmatmul.f32.gmra.mxu0 %v4673
        %v4994 = vpop.f32.mrf.mxu0
        %v4995 = vadd.f32 %v4587, %v4994
        %4996 = vmatmul.f32.gmra.mxu0 %v4676
        %v4997 = vpop.f32.mrf.mxu0
        %v4998 = vadd.f32 %v4589, %v4997
        %4999 = vmatmul.f32.gmra.mxu0 %v4679
        %v5000 = vpop.f32.mrf.mxu0
        %v5001 = vadd.f32 %v4591, %v5000
        %5002 = vmatmul.f32.gmra.mxu0 %v4682
        %v5003 = vpop.f32.mrf.mxu0
        %v5004 = vadd.f32 %v4593, %v5003
        %5005 = vmatmul.f32.gmra.mxu0 %v4685
        %v5006 = vpop.f32.mrf.mxu0
        %v5007 = vadd.f32 %v4595, %v5006
        %5008 = vmatmul.f32.gmra.mxu0 %v4688
        %v5009 = vpop.f32.mrf.mxu0
        %v5010 = vadd.f32 %v4597, %v5009
        %5011 = vmatmul.f32.gmra.mxu0 %v4691
        %v5012 = vpop.f32.mrf.mxu0
        %v5013 = vadd.f32 %v4599, %v5012
        %5014 = vmatmul.f32.gmra.mxu0 %v4694
        %v5015 = vpop.f32.mrf.mxu0
        %v5016 = vadd.f32 %v4601, %v5015
        %5017 = vmatmul.f32.gmra.mxu0 %v4697
        %v5018 = vpop.f32.mrf.mxu0
        %v5019 = vadd.f32 %v4603, %v5018
        %5020 = vmatmul.f32.gmra.mxu0 %v4700
        %v5021 = vpop.f32.mrf.mxu0
        %v5022 = vadd.f32 %v4605, %v5021
        %5023 = vmatmul.f32.gmra.mxu0 %v4703
        %v5024 = vpop.f32.mrf.mxu0
        %v5025 = vadd.f32 %v4607, %v5024
        %5026 = vdwg.mxu0
        %v5027 = vmax.f32 %v4819, %v4932
        %5028 = vmax.xlane.f32.xlu0 %v5027
        %v5029 = vpop.xlane.xlu0 %5028
        %v5030 = vmax.f32 %v4822, %v4935
        %5031 = vmax.xlane.f32.xlu0 %v5030
        %v5032 = vpop.xlane.xlu0 %5031
        %v5033 = vmax.f32 %v4825, %v4938
        %5034 = vmax.xlane.f32.xlu0 %v5033
        %v5035 = vpop.xlane.xlu0 %5034
        %v5036 = vmax.f32 %v4828, %v4941
        %5037 = vmax.xlane.f32.xlu0 %v5036
        %v5038 = vpop.xlane.xlu0 %5037
        %v5039 = vmax.f32 %v4831, %v4944
        %5040 = vmax.xlane.f32.xlu0 %v5039
        %v5041 = vpop.xlane.xlu0 %5040
        %v5042 = vmax.f32 %v4834, %v4947
        %5043 = vmax.xlane.f32.xlu0 %v5042
        %v5044 = vpop.xlane.xlu0 %5043
        %v5045 = vmax.f32 %v4837, %v4950
        %5046 = vmax.xlane.f32.xlu0 %v5045
        %v5047 = vpop.xlane.xlu0 %5046
        %v5048 = vmax.f32 %v4840, %v4953
        %5049 = vmax.xlane.f32.xlu0 %v5048
        %v5050 = vpop.xlane.xlu0 %5049
        %v5051 = vmax.f32 %v4843, %v4956
        %5052 = vmax.xlane.f32.xlu0 %v5051
        %v5053 = vpop.xlane.xlu0 %5052
        %v5054 = vmax.f32 %v4846, %v4959
        %5055 = vmax.xlane.f32.xlu0 %v5054
        %v5056 = vpop.xlane.xlu0 %5055
        %v5057 = vmax.f32 %v4849, %v4962
        %5058 = vmax.xlane.f32.xlu0 %v5057
        %v5059 = vpop.xlane.xlu0 %5058
        %v5060 = vmax.f32 %v4852, %v4965
        %5061 = vmax.xlane.f32.xlu0 %v5060
        %v5062 = vpop.xlane.xlu0 %5061
        %v5063 = vmax.f32 %v4855, %v4968
        %5064 = vmax.xlane.f32.xlu0 %v5063
        %v5065 = vpop.xlane.xlu0 %5064
        %v5066 = vmax.f32 %v4858, %v4971
        %5067 = vmax.xlane.f32.xlu0 %v5066
        %v5068 = vpop.xlane.xlu0 %5067
        %v5069 = vmax.f32 %v4861, %v4974
        %5070 = vmax.xlane.f32.xlu0 %v5069
        %v5071 = vpop.xlane.xlu0 %5070
        %v5072 = vmax.f32 %v4864, %v4977
        %5073 = vmax.xlane.f32.xlu0 %v5072
        %v5074 = vpop.xlane.xlu0 %5073
        %v5075 = vmax.f32 %v4867, %v4980
        %5076 = vmax.xlane.f32.xlu0 %v5075
        %v5077 = vpop.xlane.xlu0 %5076
        %v5078 = vmax.f32 %v4870, %v4983
        %5079 = vmax.xlane.f32.xlu0 %v5078
        %v5080 = vpop.xlane.xlu0 %5079
        %v5081 = vmax.f32 %v4873, %v4986
        %5082 = vmax.xlane.f32.xlu0 %v5081
        %v5083 = vpop.xlane.xlu0 %5082
        %v5084 = vmax.f32 %v4876, %v4989
        %5085 = vmax.xlane.f32.xlu0 %v5084
        %v5086 = vpop.xlane.xlu0 %5085
        %v5087 = vmax.f32 %v4879, %v4992
        %5088 = vmax.xlane.f32.xlu0 %v5087
        %v5089 = vpop.xlane.xlu0 %5088
        %v5090 = vmax.f32 %v4882, %v4995
        %5091 = vmax.xlane.f32.xlu0 %v5090
        %v5092 = vpop.xlane.xlu0 %5091
        %v5093 = vmax.f32 %v4885, %v4998
        %5094 = vmax.xlane.f32.xlu0 %v5093
        %v5095 = vpop.xlane.xlu0 %5094
        %v5096 = vmax.f32 %v4888, %v5001
        %5097 = vmax.xlane.f32.xlu0 %v5096
        %v5098 = vpop.xlane.xlu0 %5097
        %v5099 = vmax.f32 %v4891, %v5004
        %5100 = vmax.xlane.f32.xlu0 %v5099
        %v5101 = vpop.xlane.xlu0 %5100
        %v5102 = vmax.f32 %v4894, %v5007
        %5103 = vmax.xlane.f32.xlu0 %v5102
        %v5104 = vpop.xlane.xlu0 %5103
        %v5105 = vmax.f32 %v4897, %v5010
        %5106 = vmax.xlane.f32.xlu0 %v5105
        %v5107 = vpop.xlane.xlu0 %5106
        %v5108 = vmax.f32 %v4900, %v5013
        %5109 = vmax.xlane.f32.xlu0 %v5108
        %v5110 = vpop.xlane.xlu0 %5109
        %v5111 = vmax.f32 %v4903, %v5016
        %5112 = vmax.xlane.f32.xlu0 %v5111
        %v5113 = vpop.xlane.xlu0 %5112
        %v5114 = vmax.f32 %v4906, %v5019
        %5115 = vmax.xlane.f32.xlu0 %v5114
        %v5116 = vpop.xlane.xlu0 %5115
        %v5117 = vmax.f32 %v4909, %v5022
        %5118 = vmax.xlane.f32.xlu0 %v5117
        %v5119 = vpop.xlane.xlu0 %5118
        %v5120 = vmax.f32 %v4912, %v5025
        %5121 = vmax.xlane.f32.xlu0 %v5120
        %v5122 = vpop.xlane.xlu0 %5121
        %v5123 = vsub.f32 %v4819, %v5029
        %v5124 = vsub.f32 %v4932, %v5029
        %v5125 = vsub.f32 %v4822, %v5032
        %v5126 = vsub.f32 %v4935, %v5032
        %v5127 = vsub.f32 %v4825, %v5035
        %v5128 = vsub.f32 %v4938, %v5035
        %v5129 = vsub.f32 %v4828, %v5038
        %v5130 = vsub.f32 %v4941, %v5038
        %v5131 = vsub.f32 %v4831, %v5041
        %v5132 = vsub.f32 %v4944, %v5041
        %v5133 = vsub.f32 %v4834, %v5044
        %v5134 = vsub.f32 %v4947, %v5044
        %v5135 = vsub.f32 %v4837, %v5047
        %v5136 = vsub.f32 %v4950, %v5047
        %v5137 = vsub.f32 %v4840, %v5050
        %v5138 = vsub.f32 %v4953, %v5050
        %v5139 = vsub.f32 %v4843, %v5053
        %v5140 = vsub.f32 %v4956, %v5053
        %v5141 = vsub.f32 %v4846, %v5056
        %v5142 = vsub.f32 %v4959, %v5056
        %v5143 = vsub.f32 %v4849, %v5059
        %v5144 = vsub.f32 %v4962, %v5059
        %v5145 = vsub.f32 %v4852, %v5062
        %v5146 = vsub.f32 %v4965, %v5062
        %v5147 = vsub.f32 %v4855, %v5065
        %v5148 = vsub.f32 %v4968, %v5065
        %v5149 = vsub.f32 %v4858, %v5068
        %v5150 = vsub.f32 %v4971, %v5068
        %v5151 = vsub.f32 %v4861, %v5071
        %v5152 = vsub.f32 %v4974, %v5071
        %v5153 = vsub.f32 %v4864, %v5074
        %v5154 = vsub.f32 %v4977, %v5074
        %v5155 = vsub.f32 %v4867, %v5077
        %v5156 = vsub.f32 %v4980, %v5077
        %v5157 = vsub.f32 %v4870, %v5080
        %v5158 = vsub.f32 %v4983, %v5080
        %v5159 = vsub.f32 %v4873, %v5083
        %v5160 = vsub.f32 %v4986, %v5083
        %v5161 = vsub.f32 %v4876, %v5086
        %v5162 = vsub.f32 %v4989, %v5086
        %v5163 = vsub.f32 %v4879, %v5089
        %v5164 = vsub.f32 %v4992, %v5089
        %v5165 = vsub.f32 %v4882, %v5092
        %v5166 = vsub.f32 %v4995, %v5092
        %v5167 = vsub.f32 %v4885, %v5095
        %v5168 = vsub.f32 %v4998, %v5095
        %v5169 = vsub.f32 %v4888, %v5098
        %v5170 = vsub.f32 %v5001, %v5098
        %v5171 = vsub.f32 %v4891, %v5101
        %v5172 = vsub.f32 %v5004, %v5101
        %v5173 = vsub.f32 %v4894, %v5104
        %v5174 = vsub.f32 %v5007, %v5104
        %v5175 = vsub.f32 %v4897, %v5107
        %v5176 = vsub.f32 %v5010, %v5107
        %v5177 = vsub.f32 %v4900, %v5110
        %v5178 = vsub.f32 %v5013, %v5110
        %v5179 = vsub.f32 %v4903, %v5113
        %v5180 = vsub.f32 %v5016, %v5113
        %v5181 = vsub.f32 %v4906, %v5116
        %v5182 = vsub.f32 %v5019, %v5116
        %v5183 = vsub.f32 %v4909, %v5119
        %v5184 = vsub.f32 %v5022, %v5119
        %v5185 = vsub.f32 %v4912, %v5122
        %v5186 = vsub.f32 %v5025, %v5122
        %v5187 = vmul.f32 %v5123, 1.442695
        %v5188 = vpow.pop %v5187
        %v5189 = vmul.f32 %v5124, 1.442695
        %v5190 = vpow.pop %v5189
        %v5191 = vmul.f32 %v5125, 1.442695
        %v5192 = vpow.pop %v5191
        %v5193 = vmul.f32 %v5126, 1.442695
        %v5194 = vpow.pop %v5193
        %v5195 = vmul.f32 %v5127, 1.442695
        %v5196 = vpow.pop %v5195
        %v5197 = vmul.f32 %v5128, 1.442695
        %v5198 = vpow.pop %v5197
        %v5199 = vmul.f32 %v5129, 1.442695
        %v5200 = vpow.pop %v5199
        %v5201 = vmul.f32 %v5130, 1.442695
        %v5202 = vpow.pop %v5201
        %v5203 = vmul.f32 %v5131, 1.442695
        %v5204 = vpow.pop %v5203
        %v5205 = vmul.f32 %v5132, 1.442695
        %v5206 = vpow.pop %v5205
        %v5207 = vmul.f32 %v5133, 1.442695
        %v5208 = vpow.pop %v5207
        %v5209 = vmul.f32 %v5134, 1.442695
        %v5210 = vpow.pop %v5209
        %v5211 = vmul.f32 %v5135, 1.442695
        %v5212 = vpow.pop %v5211
        %v5213 = vmul.f32 %v5136, 1.442695
        %v5214 = vpow.pop %v5213
        %v5215 = vmul.f32 %v5137, 1.442695
        %v5216 = vpow.pop %v5215
        %v5217 = vmul.f32 %v5138, 1.442695
        %v5218 = vpow.pop %v5217
        %v5219 = vmul.f32 %v5139, 1.442695
        %v5220 = vpow.pop %v5219
        %v5221 = vmul.f32 %v5140, 1.442695
        %v5222 = vpow.pop %v5221
        %v5223 = vmul.f32 %v5141, 1.442695
        %v5224 = vpow.pop %v5223
        %v5225 = vmul.f32 %v5142, 1.442695
        %v5226 = vpow.pop %v5225
        %v5227 = vmul.f32 %v5143, 1.442695
        %v5228 = vpow.pop %v5227
        %v5229 = vmul.f32 %v5144, 1.442695
        %v5230 = vpow.pop %v5229
        %v5231 = vmul.f32 %v5145, 1.442695
        %v5232 = vpow.pop %v5231
        %v5233 = vmul.f32 %v5146, 1.442695
        %v5234 = vpow.pop %v5233
        %v5235 = vmul.f32 %v5147, 1.442695
        %v5236 = vpow.pop %v5235
        %v5237 = vmul.f32 %v5148, 1.442695
        %v5238 = vpow.pop %v5237
        %v5239 = vmul.f32 %v5149, 1.442695
        %v5240 = vpow.pop %v5239
        %v5241 = vmul.f32 %v5150, 1.442695
        %v5242 = vpow.pop %v5241
        %v5243 = vmul.f32 %v5151, 1.442695
        %v5244 = vpow.pop %v5243
        %v5245 = vmul.f32 %v5152, 1.442695
        %v5246 = vpow.pop %v5245
        %v5247 = vmul.f32 %v5153, 1.442695
        %v5248 = vpow.pop %v5247
        %v5249 = vmul.f32 %v5154, 1.442695
        %v5250 = vpow.pop %v5249
        %v5251 = vmul.f32 %v5155, 1.442695
        %v5252 = vpow.pop %v5251
        %v5253 = vmul.f32 %v5156, 1.442695
        %v5254 = vpow.pop %v5253
        %v5255 = vmul.f32 %v5157, 1.442695
        %v5256 = vpow.pop %v5255
        %v5257 = vmul.f32 %v5158, 1.442695
        %v5258 = vpow.pop %v5257
        %v5259 = vmul.f32 %v5159, 1.442695
        %v5260 = vpow.pop %v5259
        %v5261 = vmul.f32 %v5160, 1.442695
        %v5262 = vpow.pop %v5261
        %v5263 = vmul.f32 %v5161, 1.442695
        %v5264 = vpow.pop %v5263
        %v5265 = vmul.f32 %v5162, 1.442695
        %v5266 = vpow.pop %v5265
        %v5267 = vmul.f32 %v5163, 1.442695
        %v5268 = vpow.pop %v5267
        %v5269 = vmul.f32 %v5164, 1.442695
        %v5270 = vpow.pop %v5269
        %v5271 = vmul.f32 %v5165, 1.442695
        %v5272 = vpow.pop %v5271
        %v5273 = vmul.f32 %v5166, 1.442695
        %v5274 = vpow.pop %v5273
        %v5275 = vmul.f32 %v5167, 1.442695
        %v5276 = vpow.pop %v5275
        %v5277 = vmul.f32 %v5168, 1.442695
        %v5278 = vpow.pop %v5277
        %v5279 = vmul.f32 %v5169, 1.442695
        %v5280 = vpow.pop %v5279
        %v5281 = vmul.f32 %v5170, 1.442695
        %v5282 = vpow.pop %v5281
        %v5283 = vmul.f32 %v5171, 1.442695
        %v5284 = vpow.pop %v5283
        %v5285 = vmul.f32 %v5172, 1.442695
        %v5286 = vpow.pop %v5285
        %v5287 = vmul.f32 %v5173, 1.442695
        %v5288 = vpow.pop %v5287
        %v5289 = vmul.f32 %v5174, 1.442695
        %v5290 = vpow.pop %v5289
        %v5291 = vmul.f32 %v5175, 1.442695
        %v5292 = vpow.pop %v5291
        %v5293 = vmul.f32 %v5176, 1.442695
        %v5294 = vpow.pop %v5293
        %v5295 = vmul.f32 %v5177, 1.442695
        %v5296 = vpow.pop %v5295
        %v5297 = vmul.f32 %v5178, 1.442695
        %v5298 = vpow.pop %v5297
        %v5299 = vmul.f32 %v5179, 1.442695
        %v5300 = vpow.pop %v5299
        %v5301 = vmul.f32 %v5180, 1.442695
        %v5302 = vpow.pop %v5301
        %v5303 = vmul.f32 %v5181, 1.442695
        %v5304 = vpow.pop %v5303
        %v5305 = vmul.f32 %v5182, 1.442695
        %v5306 = vpow.pop %v5305
        %v5307 = vmul.f32 %v5183, 1.442695
        %v5308 = vpow.pop %v5307
        %v5309 = vmul.f32 %v5184, 1.442695
        %v5310 = vpow.pop %v5309
        %v5311 = vmul.f32 %v5185, 1.442695
        %v5312 = vpow.pop %v5311
        %v5313 = vmul.f32 %v5186, 1.442695
        %v5314 = vpow.pop %v5313
        %v5315 = vadd.f32 %v5188, %v5190
        %5316 = vadd.xlane.f32.xlu0 %v5315
        %v5317 = vpop.xlane.xlu0 %5316
        %v5318 = vadd.f32 %v5192, %v5194
        %5319 = vadd.xlane.f32.xlu0 %v5318
        %v5320 = vpop.xlane.xlu0 %5319
        %v5321 = vadd.f32 %v5196, %v5198
        %5322 = vadd.xlane.f32.xlu0 %v5321
        %v5323 = vpop.xlane.xlu0 %5322
        %v5324 = vadd.f32 %v5200, %v5202
        %5325 = vadd.xlane.f32.xlu0 %v5324
        %v5326 = vpop.xlane.xlu0 %5325
        %v5327 = vadd.f32 %v5204, %v5206
        %5328 = vadd.xlane.f32.xlu0 %v5327
        %v5329 = vpop.xlane.xlu0 %5328
        %v5330 = vadd.f32 %v5208, %v5210
        %5331 = vadd.xlane.f32.xlu0 %v5330
        %v5332 = vpop.xlane.xlu0 %5331
        %v5333 = vadd.f32 %v5212, %v5214
        %5334 = vadd.xlane.f32.xlu0 %v5333
        %v5335 = vpop.xlane.xlu0 %5334
        %v5336 = vadd.f32 %v5216, %v5218
        %5337 = vadd.xlane.f32.xlu0 %v5336
        %v5338 = vpop.xlane.xlu0 %5337
        %v5339 = vadd.f32 %v5220, %v5222
        %5340 = vadd.xlane.f32.xlu0 %v5339
        %v5341 = vpop.xlane.xlu0 %5340
        %v5342 = vadd.f32 %v5224, %v5226
        %5343 = vadd.xlane.f32.xlu0 %v5342
        %v5344 = vpop.xlane.xlu0 %5343
        %v5345 = vadd.f32 %v5228, %v5230
        %5346 = vadd.xlane.f32.xlu0 %v5345
        %v5347 = vpop.xlane.xlu0 %5346
        %v5348 = vadd.f32 %v5232, %v5234
        %5349 = vadd.xlane.f32.xlu0 %v5348
        %v5350 = vpop.xlane.xlu0 %5349
        %v5351 = vadd.f32 %v5236, %v5238
        %5352 = vadd.xlane.f32.xlu0 %v5351
        %v5353 = vpop.xlane.xlu0 %5352
        %v5354 = vadd.f32 %v5240, %v5242
        %5355 = vadd.xlane.f32.xlu0 %v5354
        %v5356 = vpop.xlane.xlu0 %5355
        %v5357 = vadd.f32 %v5244, %v5246
        %5358 = vadd.xlane.f32.xlu0 %v5357
        %v5359 = vpop.xlane.xlu0 %5358
        %v5360 = vadd.f32 %v5248, %v5250
        %5361 = vadd.xlane.f32.xlu0 %v5360
        %v5362 = vpop.xlane.xlu0 %5361
        %v5363 = vadd.f32 %v5252, %v5254
        %5364 = vadd.xlane.f32.xlu0 %v5363
        %v5365 = vpop.xlane.xlu0 %5364
        %v5366 = vadd.f32 %v5256, %v5258
        %5367 = vadd.xlane.f32.xlu0 %v5366
        %v5368 = vpop.xlane.xlu0 %5367
        %v5369 = vadd.f32 %v5260, %v5262
        %5370 = vadd.xlane.f32.xlu0 %v5369
        %v5371 = vpop.xlane.xlu0 %5370
        %v5372 = vadd.f32 %v5264, %v5266
        %5373 = vadd.xlane.f32.xlu0 %v5372
        %v5374 = vpop.xlane.xlu0 %5373
        %v5375 = vadd.f32 %v5268, %v5270
        %5376 = vadd.xlane.f32.xlu0 %v5375
        %v5377 = vpop.xlane.xlu0 %5376
        %v5378 = vadd.f32 %v5272, %v5274
        %5379 = vadd.xlane.f32.xlu0 %v5378
        %v5380 = vpop.xlane.xlu0 %5379
        %v5381 = vadd.f32 %v5276, %v5278
        %5382 = vadd.xlane.f32.xlu0 %v5381
        %v5383 = vpop.xlane.xlu0 %5382
        %v5384 = vadd.f32 %v5280, %v5282
        %5385 = vadd.xlane.f32.xlu0 %v5384
        %v5386 = vpop.xlane.xlu0 %5385
        %v5387 = vadd.f32 %v5284, %v5286
        %5388 = vadd.xlane.f32.xlu0 %v5387
        %v5389 = vpop.xlane.xlu0 %5388
        %v5390 = vadd.f32 %v5288, %v5290
        %5391 = vadd.xlane.f32.xlu0 %v5390
        %v5392 = vpop.xlane.xlu0 %5391
        %v5393 = vadd.f32 %v5292, %v5294
        %5394 = vadd.xlane.f32.xlu0 %v5393
        %v5395 = vpop.xlane.xlu0 %5394
        %v5396 = vadd.f32 %v5296, %v5298
        %5397 = vadd.xlane.f32.xlu0 %v5396
        %v5398 = vpop.xlane.xlu0 %5397
        %v5399 = vadd.f32 %v5300, %v5302
        %5400 = vadd.xlane.f32.xlu0 %v5399
        %v5401 = vpop.xlane.xlu0 %5400
        %v5402 = vadd.f32 %v5304, %v5306
        %5403 = vadd.xlane.f32.xlu0 %v5402
        %v5404 = vpop.xlane.xlu0 %5403
        %v5405 = vadd.f32 %v5308, %v5310
        %5406 = vadd.xlane.f32.xlu0 %v5405
        %v5407 = vpop.xlane.xlu0 %5406
        %v5408 = vadd.f32 %v5312, %v5314
        %5409 = vadd.xlane.f32.xlu0 %v5408
        %v5410 = vpop.xlane.xlu0 %5409
        %v5411 = vrcp.pop %v5317
        %v5412 = vrcp.pop %v5320
        %v5413 = vrcp.pop %v5323
        %v5414 = vrcp.pop %v5326
        %v5415 = vrcp.pop %v5329
        %v5416 = vrcp.pop %v5332
        %v5417 = vrcp.pop %v5335
        %v5418 = vrcp.pop %v5338
        %v5419 = vrcp.pop %v5341
        %v5420 = vrcp.pop %v5344
        %v5421 = vrcp.pop %v5347
        %v5422 = vrcp.pop %v5350
        %v5423 = vrcp.pop %v5353
        %v5424 = vrcp.pop %v5356
        %v5425 = vrcp.pop %v5359
        %v5426 = vrcp.pop %v5362
        %v5427 = vrcp.pop %v5365
        %v5428 = vrcp.pop %v5368
        %v5429 = vrcp.pop %v5371
        %v5430 = vrcp.pop %v5374
        %v5431 = vrcp.pop %v5377
        %v5432 = vrcp.pop %v5380
        %v5433 = vrcp.pop %v5383
        %v5434 = vrcp.pop %v5386
        %v5435 = vrcp.pop %v5389
        %v5436 = vrcp.pop %v5392
        %v5437 = vrcp.pop %v5395
        %v5438 = vrcp.pop %v5398
        %v5439 = vrcp.pop %v5401
        %v5440 = vrcp.pop %v5404
        %v5441 = vrcp.pop %v5407
        %v5442 = vrcp.pop %v5410
        %v5443 = vmul.f32 %v5188, %v5411
        %v5444 = vmul.f32 %v5190, %v5411
        %v5445 = vmul.f32 %v5192, %v5412
        %v5446 = vmul.f32 %v5194, %v5412
        %v5447 = vmul.f32 %v5196, %v5413
        %v5448 = vmul.f32 %v5198, %v5413
        %v5449 = vmul.f32 %v5200, %v5414
        %v5450 = vmul.f32 %v5202, %v5414
        %v5451 = vmul.f32 %v5204, %v5415
        %v5452 = vmul.f32 %v5206, %v5415
        %v5453 = vmul.f32 %v5208, %v5416
        %v5454 = vmul.f32 %v5210, %v5416
        %v5455 = vmul.f32 %v5212, %v5417
        %v5456 = vmul.f32 %v5214, %v5417
        %v5457 = vmul.f32 %v5216, %v5418
        %v5458 = vmul.f32 %v5218, %v5418
        %v5459 = vmul.f32 %v5220, %v5419
        %v5460 = vmul.f32 %v5222, %v5419
        %v5461 = vmul.f32 %v5224, %v5420
        %v5462 = vmul.f32 %v5226, %v5420
        %v5463 = vmul.f32 %v5228, %v5421
        %v5464 = vmul.f32 %v5230, %v5421
        %v5465 = vmul.f32 %v5232, %v5422
        %v5466 = vmul.f32 %v5234, %v5422
        %v5467 = vmul.f32 %v5236, %v5423
        %v5468 = vmul.f32 %v5238, %v5423
        %v5469 = vmul.f32 %v5240, %v5424
        %v5470 = vmul.f32 %v5242, %v5424
        %v5471 = vmul.f32 %v5244, %v5425
        %v5472 = vmul.f32 %v5246, %v5425
        %v5473 = vmul.f32 %v5248, %v5426
        %v5474 = vmul.f32 %v5250, %v5426
        %v5475 = vmul.f32 %v5252, %v5427
        %v5476 = vmul.f32 %v5254, %v5427
        %v5477 = vmul.f32 %v5256, %v5428
        %v5478 = vmul.f32 %v5258, %v5428
        %v5479 = vmul.f32 %v5260, %v5429
        %v5480 = vmul.f32 %v5262, %v5429
        %v5481 = vmul.f32 %v5264, %v5430
        %v5482 = vmul.f32 %v5266, %v5430
        %v5483 = vmul.f32 %v5268, %v5431
        %v5484 = vmul.f32 %v5270, %v5431
        %v5485 = vmul.f32 %v5272, %v5432
        %v5486 = vmul.f32 %v5274, %v5432
        %v5487 = vmul.f32 %v5276, %v5433
        %v5488 = vmul.f32 %v5278, %v5433
        %v5489 = vmul.f32 %v5280, %v5434
        %v5490 = vmul.f32 %v5282, %v5434
        %v5491 = vmul.f32 %v5284, %v5435
        %v5492 = vmul.f32 %v5286, %v5435
        %v5493 = vmul.f32 %v5288, %v5436
        %v5494 = vmul.f32 %v5290, %v5436
        %v5495 = vmul.f32 %v5292, %v5437
        %v5496 = vmul.f32 %v5294, %v5437
        %v5497 = vmul.f32 %v5296, %v5438
        %v5498 = vmul.f32 %v5298, %v5438
        %v5499 = vmul.f32 %v5300, %v5439
        %v5500 = vmul.f32 %v5302, %v5439
        %v5501 = vmul.f32 %v5304, %v5440
        %v5502 = vmul.f32 %v5306, %v5440
        %v5503 = vmul.f32 %v5308, %v5441
        %v5504 = vmul.f32 %v5310, %v5441
        %v5505 = vmul.f32 %v5312, %v5442
        %v5506 = vmul.f32 %v5314, %v5442
        %5507 = vmatpush.msra.mxu0 %v4319
        %5508 = vmatpush.msra.mxu0 %v4317
        %5509 = vmatpush.msra.mxu0 %v4315
        %5510 = vmatpush.msra.mxu0 %v4313
        %5511 = vmatpush.msra.mxu0 %v4311
        %5512 = vmatpush.msra.mxu0 %v4309
        %5513 = vmatpush.msra.mxu0 %v4307
        %5514 = vmatpush.msra.mxu0 %v4305
        %5515 = vmatpush.msra.mxu0 %v4207
        %5516 = vmatpush.msra.mxu0 %v4205
        %5517 = vmatpush.msra.mxu0 %v4203
        %5518 = vmatpush.msra.mxu0 %v4201
        %5519 = vmatpush.msra.mxu0 %v4199
        %5520 = vmatpush.msra.mxu0 %v4197
        %5521 = vmatpush.msra.mxu0 %v4195
        %5522 = vmatpush.msra.mxu0 %v4193
        %5523 = vmatmul.f32.gmra.mxu0 %v5443
        %v5524 = vpop.f32.mrf.mxu0
        %v5525 = vadd.f32 0.0, %v5524
        %5526 = vmatmul.f32.gmra.mxu0 %v5445
        %v5527 = vpop.f32.mrf.mxu0
        %v5528 = vadd.f32 0.0, %v5527
        %5529 = vmatmul.f32.gmra.mxu0 %v5447
        %v5530 = vpop.f32.mrf.mxu0
        %v5531 = vadd.f32 0.0, %v5530
        %5532 = vmatmul.f32.gmra.mxu0 %v5449
        %v5533 = vpop.f32.mrf.mxu0
        %v5534 = vadd.f32 0.0, %v5533
        %5535 = vmatmul.f32.gmra.mxu0 %v5451
        %v5536 = vpop.f32.mrf.mxu0
        %v5537 = vadd.f32 0.0, %v5536
        %5538 = vmatmul.f32.gmra.mxu0 %v5453
        %v5539 = vpop.f32.mrf.mxu0
        %v5540 = vadd.f32 0.0, %v5539
        %5541 = vmatmul.f32.gmra.mxu0 %v5455
        %v5542 = vpop.f32.mrf.mxu0
        %v5543 = vadd.f32 0.0, %v5542
        %5544 = vmatmul.f32.gmra.mxu0 %v5457
        %v5545 = vpop.f32.mrf.mxu0
        %v5546 = vadd.f32 0.0, %v5545
        %5547 = vmatmul.f32.gmra.mxu0 %v5459
        %v5548 = vpop.f32.mrf.mxu0
        %v5549 = vadd.f32 0.0, %v5548
        %5550 = vmatmul.f32.gmra.mxu0 %v5461
        %v5551 = vpop.f32.mrf.mxu0
        %v5552 = vadd.f32 0.0, %v5551
        %5553 = vmatmul.f32.gmra.mxu0 %v5463
        %v5554 = vpop.f32.mrf.mxu0
        %v5555 = vadd.f32 0.0, %v5554
        %5556 = vmatmul.f32.gmra.mxu0 %v5465
        %v5557 = vpop.f32.mrf.mxu0
        %v5558 = vadd.f32 0.0, %v5557
        %5559 = vmatmul.f32.gmra.mxu0 %v5467
        %v5560 = vpop.f32.mrf.mxu0
        %v5561 = vadd.f32 0.0, %v5560
        %5562 = vmatmul.f32.gmra.mxu0 %v5469
        %v5563 = vpop.f32.mrf.mxu0
        %v5564 = vadd.f32 0.0, %v5563
        %5565 = vmatmul.f32.gmra.mxu0 %v5471
        %v5566 = vpop.f32.mrf.mxu0
        %v5567 = vadd.f32 0.0, %v5566
        %5568 = vmatmul.f32.gmra.mxu0 %v5473
        %v5569 = vpop.f32.mrf.mxu0
        %v5570 = vadd.f32 0.0, %v5569
        %5571 = vmatmul.f32.gmra.mxu0 %v5475
        %v5572 = vpop.f32.mrf.mxu0
        %v5573 = vadd.f32 0.0, %v5572
        %5574 = vmatmul.f32.gmra.mxu0 %v5477
        %v5575 = vpop.f32.mrf.mxu0
        %v5576 = vadd.f32 0.0, %v5575
        %5577 = vmatmul.f32.gmra.mxu0 %v5479
        %v5578 = vpop.f32.mrf.mxu0
        %v5579 = vadd.f32 0.0, %v5578
        %5580 = vmatmul.f32.gmra.mxu0 %v5481
        %v5581 = vpop.f32.mrf.mxu0
        %v5582 = vadd.f32 0.0, %v5581
        %5583 = vmatmul.f32.gmra.mxu0 %v5483
        %v5584 = vpop.f32.mrf.mxu0
        %v5585 = vadd.f32 0.0, %v5584
        %5586 = vmatmul.f32.gmra.mxu0 %v5485
        %v5587 = vpop.f32.mrf.mxu0
        %v5588 = vadd.f32 0.0, %v5587
        %5589 = vmatmul.f32.gmra.mxu0 %v5487
        %v5590 = vpop.f32.mrf.mxu0
        %v5591 = vadd.f32 0.0, %v5590
        %5592 = vmatmul.f32.gmra.mxu0 %v5489
        %v5593 = vpop.f32.mrf.mxu0
        %v5594 = vadd.f32 0.0, %v5593
        %5595 = vmatmul.f32.gmra.mxu0 %v5491
        %v5596 = vpop.f32.mrf.mxu0
        %v5597 = vadd.f32 0.0, %v5596
        %5598 = vmatmul.f32.gmra.mxu0 %v5493
        %v5599 = vpop.f32.mrf.mxu0
        %v5600 = vadd.f32 0.0, %v5599
        %5601 = vmatmul.f32.gmra.mxu0 %v5495
        %v5602 = vpop.f32.mrf.mxu0
        %v5603 = vadd.f32 0.0, %v5602
        %5604 = vmatmul.f32.gmra.mxu0 %v5497
        %v5605 = vpop.f32.mrf.mxu0
        %v5606 = vadd.f32 0.0, %v5605
        %5607 = vmatmul.f32.gmra.mxu0 %v5499
        %v5608 = vpop.f32.mrf.mxu0
        %v5609 = vadd.f32 0.0, %v5608
        %5610 = vmatmul.f32.gmra.mxu0 %v5501
        %v5611 = vpop.f32.mrf.mxu0
        %v5612 = vadd.f32 0.0, %v5611
        %5613 = vmatmul.f32.gmra.mxu0 %v5503
        %v5614 = vpop.f32.mrf.mxu0
        %v5615 = vadd.f32 0.0, %v5614
        %5616 = vmatmul.f32.gmra.mxu0 %v5505
        %v5617 = vpop.f32.mrf.mxu0
        %v5618 = vadd.f32 0.0, %v5617
        %5619 = vdwg.mxu0
        %5620 = vmatpush.msra.mxu0 %v4543
        %5621 = vmatpush.msra.mxu0 %v4541
        %5622 = vmatpush.msra.mxu0 %v4539
        %5623 = vmatpush.msra.mxu0 %v4537
        %5624 = vmatpush.msra.mxu0 %v4535
        %5625 = vmatpush.msra.mxu0 %v4533
        %5626 = vmatpush.msra.mxu0 %v4531
        %5627 = vmatpush.msra.mxu0 %v4529
        %5628 = vmatpush.msra.mxu0 %v4431
        %5629 = vmatpush.msra.mxu0 %v4429
        %5630 = vmatpush.msra.mxu0 %v4427
        %5631 = vmatpush.msra.mxu0 %v4425
        %5632 = vmatpush.msra.mxu0 %v4423
        %5633 = vmatpush.msra.mxu0 %v4421
        %5634 = vmatpush.msra.mxu0 %v4419
        %5635 = vmatpush.msra.mxu0 %v4417
        %5636 = vmatmul.f32.gmra.mxu0 %v5444
        %v5637 = vpop.f32.mrf.mxu0
        %v5638 = vadd.f32 %v5525, %v5637
        %5639 = vmatmul.f32.gmra.mxu0 %v5446
        %v5640 = vpop.f32.mrf.mxu0
        %v5641 = vadd.f32 %v5528, %v5640
        %5642 = vmatmul.f32.gmra.mxu0 %v5448
        %v5643 = vpop.f32.mrf.mxu0
        %v5644 = vadd.f32 %v5531, %v5643
        %5645 = vmatmul.f32.gmra.mxu0 %v5450
        %v5646 = vpop.f32.mrf.mxu0
        %v5647 = vadd.f32 %v5534, %v5646
        %5648 = vmatmul.f32.gmra.mxu0 %v5452
        %v5649 = vpop.f32.mrf.mxu0
        %v5650 = vadd.f32 %v5537, %v5649
        %5651 = vmatmul.f32.gmra.mxu0 %v5454
        %v5652 = vpop.f32.mrf.mxu0
        %v5653 = vadd.f32 %v5540, %v5652
        %5654 = vmatmul.f32.gmra.mxu0 %v5456
        %v5655 = vpop.f32.mrf.mxu0
        %v5656 = vadd.f32 %v5543, %v5655
        %5657 = vmatmul.f32.gmra.mxu0 %v5458
        %v5658 = vpop.f32.mrf.mxu0
        %v5659 = vadd.f32 %v5546, %v5658
        %5660 = vmatmul.f32.gmra.mxu0 %v5460
        %v5661 = vpop.f32.mrf.mxu0
        %v5662 = vadd.f32 %v5549, %v5661
        %5663 = vmatmul.f32.gmra.mxu0 %v5462
        %v5664 = vpop.f32.mrf.mxu0
        %v5665 = vadd.f32 %v5552, %v5664
        %5666 = vmatmul.f32.gmra.mxu0 %v5464
        %v5667 = vpop.f32.mrf.mxu0
        %v5668 = vadd.f32 %v5555, %v5667
        %5669 = vmatmul.f32.gmra.mxu0 %v5466
        %v5670 = vpop.f32.mrf.mxu0
        %v5671 = vadd.f32 %v5558, %v5670
        %5672 = vmatmul.f32.gmra.mxu0 %v5468
        %v5673 = vpop.f32.mrf.mxu0
        %v5674 = vadd.f32 %v5561, %v5673
        %5675 = vmatmul.f32.gmra.mxu0 %v5470
        %v5676 = vpop.f32.mrf.mxu0
        %v5677 = vadd.f32 %v5564, %v5676
        %5678 = vmatmul.f32.gmra.mxu0 %v5472
        %v5679 = vpop.f32.mrf.mxu0
        %v5680 = vadd.f32 %v5567, %v5679
        %5681 = vmatmul.f32.gmra.mxu0 %v5474
        %v5682 = vpop.f32.mrf.mxu0
        %v5683 = vadd.f32 %v5570, %v5682
        %5684 = vmatmul.f32.gmra.mxu0 %v5476
        %v5685 = vpop.f32.mrf.mxu0
        %v5686 = vadd.f32 %v5573, %v5685
        %5687 = vmatmul.f32.gmra.mxu0 %v5478
        %v5688 = vpop.f32.mrf.mxu0
        %v5689 = vadd.f32 %v5576, %v5688
        %5690 = vmatmul.f32.gmra.mxu0 %v5480
        %v5691 = vpop.f32.mrf.mxu0
        %v5692 = vadd.f32 %v5579, %v5691
        %5693 = vmatmul.f32.gmra.mxu0 %v5482
        %v5694 = vpop.f32.mrf.mxu0
        %v5695 = vadd.f32 %v5582, %v5694
        %5696 = vmatmul.f32.gmra.mxu0 %v5484
        %v5697 = vpop.f32.mrf.mxu0
        %v5698 = vadd.f32 %v5585, %v5697
        %5699 = vmatmul.f32.gmra.mxu0 %v5486
        %v5700 = vpop.f32.mrf.mxu0
        %v5701 = vadd.f32 %v5588, %v5700
        %5702 = vmatmul.f32.gmra.mxu0 %v5488
        %v5703 = vpop.f32.mrf.mxu0
        %v5704 = vadd.f32 %v5591, %v5703
        %5705 = vmatmul.f32.gmra.mxu0 %v5490
        %v5706 = vpop.f32.mrf.mxu0
        %v5707 = vadd.f32 %v5594, %v5706
        %5708 = vmatmul.f32.gmra.mxu0 %v5492
        %v5709 = vpop.f32.mrf.mxu0
        %v5710 = vadd.f32 %v5597, %v5709
        %5711 = vmatmul.f32.gmra.mxu0 %v5494
        %v5712 = vpop.f32.mrf.mxu0
        %v5713 = vadd.f32 %v5600, %v5712
        %5714 = vmatmul.f32.gmra.mxu0 %v5496
        %v5715 = vpop.f32.mrf.mxu0
        %v5716 = vadd.f32 %v5603, %v5715
        %5717 = vmatmul.f32.gmra.mxu0 %v5498
        %v5718 = vpop.f32.mrf.mxu0
        %v5719 = vadd.f32 %v5606, %v5718
        %5720 = vmatmul.f32.gmra.mxu0 %v5500
        %v5721 = vpop.f32.mrf.mxu0
        %v5722 = vadd.f32 %v5609, %v5721
        %5723 = vmatmul.f32.gmra.mxu0 %v5502
        %v5724 = vpop.f32.mrf.mxu0
        %v5725 = vadd.f32 %v5612, %v5724
        %5726 = vmatmul.f32.gmra.mxu0 %v5504
        %v5727 = vpop.f32.mrf.mxu0
        %v5728 = vadd.f32 %v5615, %v5727
        %5729 = vmatmul.f32.gmra.mxu0 %v5506
        %v5730 = vpop.f32.mrf.mxu0
        %v5731 = vadd.f32 %v5618, %v5730
        %5732 = vdwg.mxu0
        %v5733 = vrot.slane %v5644, 4
        %v5734 = vsel %vm1696, %v5733, %v5638
        %v5735 = vrot.slane %v5638, 4
        %v5736 = vsel %vm1696, %v5644, %v5735
        %v5738 = vunpack.c.l.s4 1983009808
        %v5739 = vunpack.c.0.s8 %v5738
        %v5740 = vperm.slane %v5734, %v5739
        %v5742 = vunpack.c.l.s4 1983009808
        %v5743 = vunpack.c.0.s8 %v5742
        %v5744 = vperm.slane %v5736, %v5743
        %v5745 = vrot.slane %v5647, 4
        %v5746 = vsel %vm1696, %v5745, %v5641
        %v5747 = vrot.slane %v5641, 4
        %v5748 = vsel %vm1696, %v5647, %v5747
        %v5750 = vunpack.c.l.s4 1983009808
        %v5751 = vunpack.c.0.s8 %v5750
        %v5752 = vperm.slane %v5746, %v5751
        %v5754 = vunpack.c.l.s4 1983009808
        %v5755 = vunpack.c.0.s8 %v5754
        %v5756 = vperm.slane %v5748, %v5755
        %v5757 = vrot.slane %v5656, 4
        %v5758 = vsel %vm1696, %v5757, %v5650
        %v5759 = vrot.slane %v5650, 4
        %v5760 = vsel %vm1696, %v5656, %v5759
        %v5762 = vunpack.c.l.s4 1983009808
        %v5763 = vunpack.c.0.s8 %v5762
        %v5764 = vperm.slane %v5758, %v5763
        %v5766 = vunpack.c.l.s4 1983009808
        %v5767 = vunpack.c.0.s8 %v5766
        %v5768 = vperm.slane %v5760, %v5767
        %v5769 = vrot.slane %v5659, 4
        %v5770 = vsel %vm1696, %v5769, %v5653
        %v5771 = vrot.slane %v5653, 4
        %v5772 = vsel %vm1696, %v5659, %v5771
        %v5774 = vunpack.c.l.s4 1983009808
        %v5775 = vunpack.c.0.s8 %v5774
        %v5776 = vperm.slane %v5770, %v5775
        %v5778 = vunpack.c.l.s4 1983009808
        %v5779 = vunpack.c.0.s8 %v5778
        %v5780 = vperm.slane %v5772, %v5779
        %v5781 = vrot.slane %v5752, 4
        %v5782 = vsel %vm1696, %v5781, %v5740
        %v5783 = vrot.slane %v5740, 4
        %v5784 = vsel %vm1696, %v5752, %v5783
        %v5786 = vunpack.c.l.s4 1934713408
        %v5787 = vunpack.c.0.s8 %v5786
        %v5788 = vperm.slane %v5782, %v5787
        %v5790 = vunpack.c.l.s4 1934713408
        %v5791 = vunpack.c.0.s8 %v5790
        %v5792 = vperm.slane %v5784, %v5791
        %v5793 = vrot.slane %v5756, 4
        %v5794 = vsel %vm1696, %v5793, %v5744
        %v5795 = vrot.slane %v5744, 4
        %v5796 = vsel %vm1696, %v5756, %v5795
        %v5798 = vunpack.c.l.s4 1934713408
        %v5799 = vunpack.c.0.s8 %v5798
        %v5800 = vperm.slane %v5794, %v5799
        %v5802 = vunpack.c.l.s4 1934713408
        %v5803 = vunpack.c.0.s8 %v5802
        %v5804 = vperm.slane %v5796, %v5803
        %v5805 = vrot.slane %v5776, 4
        %v5806 = vsel %vm1696, %v5805, %v5764
        %v5807 = vrot.slane %v5764, 4
        %v5808 = vsel %vm1696, %v5776, %v5807
        %v5810 = vunpack.c.l.s4 1934713408
        %v5811 = vunpack.c.0.s8 %v5810
        %v5812 = vperm.slane %v5806, %v5811
        %v5814 = vunpack.c.l.s4 1934713408
        %v5815 = vunpack.c.0.s8 %v5814
        %v5816 = vperm.slane %v5808, %v5815
        %v5817 = vrot.slane %v5780, 4
        %v5818 = vsel %vm1696, %v5817, %v5768
        %v5819 = vrot.slane %v5768, 4
        %v5820 = vsel %vm1696, %v5780, %v5819
        %v5822 = vunpack.c.l.s4 1934713408
        %v5823 = vunpack.c.0.s8 %v5822
        %v5824 = vperm.slane %v5818, %v5823
        %v5826 = vunpack.c.l.s4 1934713408
        %v5827 = vunpack.c.0.s8 %v5826
        %v5828 = vperm.slane %v5820, %v5827
        %v5829 = vrot.slane %v5812, 4
        %v5830 = vsel %vm1696, %v5829, %v5788
        %v5831 = vrot.slane %v5788, 4
        %v5832 = vsel %vm1696, %v5812, %v5831
        %v5833 = vrot.slane %v5816, 4
        %v5834 = vsel %vm1696, %v5833, %v5792
        %v5835 = vrot.slane %v5792, 4
        %v5836 = vsel %vm1696, %v5816, %v5835
        %v5837 = vrot.slane %v5824, 4
        %v5838 = vsel %vm1696, %v5837, %v5800
        %v5839 = vrot.slane %v5800, 4
        %v5840 = vsel %vm1696, %v5824, %v5839
        %v5841 = vrot.slane %v5828, 4
        %v5842 = vsel %vm1696, %v5841, %v5804
        %v5843 = vrot.slane %v5804, 4
        %v5844 = vsel %vm1696, %v5828, %v5843
        %v5845 = vrot.slane %v5668, 4
        %v5846 = vsel %vm1696, %v5845, %v5662
        %v5847 = vrot.slane %v5662, 4
        %v5848 = vsel %vm1696, %v5668, %v5847
        %v5850 = vunpack.c.l.s4 1983009808
        %v5851 = vunpack.c.0.s8 %v5850
        %v5852 = vperm.slane %v5846, %v5851
        %v5854 = vunpack.c.l.s4 1983009808
        %v5855 = vunpack.c.0.s8 %v5854
        %v5856 = vperm.slane %v5848, %v5855
        %v5857 = vrot.slane %v5671, 4
        %v5858 = vsel %vm1696, %v5857, %v5665
        %v5859 = vrot.slane %v5665, 4
        %v5860 = vsel %vm1696, %v5671, %v5859
        %v5862 = vunpack.c.l.s4 1983009808
        %v5863 = vunpack.c.0.s8 %v5862
        %v5864 = vperm.slane %v5858, %v5863
        %v5866 = vunpack.c.l.s4 1983009808
        %v5867 = vunpack.c.0.s8 %v5866
        %v5868 = vperm.slane %v5860, %v5867
        %v5869 = vrot.slane %v5680, 4
        %v5870 = vsel %vm1696, %v5869, %v5674
        %v5871 = vrot.slane %v5674, 4
        %v5872 = vsel %vm1696, %v5680, %v5871
        %v5874 = vunpack.c.l.s4 1983009808
        %v5875 = vunpack.c.0.s8 %v5874
        %v5876 = vperm.slane %v5870, %v5875
        %v5878 = vunpack.c.l.s4 1983009808
        %v5879 = vunpack.c.0.s8 %v5878
        %v5880 = vperm.slane %v5872, %v5879
        %v5881 = vrot.slane %v5683, 4
        %v5882 = vsel %vm1696, %v5881, %v5677
        %v5883 = vrot.slane %v5677, 4
        %v5884 = vsel %vm1696, %v5683, %v5883
        %v5886 = vunpack.c.l.s4 1983009808
        %v5887 = vunpack.c.0.s8 %v5886
        %v5888 = vperm.slane %v5882, %v5887
        %v5890 = vunpack.c.l.s4 1983009808
        %v5891 = vunpack.c.0.s8 %v5890
        %v5892 = vperm.slane %v5884, %v5891
        %v5893 = vrot.slane %v5864, 4
        %v5894 = vsel %vm1696, %v5893, %v5852
        %v5895 = vrot.slane %v5852, 4
        %v5896 = vsel %vm1696, %v5864, %v5895
        %v5898 = vunpack.c.l.s4 1934713408
        %v5899 = vunpack.c.0.s8 %v5898
        %v5900 = vperm.slane %v5894, %v5899
        %v5902 = vunpack.c.l.s4 1934713408
        %v5903 = vunpack.c.0.s8 %v5902
        %v5904 = vperm.slane %v5896, %v5903
        %v5905 = vrot.slane %v5868, 4
        %v5906 = vsel %vm1696, %v5905, %v5856
        %v5907 = vrot.slane %v5856, 4
        %v5908 = vsel %vm1696, %v5868, %v5907
        %v5910 = vunpack.c.l.s4 1934713408
        %v5911 = vunpack.c.0.s8 %v5910
        %v5912 = vperm.slane %v5906, %v5911
        %v5914 = vunpack.c.l.s4 1934713408
        %v5915 = vunpack.c.0.s8 %v5914
        %v5916 = vperm.slane %v5908, %v5915
        %v5917 = vrot.slane %v5888, 4
        %v5918 = vsel %vm1696, %v5917, %v5876
        %v5919 = vrot.slane %v5876, 4
        %v5920 = vsel %vm1696, %v5888, %v5919
        %v5922 = vunpack.c.l.s4 1934713408
        %v5923 = vunpack.c.0.s8 %v5922
        %v5924 = vperm.slane %v5918, %v5923
        %v5926 = vunpack.c.l.s4 1934713408
        %v5927 = vunpack.c.0.s8 %v5926
        %v5928 = vperm.slane %v5920, %v5927
        %v5929 = vrot.slane %v5892, 4
        %v5930 = vsel %vm1696, %v5929, %v5880
        %v5931 = vrot.slane %v5880, 4
        %v5932 = vsel %vm1696, %v5892, %v5931
        %v5934 = vunpack.c.l.s4 1934713408
        %v5935 = vunpack.c.0.s8 %v5934
        %v5936 = vperm.slane %v5930, %v5935
        %v5938 = vunpack.c.l.s4 1934713408
        %v5939 = vunpack.c.0.s8 %v5938
        %v5940 = vperm.slane %v5932, %v5939
        %v5941 = vrot.slane %v5924, 4
        %v5942 = vsel %vm1696, %v5941, %v5900
        %v5943 = vrot.slane %v5900, 4
        %v5944 = vsel %vm1696, %v5924, %v5943
        %v5945 = vrot.slane %v5928, 4
        %v5946 = vsel %vm1696, %v5945, %v5904
        %v5947 = vrot.slane %v5904, 4
        %v5948 = vsel %vm1696, %v5928, %v5947
        %v5949 = vrot.slane %v5936, 4
        %v5950 = vsel %vm1696, %v5949, %v5912
        %v5951 = vrot.slane %v5912, 4
        %v5952 = vsel %vm1696, %v5936, %v5951
        %v5953 = vrot.slane %v5940, 4
        %v5954 = vsel %vm1696, %v5953, %v5916
        %v5955 = vrot.slane %v5916, 4
        %v5956 = vsel %vm1696, %v5940, %v5955
        %v5957 = vrot.slane %v5692, 4
        %v5958 = vsel %vm1696, %v5957, %v5686
        %v5959 = vrot.slane %v5686, 4
        %v5960 = vsel %vm1696, %v5692, %v5959
        %v5962 = vunpack.c.l.s4 1983009808
        %v5963 = vunpack.c.0.s8 %v5962
        %v5964 = vperm.slane %v5958, %v5963
        %v5966 = vunpack.c.l.s4 1983009808
        %v5967 = vunpack.c.0.s8 %v5966
        %v5968 = vperm.slane %v5960, %v5967
        %v5969 = vrot.slane %v5695, 4
        %v5970 = vsel %vm1696, %v5969, %v5689
        %v5971 = vrot.slane %v5689, 4
        %v5972 = vsel %vm1696, %v5695, %v5971
        %v5974 = vunpack.c.l.s4 1983009808
        %v5975 = vunpack.c.0.s8 %v5974
        %v5976 = vperm.slane %v5970, %v5975
        %v5978 = vunpack.c.l.s4 1983009808
        %v5979 = vunpack.c.0.s8 %v5978
        %v5980 = vperm.slane %v5972, %v5979
        %v5981 = vrot.slane %v5704, 4
        %v5982 = vsel %vm1696, %v5981, %v5698
        %v5983 = vrot.slane %v5698, 4
        %v5984 = vsel %vm1696, %v5704, %v5983
        %v5986 = vunpack.c.l.s4 1983009808
        %v5987 = vunpack.c.0.s8 %v5986
        %v5988 = vperm.slane %v5982, %v5987
        %v5990 = vunpack.c.l.s4 1983009808
        %v5991 = vunpack.c.0.s8 %v5990
        %v5992 = vperm.slane %v5984, %v5991
        %v5993 = vrot.slane %v5707, 4
        %v5994 = vsel %vm1696, %v5993, %v5701
        %v5995 = vrot.slane %v5701, 4
        %v5996 = vsel %vm1696, %v5707, %v5995
        %v5998 = vunpack.c.l.s4 1983009808
        %v5999 = vunpack.c.0.s8 %v5998
        %v6000 = vperm.slane %v5994, %v5999
        %v6002 = vunpack.c.l.s4 1983009808
        %v6003 = vunpack.c.0.s8 %v6002
        %v6004 = vperm.slane %v5996, %v6003
        %v6005 = vrot.slane %v5976, 4
        %v6006 = vsel %vm1696, %v6005, %v5964
        %v6007 = vrot.slane %v5964, 4
        %v6008 = vsel %vm1696, %v5976, %v6007
        %v6010 = vunpack.c.l.s4 1934713408
        %v6011 = vunpack.c.0.s8 %v6010
        %v6012 = vperm.slane %v6006, %v6011
        %v6014 = vunpack.c.l.s4 1934713408
        %v6015 = vunpack.c.0.s8 %v6014
        %v6016 = vperm.slane %v6008, %v6015
        %v6017 = vrot.slane %v5980, 4
        %v6018 = vsel %vm1696, %v6017, %v5968
        %v6019 = vrot.slane %v5968, 4
        %v6020 = vsel %vm1696, %v5980, %v6019
        %v6022 = vunpack.c.l.s4 1934713408
        %v6023 = vunpack.c.0.s8 %v6022
        %v6024 = vperm.slane %v6018, %v6023
        %v6026 = vunpack.c.l.s4 1934713408
        %v6027 = vunpack.c.0.s8 %v6026
        %v6028 = vperm.slane %v6020, %v6027
        %v6029 = vrot.slane %v6000, 4
        %v6030 = vsel %vm1696, %v6029, %v5988
        %v6031 = vrot.slane %v5988, 4
        %v6032 = vsel %vm1696, %v6000, %v6031
        %v6034 = vunpack.c.l.s4 1934713408
        %v6035 = vunpack.c.0.s8 %v6034
        %v6036 = vperm.slane %v6030, %v6035
        %v6038 = vunpack.c.l.s4 1934713408
        %v6039 = vunpack.c.0.s8 %v6038
        %v6040 = vperm.slane %v6032, %v6039
        %v6041 = vrot.slane %v6004, 4
        %v6042 = vsel %vm1696, %v6041, %v5992
        %v6043 = vrot.slane %v5992, 4
        %v6044 = vsel %vm1696, %v6004, %v6043
        %v6046 = vunpack.c.l.s4 1934713408
        %v6047 = vunpack.c.0.s8 %v6046
        %v6048 = vperm.slane %v6042, %v6047
        %v6050 = vunpack.c.l.s4 1934713408
        %v6051 = vunpack.c.0.s8 %v6050
        %v6052 = vperm.slane %v6044, %v6051
        %v6053 = vrot.slane %v6036, 4
        %v6054 = vsel %vm1696, %v6053, %v6012
        %v6055 = vrot.slane %v6012, 4
        %v6056 = vsel %vm1696, %v6036, %v6055
        %v6057 = vrot.slane %v6040, 4
        %v6058 = vsel %vm1696, %v6057, %v6016
        %v6059 = vrot.slane %v6016, 4
        %v6060 = vsel %vm1696, %v6040, %v6059
        %v6061 = vrot.slane %v6048, 4
        %v6062 = vsel %vm1696, %v6061, %v6024
        %v6063 = vrot.slane %v6024, 4
        %v6064 = vsel %vm1696, %v6048, %v6063
        %v6065 = vrot.slane %v6052, 4
        %v6066 = vsel %vm1696, %v6065, %v6028
        %v6067 = vrot.slane %v6028, 4
        %v6068 = vsel %vm1696, %v6052, %v6067
        %v6069 = vrot.slane %v5716, 4
        %v6070 = vsel %vm1696, %v6069, %v5710
        %v6071 = vrot.slane %v5710, 4
        %v6072 = vsel %vm1696, %v5716, %v6071
        %v6074 = vunpack.c.l.s4 1983009808
        %v6075 = vunpack.c.0.s8 %v6074
        %v6076 = vperm.slane %v6070, %v6075
        %v6078 = vunpack.c.l.s4 1983009808
        %v6079 = vunpack.c.0.s8 %v6078
        %v6080 = vperm.slane %v6072, %v6079
        %v6081 = vrot.slane %v5719, 4
        %v6082 = vsel %vm1696, %v6081, %v5713
        %v6083 = vrot.slane %v5713, 4
        %v6084 = vsel %vm1696, %v5719, %v6083
        %v6086 = vunpack.c.l.s4 1983009808
        %v6087 = vunpack.c.0.s8 %v6086
        %v6088 = vperm.slane %v6082, %v6087
        %v6090 = vunpack.c.l.s4 1983009808
        %v6091 = vunpack.c.0.s8 %v6090
        %v6092 = vperm.slane %v6084, %v6091
        %v6093 = vrot.slane %v5728, 4
        %v6094 = vsel %vm1696, %v6093, %v5722
        %v6095 = vrot.slane %v5722, 4
        %v6096 = vsel %vm1696, %v5728, %v6095
        %v6098 = vunpack.c.l.s4 1983009808
        %v6099 = vunpack.c.0.s8 %v6098
        %v6100 = vperm.slane %v6094, %v6099
        %v6102 = vunpack.c.l.s4 1983009808
        %v6103 = vunpack.c.0.s8 %v6102
        %v6104 = vperm.slane %v6096, %v6103
        %v6105 = vrot.slane %v5731, 4
        %v6106 = vsel %vm1696, %v6105, %v5725
        %v6107 = vrot.slane %v5725, 4
        %v6108 = vsel %vm1696, %v5731, %v6107
        %v6110 = vunpack.c.l.s4 1983009808
        %v6111 = vunpack.c.0.s8 %v6110
        %v6112 = vperm.slane %v6106, %v6111
        %v6114 = vunpack.c.l.s4 1983009808
        %v6115 = vunpack.c.0.s8 %v6114
        %v6116 = vperm.slane %v6108, %v6115
        %v6117 = vrot.slane %v6088, 4
        %v6118 = vsel %vm1696, %v6117, %v6076
        %v6119 = vrot.slane %v6076, 4
        %v6120 = vsel %vm1696, %v6088, %v6119
        %v6122 = vunpack.c.l.s4 1934713408
        %v6123 = vunpack.c.0.s8 %v6122
        %v6124 = vperm.slane %v6118, %v6123
        %v6126 = vunpack.c.l.s4 1934713408
        %v6127 = vunpack.c.0.s8 %v6126
        %v6128 = vperm.slane %v6120, %v6127
        %v6129 = vrot.slane %v6092, 4
        %v6130 = vsel %vm1696, %v6129, %v6080
        %v6131 = vrot.slane %v6080, 4
        %v6132 = vsel %vm1696, %v6092, %v6131
        %v6134 = vunpack.c.l.s4 1934713408
        %v6135 = vunpack.c.0.s8 %v6134
        %v6136 = vperm.slane %v6130, %v6135
        %v6138 = vunpack.c.l.s4 1934713408
        %v6139 = vunpack.c.0.s8 %v6138
        %v6140 = vperm.slane %v6132, %v6139
        %v6141 = vrot.slane %v6112, 4
        %v6142 = vsel %vm1696, %v6141, %v6100
        %v6143 = vrot.slane %v6100, 4
        %v6144 = vsel %vm1696, %v6112, %v6143
        %v6146 = vunpack.c.l.s4 1934713408
        %v6147 = vunpack.c.0.s8 %v6146
        %v6148 = vperm.slane %v6142, %v6147
        %v6150 = vunpack.c.l.s4 1934713408
        %v6151 = vunpack.c.0.s8 %v6150
        %v6152 = vperm.slane %v6144, %v6151
        %v6153 = vrot.slane %v6116, 4
        %v6154 = vsel %vm1696, %v6153, %v6104
        %v6155 = vrot.slane %v6104, 4
        %v6156 = vsel %vm1696, %v6116, %v6155
        %v6158 = vunpack.c.l.s4 1934713408
        %v6159 = vunpack.c.0.s8 %v6158
        %v6160 = vperm.slane %v6154, %v6159
        %v6162 = vunpack.c.l.s4 1934713408
        %v6163 = vunpack.c.0.s8 %v6162
        %v6164 = vperm.slane %v6156, %v6163
        %v6165 = vrot.slane %v6148, 4
        %v6166 = vsel %vm1696, %v6165, %v6124
        %v6167 = vrot.slane %v6124, 4
        %v6168 = vsel %vm1696, %v6148, %v6167
        %v6169 = vrot.slane %v6152, 4
        %v6170 = vsel %vm1696, %v6169, %v6128
        %v6171 = vrot.slane %v6128, 4
        %v6172 = vsel %vm1696, %v6152, %v6171
        %v6173 = vrot.slane %v6160, 4
        %v6174 = vsel %vm1696, %v6173, %v6136
        %v6175 = vrot.slane %v6136, 4
        %v6176 = vsel %vm1696, %v6160, %v6175
        %v6177 = vrot.slane %v6164, 4
        %v6178 = vsel %vm1696, %v6177, %v6140
        %v6179 = vrot.slane %v6140, 4
        %v6180 = vsel %vm1696, %v6164, %v6179
        %v6181 = vrot.slane %v5834, 4
        %v6182 = vsel %vm1696, %v6181, %v5830
        %v6183 = vrot.slane %v5830, 4
        %v6184 = vsel %vm1696, %v5834, %v6183
        %v6186 = vunpack.c.l.s4 1983009808
        %v6187 = vunpack.c.0.s8 %v6186
        %v6188 = vperm.slane %v6182, %v6187
        %v6190 = vunpack.c.l.s4 1983009808
        %v6191 = vunpack.c.0.s8 %v6190
        %v6192 = vperm.slane %v6184, %v6191
        %v6193 = vrot.slane %v5836, 4
        %v6194 = vsel %vm1696, %v6193, %v5832
        %v6195 = vrot.slane %v5832, 4
        %v6196 = vsel %vm1696, %v5836, %v6195
        %v6198 = vunpack.c.l.s4 1983009808
        %v6199 = vunpack.c.0.s8 %v6198
        %v6200 = vperm.slane %v6194, %v6199
        %v6202 = vunpack.c.l.s4 1983009808
        %v6203 = vunpack.c.0.s8 %v6202
        %v6204 = vperm.slane %v6196, %v6203
        %v6205 = vrot.slane %v5842, 4
        %v6206 = vsel %vm1696, %v6205, %v5838
        %v6207 = vrot.slane %v5838, 4
        %v6208 = vsel %vm1696, %v5842, %v6207
        %v6210 = vunpack.c.l.s4 1983009808
        %v6211 = vunpack.c.0.s8 %v6210
        %v6212 = vperm.slane %v6206, %v6211
        %v6214 = vunpack.c.l.s4 1983009808
        %v6215 = vunpack.c.0.s8 %v6214
        %v6216 = vperm.slane %v6208, %v6215
        %v6217 = vrot.slane %v5844, 4
        %v6218 = vsel %vm1696, %v6217, %v5840
        %v6219 = vrot.slane %v5840, 4
        %v6220 = vsel %vm1696, %v5844, %v6219
        %v6222 = vunpack.c.l.s4 1983009808
        %v6223 = vunpack.c.0.s8 %v6222
        %v6224 = vperm.slane %v6218, %v6223
        %v6226 = vunpack.c.l.s4 1983009808
        %v6227 = vunpack.c.0.s8 %v6226
        %v6228 = vperm.slane %v6220, %v6227
        %v6229 = vrot.slane %v6200, 4
        %v6230 = vsel %vm1696, %v6229, %v6188
        %v6231 = vrot.slane %v6188, 4
        %v6232 = vsel %vm1696, %v6200, %v6231
        %v6234 = vunpack.c.l.s4 1934713408
        %v6235 = vunpack.c.0.s8 %v6234
        %v6236 = vperm.slane %v6230, %v6235
        %v6238 = vunpack.c.l.s4 1934713408
        %v6239 = vunpack.c.0.s8 %v6238
        %v6240 = vperm.slane %v6232, %v6239
        %v6241 = vrot.slane %v6204, 4
        %v6242 = vsel %vm1696, %v6241, %v6192
        %v6243 = vrot.slane %v6192, 4
        %v6244 = vsel %vm1696, %v6204, %v6243
        %v6246 = vunpack.c.l.s4 1934713408
        %v6247 = vunpack.c.0.s8 %v6246
        %v6248 = vperm.slane %v6242, %v6247
        %v6250 = vunpack.c.l.s4 1934713408
        %v6251 = vunpack.c.0.s8 %v6250
        %v6252 = vperm.slane %v6244, %v6251
        %v6253 = vrot.slane %v6224, 4
        %v6254 = vsel %vm1696, %v6253, %v6212
        %v6255 = vrot.slane %v6212, 4
        %v6256 = vsel %vm1696, %v6224, %v6255
        %v6258 = vunpack.c.l.s4 1934713408
        %v6259 = vunpack.c.0.s8 %v6258
        %v6260 = vperm.slane %v6254, %v6259
        %v6262 = vunpack.c.l.s4 1934713408
        %v6263 = vunpack.c.0.s8 %v6262
        %v6264 = vperm.slane %v6256, %v6263
        %v6265 = vrot.slane %v6228, 4
        %v6266 = vsel %vm1696, %v6265, %v6216
        %v6267 = vrot.slane %v6216, 4
        %v6268 = vsel %vm1696, %v6228, %v6267
        %v6270 = vunpack.c.l.s4 1934713408
        %v6271 = vunpack.c.0.s8 %v6270
        %v6272 = vperm.slane %v6266, %v6271
        %v6274 = vunpack.c.l.s4 1934713408
        %v6275 = vunpack.c.0.s8 %v6274
        %v6276 = vperm.slane %v6268, %v6275
        %v6277 = vrot.slane %v6260, 4
        %v6278 = vsel %vm1696, %v6277, %v6236
        %v6279 = vrot.slane %v6236, 4
        %v6280 = vsel %vm1696, %v6260, %v6279
        %v6281 = vrot.slane %v6264, 4
        %v6282 = vsel %vm1696, %v6281, %v6240
        %v6283 = vrot.slane %v6240, 4
        %v6284 = vsel %vm1696, %v6264, %v6283
        %v6285 = vrot.slane %v6272, 4
        %v6286 = vsel %vm1696, %v6285, %v6248
        %v6287 = vrot.slane %v6248, 4
        %v6288 = vsel %vm1696, %v6272, %v6287
        %v6289 = vrot.slane %v6276, 4
        %v6290 = vsel %vm1696, %v6289, %v6252
        %v6291 = vrot.slane %v6252, 4
        %v6292 = vsel %vm1696, %v6276, %v6291
        %v6293 = vrot.slane %v6058, 4
        %v6294 = vsel %vm1696, %v6293, %v6054
        %v6295 = vrot.slane %v6054, 4
        %v6296 = vsel %vm1696, %v6058, %v6295
        %v6298 = vunpack.c.l.s4 1983009808
        %v6299 = vunpack.c.0.s8 %v6298
        %v6300 = vperm.slane %v6294, %v6299
        %v6302 = vunpack.c.l.s4 1983009808
        %v6303 = vunpack.c.0.s8 %v6302
        %v6304 = vperm.slane %v6296, %v6303
        %v6305 = vrot.slane %v6060, 4
        %v6306 = vsel %vm1696, %v6305, %v6056
        %v6307 = vrot.slane %v6056, 4
        %v6308 = vsel %vm1696, %v6060, %v6307
        %v6310 = vunpack.c.l.s4 1983009808
        %v6311 = vunpack.c.0.s8 %v6310
        %v6312 = vperm.slane %v6306, %v6311
        %v6314 = vunpack.c.l.s4 1983009808
        %v6315 = vunpack.c.0.s8 %v6314
        %v6316 = vperm.slane %v6308, %v6315
        %v6317 = vrot.slane %v6066, 4
        %v6318 = vsel %vm1696, %v6317, %v6062
        %v6319 = vrot.slane %v6062, 4
        %v6320 = vsel %vm1696, %v6066, %v6319
        %v6322 = vunpack.c.l.s4 1983009808
        %v6323 = vunpack.c.0.s8 %v6322
        %v6324 = vperm.slane %v6318, %v6323
        %v6326 = vunpack.c.l.s4 1983009808
        %v6327 = vunpack.c.0.s8 %v6326
        %v6328 = vperm.slane %v6320, %v6327
        %v6329 = vrot.slane %v6068, 4
        %v6330 = vsel %vm1696, %v6329, %v6064
        %v6331 = vrot.slane %v6064, 4
        %v6332 = vsel %vm1696, %v6068, %v6331
        %v6334 = vunpack.c.l.s4 1983009808
        %v6335 = vunpack.c.0.s8 %v6334
        %v6336 = vperm.slane %v6330, %v6335
        %v6338 = vunpack.c.l.s4 1983009808
        %v6339 = vunpack.c.0.s8 %v6338
        %v6340 = vperm.slane %v6332, %v6339
        %v6341 = vrot.slane %v6312, 4
        %v6342 = vsel %vm1696, %v6341, %v6300
        %v6343 = vrot.slane %v6300, 4
        %v6344 = vsel %vm1696, %v6312, %v6343
        %v6346 = vunpack.c.l.s4 1934713408
        %v6347 = vunpack.c.0.s8 %v6346
        %v6348 = vperm.slane %v6342, %v6347
        %v6350 = vunpack.c.l.s4 1934713408
        %v6351 = vunpack.c.0.s8 %v6350
        %v6352 = vperm.slane %v6344, %v6351
        %v6353 = vrot.slane %v6316, 4
        %v6354 = vsel %vm1696, %v6353, %v6304
        %v6355 = vrot.slane %v6304, 4
        %v6356 = vsel %vm1696, %v6316, %v6355
        %v6358 = vunpack.c.l.s4 1934713408
        %v6359 = vunpack.c.0.s8 %v6358
        %v6360 = vperm.slane %v6354, %v6359
        %v6362 = vunpack.c.l.s4 1934713408
        %v6363 = vunpack.c.0.s8 %v6362
        %v6364 = vperm.slane %v6356, %v6363
        %v6365 = vrot.slane %v6336, 4
        %v6366 = vsel %vm1696, %v6365, %v6324
        %v6367 = vrot.slane %v6324, 4
        %v6368 = vsel %vm1696, %v6336, %v6367
        %v6370 = vunpack.c.l.s4 1934713408
        %v6371 = vunpack.c.0.s8 %v6370
        %v6372 = vperm.slane %v6366, %v6371
        %v6374 = vunpack.c.l.s4 1934713408
        %v6375 = vunpack.c.0.s8 %v6374
        %v6376 = vperm.slane %v6368, %v6375
        %v6377 = vrot.slane %v6340, 4
        %v6378 = vsel %vm1696, %v6377, %v6328
        %v6379 = vrot.slane %v6328, 4
        %v6380 = vsel %vm1696, %v6340, %v6379
        %v6382 = vunpack.c.l.s4 1934713408
        %v6383 = vunpack.c.0.s8 %v6382
        %v6384 = vperm.slane %v6378, %v6383
        %v6386 = vunpack.c.l.s4 1934713408
        %v6387 = vunpack.c.0.s8 %v6386
        %v6388 = vperm.slane %v6380, %v6387
        %v6389 = vrot.slane %v6372, 4
        %v6390 = vsel %vm1696, %v6389, %v6348
        %v6391 = vrot.slane %v6348, 4
        %v6392 = vsel %vm1696, %v6372, %v6391
        %v6393 = vrot.slane %v6376, 4
        %v6394 = vsel %vm1696, %v6393, %v6352
        %v6395 = vrot.slane %v6352, 4
        %v6396 = vsel %vm1696, %v6376, %v6395
        %v6397 = vrot.slane %v6384, 4
        %v6398 = vsel %vm1696, %v6397, %v6360
        %v6399 = vrot.slane %v6360, 4
        %v6400 = vsel %vm1696, %v6384, %v6399
        %v6401 = vrot.slane %v6388, 4
        %v6402 = vsel %vm1696, %v6401, %v6364
        %v6403 = vrot.slane %v6364, 4
        %v6404 = vsel %vm1696, %v6388, %v6403
        %v6405 = vrot.slane %v5946, 4
        %v6406 = vsel %vm1696, %v6405, %v5942
        %v6407 = vrot.slane %v5942, 4
        %v6408 = vsel %vm1696, %v5946, %v6407
        %v6410 = vunpack.c.l.s4 1983009808
        %v6411 = vunpack.c.0.s8 %v6410
        %v6412 = vperm.slane %v6406, %v6411
        %v6414 = vunpack.c.l.s4 1983009808
        %v6415 = vunpack.c.0.s8 %v6414
        %v6416 = vperm.slane %v6408, %v6415
        %v6417 = vrot.slane %v5948, 4
        %v6418 = vsel %vm1696, %v6417, %v5944
        %v6419 = vrot.slane %v5944, 4
        %v6420 = vsel %vm1696, %v5948, %v6419
        %v6422 = vunpack.c.l.s4 1983009808
        %v6423 = vunpack.c.0.s8 %v6422
        %v6424 = vperm.slane %v6418, %v6423
        %v6426 = vunpack.c.l.s4 1983009808
        %v6427 = vunpack.c.0.s8 %v6426
        %v6428 = vperm.slane %v6420, %v6427
        %v6429 = vrot.slane %v5954, 4
        %v6430 = vsel %vm1696, %v6429, %v5950
        %v6431 = vrot.slane %v5950, 4
        %v6432 = vsel %vm1696, %v5954, %v6431
        %v6434 = vunpack.c.l.s4 1983009808
        %v6435 = vunpack.c.0.s8 %v6434
        %v6436 = vperm.slane %v6430, %v6435
        %v6438 = vunpack.c.l.s4 1983009808
        %v6439 = vunpack.c.0.s8 %v6438
        %v6440 = vperm.slane %v6432, %v6439
        %v6441 = vrot.slane %v5956, 4
        %v6442 = vsel %vm1696, %v6441, %v5952
        %v6443 = vrot.slane %v5952, 4
        %v6444 = vsel %vm1696, %v5956, %v6443
        %v6446 = vunpack.c.l.s4 1983009808
        %v6447 = vunpack.c.0.s8 %v6446
        %v6448 = vperm.slane %v6442, %v6447
        %v6450 = vunpack.c.l.s4 1983009808
        %v6451 = vunpack.c.0.s8 %v6450
        %v6452 = vperm.slane %v6444, %v6451
        %v6453 = vrot.slane %v6424, 4
        %v6454 = vsel %vm1696, %v6453, %v6412
        %v6455 = vrot.slane %v6412, 4
        %v6456 = vsel %vm1696, %v6424, %v6455
        %v6458 = vunpack.c.l.s4 1934713408
        %v6459 = vunpack.c.0.s8 %v6458
        %v6460 = vperm.slane %v6454, %v6459
        %v6462 = vunpack.c.l.s4 1934713408
        %v6463 = vunpack.c.0.s8 %v6462
        %v6464 = vperm.slane %v6456, %v6463
        %v6465 = vrot.slane %v6428, 4
        %v6466 = vsel %vm1696, %v6465, %v6416
        %v6467 = vrot.slane %v6416, 4
        %v6468 = vsel %vm1696, %v6428, %v6467
        %v6470 = vunpack.c.l.s4 1934713408
        %v6471 = vunpack.c.0.s8 %v6470
        %v6472 = vperm.slane %v6466, %v6471
        %v6474 = vunpack.c.l.s4 1934713408
        %v6475 = vunpack.c.0.s8 %v6474
        %v6476 = vperm.slane %v6468, %v6475
        %v6477 = vrot.slane %v6448, 4
        %v6478 = vsel %vm1696, %v6477, %v6436
        %v6479 = vrot.slane %v6436, 4
        %v6480 = vsel %vm1696, %v6448, %v6479
        %v6482 = vunpack.c.l.s4 1934713408
        %v6483 = vunpack.c.0.s8 %v6482
        %v6484 = vperm.slane %v6478, %v6483
        %v6486 = vunpack.c.l.s4 1934713408
        %v6487 = vunpack.c.0.s8 %v6486
        %v6488 = vperm.slane %v6480, %v6487
        %v6489 = vrot.slane %v6452, 4
        %v6490 = vsel %vm1696, %v6489, %v6440
        %v6491 = vrot.slane %v6440, 4
        %v6492 = vsel %vm1696, %v6452, %v6491
        %v6494 = vunpack.c.l.s4 1934713408
        %v6495 = vunpack.c.0.s8 %v6494
        %v6496 = vperm.slane %v6490, %v6495
        %v6498 = vunpack.c.l.s4 1934713408
        %v6499 = vunpack.c.0.s8 %v6498
        %v6500 = vperm.slane %v6492, %v6499
        %v6501 = vrot.slane %v6484, 4
        %v6502 = vsel %vm1696, %v6501, %v6460
        %v6503 = vrot.slane %v6460, 4
        %v6504 = vsel %vm1696, %v6484, %v6503
        %v6505 = vrot.slane %v6488, 4
        %v6506 = vsel %vm1696, %v6505, %v6464
        %v6507 = vrot.slane %v6464, 4
        %v6508 = vsel %vm1696, %v6488, %v6507
        %v6509 = vrot.slane %v6496, 4
        %v6510 = vsel %vm1696, %v6509, %v6472
        %v6511 = vrot.slane %v6472, 4
        %v6512 = vsel %vm1696, %v6496, %v6511
        %v6513 = vrot.slane %v6500, 4
        %v6514 = vsel %vm1696, %v6513, %v6476
        %v6515 = vrot.slane %v6476, 4
        %v6516 = vsel %vm1696, %v6500, %v6515
        %v6517 = vrot.slane %v6170, 4
        %v6518 = vsel %vm1696, %v6517, %v6166
        %v6519 = vrot.slane %v6166, 4
        %v6520 = vsel %vm1696, %v6170, %v6519
        %v6522 = vunpack.c.l.s4 1983009808
        %v6523 = vunpack.c.0.s8 %v6522
        %v6524 = vperm.slane %v6518, %v6523
        %v6526 = vunpack.c.l.s4 1983009808
        %v6527 = vunpack.c.0.s8 %v6526
        %v6528 = vperm.slane %v6520, %v6527
        %v6529 = vrot.slane %v6172, 4
        %v6530 = vsel %vm1696, %v6529, %v6168
        %v6531 = vrot.slane %v6168, 4
        %v6532 = vsel %vm1696, %v6172, %v6531
        %v6534 = vunpack.c.l.s4 1983009808
        %v6535 = vunpack.c.0.s8 %v6534
        %v6536 = vperm.slane %v6530, %v6535
        %v6538 = vunpack.c.l.s4 1983009808
        %v6539 = vunpack.c.0.s8 %v6538
        %v6540 = vperm.slane %v6532, %v6539
        %v6541 = vrot.slane %v6178, 4
        %v6542 = vsel %vm1696, %v6541, %v6174
        %v6543 = vrot.slane %v6174, 4
        %v6544 = vsel %vm1696, %v6178, %v6543
        %v6546 = vunpack.c.l.s4 1983009808
        %v6547 = vunpack.c.0.s8 %v6546
        %v6548 = vperm.slane %v6542, %v6547
        %v6550 = vunpack.c.l.s4 1983009808
        %v6551 = vunpack.c.0.s8 %v6550
        %v6552 = vperm.slane %v6544, %v6551
        %v6553 = vrot.slane %v6180, 4
        %v6554 = vsel %vm1696, %v6553, %v6176
        %v6555 = vrot.slane %v6176, 4
        %v6556 = vsel %vm1696, %v6180, %v6555
        %v6558 = vunpack.c.l.s4 1983009808
        %v6559 = vunpack.c.0.s8 %v6558
        %v6560 = vperm.slane %v6554, %v6559
        %v6562 = vunpack.c.l.s4 1983009808
        %v6563 = vunpack.c.0.s8 %v6562
        %v6564 = vperm.slane %v6556, %v6563
        %v6565 = vrot.slane %v6536, 4
        %v6566 = vsel %vm1696, %v6565, %v6524
        %v6567 = vrot.slane %v6524, 4
        %v6568 = vsel %vm1696, %v6536, %v6567
        %v6570 = vunpack.c.l.s4 1934713408
        %v6571 = vunpack.c.0.s8 %v6570
        %v6572 = vperm.slane %v6566, %v6571
        %v6574 = vunpack.c.l.s4 1934713408
        %v6575 = vunpack.c.0.s8 %v6574
        %v6576 = vperm.slane %v6568, %v6575
        %v6577 = vrot.slane %v6540, 4
        %v6578 = vsel %vm1696, %v6577, %v6528
        %v6579 = vrot.slane %v6528, 4
        %v6580 = vsel %vm1696, %v6540, %v6579
        %v6582 = vunpack.c.l.s4 1934713408
        %v6583 = vunpack.c.0.s8 %v6582
        %v6584 = vperm.slane %v6578, %v6583
        %v6586 = vunpack.c.l.s4 1934713408
        %v6587 = vunpack.c.0.s8 %v6586
        %v6588 = vperm.slane %v6580, %v6587
        %v6589 = vrot.slane %v6560, 4
        %v6590 = vsel %vm1696, %v6589, %v6548
        %v6591 = vrot.slane %v6548, 4
        %v6592 = vsel %vm1696, %v6560, %v6591
        %v6594 = vunpack.c.l.s4 1934713408
        %v6595 = vunpack.c.0.s8 %v6594
        %v6596 = vperm.slane %v6590, %v6595
        %v6598 = vunpack.c.l.s4 1934713408
        %v6599 = vunpack.c.0.s8 %v6598
        %v6600 = vperm.slane %v6592, %v6599
        %v6601 = vrot.slane %v6564, 4
        %v6602 = vsel %vm1696, %v6601, %v6552
        %v6603 = vrot.slane %v6552, 4
        %v6604 = vsel %vm1696, %v6564, %v6603
        %v6606 = vunpack.c.l.s4 1934713408
        %v6607 = vunpack.c.0.s8 %v6606
        %v6608 = vperm.slane %v6602, %v6607
        %v6610 = vunpack.c.l.s4 1934713408
        %v6611 = vunpack.c.0.s8 %v6610
        %v6612 = vperm.slane %v6604, %v6611
        %v6613 = vrot.slane %v6596, 4
        %v6614 = vsel %vm1696, %v6613, %v6572
        %v6615 = vrot.slane %v6572, 4
        %v6616 = vsel %vm1696, %v6596, %v6615
        %v6617 = vrot.slane %v6600, 4
        %v6618 = vsel %vm1696, %v6617, %v6576
        %v6619 = vrot.slane %v6576, 4
        %v6620 = vsel %vm1696, %v6600, %v6619
        %v6621 = vrot.slane %v6608, 4
        %v6622 = vsel %vm1696, %v6621, %v6584
        %v6623 = vrot.slane %v6584, 4
        %v6624 = vsel %vm1696, %v6608, %v6623
        %v6625 = vrot.slane %v6612, 4
        %v6626 = vsel %vm1696, %v6625, %v6588
        %v6627 = vrot.slane %v6588, 4
        %v6628 = vsel %vm1696, %v6612, %v6627
        %6631 = vrot.lane.b32.xlu0 %v6280, 32
        %v6632 = vpop.permute.xlu0 %6631
        %6633 = vrot.lane.b32.xlu0 %v6392, 32
        %v6634 = vpop.permute.xlu0 %6633
        %6639 = vrot.lane.b32.xlu0 %v6282, 64
        %v6640 = vpop.permute.xlu0 %6639
        %6641 = vrot.lane.b32.xlu0 %v6394, 64
        %v6642 = vpop.permute.xlu0 %6641
        %6647 = vrot.lane.b32.xlu0 %v6284, 96
        %v6648 = vpop.permute.xlu0 %6647
        %6649 = vrot.lane.b32.xlu0 %v6396, 96
        %v6650 = vpop.permute.xlu0 %6649
        %6655 = vrot.lane.b32.xlu0 %v6288, 32
        %v6656 = vpop.permute.xlu0 %6655
        %6657 = vrot.lane.b32.xlu0 %v6400, 32
        %v6658 = vpop.permute.xlu0 %6657
        %6663 = vrot.lane.b32.xlu0 %v6290, 64
        %v6664 = vpop.permute.xlu0 %6663
        %6665 = vrot.lane.b32.xlu0 %v6402, 64
        %v6666 = vpop.permute.xlu0 %6665
        %6671 = vrot.lane.b32.xlu0 %v6292, 96
        %v6672 = vpop.permute.xlu0 %6671
        %6673 = vrot.lane.b32.xlu0 %v6404, 96
        %v6674 = vpop.permute.xlu0 %6673
        %6679 = vrot.lane.b32.xlu0 %v6504, 32
        %v6680 = vpop.permute.xlu0 %6679
        %6681 = vrot.lane.b32.xlu0 %v6616, 32
        %v6682 = vpop.permute.xlu0 %6681
        %6687 = vrot.lane.b32.xlu0 %v6506, 64
        %v6688 = vpop.permute.xlu0 %6687
        %6689 = vrot.lane.b32.xlu0 %v6618, 64
        %v6690 = vpop.permute.xlu0 %6689
        %6695 = vrot.lane.b32.xlu0 %v6508, 96
        %v6696 = vpop.permute.xlu0 %6695
        %6697 = vrot.lane.b32.xlu0 %v6620, 96
        %v6698 = vpop.permute.xlu0 %6697
        %6703 = vrot.lane.b32.xlu0 %v6512, 32
        %v6704 = vpop.permute.xlu0 %6703
        %6705 = vrot.lane.b32.xlu0 %v6624, 32
        %v6706 = vpop.permute.xlu0 %6705
        %6711 = vrot.lane.b32.xlu0 %v6514, 64
        %v6712 = vpop.permute.xlu0 %6711
        %6713 = vrot.lane.b32.xlu0 %v6626, 64
        %v6714 = vpop.permute.xlu0 %6713
        %6719 = vrot.lane.b32.xlu0 %v6516, 96
        %v6720 = vpop.permute.xlu0 %6719
        %6721 = vrot.lane.b32.xlu0 %v6628, 96
        %v6722 = vpop.permute.xlu0 %6721
        %v6725 = vsel %vm4608, %v6278, %v6632
        %v6726 = vsel %vm4608, %v6390, %v6634
        %vm6727 = vcmask 523264
        %v6728 = vsel %vm6727, %v6725, %v6640
        %v6729 = vsel %vm6727, %v6726, %v6642
        %vm6730 = vcmask 785408
        %v6731 = vsel %vm6730, %v6728, %v6648
        %v6732 = vsel %vm6730, %v6729, %v6650
        %v6733 = vsel %vm4608, %v6286, %v6656
        %v6734 = vsel %vm4608, %v6398, %v6658
        %v6735 = vsel %vm6727, %v6733, %v6664
        %v6736 = vsel %vm6727, %v6734, %v6666
        %v6737 = vsel %vm6730, %v6735, %v6672
        %v6738 = vsel %vm6730, %v6736, %v6674
        %v6739 = vsel %vm4608, %v6502, %v6680
        %v6740 = vsel %vm4608, %v6614, %v6682
        %v6741 = vsel %vm6727, %v6739, %v6688
        %v6742 = vsel %vm6727, %v6740, %v6690
        %v6743 = vsel %vm6730, %v6741, %v6696
        %v6744 = vsel %vm6730, %v6742, %v6698
        %v6745 = vsel %vm4608, %v6510, %v6704
        %v6746 = vsel %vm4608, %v6622, %v6706
        %v6747 = vsel %vm6727, %v6745, %v6712
        %v6748 = vsel %vm6727, %v6746, %v6714
        %v6749 = vsel %vm6730, %v6747, %v6720
        %v6750 = vsel %vm6730, %v6748, %v6722
        %v6751 = vld [vmem:[%s503] sm:$0xff]
        %v6752 = vld [vmem:[%s503 + $0x8] sm:$0xff]
        %v6753 = vld [vmem:[%s503 + $0x10] sm:$0xff]
        %v6754 = vld [vmem:[%s503 + $0x18] sm:$0xff]
        %v6755 = vld [vmem:[%s503 + $0x20] sm:$0xff]
        %v6756 = vld [vmem:[%s503 + $0x28] sm:$0xff]
        %v6757 = vld [vmem:[%s503 + $0x30] sm:$0xff]
        %v6758 = vld [vmem:[%s503 + $0x38] sm:$0xff]
        %v6759 = vld [vmem:[%s503 + $0x40] sm:$0xff]
        %v6760 = vld [vmem:[%s503 + $0x48] sm:$0xff]
        %v6761 = vld [vmem:[%s503 + $0x50] sm:$0xff]
        %v6762 = vld [vmem:[%s503 + $0x58] sm:$0xff]
        %v6763 = vld [vmem:[%s503 + $0x60] sm:$0xff]
        %v6764 = vld [vmem:[%s503 + $0x68] sm:$0xff]
        %v6765 = vld [vmem:[%s503 + $0x70] sm:$0xff]
        %v6766 = vld [vmem:[%s503 + $0x78] sm:$0xff]
        %v6767 = vld [vmem:[%s503 + $0x80] sm:$0xff]
        %v6768 = vld [vmem:[%s503 + $0x88] sm:$0xff]
        %v6769 = vld [vmem:[%s503 + $0x90] sm:$0xff]
        %v6770 = vld [vmem:[%s503 + $0x98] sm:$0xff]
        %v6771 = vld [vmem:[%s503 + $0xa0] sm:$0xff]
        %v6772 = vld [vmem:[%s503 + $0xa8] sm:$0xff]
        %v6773 = vld [vmem:[%s503 + $0xb0] sm:$0xff]
        %v6774 = vld [vmem:[%s503 + $0xb8] sm:$0xff]
        %v6775 = vld [vmem:[%s503 + $0xc0] sm:$0xff]
        %v6776 = vld [vmem:[%s503 + $0xc8] sm:$0xff]
        %v6777 = vld [vmem:[%s503 + $0xd0] sm:$0xff]
        %v6778 = vld [vmem:[%s503 + $0xd8] sm:$0xff]
        %v6779 = vld [vmem:[%s503 + $0xe0] sm:$0xff]
        %v6780 = vld [vmem:[%s503 + $0xe8] sm:$0xff]
        %v6781 = vld [vmem:[%s503 + $0xf0] sm:$0xff]
        %v6782 = vld [vmem:[%s503 + $0xf8] sm:$0xff]
        %v6783 = vld [vmem:[%s503 + $0x100] sm:$0xff]
        %v6784 = vld [vmem:[%s503 + $0x108] sm:$0xff]
        %v6785 = vld [vmem:[%s503 + $0x110] sm:$0xff]
        %v6786 = vld [vmem:[%s503 + $0x118] sm:$0xff]
        %v6787 = vld [vmem:[%s503 + $0x120] sm:$0xff]
        %v6788 = vld [vmem:[%s503 + $0x128] sm:$0xff]
        %v6789 = vld [vmem:[%s503 + $0x130] sm:$0xff]
        %v6790 = vld [vmem:[%s503 + $0x138] sm:$0xff]
        %v6791 = vld [vmem:[%s503 + $0x140] sm:$0xff]
        %v6792 = vld [vmem:[%s503 + $0x148] sm:$0xff]
        %v6793 = vld [vmem:[%s503 + $0x150] sm:$0xff]
        %v6794 = vld [vmem:[%s503 + $0x158] sm:$0xff]
        %v6795 = vld [vmem:[%s503 + $0x160] sm:$0xff]
        %v6796 = vld [vmem:[%s503 + $0x168] sm:$0xff]
        %v6797 = vld [vmem:[%s503 + $0x170] sm:$0xff]
        %v6798 = vld [vmem:[%s503 + $0x178] sm:$0xff]
        %v6799 = vld [vmem:[%s503 + $0x180] sm:$0xff]
        %v6800 = vld [vmem:[%s503 + $0x188] sm:$0xff]
        %v6801 = vld [vmem:[%s503 + $0x190] sm:$0xff]
        %v6802 = vld [vmem:[%s503 + $0x198] sm:$0xff]
        %v6803 = vld [vmem:[%s503 + $0x1a0] sm:$0xff]
        %v6804 = vld [vmem:[%s503 + $0x1a8] sm:$0xff]
        %v6805 = vld [vmem:[%s503 + $0x1b0] sm:$0xff]
        %v6806 = vld [vmem:[%s503 + $0x1b8] sm:$0xff]
        %v6807 = vld [vmem:[%s503 + $0x1c0] sm:$0xff]
        %v6808 = vld [vmem:[%s503 + $0x1c8] sm:$0xff]
        %v6809 = vld [vmem:[%s503 + $0x1d0] sm:$0xff]
        %v6810 = vld [vmem:[%s503 + $0x1d8] sm:$0xff]
        %v6811 = vld [vmem:[%s503 + $0x1e0] sm:$0xff]
        %v6812 = vld [vmem:[%s503 + $0x1e8] sm:$0xff]
        %v6813 = vld [vmem:[%s503 + $0x1f0] sm:$0xff]
        %v6814 = vld [vmem:[%s503 + $0x1f8] sm:$0xff]
        %v6815 = vld [vmem:[%s503 + $0x200] sm:$0xff]
        %v6816 = vld [vmem:[%s503 + $0x208] sm:$0xff]
        %v6817 = vld [vmem:[%s503 + $0x210] sm:$0xff]
        %v6818 = vld [vmem:[%s503 + $0x218] sm:$0xff]
        %v6819 = vld [vmem:[%s503 + $0x220] sm:$0xff]
        %v6820 = vld [vmem:[%s503 + $0x228] sm:$0xff]
        %v6821 = vld [vmem:[%s503 + $0x230] sm:$0xff]
        %v6822 = vld [vmem:[%s503 + $0x238] sm:$0xff]
        %v6823 = vld [vmem:[%s503 + $0x240] sm:$0xff]
        %v6824 = vld [vmem:[%s503 + $0x248] sm:$0xff]
        %v6825 = vld [vmem:[%s503 + $0x250] sm:$0xff]
        %v6826 = vld [vmem:[%s503 + $0x258] sm:$0xff]
        %v6827 = vld [vmem:[%s503 + $0x260] sm:$0xff]
        %v6828 = vld [vmem:[%s503 + $0x268] sm:$0xff]
        %v6829 = vld [vmem:[%s503 + $0x270] sm:$0xff]
        %v6830 = vld [vmem:[%s503 + $0x278] sm:$0xff]
        %v6831 = vld [vmem:[%s503 + $0x280] sm:$0xff]
        %v6832 = vld [vmem:[%s503 + $0x288] sm:$0xff]
        %v6833 = vld [vmem:[%s503 + $0x290] sm:$0xff]
        %v6834 = vld [vmem:[%s503 + $0x298] sm:$0xff]
        %v6835 = vld [vmem:[%s503 + $0x2a0] sm:$0xff]
        %v6836 = vld [vmem:[%s503 + $0x2a8] sm:$0xff]
        %v6837 = vld [vmem:[%s503 + $0x2b0] sm:$0xff]
        %v6838 = vld [vmem:[%s503 + $0x2b8] sm:$0xff]
        %v6839 = vld [vmem:[%s503 + $0x2c0] sm:$0xff]
        %v6840 = vld [vmem:[%s503 + $0x2c8] sm:$0xff]
        %v6841 = vld [vmem:[%s503 + $0x2d0] sm:$0xff]
        %v6842 = vld [vmem:[%s503 + $0x2d8] sm:$0xff]
        %v6843 = vld [vmem:[%s503 + $0x2e0] sm:$0xff]
        %v6844 = vld [vmem:[%s503 + $0x2e8] sm:$0xff]
        %v6845 = vld [vmem:[%s503 + $0x2f0] sm:$0xff]
        %v6846 = vld [vmem:[%s503 + $0x2f8] sm:$0xff]
        %v6847 = vld [vmem:[%s503 + $0x300] sm:$0xff]
        %v6848 = vld [vmem:[%s503 + $0x308] sm:$0xff]
        %v6849 = vld [vmem:[%s503 + $0x310] sm:$0xff]
        %v6850 = vld [vmem:[%s503 + $0x318] sm:$0xff]
        %v6851 = vld [vmem:[%s503 + $0x320] sm:$0xff]
        %v6852 = vld [vmem:[%s503 + $0x328] sm:$0xff]
        %v6853 = vld [vmem:[%s503 + $0x330] sm:$0xff]
        %v6854 = vld [vmem:[%s503 + $0x338] sm:$0xff]
        %v6855 = vld [vmem:[%s503 + $0x340] sm:$0xff]
        %v6856 = vld [vmem:[%s503 + $0x348] sm:$0xff]
        %v6857 = vld [vmem:[%s503 + $0x350] sm:$0xff]
        %v6858 = vld [vmem:[%s503 + $0x358] sm:$0xff]
        %v6859 = vld [vmem:[%s503 + $0x360] sm:$0xff]
        %v6860 = vld [vmem:[%s503 + $0x368] sm:$0xff]
        %v6861 = vld [vmem:[%s503 + $0x370] sm:$0xff]
        %v6862 = vld [vmem:[%s503 + $0x378] sm:$0xff]
        %v6863 = vld [vmem:[%s503 + $0x380] sm:$0xff]
        %v6864 = vld [vmem:[%s503 + $0x388] sm:$0xff]
        %v6865 = vld [vmem:[%s503 + $0x390] sm:$0xff]
        %v6866 = vld [vmem:[%s503 + $0x398] sm:$0xff]
        %v6867 = vld [vmem:[%s503 + $0x3a0] sm:$0xff]
        %v6868 = vld [vmem:[%s503 + $0x3a8] sm:$0xff]
        %v6869 = vld [vmem:[%s503 + $0x3b0] sm:$0xff]
        %v6870 = vld [vmem:[%s503 + $0x3b8] sm:$0xff]
        %v6871 = vld [vmem:[%s503 + $0x3c0] sm:$0xff]
        %v6872 = vld [vmem:[%s503 + $0x3c8] sm:$0xff]
        %v6873 = vld [vmem:[%s503 + $0x3d0] sm:$0xff]
        %v6874 = vld [vmem:[%s503 + $0x3d8] sm:$0xff]
        %v6875 = vld [vmem:[%s503 + $0x3e0] sm:$0xff]
        %v6876 = vld [vmem:[%s503 + $0x3e8] sm:$0xff]
        %v6877 = vld [vmem:[%s503 + $0x3f0] sm:$0xff]
        %v6878 = vld [vmem:[%s503 + $0x3f8] sm:$0xff]
        %v6879 = vld [vmem:[%s513] sm:$0x3]
        %v6881 = vperm.slane %v6879, 0
        %v6882 = vperm.slane %v6879, 1
        %6885 = vmatpush.msra.mxu0 %v6781
        %6886 = vmatpush.msra.mxu0 %v6779
        %6887 = vmatpush.msra.mxu0 %v6777
        %6888 = vmatpush.msra.mxu0 %v6775
        %6889 = vmatpush.msra.mxu0 %v6773
        %6890 = vmatpush.msra.mxu0 %v6771
        %6891 = vmatpush.msra.mxu0 %v6769
        %6892 = vmatpush.msra.mxu0 %v6767
        %6893 = vmatpush.msra.mxu0 %v6765
        %6894 = vmatpush.msra.mxu0 %v6763
        %6895 = vmatpush.msra.mxu0 %v6761
        %6896 = vmatpush.msra.mxu0 %v6759
        %6897 = vmatpush.msra.mxu0 %v6757
        %6898 = vmatpush.msra.mxu0 %v6755
        %6899 = vmatpush.msra.mxu0 %v6753
        %6900 = vmatpush.msra.mxu0 %v6751
        %6901 = vmatmul.f32.gmra.mxu0 %v6731
        %v6902 = vpop.f32.mrf.mxu0
        %v6903 = vadd.f32 %v6881, %v6902
        %6904 = vmatmul.f32.gmra.mxu0 %v6732
        %v6905 = vpop.f32.mrf.mxu0
        %v6906 = vadd.f32 %v6881, %v6905
        %6907 = vdwg.mxu0
        %6908 = vmatpush.msra.mxu0 %v6813
        %6909 = vmatpush.msra.mxu0 %v6811
        %6910 = vmatpush.msra.mxu0 %v6809
        %6911 = vmatpush.msra.mxu0 %v6807
        %6912 = vmatpush.msra.mxu0 %v6805
        %6913 = vmatpush.msra.mxu0 %v6803
        %6914 = vmatpush.msra.mxu0 %v6801
        %6915 = vmatpush.msra.mxu0 %v6799
        %6916 = vmatpush.msra.mxu0 %v6797
        %6917 = vmatpush.msra.mxu0 %v6795
        %6918 = vmatpush.msra.mxu0 %v6793
        %6919 = vmatpush.msra.mxu0 %v6791
        %6920 = vmatpush.msra.mxu0 %v6789
        %6921 = vmatpush.msra.mxu0 %v6787
        %6922 = vmatpush.msra.mxu0 %v6785
        %6923 = vmatpush.msra.mxu0 %v6783
        %6924 = vmatmul.f32.gmra.mxu0 %v6737
        %v6925 = vpop.f32.mrf.mxu0
        %v6926 = vadd.f32 %v6903, %v6925
        %6927 = vmatmul.f32.gmra.mxu0 %v6738
        %v6928 = vpop.f32.mrf.mxu0
        %v6929 = vadd.f32 %v6906, %v6928
        %6930 = vdwg.mxu0
        %6931 = vmatpush.msra.mxu0 %v6845
        %6932 = vmatpush.msra.mxu0 %v6843
        %6933 = vmatpush.msra.mxu0 %v6841
        %6934 = vmatpush.msra.mxu0 %v6839
        %6935 = vmatpush.msra.mxu0 %v6837
        %6936 = vmatpush.msra.mxu0 %v6835
        %6937 = vmatpush.msra.mxu0 %v6833
        %6938 = vmatpush.msra.mxu0 %v6831
        %6939 = vmatpush.msra.mxu0 %v6829
        %6940 = vmatpush.msra.mxu0 %v6827
        %6941 = vmatpush.msra.mxu0 %v6825
        %6942 = vmatpush.msra.mxu0 %v6823
        %6943 = vmatpush.msra.mxu0 %v6821
        %6944 = vmatpush.msra.mxu0 %v6819
        %6945 = vmatpush.msra.mxu0 %v6817
        %6946 = vmatpush.msra.mxu0 %v6815
        %6947 = vmatmul.f32.gmra.mxu0 %v6743
        %v6948 = vpop.f32.mrf.mxu0
        %v6949 = vadd.f32 %v6926, %v6948
        %6950 = vmatmul.f32.gmra.mxu0 %v6744
        %v6951 = vpop.f32.mrf.mxu0
        %v6952 = vadd.f32 %v6929, %v6951
        %6953 = vdwg.mxu0
        %6954 = vmatpush.msra.mxu0 %v6877
        %6955 = vmatpush.msra.mxu0 %v6875
        %6956 = vmatpush.msra.mxu0 %v6873
        %6957 = vmatpush.msra.mxu0 %v6871
        %6958 = vmatpush.msra.mxu0 %v6869
        %6959 = vmatpush.msra.mxu0 %v6867
        %6960 = vmatpush.msra.mxu0 %v6865
        %6961 = vmatpush.msra.mxu0 %v6863
        %6962 = vmatpush.msra.mxu0 %v6861
        %6963 = vmatpush.msra.mxu0 %v6859
        %6964 = vmatpush.msra.mxu0 %v6857
        %6965 = vmatpush.msra.mxu0 %v6855
        %6966 = vmatpush.msra.mxu0 %v6853
        %6967 = vmatpush.msra.mxu0 %v6851
        %6968 = vmatpush.msra.mxu0 %v6849
        %6969 = vmatpush.msra.mxu0 %v6847
        %6970 = vmatmul.f32.gmra.mxu0 %v6749
        %v6971 = vpop.f32.mrf.mxu0
        %v6972 = vadd.f32 %v6949, %v6971
        %6973 = vmatmul.f32.gmra.mxu0 %v6750
        %v6974 = vpop.f32.mrf.mxu0
        %v6975 = vadd.f32 %v6952, %v6974
        %6976 = vdwg.mxu0
        %6977 = vmatpush.msra.mxu0 %v6782
        %6978 = vmatpush.msra.mxu0 %v6780
        %6979 = vmatpush.msra.mxu0 %v6778
        %6980 = vmatpush.msra.mxu0 %v6776
        %6981 = vmatpush.msra.mxu0 %v6774
        %6982 = vmatpush.msra.mxu0 %v6772
        %6983 = vmatpush.msra.mxu0 %v6770
        %6984 = vmatpush.msra.mxu0 %v6768
        %6985 = vmatpush.msra.mxu0 %v6766
        %6986 = vmatpush.msra.mxu0 %v6764
        %6987 = vmatpush.msra.mxu0 %v6762
        %6988 = vmatpush.msra.mxu0 %v6760
        %6989 = vmatpush.msra.mxu0 %v6758
        %6990 = vmatpush.msra.mxu0 %v6756
        %6991 = vmatpush.msra.mxu0 %v6754
        %6992 = vmatpush.msra.mxu0 %v6752
        %6993 = vmatmul.f32.gmra.mxu0 %v6731
        %v6994 = vpop.f32.mrf.mxu0
        %v6995 = vadd.f32 %v6882, %v6994
        %6996 = vmatmul.f32.gmra.mxu0 %v6732
        %v6997 = vpop.f32.mrf.mxu0
        %v6998 = vadd.f32 %v6882, %v6997
        %6999 = vdwg.mxu0
        %7000 = vmatpush.msra.mxu0 %v6814
        %7001 = vmatpush.msra.mxu0 %v6812
        %7002 = vmatpush.msra.mxu0 %v6810
        %7003 = vmatpush.msra.mxu0 %v6808
        %7004 = vmatpush.msra.mxu0 %v6806
        %7005 = vmatpush.msra.mxu0 %v6804
        %7006 = vmatpush.msra.mxu0 %v6802
        %7007 = vmatpush.msra.mxu0 %v6800
        %7008 = vmatpush.msra.mxu0 %v6798
        %7009 = vmatpush.msra.mxu0 %v6796
        %7010 = vmatpush.msra.mxu0 %v6794
        %7011 = vmatpush.msra.mxu0 %v6792
        %7012 = vmatpush.msra.mxu0 %v6790
        %7013 = vmatpush.msra.mxu0 %v6788
        %7014 = vmatpush.msra.mxu0 %v6786
        %7015 = vmatpush.msra.mxu0 %v6784
        %7016 = vmatmul.f32.gmra.mxu0 %v6737
        %v7017 = vpop.f32.mrf.mxu0
        %v7018 = vadd.f32 %v6995, %v7017
        %7019 = vmatmul.f32.gmra.mxu0 %v6738
        %v7020 = vpop.f32.mrf.mxu0
        %v7021 = vadd.f32 %v6998, %v7020
        %7022 = vdwg.mxu0
        %7023 = vmatpush.msra.mxu0 %v6846
        %7024 = vmatpush.msra.mxu0 %v6844
        %7025 = vmatpush.msra.mxu0 %v6842
        %7026 = vmatpush.msra.mxu0 %v6840
        %7027 = vmatpush.msra.mxu0 %v6838
        %7028 = vmatpush.msra.mxu0 %v6836
        %7029 = vmatpush.msra.mxu0 %v6834
        %7030 = vmatpush.msra.mxu0 %v6832
        %7031 = vmatpush.msra.mxu0 %v6830
        %7032 = vmatpush.msra.mxu0 %v6828
        %7033 = vmatpush.msra.mxu0 %v6826
        %7034 = vmatpush.msra.mxu0 %v6824
        %7035 = vmatpush.msra.mxu0 %v6822
        %7036 = vmatpush.msra.mxu0 %v6820
        %7037 = vmatpush.msra.mxu0 %v6818
        %7038 = vmatpush.msra.mxu0 %v6816
        %7039 = vmatmul.f32.gmra.mxu0 %v6743
        %v7040 = vpop.f32.mrf.mxu0
        %v7041 = vadd.f32 %v7018, %v7040
        %7042 = vmatmul.f32.gmra.mxu0 %v6744
        %v7043 = vpop.f32.mrf.mxu0
        %v7044 = vadd.f32 %v7021, %v7043
        %7045 = vdwg.mxu0
        %7046 = vmatpush.msra.mxu0 %v6878
        %7047 = vmatpush.msra.mxu0 %v6876
        %7048 = vmatpush.msra.mxu0 %v6874
        %7049 = vmatpush.msra.mxu0 %v6872
        %7050 = vmatpush.msra.mxu0 %v6870
        %7051 = vmatpush.msra.mxu0 %v6868
        %7052 = vmatpush.msra.mxu0 %v6866
        %7053 = vmatpush.msra.mxu0 %v6864
        %7054 = vmatpush.msra.mxu0 %v6862
        %7055 = vmatpush.msra.mxu0 %v6860
        %7056 = vmatpush.msra.mxu0 %v6858
        %7057 = vmatpush.msra.mxu0 %v6856
        %7058 = vmatpush.msra.mxu0 %v6854
        %7059 = vmatpush.msra.mxu0 %v6852
        %7060 = vmatpush.msra.mxu0 %v6850
        %7061 = vmatpush.msra.mxu0 %v6848
        %7062 = vmatmul.f32.gmra.mxu0 %v6749
        %v7063 = vpop.f32.mrf.mxu0
        %v7064 = vadd.f32 %v7041, %v7063
        %7065 = vmatmul.f32.gmra.mxu0 %v6750
        %v7066 = vpop.f32.mrf.mxu0
        %v7067 = vadd.f32 %v7044, %v7066
        %7068 = vdwg.mxu0
        %v7069 = vadd.f32 %v629, %v6972
        %v7070 = vadd.f32 %v630, %v7064
        %v7071 = vadd.f32 %v631, %v6975
        %v7072 = vadd.f32 %v632, %v7067
        %v7073 = vadd.f32 %v7069, %v7070
        %7074 = vadd.xlane.f32.xlu0 %v7073
        %v7075 = vpop.xlane.xlu0 %7074
        %v7076 = vadd.f32 %v7071, %v7072
        %7077 = vadd.xlane.f32.xlu0 %v7076
        %v7078 = vpop.xlane.xlu0 %7077
        %v7079 = vstv %s650
        %v7080 = vmul.f32 %v7075, %v7079
        %v7081 = vmul.f32 %v7078, %v7079
        %v7082 = vsub.f32 %v7069, %v7080
        %v7083 = vsub.f32 %v7070, %v7080
        %v7084 = vsub.f32 %v7071, %v7081
        %v7085 = vsub.f32 %v7072, %v7081
        %v7086 = vld [vmem:[%s543] sm:$0x3]
        %v7088 = vperm.slane %v7086, 0
        %v7089 = vperm.slane %v7086, 1
        %v7092 = vmul.f32 %v7082, %v7088
        %v7093 = vmul.f32 %v7083, %v7089
        %v7094 = vmul.f32 %v7084, %v7088
        %v7095 = vmul.f32 %v7085, %v7089
        %v7096 = vmul.f32 %v7092, %v7092
        %v7097 = vmul.f32 %v7093, %v7093
        %v7098 = vmul.f32 %v7094, %v7094
        %v7099 = vmul.f32 %v7095, %v7095
        %v7100 = vadd.f32 %v7096, %v7097
        %7101 = vadd.xlane.f32.xlu0 %v7100
        %v7102 = vpop.xlane.xlu0 %7101
        %v7103 = vadd.f32 %v7098, %v7099
        %7104 = vadd.xlane.f32.xlu0 %v7103
        %v7105 = vpop.xlane.xlu0 %7104
        %v7106 = vmul.f32 %v7102, %v7079
        %v7107 = vmul.f32 %v7105, %v7079
        %v7108 = vadd.f32 %v7106, 1e-12
        %v7109 = vadd.f32 %v7107, 1e-12
        %v7110 = vrsqrt.pop %v7108
        %v7111 = vmul.f32 %v7110, %v7108
        %v7112 = vmul.f32 %v7111, %v7110
        %v7113 = vmul.f32 0.5, %v7112
        %v7114 = vsub.f32 1.5, %v7113
        %v7115 = vmul.f32 %v7110, %v7114
        %vm7116 = vweird.f32 %v7108
        %vm7117 = vweird.f32 %v7110
        %vm7118 = vmor %vm7116, %vm7117
        %v7119 = vsel %vm7118, %v7110, %v7115
        %v7120 = vrsqrt.pop %v7109
        %v7121 = vmul.f32 %v7120, %v7109
        %v7122 = vmul.f32 %v7121, %v7120
        %v7123 = vmul.f32 0.5, %v7122
        %v7124 = vsub.f32 1.5, %v7123
        %v7125 = vmul.f32 %v7120, %v7124
        %vm7126 = vweird.f32 %v7109
        %vm7127 = vweird.f32 %v7120
        %vm7128 = vmor %vm7126, %vm7127
        %v7129 = vsel %vm7128, %v7120, %v7125
        %v7130 = vmul.f32 %v7092, %v7119
        %v7131 = vmul.f32 %v7093, %v7119
        %v7132 = vmul.f32 %v7094, %v7129
        %v7133 = vmul.f32 %v7095, %v7129
        %v7134 = vld [vmem:[%s523] sm:$0x3]
        %v7136 = vperm.slane %v7134, 0
        %v7137 = vperm.slane %v7134, 1
        %v7140 = vmul.f32 %v7130, %v7136
        %v7141 = vmul.f32 %v7131, %v7137
        %v7142 = vmul.f32 %v7132, %v7136
        %v7143 = vmul.f32 %v7133, %v7137
        %v7144 = vld [vmem:[%s533] sm:$0x3]
        %v7146 = vperm.slane %v7144, 0
        %v7147 = vperm.slane %v7144, 1
        %v7150 = vadd.f32 %v7140, %v7146
        %v7151 = vadd.f32 %v7141, %v7147
        %v7152 = vadd.f32 %v7142, %v7146
        %v7153 = vadd.f32 %v7143, %v7147
        %7154 = vst [vmem:[%s628] sm:$0xff] %v7150
        %7155 = vst [vmem:[%s628 + $0x8] sm:$0xff] %v7151
        %7156 = vst [vmem:[%s628 + $0x10] sm:$0xff] %v7152
        %7157 = vst [vmem:[%s628 + $0x18] sm:$0xff] %v7153
        %p7158 = scmp.lt.s32.totalorder %s42, 1
        %s7159 = scalar_select %p7158, %s42, 1
        %s7160 = smul.addr %s7159, 4
        %s7161 = smul.addr %s7160, 8
        %s7162 = scalar_lea.vmem %s10, %s7161
        // Predicated region
        $region89: #{model_forward.1} parent=55 // pred_check
          %p7163 = pneg %p289
        $region90: #{model_forward.1} parent=55 // pred_check_branch
          %7165 = sbr.rel (%p7163) target = $region92
        $region91: #{model_forward.1} parent=55 // pred_region
          _
        $region92: #{model_forward.1} parent=55 // pred_fallthru
          _
      $region56: #{model_forward.1} parent=5 // pred_fallthru
        _
      %p7166 = scmp.le.s32.totalorder 2, %s37
      // Predicated region
      $region93: #{model_forward.1} parent=5 // pred_check
        %p7167 = pneg %p7166
      $region94: #{model_forward.1} parent=5 // pred_check_branch
        %7169 = sbr.rel (%p7167) target = $region96
      $region95: #{model_forward.1} parent=5 // pred_region
        %s7170 = ssub.s32 %s37, 2
        // Predicated region
        $region97: #{model_forward.1} parent=95 // pred_check
          %p7171 = pneg %p295
        $region98: #{model_forward.1} parent=95 // pred_check_branch
          %7173 = sbr.rel (%p7171) target = $region100
        $region99: #{model_forward.1} parent=95 // pred_region
          %p7174 = scmp.lt.s32.totalorder %s43, 1
          %s7175 = scalar_select %p7174, %s43, 1
          %s7176 = smul.addr %s7175, 4
          %s7177 = smul.addr %s7176, 8
          %s7178 = scalar_lea.vmem %s10, %s7177
        $region100: #{model_forward.1} parent=95 // pred_fallthru
          _
      $region96: #{model_forward.1} parent=5 // pred_fallthru
        _
    $region6: #{model_forward.1} parent=1 // loop_footer
      %s41 = sadd.s32 1, %s37
    $region7: #{model_forward.1} parent=1 // loop_footer_branch
      %36 = sbr.rel target = $region3
    $region8: #{model_forward.1} parent=1 // loop_exit
      _
    %7179 = vsyncpa [#allocation5], 1
    %s7180 = scalar_lea.sflag [#allocation5], 1
    %7181 = vsyncpa %s7180, 1
    %7182 = vsyncpa [#allocation7], 1
    %s7183 = scalar_lea.sflag [#allocation7], 1
    %7184 = vsyncpa %s7183, 1
    %7185 = vsyncpa [#allocation10], 1
    %s7186 = scalar_lea.sflag [#allocation10], 1
    %7187 = vsyncpa %s7186, 1
    %7188 = vsyncpa [#allocation13], 1
    %s7189 = scalar_lea.sflag [#allocation13], 1
    %7190 = vsyncpa %s7189, 1
    %7191 = vsyncpa [#allocation16], 1

</llo_original>
